<compile_context>
chip_gen: v6e
topology: v6e:2x2x1
jax: 0.10.0
libtpu: 0.0.40
codegen_flags: <defaults>
</compile_context>

<pallas_src>
import math

import numpy as np
import jax
import jax.numpy as jnp
from jax.experimental import pallas as pl
from jax.experimental.pallas import tpu as pltpu


def _round_up(x, m):
    return (x + m - 1) // m * m


# ----------------------------------------------------------------------------
# Fused Pallas kernel (one batch tile per grid step)
# ----------------------------------------------------------------------------
def _bwd_lstm_kernel(spec_ref,
                     wih_all_ref, b_all_ref,
                     whh3_ref, whh2_ref, whh1_ref,
                     conv_rows_ref, seg_ones_ref,
                     out_ref):
    """Whole bwd_LSTM forward for one (TB, D) batch tile.

    wih_all: (D, 16H) bf16, columns = [level4 | level3 | level2 | level1],
             each level a (4H)-wide gate block laid out [i_all|f_all|g_all|o_all]
             with step s occupying its own hidden-size window.
    b_all:   (1, 16H) f32, same layout.
    whh{3,2,1}: (H, 4H) bf16 block-diagonal recurrent weights.
    conv_rows: (3, 3, 2H) f32 per-lane conv taps; [level, tap, lane] with the
               h-filter on lanes [0:H] and the c-filter on lanes [H:2H].
    seg_ones: (3, 2H, 2H) f32 block-diagonal ones (per-window softmax sums).
    """
    f32 = jnp.float32
    x = spec_ref[...]                       # (TB, D) f32
    H4 = b_all_ref.shape[1] // 4            # 4H  (one level's gate width)
    H = H4 // 4                             # output_dim (slab width)
    W2 = 2 * H                              # packed (h|c) slab width
    cdt = wih_all_ref.dtype                 # matmul operand dtype (bf16)

    # ---- one merged input matmul for all four levels' gate pre-activations --
    gih = jnp.dot(x.astype(cdt), wih_all_ref[...],
                  preferred_element_type=f32) + b_all_ref[...]   # (TB, 16H)

    def lstm_hc(gates, c_prev):
        # gates: (TB, 4H) = [i_all | f_all | g_all | o_all]; all steps at once.
        i_g = jax.nn.sigmoid(gates[:, 0 * H:1 * H])
        f_g = jax.nn.sigmoid(gates[:, 1 * H:2 * H])
        g_g = jnp.tanh(gates[:, 2 * H:3 * H])
        o_g = jax.nn.sigmoid(gates[:, 3 * H:4 * H])
        c_new = i_g * g_g if c_prev is None else f_g * c_prev + i_g * g_g
        h_new = o_g * jnp.tanh(c_new)
        return h_new, c_new

    def conv_softmax_hc(hc, lvl, win):
        # hc: (TB, 2H) packed [h | c] slab.  Conv1d(k=3, stride=1, pad=1,
        # no bias) + softmax applied independently to each aligned `win`-wide
        # window; h-half and c-half use different per-lane taps.
        taps = conv_rows_ref[lvl]                               # (3, 2H)
        iot = jax.lax.broadcasted_iota(jnp.int32, (1, W2), 1)
        pos = (iot & (win - 1)) if (win & (win - 1)) == 0 else (iot % win)
        left = jnp.where(pos != 0,
                         pltpu.roll(hc, shift=1, axis=1), 0.0)
        right = jnp.where(pos != win - 1,
                          pltpu.roll(hc, shift=W2 - 1, axis=1), 0.0)
        conv = taps[1:2, :] * hc + taps[0:1, :] * left + taps[2:3, :] * right
        # Row-global max subtraction is exact for per-window softmax (any
        # per-row constant cancels inside each window's normalization).
        m = jnp.max(conv, axis=-1, keepdims=True)
        e = jnp.exp(conv - m)
        denom = jnp.dot(e, seg_ones_ref[lvl],                   # per-window sums
                        preferred_element_type=f32)             # on the idle MXU
        return e * pl.reciprocal(denom, approx=False)

    # ---- Level 4: 8 steps, hidden H/8, zero initial state --------------------
    h4, c4 = lstm_hc(gih[:, 0 * H4:1 * H4], None)
    t43 = conv_softmax_hc(jnp.concatenate([h4, c4], axis=-1), 0, H // 4)
    h3_0, c3_0 = t43[:, :H], t43[:, H:]

    # ---- Level 3: 4 steps, hidden H/4 ----------------------------------------
    g3 = gih[:, 1 * H4:2 * H4] + jnp.dot(h3_0.astype(cdt), whh3_ref[...],
                                         preferred_element_type=f32)
    h3, c3 = lstm_hc(g3, c3_0)
    t32 = conv_softmax_hc(jnp.concatenate([h3, c3], axis=-1), 1, H // 2)
    h2_0, c2_0 = t32[:, :H], t32[:, H:]

    # ---- Level 2: 2 steps, hidden H/2 ----------------------------------------
    g2 = gih[:, 2 * H4:3 * H4] + jnp.dot(h2_0.astype(cdt), whh2_ref[...],
                                         preferred_element_type=f32)
    h2, c2 = lstm_hc(g2, c2_0)
    t21 = conv_softmax_hc(jnp.concatenate([h2, c2], axis=-1), 2, H)
    h1_0, c1_0 = t21[:, :H], t21[:, H:]

    # ---- Level 1: single step over the full spectrum -------------------------
    g1 = gih[:, 3 * H4:4 * H4] + jnp.dot(h1_0.astype(cdt), whh1_ref[...],
                                         preferred_element_type=f32)
    h1, _ = lstm_hc(g1, c1_0)
    out_ref[...] = h1.astype(out_ref.dtype)     # out1 = hx1


# ----------------------------------------------------------------------------
# Weight packing
# ----------------------------------------------------------------------------
def _pack_level(w_ih, w_hh, b_sum, n_steps):
    """Block-diagonal, gate-permuted packing of one LSTMCell for n_steps steps.

    w_ih: (4hs, in_sz), w_hh: (4hs, hs), b_sum = b_ih + b_hh: (4hs,).
    Returns Wih (n_steps*in_sz, 4H), Whh (H, 4H), b (1, 4H), H = n_steps*hs,
    columns = [i_all | f_all | g_all | o_all], step s at [s*hs:(s+1)*hs].
    """
    w_ih = np.asarray(w_ih, np.float32)
    w_hh = np.asarray(w_hh, np.float32)
    b_sum = np.asarray(b_sum, np.float32)
    hs = w_hh.shape[1]
    in_sz = w_ih.shape[1]
    H = n_steps * hs
    wih_t, whh_t = w_ih.T, w_hh.T              # (in_sz|hs, 4hs) cols [i|f|g|o]
    Wih = np.zeros((n_steps * in_sz, 4 * H), np.float32)
    Whh = np.zeros((H, 4 * H), np.float32)
    bp = np.zeros((1, 4 * H), np.float32)
    for s in range(n_steps):
        for g in range(4):
            col = g * H + s * hs
            Wih[s * in_sz:(s + 1) * in_sz, col:col + hs] = wih_t[:, g * hs:(g + 1) * hs]
            Whh[s * hs:(s + 1) * hs, col:col + hs] = whh_t[:, g * hs:(g + 1) * hs]
            bp[0, col:col + hs] = b_sum[g * hs:(g + 1) * hs]
    return Wih, Whh, bp


def _raw_cell(k, in_sz, hs):
    bound = 1.0 / math.sqrt(hs)
    ks = jax.random.split(k, 4)
    w_ih = jax.random.uniform(ks[0], (4 * hs, in_sz), jnp.float32, -bound, bound)
    w_hh = jax.random.uniform(ks[1], (4 * hs, hs), jnp.float32, -bound, bound)
    b_ih = jax.random.uniform(ks[2], (4 * hs,), jnp.float32, -bound, bound)
    b_hh = jax.random.uniform(ks[3], (4 * hs,), jnp.float32, -bound, bound)
    return np.asarray(w_ih), np.asarray(w_hh), np.asarray(b_ih + b_hh)


def init_params(key, input_dim, output_dim, matmul_dtype=jnp.bfloat16):
    """Deterministic init mirroring PyTorch default ranges, pre-packed.

    Returns (params_for_kernel, raw_weights_for_reference).
    """
    D, H = input_dim, output_dim
    assert D % 8 == 0 and H % 8 == 0, "level-4 cells need input_dim/8, output_dim/8"

    keys = jax.random.split(key, 10)
    cell_keys = {'1': keys[0], '2': keys[1], '3': keys[2], '4': keys[3]}

    raw, packed = {}, {}
    for name, n_steps in (('4', 8), ('3', 4), ('2', 2), ('1', 1)):
        w_ih, w_hh, b = _raw_cell(cell_keys[name], D // n_steps, H // n_steps)
        raw[f'w_ih{name}'], raw[f'w_hh{name}'], raw[f'b{name}'] = w_ih, w_hh, b
        packed[name] = _pack_level(w_ih, w_hh, b, n_steps)

    wih_all = np.concatenate([packed[n][0] for n in ('4', '3', '2', '1')], axis=1)
    b_all = np.concatenate([packed[n][2] for n in ('4', '3', '2', '1')], axis=1)
    params = {
        'wih_all': jnp.asarray(wih_all, matmul_dtype),          # (D, 16H)
        'b_all': jnp.asarray(b_all, jnp.float32),               # (1, 16H)
        'whh3': jnp.asarray(packed['3'][1], matmul_dtype),      # (H, 4H)
        'whh2': jnp.asarray(packed['2'][1], matmul_dtype),
        'whh1': jnp.asarray(packed['1'][1], matmul_dtype),
        # whh4 dropped on purpose: level-4 initial state is always zero.
    }

    # Six Conv1d(1,1,3,bias=False) filters: bound = 1/sqrt(3).
    # Order: [trans4_3h, trans4_3c, trans3_2h, trans3_2c, trans2_1h, trans2_1c]
    kc = 1.0 / math.sqrt(3.0)
    filt = [np.asarray(jax.random.uniform(keys[4 + i], (3,), jnp.float32, -kc, kc))
            for i in range(6)]
    raw['filt'] = filt

    # Per-lane tap rows: h-filter on lanes [0:H], c-filter on lanes [H:2H].
    conv_rows = np.zeros((3, 3, 2 * H), np.float32)
    for lvl in range(3):
        for t in range(3):
            conv_rows[lvl, t, :H] = filt[2 * lvl][t]
            conv_rows[lvl, t, H:] = filt[2 * lvl + 1][t]
    params['conv_rows'] = jnp.asarray(conv_rows)

    # Block-diagonal ones for per-window softmax sums (one matmul per level).
    wins = (H // 4, H // 2, H)
    seg = np.zeros((3, 2 * H, 2 * H), np.float32)
    for lvl, win in enumerate(wins):
        idx = np.arange(2 * H) // win
        seg[lvl] = (idx[:, None] == idx[None, :]).astype(np.float32)
    params['seg_ones'] = jnp.asarray(seg)

    # TODO(synk): `fc` (Linear(output_dim*4, output_dim)) is unused in forward(); omitted.
    return params, raw


# ----------------------------------------------------------------------------
# Wrapper: batch grid over a single fused pallas_call
# ----------------------------------------------------------------------------
def bwd_lstm_forward(params, spec, *, block_batch=256):
    B, D = spec.shape
    H = params['b_all'].shape[1] // 16
    TB = min(block_batch, _round_up(max(B, 8), 8))   # batch tile (sublanes)
    BP = _round_up(B, TB)
    spec_p = spec if BP == B else jnp.pad(spec, ((0, BP - B), (0, 0)))

    weight_args = (params['wih_all'], params['b_all'],
                   params['whh3'], params['whh2'], params['whh1'],
                   params['conv_rows'], params['seg_ones'])

    def const_spec(a):                      # whole-array, grid-invariant block
        return pl.BlockSpec(a.shape, lambda i, _nd=a.ndim: (0,) * _nd)

    grid_spec = pltpu.PrefetchScalarGridSpec(
        num_scalar_prefetch=0,
        grid=(BP // TB,),
        in_specs=[pl.BlockSpec((TB, D), lambda i: (i, 0))]
                 + [const_spec(a) for a in weight_args],
        out_specs=pl.BlockSpec((TB, H), lambda i: (i, 0)),
    )

    out = pl.pallas_call(
        _bwd_lstm_kernel,
        out_shape=jax.ShapeDtypeStruct((BP, H), jnp.float32),
        grid_spec=grid_spec,
        compiler_params=pltpu.CompilerParams(
            dimension_semantics=("parallel",),        # shard tiles across TCs (v7x)
            vmem_limit_bytes=32 * 1024 * 1024),       # safe on v5e/v6e/v7x
    )(spec_p, *weight_args)
    return out[:B]                                    # out1 = hx1, shape (B, H)


# ----------------------------------------------------------------------------
# Pure-JAX reference (mirrors the PyTorch forward; matmul operands quantized
# to the same dtype the kernel uses so the check isolates kernel correctness).
# ----------------------------------------------------------------------------
def _reference_forward(raw, spec, matmul_dtype=jnp.bfloat16):
    B, D = spec.shape

    def cell(x, h, c, w_ih, w_hh, b):
        hs = w_hh.shape[1]
        gates = (jnp.dot(x.astype(matmul_dtype), w_ih.T.astype(matmul_dtype),
                         preferred_element_type=jnp.float32)
                 + jnp.dot(h.astype(matmul_dtype), w_hh.T.astype(matmul_dtype),
                           preferred_element_type=jnp.float32) + b)
        i = jax.nn.sigmoid(gates[:, :hs]);        f = jax.nn.sigmoid(gates[:, hs:2 * hs])
        g = jnp.tanh(gates[:, 2 * hs:3 * hs]);    o = jax.nn.sigmoid(gates[:, 3 * hs:])
        c = f * c + i * g
        return o * jnp.tanh(c), c

    def conv_softmax(y, w):                        # Conv1d(k=3, pad=1) + softmax
        yp = jnp.pad(y, ((0, 0), (1, 1)))
        conv = w[0] * yp[:, :-2] + w[1] * yp[:, 1:-1] + w[2] * yp[:, 2:]
        return jax.nn.softmax(conv, axis=-1)

    filt = raw['filt']
    hx_b, cx_b = [], []
    # level 4
    hs4 = raw['w_hh4'].shape[1]
    ths, tcs = [], []
    for s in range(8):
        x = spec[:, s * (D // 8):(s + 1) * (D // 8)]
        z = jnp.zeros((B, hs4), jnp.float32)
        h, c = cell(x, z, z, raw['w_ih4'], raw['w_hh4'], raw['b4'])
        ths.append(h); tcs.append(c)
        if s % 2 == 1:
            hx_b.append(conv_softmax(jnp.concatenate(ths, -1), filt[0]))
            cx_b.append(conv_softmax(jnp.concatenate(tcs, -1), filt[1]))
            ths, tcs = [], []
    # level 3
    ths, tcs = [], []
    for s in range(4):
        x = spec[:, s * (D // 4):(s + 1) * (D // 4)]
        h, c = cell(x, hx_b[s], cx_b[s], raw['w_ih3'], raw['w_hh3'], raw['b3'])
        ths.append(h); tcs.append(c)
        if s % 2 == 1:
            hx_b.append(conv_softmax(jnp.concatenate(ths, -1), filt[2]))
            cx_b.append(conv_softmax(jnp.concatenate(tcs, -1), filt[3]))
            ths, tcs = [], []
    del hx_b[:4]; del cx_b[:4]
    # level 2
    ths, tcs = [], []
    for s in range(2):
        x = spec[:, s * (D // 2):(s + 1) * (D // 2)]
        h, c = cell(x, hx_b[s], cx_b[s], raw['w_ih2'], raw['w_hh2'], raw['b2'])
        ths.append(h); tcs.append(c)
        if s % 2 == 1:
            hx_b.append(conv_softmax(jnp.concatenate(ths, -1), filt[4]))
            cx_b.append(conv_softmax(jnp.concatenate(tcs, -1), filt[5]))
            ths, tcs = [], []
    del hx_b[:2]; del cx_b[:2]
    # level 1
    h1, _ = cell(spec, hx_b[0], cx_b[0], raw['w_ih1'], raw['w_hh1'], raw['b1'])
    return h1


# ----------------------------------------------------------------------------
if __name__ == "__main__":
    INPUT_DIM = 32
    OUTPUT_DIM = 32
    BATCH = 500        # pads to 512 -> grid=(2,) tiles of 256: exercises the
                       # batch grid, megacore "parallel" sharding and padding.

    key = jax.random.PRNGKey(0)
    pkey, xkey = jax.random.split(key)
    params, raw = init_params(pkey, INPUT_DIM, OUTPUT_DIM)
    spec = jax.random.normal(xkey, (BATCH, INPUT_DIM), jnp.float32)

    fwd = jax.jit(bwd_lstm_forward)
    out1 = fwd(params, spec)
    jax.block_until_ready(out1)

    assert out1.shape == (BATCH, OUTPUT_DIM), out1.shape
    assert out1.dtype == jnp.float32
    assert bool(jnp.all(jnp.isfinite(out1)))

    # Correctness vs. a pure-JAX mirror of the PyTorch forward (same bf16
    # matmul-operand quantization, exact softmax/reciprocal).
    ref = _reference_forward(raw, spec)
    err = float(jnp.max(jnp.abs(out1 - ref)))
    assert err < 5e-3, f"kernel/reference mismatch: max|diff|={err}"

    print("KERNEL_OK")
</pallas_src>

<mosaic_0001>
module attributes {stable_mosaic.version = 11 : i64} {
  func.func @_bwd_lstm_kernel(%arg0: i32, %arg1: memref<256x32xf32, #tpu.memory_space<vmem>>, %arg2: memref<32x512xbf16, #tpu.memory_space<vmem>>, %arg3: memref<1x512xf32, #tpu.memory_space<vmem>>, %arg4: memref<32x128xbf16, #tpu.memory_space<vmem>>, %arg5: memref<32x128xbf16, #tpu.memory_space<vmem>>, %arg6: memref<32x128xbf16, #tpu.memory_space<vmem>>, %arg7: memref<3x3x64xf32, #tpu.memory_space<vmem>>, %arg8: memref<3x64x64xf32, #tpu.memory_space<vmem>>, %arg9: memref<256x32xf32, #tpu.memory_space<vmem>>) attributes {dimension_semantics = [#tpu.dimension_semantics<parallel>], iteration_bounds = array<i64: 2>, scalar_prefetch = 0 : i64, scratch_operands = 0 : i64, tpu.core_type = #tpu.core_type<tc>, window_params = [{transform_indices = @transform_0, window_bounds = array<i64: 256, 32>}, {pipeline_mode = #tpu.pipeline_mode<synchronous>, transform_indices = @transform_1, window_bounds = array<i64: 32, 512>}, {pipeline_mode = #tpu.pipeline_mode<synchronous>, transform_indices = @transform_2, window_bounds = array<i64: 1, 512>}, {pipeline_mode = #tpu.pipeline_mode<synchronous>, transform_indices = @transform_3, window_bounds = array<i64: 32, 128>}, {pipeline_mode = #tpu.pipeline_mode<synchronous>, transform_indices = @transform_4, window_bounds = array<i64: 32, 128>}, {pipeline_mode = #tpu.pipeline_mode<synchronous>, transform_indices = @transform_5, window_bounds = array<i64: 32, 128>}, {pipeline_mode = #tpu.pipeline_mode<synchronous>, transform_indices = @transform_6, window_bounds = array<i64: 3, 3, 64>}, {pipeline_mode = #tpu.pipeline_mode<synchronous>, transform_indices = @transform_7, window_bounds = array<i64: 3, 64, 64>}, {transform_indices = @transform_8, window_bounds = array<i64: 256, 32>}]} {
    %c0 = arith.constant 0 : index
    %c0_0 = arith.constant 0 : index
    %0 = vector.load %arg1[%c0, %c0_0] : memref<256x32xf32, #tpu.memory_space<vmem>>, vector<256x32xf32>
    %1 = arith.truncf %0 : vector<256x32xf32> to vector<256x32xbf16>
    %c0_1 = arith.constant 0 : index
    %c0_2 = arith.constant 0 : index
    %2 = vector.load %arg2[%c0_1, %c0_2] : memref<32x512xbf16, #tpu.memory_space<vmem>>, vector<32x512xbf16>
    %cst = arith.constant dense<0.000000e+00> : vector<256x512xf32>
    %3 = tpu.matmul %1, %2, %cst {dimension_numbers = #tpu.dot_dimension_numbers<[1], [0], [0], [1], [0, 0, 1, 1], [], []>} : vector<256x32xbf16>, vector<32x512xbf16>, vector<256x512xf32> -> vector<256x512xf32>
    %c0_3 = arith.constant 0 : index
    %c0_4 = arith.constant 0 : index
    %4 = vector.load %arg3[%c0_3, %c0_4] : memref<1x512xf32, #tpu.memory_space<vmem>>, vector<1x512xf32>
    %5 = vector.broadcast %4 : vector<1x512xf32> to vector<256x512xf32>
    %6 = arith.addf %3, %5 : vector<256x512xf32>
    %7 = vector.extract_strided_slice %6 {offsets = [0, 0], sizes = [256, 128], strides = [1, 1]} : vector<256x512xf32> to vector<256x128xf32>
    %8 = vector.extract_strided_slice %7 {offsets = [0, 0], sizes = [256, 32], strides = [1, 1]} : vector<256x128xf32> to vector<256x32xf32>
    %9 = arith.negf %8 : vector<256x32xf32>
    %10 = math.exp %9 : vector<256x32xf32>
    %cst_5 = arith.constant 1.000000e+00 : f32
    %11 = vector.broadcast %cst_5 : f32 to vector<256x32xf32>
    %12 = arith.addf %11, %10 : vector<256x32xf32>
    %13 = arith.divf %11, %12 : vector<256x32xf32>
    %14 = vector.extract_strided_slice %7 {offsets = [0, 64], sizes = [256, 32], strides = [1, 1]} : vector<256x128xf32> to vector<256x32xf32>
    %15 = math.tanh %14 : vector<256x32xf32>
    %16 = vector.extract_strided_slice %7 {offsets = [0, 96], sizes = [256, 32], strides = [1, 1]} : vector<256x128xf32> to vector<256x32xf32>
    %17 = arith.negf %16 : vector<256x32xf32>
    %18 = math.exp %17 : vector<256x32xf32>
    %cst_6 = arith.constant 1.000000e+00 : f32
    %19 = vector.broadcast %cst_6 : f32 to vector<256x32xf32>
    %20 = arith.addf %19, %18 : vector<256x32xf32>
    %21 = arith.divf %19, %20 : vector<256x32xf32>
    %22 = arith.mulf %13, %15 : vector<256x32xf32>
    %23 = math.tanh %22 : vector<256x32xf32>
    %24 = arith.mulf %21, %23 : vector<256x32xf32>
    %25 = tpu.concatenate %24, %22 in 1 : vector<256x32xf32>, vector<256x32xf32> -> vector<256x64xf32>
    %c0_7 = arith.constant 0 : index
    %c0_8 = arith.constant 0 : index
    %c0_9 = arith.constant 0 : index
    %26 = vector.load %arg7[%c0_7, %c0_8, %c0_9] : memref<3x3x64xf32, #tpu.memory_space<vmem>>, vector<1x3x64xf32>
    %27 = vector.shape_cast %26 : vector<1x3x64xf32> to vector<3x64xf32>
    %28 = tpu.iota {dimensions = array<i32: 1>} : vector<1x64xi32>
    %c7_i32 = arith.constant 7 : i32
    %29 = vector.broadcast %c7_i32 : i32 to vector<1x64xi32>
    %30 = arith.andi %28, %29 : vector<1x64xi32>
    %c0_i32 = arith.constant 0 : i32
    %31 = vector.broadcast %c0_i32 : i32 to vector<1x64xi32>
    %32 = arith.cmpi ne, %30, %31 : vector<1x64xi32>
    %c1_i32 = arith.constant 1 : i32
    %33 = tpu.dynamic_rotate %25 by %c1_i32 dim 1 : vector<256x64xf32>, i32 -> vector<256x64xf32>
    %cst_10 = arith.constant 0.000000e+00 : f32
    %34 = vector.shape_cast %32 : vector<1x64xi1> to vector<1x64xi1>
    %35 = vector.broadcast %34 : vector<1x64xi1> to vector<256x64xi1>
    %36 = vector.broadcast %cst_10 : f32 to vector<256x64xf32>
    %37 = arith.select %35, %33, %36 : vector<256x64xi1>, vector<256x64xf32>
    %c7_i32_11 = arith.constant 7 : i32
    %38 = vector.broadcast %c7_i32_11 : i32 to vector<1x64xi32>
    %39 = arith.cmpi ne, %30, %38 : vector<1x64xi32>
    %c63_i32 = arith.constant 63 : i32
    %40 = tpu.dynamic_rotate %25 by %c63_i32 dim 1 : vector<256x64xf32>, i32 -> vector<256x64xf32>
    %cst_12 = arith.constant 0.000000e+00 : f32
    %41 = vector.shape_cast %39 : vector<1x64xi1> to vector<1x64xi1>
    %42 = vector.broadcast %41 : vector<1x64xi1> to vector<256x64xi1>
    %43 = vector.broadcast %cst_12 : f32 to vector<256x64xf32>
    %44 = arith.select %42, %40, %43 : vector<256x64xi1>, vector<256x64xf32>
    %45 = vector.extract_strided_slice %27 {offsets = [1, 0], sizes = [1, 64], strides = [1, 1]} : vector<3x64xf32> to vector<1x64xf32>
    %46 = vector.broadcast %45 : vector<1x64xf32> to vector<256x64xf32>
    %47 = arith.mulf %46, %25 : vector<256x64xf32>
    %48 = vector.extract_strided_slice %27 {offsets = [0, 0], sizes = [1, 64], strides = [1, 1]} : vector<3x64xf32> to vector<1x64xf32>
    %49 = vector.broadcast %48 : vector<1x64xf32> to vector<256x64xf32>
    %50 = arith.mulf %49, %37 : vector<256x64xf32>
    %51 = arith.addf %47, %50 : vector<256x64xf32>
    %52 = vector.extract_strided_slice %27 {offsets = [2, 0], sizes = [1, 64], strides = [1, 1]} : vector<3x64xf32> to vector<1x64xf32>
    %53 = vector.broadcast %52 : vector<1x64xf32> to vector<256x64xf32>
    %54 = arith.mulf %53, %44 : vector<256x64xf32>
    %55 = arith.addf %51, %54 : vector<256x64xf32>
    %cst_13 = arith.constant dense<0xFF800000> : vector<256xf32>
    %56 = vector.multi_reduction <maximumf>, %55, %cst_13 [1] : vector<256x64xf32> to vector<256xf32>
    %57 = vector.shape_cast %56 : vector<256xf32> to vector<256x1xf32>
    %58 = vector.broadcast %57 : vector<256x1xf32> to vector<256x64xf32>
    %59 = arith.subf %55, %58 : vector<256x64xf32>
    %60 = math.exp %59 : vector<256x64xf32>
    %c0_14 = arith.constant 0 : index
    %c0_15 = arith.constant 0 : index
    %c0_16 = arith.constant 0 : index
    %61 = vector.load %arg8[%c0_14, %c0_15, %c0_16] : memref<3x64x64xf32, #tpu.memory_space<vmem>>, vector<1x64x64xf32>
    %62 = vector.shape_cast %61 : vector<1x64x64xf32> to vector<64x64xf32>
    %cst_17 = arith.constant dense<0.000000e+00> : vector<256x64xf32>
    %63 = tpu.matmul %60, %62, %cst_17 {dimension_numbers = #tpu.dot_dimension_numbers<[1], [0], [0], [1], [0, 0, 1, 1], [], []>} : vector<256x64xf32>, vector<64x64xf32>, vector<256x64xf32> -> vector<256x64xf32>
    %64 = tpu.reciprocal %63 : vector<256x64xf32> -> vector<256x64xf32>
    %65 = arith.mulf %60, %64 : vector<256x64xf32>
    %66 = vector.extract_strided_slice %65 {offsets = [0, 0], sizes = [256, 32], strides = [1, 1]} : vector<256x64xf32> to vector<256x32xf32>
    %67 = vector.extract_strided_slice %65 {offsets = [0, 32], sizes = [256, 32], strides = [1, 1]} : vector<256x64xf32> to vector<256x32xf32>
    %68 = vector.extract_strided_slice %6 {offsets = [0, 128], sizes = [256, 128], strides = [1, 1]} : vector<256x512xf32> to vector<256x128xf32>
    %69 = arith.truncf %66 : vector<256x32xf32> to vector<256x32xbf16>
    %c0_18 = arith.constant 0 : index
    %c0_19 = arith.constant 0 : index
    %70 = vector.load %arg4[%c0_18, %c0_19] : memref<32x128xbf16, #tpu.memory_space<vmem>>, vector<32x128xbf16>
    %cst_20 = arith.constant dense<0.000000e+00> : vector<256x128xf32>
    %71 = tpu.matmul %69, %70, %cst_20 {dimension_numbers = #tpu.dot_dimension_numbers<[1], [0], [0], [1], [0, 0, 1, 1], [], []>} : vector<256x32xbf16>, vector<32x128xbf16>, vector<256x128xf32> -> vector<256x128xf32>
    %72 = arith.addf %68, %71 : vector<256x128xf32>
    %73 = vector.extract_strided_slice %72 {offsets = [0, 0], sizes = [256, 32], strides = [1, 1]} : vector<256x128xf32> to vector<256x32xf32>
    %74 = arith.negf %73 : vector<256x32xf32>
    %75 = math.exp %74 : vector<256x32xf32>
    %cst_21 = arith.constant 1.000000e+00 : f32
    %76 = vector.broadcast %cst_21 : f32 to vector<256x32xf32>
    %77 = arith.addf %76, %75 : vector<256x32xf32>
    %78 = arith.divf %76, %77 : vector<256x32xf32>
    %79 = vector.extract_strided_slice %72 {offsets = [0, 32], sizes = [256, 32], strides = [1, 1]} : vector<256x128xf32> to vector<256x32xf32>
    %80 = arith.negf %79 : vector<256x32xf32>
    %81 = math.exp %80 : vector<256x32xf32>
    %cst_22 = arith.constant 1.000000e+00 : f32
    %82 = vector.broadcast %cst_22 : f32 to vector<256x32xf32>
    %83 = arith.addf %82, %81 : vector<256x32xf32>
    %84 = arith.divf %82, %83 : vector<256x32xf32>
    %85 = vector.extract_strided_slice %72 {offsets = [0, 64], sizes = [256, 32], strides = [1, 1]} : vector<256x128xf32> to vector<256x32xf32>
    %86 = math.tanh %85 : vector<256x32xf32>
    %87 = vector.extract_strided_slice %72 {offsets = [0, 96], sizes = [256, 32], strides = [1, 1]} : vector<256x128xf32> to vector<256x32xf32>
    %88 = arith.negf %87 : vector<256x32xf32>
    %89 = math.exp %88 : vector<256x32xf32>
    %cst_23 = arith.constant 1.000000e+00 : f32
    %90 = vector.broadcast %cst_23 : f32 to vector<256x32xf32>
    %91 = arith.addf %90, %89 : vector<256x32xf32>
    %92 = arith.divf %90, %91 : vector<256x32xf32>
    %93 = arith.mulf %84, %67 : vector<256x32xf32>
    %94 = arith.mulf %78, %86 : vector<256x32xf32>
    %95 = arith.addf %93, %94 : vector<256x32xf32>
    %96 = math.tanh %95 : vector<256x32xf32>
    %97 = arith.mulf %92, %96 : vector<256x32xf32>
    %98 = tpu.concatenate %97, %95 in 1 : vector<256x32xf32>, vector<256x32xf32> -> vector<256x64xf32>
    %c1 = arith.constant 1 : index
    %c0_24 = arith.constant 0 : index
    %c0_25 = arith.constant 0 : index
    %99 = vector.load %arg7[%c1, %c0_24, %c0_25] : memref<3x3x64xf32, #tpu.memory_space<vmem>>, vector<1x3x64xf32>
    %100 = vector.shape_cast %99 : vector<1x3x64xf32> to vector<3x64xf32>
    %101 = tpu.iota {dimensions = array<i32: 1>} : vector<1x64xi32>
    %c15_i32 = arith.constant 15 : i32
    %102 = vector.broadcast %c15_i32 : i32 to vector<1x64xi32>
    %103 = arith.andi %101, %102 : vector<1x64xi32>
    %c0_i32_26 = arith.constant 0 : i32
    %104 = vector.broadcast %c0_i32_26 : i32 to vector<1x64xi32>
    %105 = arith.cmpi ne, %103, %104 : vector<1x64xi32>
    %c1_i32_27 = arith.constant 1 : i32
    %106 = tpu.dynamic_rotate %98 by %c1_i32_27 dim 1 : vector<256x64xf32>, i32 -> vector<256x64xf32>
    %cst_28 = arith.constant 0.000000e+00 : f32
    %107 = vector.shape_cast %105 : vector<1x64xi1> to vector<1x64xi1>
    %108 = vector.broadcast %107 : vector<1x64xi1> to vector<256x64xi1>
    %109 = vector.broadcast %cst_28 : f32 to vector<256x64xf32>
    %110 = arith.select %108, %106, %109 : vector<256x64xi1>, vector<256x64xf32>
    %c15_i32_29 = arith.constant 15 : i32
    %111 = vector.broadcast %c15_i32_29 : i32 to vector<1x64xi32>
    %112 = arith.cmpi ne, %103, %111 : vector<1x64xi32>
    %c63_i32_30 = arith.constant 63 : i32
    %113 = tpu.dynamic_rotate %98 by %c63_i32_30 dim 1 : vector<256x64xf32>, i32 -> vector<256x64xf32>
    %cst_31 = arith.constant 0.000000e+00 : f32
    %114 = vector.shape_cast %112 : vector<1x64xi1> to vector<1x64xi1>
    %115 = vector.broadcast %114 : vector<1x64xi1> to vector<256x64xi1>
    %116 = vector.broadcast %cst_31 : f32 to vector<256x64xf32>
    %117 = arith.select %115, %113, %116 : vector<256x64xi1>, vector<256x64xf32>
    %118 = vector.extract_strided_slice %100 {offsets = [1, 0], sizes = [1, 64], strides = [1, 1]} : vector<3x64xf32> to vector<1x64xf32>
    %119 = vector.broadcast %118 : vector<1x64xf32> to vector<256x64xf32>
    %120 = arith.mulf %119, %98 : vector<256x64xf32>
    %121 = vector.extract_strided_slice %100 {offsets = [0, 0], sizes = [1, 64], strides = [1, 1]} : vector<3x64xf32> to vector<1x64xf32>
    %122 = vector.broadcast %121 : vector<1x64xf32> to vector<256x64xf32>
    %123 = arith.mulf %122, %110 : vector<256x64xf32>
    %124 = arith.addf %120, %123 : vector<256x64xf32>
    %125 = vector.extract_strided_slice %100 {offsets = [2, 0], sizes = [1, 64], strides = [1, 1]} : vector<3x64xf32> to vector<1x64xf32>
    %126 = vector.broadcast %125 : vector<1x64xf32> to vector<256x64xf32>
    %127 = arith.mulf %126, %117 : vector<256x64xf32>
    %128 = arith.addf %124, %127 : vector<256x64xf32>
    %cst_32 = arith.constant dense<0xFF800000> : vector<256xf32>
    %129 = vector.multi_reduction <maximumf>, %128, %cst_32 [1] : vector<256x64xf32> to vector<256xf32>
    %130 = vector.shape_cast %129 : vector<256xf32> to vector<256x1xf32>
    %131 = vector.broadcast %130 : vector<256x1xf32> to vector<256x64xf32>
    %132 = arith.subf %128, %131 : vector<256x64xf32>
    %133 = math.exp %132 : vector<256x64xf32>
    %c1_33 = arith.constant 1 : index
    %c0_34 = arith.constant 0 : index
    %c0_35 = arith.constant 0 : index
    %134 = vector.load %arg8[%c1_33, %c0_34, %c0_35] : memref<3x64x64xf32, #tpu.memory_space<vmem>>, vector<1x64x64xf32>
    %135 = vector.shape_cast %134 : vector<1x64x64xf32> to vector<64x64xf32>
    %cst_36 = arith.constant dense<0.000000e+00> : vector<256x64xf32>
    %136 = tpu.matmul %133, %135, %cst_36 {dimension_numbers = #tpu.dot_dimension_numbers<[1], [0], [0], [1], [0, 0, 1, 1], [], []>} : vector<256x64xf32>, vector<64x64xf32>, vector<256x64xf32> -> vector<256x64xf32>
    %137 = tpu.reciprocal %136 : vector<256x64xf32> -> vector<256x64xf32>
    %138 = arith.mulf %133, %137 : vector<256x64xf32>
    %139 = vector.extract_strided_slice %138 {offsets = [0, 0], sizes = [256, 32], strides = [1, 1]} : vector<256x64xf32> to vector<256x32xf32>
    %140 = vector.extract_strided_slice %138 {offsets = [0, 32], sizes = [256, 32], strides = [1, 1]} : vector<256x64xf32> to vector<256x32xf32>
    %141 = vector.extract_strided_slice %6 {offsets = [0, 256], sizes = [256, 128], strides = [1, 1]} : vector<256x512xf32> to vector<256x128xf32>
    %142 = arith.truncf %139 : vector<256x32xf32> to vector<256x32xbf16>
    %c0_37 = arith.constant 0 : index
    %c0_38 = arith.constant 0 : index
    %143 = vector.load %arg5[%c0_37, %c0_38] : memref<32x128xbf16, #tpu.memory_space<vmem>>, vector<32x128xbf16>
    %cst_39 = arith.constant dense<0.000000e+00> : vector<256x128xf32>
    %144 = tpu.matmul %142, %143, %cst_39 {dimension_numbers = #tpu.dot_dimension_numbers<[1], [0], [0], [1], [0, 0, 1, 1], [], []>} : vector<256x32xbf16>, vector<32x128xbf16>, vector<256x128xf32> -> vector<256x128xf32>
    %145 = arith.addf %141, %144 : vector<256x128xf32>
    %146 = vector.extract_strided_slice %145 {offsets = [0, 0], sizes = [256, 32], strides = [1, 1]} : vector<256x128xf32> to vector<256x32xf32>
    %147 = arith.negf %146 : vector<256x32xf32>
    %148 = math.exp %147 : vector<256x32xf32>
    %cst_40 = arith.constant 1.000000e+00 : f32
    %149 = vector.broadcast %cst_40 : f32 to vector<256x32xf32>
    %150 = arith.addf %149, %148 : vector<256x32xf32>
    %151 = arith.divf %149, %150 : vector<256x32xf32>
    %152 = vector.extract_strided_slice %145 {offsets = [0, 32], sizes = [256, 32], strides = [1, 1]} : vector<256x128xf32> to vector<256x32xf32>
    %153 = arith.negf %152 : vector<256x32xf32>
    %154 = math.exp %153 : vector<256x32xf32>
    %cst_41 = arith.constant 1.000000e+00 : f32
    %155 = vector.broadcast %cst_41 : f32 to vector<256x32xf32>
    %156 = arith.addf %155, %154 : vector<256x32xf32>
    %157 = arith.divf %155, %156 : vector<256x32xf32>
    %158 = vector.extract_strided_slice %145 {offsets = [0, 64], sizes = [256, 32], strides = [1, 1]} : vector<256x128xf32> to vector<256x32xf32>
    %159 = math.tanh %158 : vector<256x32xf32>
    %160 = vector.extract_strided_slice %145 {offsets = [0, 96], sizes = [256, 32], strides = [1, 1]} : vector<256x128xf32> to vector<256x32xf32>
    %161 = arith.negf %160 : vector<256x32xf32>
    %162 = math.exp %161 : vector<256x32xf32>
    %cst_42 = arith.constant 1.000000e+00 : f32
    %163 = vector.broadcast %cst_42 : f32 to vector<256x32xf32>
    %164 = arith.addf %163, %162 : vector<256x32xf32>
    %165 = arith.divf %163, %164 : vector<256x32xf32>
    %166 = arith.mulf %157, %140 : vector<256x32xf32>
    %167 = arith.mulf %151, %159 : vector<256x32xf32>
    %168 = arith.addf %166, %167 : vector<256x32xf32>
    %169 = math.tanh %168 : vector<256x32xf32>
    %170 = arith.mulf %165, %169 : vector<256x32xf32>
    %171 = tpu.concatenate %170, %168 in 1 : vector<256x32xf32>, vector<256x32xf32> -> vector<256x64xf32>
    %c2 = arith.constant 2 : index
    %c0_43 = arith.constant 0 : index
    %c0_44 = arith.constant 0 : index
    %172 = vector.load %arg7[%c2, %c0_43, %c0_44] : memref<3x3x64xf32, #tpu.memory_space<vmem>>, vector<1x3x64xf32>
    %173 = vector.shape_cast %172 : vector<1x3x64xf32> to vector<3x64xf32>
    %174 = tpu.iota {dimensions = array<i32: 1>} : vector<1x64xi32>
    %c31_i32 = arith.constant 31 : i32
    %175 = vector.broadcast %c31_i32 : i32 to vector<1x64xi32>
    %176 = arith.andi %174, %175 : vector<1x64xi32>
    %c0_i32_45 = arith.constant 0 : i32
    %177 = vector.broadcast %c0_i32_45 : i32 to vector<1x64xi32>
    %178 = arith.cmpi ne, %176, %177 : vector<1x64xi32>
    %c1_i32_46 = arith.constant 1 : i32
    %179 = tpu.dynamic_rotate %171 by %c1_i32_46 dim 1 : vector<256x64xf32>, i32 -> vector<256x64xf32>
    %cst_47 = arith.constant 0.000000e+00 : f32
    %180 = vector.shape_cast %178 : vector<1x64xi1> to vector<1x64xi1>
    %181 = vector.broadcast %180 : vector<1x64xi1> to vector<256x64xi1>
    %182 = vector.broadcast %cst_47 : f32 to vector<256x64xf32>
    %183 = arith.select %181, %179, %182 : vector<256x64xi1>, vector<256x64xf32>
    %c31_i32_48 = arith.constant 31 : i32
    %184 = vector.broadcast %c31_i32_48 : i32 to vector<1x64xi32>
    %185 = arith.cmpi ne, %176, %184 : vector<1x64xi32>
    %c63_i32_49 = arith.constant 63 : i32
    %186 = tpu.dynamic_rotate %171 by %c63_i32_49 dim 1 : vector<256x64xf32>, i32 -> vector<256x64xf32>
    %cst_50 = arith.constant 0.000000e+00 : f32
    %187 = vector.shape_cast %185 : vector<1x64xi1> to vector<1x64xi1>
    %188 = vector.broadcast %187 : vector<1x64xi1> to vector<256x64xi1>
    %189 = vector.broadcast %cst_50 : f32 to vector<256x64xf32>
    %190 = arith.select %188, %186, %189 : vector<256x64xi1>, vector<256x64xf32>
    %191 = vector.extract_strided_slice %173 {offsets = [1, 0], sizes = [1, 64], strides = [1, 1]} : vector<3x64xf32> to vector<1x64xf32>
    %192 = vector.broadcast %191 : vector<1x64xf32> to vector<256x64xf32>
    %193 = arith.mulf %192, %171 : vector<256x64xf32>
    %194 = vector.extract_strided_slice %173 {offsets = [0, 0], sizes = [1, 64], strides = [1, 1]} : vector<3x64xf32> to vector<1x64xf32>
    %195 = vector.broadcast %194 : vector<1x64xf32> to vector<256x64xf32>
    %196 = arith.mulf %195, %183 : vector<256x64xf32>
    %197 = arith.addf %193, %196 : vector<256x64xf32>
    %198 = vector.extract_strided_slice %173 {offsets = [2, 0], sizes = [1, 64], strides = [1, 1]} : vector<3x64xf32> to vector<1x64xf32>
    %199 = vector.broadcast %198 : vector<1x64xf32> to vector<256x64xf32>
    %200 = arith.mulf %199, %190 : vector<256x64xf32>
    %201 = arith.addf %197, %200 : vector<256x64xf32>
    %cst_51 = arith.constant dense<0xFF800000> : vector<256xf32>
    %202 = vector.multi_reduction <maximumf>, %201, %cst_51 [1] : vector<256x64xf32> to vector<256xf32>
    %203 = vector.shape_cast %202 : vector<256xf32> to vector<256x1xf32>
    %204 = vector.broadcast %203 : vector<256x1xf32> to vector<256x64xf32>
    %205 = arith.subf %201, %204 : vector<256x64xf32>
    %206 = math.exp %205 : vector<256x64xf32>
    %c2_52 = arith.constant 2 : index
    %c0_53 = arith.constant 0 : index
    %c0_54 = arith.constant 0 : index
    %207 = vector.load %arg8[%c2_52, %c0_53, %c0_54] : memref<3x64x64xf32, #tpu.memory_space<vmem>>, vector<1x64x64xf32>
    %208 = vector.shape_cast %207 : vector<1x64x64xf32> to vector<64x64xf32>
    %cst_55 = arith.constant dense<0.000000e+00> : vector<256x64xf32>
    %209 = tpu.matmul %206, %208, %cst_55 {dimension_numbers = #tpu.dot_dimension_numbers<[1], [0], [0], [1], [0, 0, 1, 1], [], []>} : vector<256x64xf32>, vector<64x64xf32>, vector<256x64xf32> -> vector<256x64xf32>
    %210 = tpu.reciprocal %209 : vector<256x64xf32> -> vector<256x64xf32>
    %211 = arith.mulf %206, %210 : vector<256x64xf32>
    %212 = vector.extract_strided_slice %211 {offsets = [0, 0], sizes = [256, 32], strides = [1, 1]} : vector<256x64xf32> to vector<256x32xf32>
    %213 = vector.extract_strided_slice %211 {offsets = [0, 32], sizes = [256, 32], strides = [1, 1]} : vector<256x64xf32> to vector<256x32xf32>
    %214 = vector.extract_strided_slice %6 {offsets = [0, 384], sizes = [256, 128], strides = [1, 1]} : vector<256x512xf32> to vector<256x128xf32>
    %215 = arith.truncf %212 : vector<256x32xf32> to vector<256x32xbf16>
    %c0_56 = arith.constant 0 : index
    %c0_57 = arith.constant 0 : index
    %216 = vector.load %arg6[%c0_56, %c0_57] : memref<32x128xbf16, #tpu.memory_space<vmem>>, vector<32x128xbf16>
    %cst_58 = arith.constant dense<0.000000e+00> : vector<256x128xf32>
    %217 = tpu.matmul %215, %216, %cst_58 {dimension_numbers = #tpu.dot_dimension_numbers<[1], [0], [0], [1], [0, 0, 1, 1], [], []>} : vector<256x32xbf16>, vector<32x128xbf16>, vector<256x128xf32> -> vector<256x128xf32>
    %218 = arith.addf %214, %217 : vector<256x128xf32>
    %219 = vector.extract_strided_slice %218 {offsets = [0, 0], sizes = [256, 32], strides = [1, 1]} : vector<256x128xf32> to vector<256x32xf32>
    %220 = arith.negf %219 : vector<256x32xf32>
    %221 = math.exp %220 : vector<256x32xf32>
    %cst_59 = arith.constant 1.000000e+00 : f32
    %222 = vector.broadcast %cst_59 : f32 to vector<256x32xf32>
    %223 = arith.addf %222, %221 : vector<256x32xf32>
    %224 = arith.divf %222, %223 : vector<256x32xf32>
    %225 = vector.extract_strided_slice %218 {offsets = [0, 32], sizes = [256, 32], strides = [1, 1]} : vector<256x128xf32> to vector<256x32xf32>
    %226 = arith.negf %225 : vector<256x32xf32>
    %227 = math.exp %226 : vector<256x32xf32>
    %cst_60 = arith.constant 1.000000e+00 : f32
    %228 = vector.broadcast %cst_60 : f32 to vector<256x32xf32>
    %229 = arith.addf %228, %227 : vector<256x32xf32>
    %230 = arith.divf %228, %229 : vector<256x32xf32>
    %231 = vector.extract_strided_slice %218 {offsets = [0, 64], sizes = [256, 32], strides = [1, 1]} : vector<256x128xf32> to vector<256x32xf32>
    %232 = math.tanh %231 : vector<256x32xf32>
    %233 = vector.extract_strided_slice %218 {offsets = [0, 96], sizes = [256, 32], strides = [1, 1]} : vector<256x128xf32> to vector<256x32xf32>
    %234 = arith.negf %233 : vector<256x32xf32>
    %235 = math.exp %234 : vector<256x32xf32>
    %cst_61 = arith.constant 1.000000e+00 : f32
    %236 = vector.broadcast %cst_61 : f32 to vector<256x32xf32>
    %237 = arith.addf %236, %235 : vector<256x32xf32>
    %238 = arith.divf %236, %237 : vector<256x32xf32>
    %239 = arith.mulf %230, %213 : vector<256x32xf32>
    %240 = arith.mulf %224, %232 : vector<256x32xf32>
    %241 = arith.addf %239, %240 : vector<256x32xf32>
    %242 = math.tanh %241 : vector<256x32xf32>
    %243 = arith.mulf %238, %242 : vector<256x32xf32>
    %c0_62 = arith.constant 0 : index
    %c0_63 = arith.constant 0 : index
    %244 = vector.load %arg9[%c0_62, %c0_63] : memref<256x32xf32, #tpu.memory_space<vmem>>, vector<256x32xf32>
    tpu.vector_store %arg9[%c0_62, %c0_63], %243 {strides = array<i32>} : memref<256x32xf32, #tpu.memory_space<vmem>>, vector<256x32xf32>,
    return
  }
  func.func @transform_0(%arg0: i32) -> (i32, i32) {
    %c0_i32 = arith.constant 0 : i32
    %c0_i32_0 = arith.constant 0 : i32
    return %arg0, %c0_i32 : i32, i32
  }
  func.func @transform_1(%arg0: i32) -> (i32, i32) {
    %c0_i32 = arith.constant 0 : i32
    %c0_i32_0 = arith.constant 0 : i32
    %c0_i32_1 = arith.constant 0 : i32
    return %c0_i32, %c0_i32_0 : i32, i32
  }
  func.func @transform_2(%arg0: i32) -> (i32, i32) {
    %c0_i32 = arith.constant 0 : i32
    %c0_i32_0 = arith.constant 0 : i32
    %c0_i32_1 = arith.constant 0 : i32
    return %c0_i32, %c0_i32_0 : i32, i32
  }
  func.func @transform_3(%arg0: i32) -> (i32, i32) {
    %c0_i32 = arith.constant 0 : i32
    %c0_i32_0 = arith.constant 0 : i32
    %c0_i32_1 = arith.constant 0 : i32
    return %c0_i32, %c0_i32_0 : i32, i32
  }
  func.func @transform_4(%arg0: i32) -> (i32, i32) {
    %c0_i32 = arith.constant 0 : i32
    %c0_i32_0 = arith.constant 0 : i32
    %c0_i32_1 = arith.constant 0 : i32
    return %c0_i32, %c0_i32_0 : i32, i32
  }
  func.func @transform_5(%arg0: i32) -> (i32, i32) {
    %c0_i32 = arith.constant 0 : i32
    %c0_i32_0 = arith.constant 0 : i32
    %c0_i32_1 = arith.constant 0 : i32
    return %c0_i32, %c0_i32_0 : i32, i32
  }
  func.func @transform_6(%arg0: i32) -> (i32, i32, i32) {
    %c0_i32 = arith.constant 0 : i32
    %c0_i32_0 = arith.constant 0 : i32
    %c0_i32_1 = arith.constant 0 : i32
    %c0_i32_2 = arith.constant 0 : i32
    return %c0_i32, %c0_i32_0, %c0_i32_1 : i32, i32, i32
  }
  func.func @transform_7(%arg0: i32) -> (i32, i32, i32) {
    %c0_i32 = arith.constant 0 : i32
    %c0_i32_0 = arith.constant 0 : i32
    %c0_i32_1 = arith.constant 0 : i32
    %c0_i32_2 = arith.constant 0 : i32
    return %c0_i32, %c0_i32_0, %c0_i32_1 : i32, i32, i32
  }
  func.func @transform_8(%arg0: i32) -> (i32, i32) {
    %c0_i32 = arith.constant 0 : i32
    %c0_i32_0 = arith.constant 0 : i32
    return %arg0, %c0_i32 : i32, i32
  }
}

</mosaic_0001>

<llo_original>
// kernel: bwd_lstm_forward.1
$region0: #{bwd_lstm_forward.1}
  #allocation0 [shape = 'u32[]', space=smem, size = 0x4, offset = 0x4, fixed_abs, tag = 'smem constant byte address 0x4 - core index']
  #allocation1 [shape = 'u32[144,128]{1,0:T(1,128)}', space=vmem, size = 0x12000, scoped, tag = 'internal scratch']
  %s0 = inlined_call_operand.vmem [shape: f32[512,32], index: 0, kind: input, shape index: {}]
  %s1 = inlined_call_operand.vmem [shape: bf16[32,512], index: 1, kind: input, shape index: {}]
  %s2 = inlined_call_operand.vmem [shape: f32[1,512], index: 2, kind: input, shape index: {}]
  %s3 = inlined_call_operand.vmem [shape: bf16[32,128], index: 3, kind: input, shape index: {}]
  %s4 = inlined_call_operand.vmem [shape: bf16[32,128], index: 4, kind: input, shape index: {}]
  %s5 = inlined_call_operand.vmem [shape: bf16[32,128], index: 5, kind: input, shape index: {}]
  %s6 = inlined_call_operand.vmem [shape: f32[3,3,64], index: 6, kind: input, shape index: {}]
  %s7 = inlined_call_operand.vmem [shape: f32[3,64,64], index: 7, kind: input, shape index: {}]
  %s8 = inlined_call_operand.vmem [shape: f32[512,32], index: 8, kind: output, shape index: {}]
  %s9 = sld [smem:[#allocation0]]
  $region65: #{bwd_lstm_forward.1} parent=0
    _
  %s11 = ssub.s32 1, %s9
  %s12 = scalar_select 0, %s11, %s9
  loop: start=0, step=1, limit=4
  $region2: #{bwd_lstm_forward.1} parent=0 // loop_pre_header
    _
  $region3: #{bwd_lstm_forward.1} parent=0 // loop_header
    %s14 = sphi 0, %s18
    %p15 = scmp.ge.s32.totalorder %s14, 4
    %s24 = sphi 0, %s26
    %s27 = sphi 0, %s24
    %s28 = sphi 0, %s27
    %s44 = sphi 0, %s28
    %s48 = sphi 0, %s48
    %s50 = sphi 0, %s48
    %s51 = sphi 0, %s50
    %s65 = sphi 0, %s51
    %s69 = sphi 0, %s69
    %s71 = sphi 0, %s69
    %s72 = sphi 0, %s71
    %s86 = sphi 0, %s72
    %s90 = sphi 0, %s90
    %s92 = sphi 0, %s90
    %s93 = sphi 0, %s92
    %s107 = sphi 0, %s93
    %s111 = sphi 0, %s111
    %s113 = sphi 0, %s111
    %s114 = sphi 0, %s113
    %s128 = sphi 0, %s114
    %s132 = sphi 0, %s132
    %s134 = sphi 0, %s132
    %s135 = sphi 0, %s134
    %s149 = sphi 0, %s135
    %s153 = sphi 0, %s153
    %s155 = sphi 0, %s153
    %s156 = sphi 0, %s155
    %s170 = sphi 0, %s156
    %s174 = sphi 0, %s174
    %s176 = sphi 0, %s174
    %s177 = sphi 0, %s176
    %s191 = sphi 0, %s177
    %s197 = sphi 0, %s199
    %s200 = sphi 0, %s197
    %s201 = sphi 0, %s200
    %s217 = sphi 0, %s201
  $region4: #{bwd_lstm_forward.1} parent=0 // loop_header_branch
    %17 = sbr.rel (%p15) target = $region8
  $region5: #{bwd_lstm_forward.1} parent=0 // loop_body
    %s19 = ssub.s32 %s14, 1
    %s20 = ssub.s32 %s14, 2
    %s21 = sadd.s32 %s14, 1
    %s22 = ssub.s32 %s14, %s21
    %p23 = scmp.eq.s32.totalorder %s22, 0
    %s25 = sadd.s32 %s24, 1
    %s26 = scalar_select %p23, %s24, %s25
    %p29 = pneg %p23
    %p30 = scmp.eq.s32.totalorder %s14, 1
    %p31 = por %p29, %p30
    %p32 = scmp.ne.s32.totalorder %s24, %s27
    %p33 = scmp.eq.s32.totalorder %s14, 0
    %p34 = por %p32, %p33
    %p35 = scmp.ne.s32.totalorder %s24, %s27
    %p36 = scmp.eq.s32.totalorder %s19, 1
    %p37 = por %p35, %p36
    %p38 = scmp.ne.s32.totalorder %s27, %s28
    %p39 = scmp.eq.s32.totalorder %s19, 0
    %p40 = por %p38, %p39
    %p41 = scmp.ne.s32.totalorder %s27, %s28
    %p42 = scmp.eq.s32.totalorder %s20, 1
    %p43 = por %p41, %p42
    %p45 = scmp.ne.s32.totalorder %s28, %s44
    %p46 = scmp.eq.s32.totalorder %s20, 0
    %p47 = por %p45, %p46
    %s49 = sadd.s32 %s48, 1
    %p52 = scmp.eq.s32.totalorder %s14, 1
    %p53 = scmp.ne.s32.totalorder %s48, %s50
    %p54 = scmp.eq.s32.totalorder %s14, 0
    %p55 = por %p53, %p54
    %p56 = scmp.ne.s32.totalorder %s48, %s50
    %p57 = scmp.eq.s32.totalorder %s19, 1
    %p58 = por %p56, %p57
    %p59 = scmp.ne.s32.totalorder %s50, %s51
    %p60 = scmp.eq.s32.totalorder %s19, 0
    %p61 = por %p59, %p60
    %p62 = scmp.ne.s32.totalorder %s50, %s51
    %p63 = scmp.eq.s32.totalorder %s20, 1
    %p64 = por %p62, %p63
    %p66 = scmp.ne.s32.totalorder %s51, %s65
    %p67 = scmp.eq.s32.totalorder %s20, 0
    %p68 = por %p66, %p67
    %s70 = sadd.s32 %s69, 1
    %p73 = scmp.eq.s32.totalorder %s14, 1
    %p74 = scmp.ne.s32.totalorder %s69, %s71
    %p75 = scmp.eq.s32.totalorder %s14, 0
    %p76 = por %p74, %p75
    %p77 = scmp.ne.s32.totalorder %s69, %s71
    %p78 = scmp.eq.s32.totalorder %s19, 1
    %p79 = por %p77, %p78
    %p80 = scmp.ne.s32.totalorder %s71, %s72
    %p81 = scmp.eq.s32.totalorder %s19, 0
    %p82 = por %p80, %p81
    %p83 = scmp.ne.s32.totalorder %s71, %s72
    %p84 = scmp.eq.s32.totalorder %s20, 1
    %p85 = por %p83, %p84
    %p87 = scmp.ne.s32.totalorder %s72, %s86
    %p88 = scmp.eq.s32.totalorder %s20, 0
    %p89 = por %p87, %p88
    %s91 = sadd.s32 %s90, 1
    %p94 = scmp.eq.s32.totalorder %s14, 1
    %p95 = scmp.ne.s32.totalorder %s90, %s92
    %p96 = scmp.eq.s32.totalorder %s14, 0
    %p97 = por %p95, %p96
    %p98 = scmp.ne.s32.totalorder %s90, %s92
    %p99 = scmp.eq.s32.totalorder %s19, 1
    %p100 = por %p98, %p99
    %p101 = scmp.ne.s32.totalorder %s92, %s93
    %p102 = scmp.eq.s32.totalorder %s19, 0
    %p103 = por %p101, %p102
    %p104 = scmp.ne.s32.totalorder %s92, %s93
    %p105 = scmp.eq.s32.totalorder %s20, 1
    %p106 = por %p104, %p105
    %p108 = scmp.ne.s32.totalorder %s93, %s107
    %p109 = scmp.eq.s32.totalorder %s20, 0
    %p110 = por %p108, %p109
    %s112 = sadd.s32 %s111, 1
    %p115 = scmp.eq.s32.totalorder %s14, 1
    %p116 = scmp.ne.s32.totalorder %s111, %s113
    %p117 = scmp.eq.s32.totalorder %s14, 0
    %p118 = por %p116, %p117
    %p119 = scmp.ne.s32.totalorder %s111, %s113
    %p120 = scmp.eq.s32.totalorder %s19, 1
    %p121 = por %p119, %p120
    %p122 = scmp.ne.s32.totalorder %s113, %s114
    %p123 = scmp.eq.s32.totalorder %s19, 0
    %p124 = por %p122, %p123
    %p125 = scmp.ne.s32.totalorder %s113, %s114
    %p126 = scmp.eq.s32.totalorder %s20, 1
    %p127 = por %p125, %p126
    %p129 = scmp.ne.s32.totalorder %s114, %s128
    %p130 = scmp.eq.s32.totalorder %s20, 0
    %p131 = por %p129, %p130
    %s133 = sadd.s32 %s132, 1
    %p136 = scmp.eq.s32.totalorder %s14, 1
    %p137 = scmp.ne.s32.totalorder %s132, %s134
    %p138 = scmp.eq.s32.totalorder %s14, 0
    %p139 = por %p137, %p138
    %p140 = scmp.ne.s32.totalorder %s132, %s134
    %p141 = scmp.eq.s32.totalorder %s19, 1
    %p142 = por %p140, %p141
    %p143 = scmp.ne.s32.totalorder %s134, %s135
    %p144 = scmp.eq.s32.totalorder %s19, 0
    %p145 = por %p143, %p144
    %p146 = scmp.ne.s32.totalorder %s134, %s135
    %p147 = scmp.eq.s32.totalorder %s20, 1
    %p148 = por %p146, %p147
    %p150 = scmp.ne.s32.totalorder %s135, %s149
    %p151 = scmp.eq.s32.totalorder %s20, 0
    %p152 = por %p150, %p151
    %s154 = sadd.s32 %s153, 1
    %p157 = scmp.eq.s32.totalorder %s14, 1
    %p158 = scmp.ne.s32.totalorder %s153, %s155
    %p159 = scmp.eq.s32.totalorder %s14, 0
    %p160 = por %p158, %p159
    %p161 = scmp.ne.s32.totalorder %s153, %s155
    %p162 = scmp.eq.s32.totalorder %s19, 1
    %p163 = por %p161, %p162
    %p164 = scmp.ne.s32.totalorder %s155, %s156
    %p165 = scmp.eq.s32.totalorder %s19, 0
    %p166 = por %p164, %p165
    %p167 = scmp.ne.s32.totalorder %s155, %s156
    %p168 = scmp.eq.s32.totalorder %s20, 1
    %p169 = por %p167, %p168
    %p171 = scmp.ne.s32.totalorder %s156, %s170
    %p172 = scmp.eq.s32.totalorder %s20, 0
    %p173 = por %p171, %p172
    %s175 = sadd.s32 %s174, 1
    %p178 = scmp.eq.s32.totalorder %s14, 1
    %p179 = scmp.ne.s32.totalorder %s174, %s176
    %p180 = scmp.eq.s32.totalorder %s14, 0
    %p181 = por %p179, %p180
    %p182 = scmp.ne.s32.totalorder %s174, %s176
    %p183 = scmp.eq.s32.totalorder %s19, 1
    %p184 = por %p182, %p183
    %p185 = scmp.ne.s32.totalorder %s176, %s177
    %p186 = scmp.eq.s32.totalorder %s19, 0
    %p187 = por %p185, %p186
    %p188 = scmp.ne.s32.totalorder %s176, %s177
    %p189 = scmp.eq.s32.totalorder %s20, 1
    %p190 = por %p188, %p189
    %p192 = scmp.ne.s32.totalorder %s177, %s191
    %p193 = scmp.eq.s32.totalorder %s20, 0
    %p194 = por %p192, %p193
    %s195 = ssub.s32 %s14, %s21
    %p196 = scmp.eq.s32.totalorder %s195, 0
    %s198 = sadd.s32 %s197, 1
    %s199 = scalar_select %p196, %s197, %s198
    %p202 = pneg %p196
    %p203 = scmp.eq.s32.totalorder %s14, 1
    %p204 = por %p202, %p203
    %p205 = scmp.ne.s32.totalorder %s197, %s200
    %p206 = scmp.eq.s32.totalorder %s14, 0
    %p207 = por %p205, %p206
    %p208 = scmp.ne.s32.totalorder %s197, %s200
    %p209 = scmp.eq.s32.totalorder %s19, 1
    %p210 = por %p208, %p209
    %p211 = scmp.ne.s32.totalorder %s200, %s201
    %p212 = scmp.eq.s32.totalorder %s19, 0
    %p213 = por %p211, %p212
    %p214 = scmp.ne.s32.totalorder %s200, %s201
    %p215 = scmp.eq.s32.totalorder %s20, 1
    %p216 = por %p214, %p215
    %p218 = scmp.ne.s32.totalorder %s201, %s217
    %p219 = scmp.eq.s32.totalorder %s20, 0
    %p220 = por %p218, %p219
    %p221 = scmp.le.s32.totalorder 1, %s14
    %p222 = scmp.lt.s32.totalorder %s14, 3
    %p223 = pnand %p221, %p222
    %p224 = pneg %p223
    // Predicated region
    $region9: #{bwd_lstm_forward.1} parent=5 // pred_check
      _
    $region10: #{bwd_lstm_forward.1} parent=5 // pred_check_branch
      %226 = sbr.rel (%p223) target = $region12
    $region11: #{bwd_lstm_forward.1} parent=5 // pred_region
      %s227 = ssub.s32 %s14, 1
      // Predicated region
      $region13: #{bwd_lstm_forward.1} parent=11 // pred_check
        %p228 = pneg %p61
      $region14: #{bwd_lstm_forward.1} parent=11 // pred_check_branch
        %230 = sbr.rel (%p228) target = $region16
      $region15: #{bwd_lstm_forward.1} parent=11 // pred_region
        _
      $region16: #{bwd_lstm_forward.1} parent=11 // pred_fallthru
        _
      // Predicated region
      $region17: #{bwd_lstm_forward.1} parent=11 // pred_check
        %p231 = pneg %p82
      $region18: #{bwd_lstm_forward.1} parent=11 // pred_check_branch
        %233 = sbr.rel (%p231) target = $region20
      $region19: #{bwd_lstm_forward.1} parent=11 // pred_region
        _
      $region20: #{bwd_lstm_forward.1} parent=11 // pred_fallthru
        _
      // Predicated region
      $region21: #{bwd_lstm_forward.1} parent=11 // pred_check
        %p234 = pneg %p103
      $region22: #{bwd_lstm_forward.1} parent=11 // pred_check_branch
        %236 = sbr.rel (%p234) target = $region24
      $region23: #{bwd_lstm_forward.1} parent=11 // pred_region
        _
      $region24: #{bwd_lstm_forward.1} parent=11 // pred_fallthru
        _
      // Predicated region
      $region25: #{bwd_lstm_forward.1} parent=11 // pred_check
        %p237 = pneg %p124
      $region26: #{bwd_lstm_forward.1} parent=11 // pred_check_branch
        %239 = sbr.rel (%p237) target = $region28
      $region27: #{bwd_lstm_forward.1} parent=11 // pred_region
        _
      $region28: #{bwd_lstm_forward.1} parent=11 // pred_fallthru
        _
      // Predicated region
      $region29: #{bwd_lstm_forward.1} parent=11 // pred_check
        %p240 = pneg %p145
      $region30: #{bwd_lstm_forward.1} parent=11 // pred_check_branch
        %242 = sbr.rel (%p240) target = $region32
      $region31: #{bwd_lstm_forward.1} parent=11 // pred_region
        _
      $region32: #{bwd_lstm_forward.1} parent=11 // pred_fallthru
        _
      // Predicated region
      $region33: #{bwd_lstm_forward.1} parent=11 // pred_check
        %p243 = pneg %p166
      $region34: #{bwd_lstm_forward.1} parent=11 // pred_check_branch
        %245 = sbr.rel (%p243) target = $region36
      $region35: #{bwd_lstm_forward.1} parent=11 // pred_region
        _
      $region36: #{bwd_lstm_forward.1} parent=11 // pred_fallthru
        _
      // Predicated region
      $region37: #{bwd_lstm_forward.1} parent=11 // pred_check
        %p246 = pneg %p187
      $region38: #{bwd_lstm_forward.1} parent=11 // pred_check_branch
        %248 = sbr.rel (%p246) target = $region40
      $region39: #{bwd_lstm_forward.1} parent=11 // pred_region
        _
      $region40: #{bwd_lstm_forward.1} parent=11 // pred_fallthru
        _
    $region12: #{bwd_lstm_forward.1} parent=5 // pred_fallthru
      _
    %p249 = scmp.lt.s32.totalorder %s14, 2
    // Predicated region
    $region41: #{bwd_lstm_forward.1} parent=5 // pred_check
      %p250 = pneg %p249
    $region42: #{bwd_lstm_forward.1} parent=5 // pred_check_branch
      %252 = sbr.rel (%p250) target = $region44
    $region43: #{bwd_lstm_forward.1} parent=5 // pred_region
      // Predicated region
      $region45: #{bwd_lstm_forward.1} parent=43 // pred_check
        %p253 = pneg %p34
      $region46: #{bwd_lstm_forward.1} parent=43 // pred_check_branch
        %255 = sbr.rel (%p253) target = $region48
      $region47: #{bwd_lstm_forward.1} parent=43 // pred_region
        %s256 = smul.u32 32, %s14
        %p257 = scmp.lt.s32.totalorder %s256, 63
        %s258 = scalar_select %p257, %s256, 63
        %s259 = smul.addr %s258, 8
        %s260 = scalar_lea.vmem %s0, %s259
        %s261 = smul.u32 32, %s14
      $region48: #{bwd_lstm_forward.1} parent=43 // pred_fallthru
        _
    $region44: #{bwd_lstm_forward.1} parent=5 // pred_fallthru
      _
    %p262 = scmp.le.s32.totalorder 1, %s14
    %p263 = scmp.lt.s32.totalorder %s14, 3
    %p264 = pnand %p262, %p263
    %p265 = pneg %p264
    // Predicated region
    $region49: #{bwd_lstm_forward.1} parent=5 // pred_check
      _
    $region50: #{bwd_lstm_forward.1} parent=5 // pred_check_branch
      %267 = sbr.rel (%p264) target = $region52
    $region51: #{bwd_lstm_forward.1} parent=5 // pred_region
      %s268 = ssub.s32 %s14, 1
      %s269 = smul.u32 32, %s19
      %p270 = scmp.lt.s32.totalorder %s269, 63
      %s271 = scalar_select %p270, %s269, 63
      %s272 = smul.addr %s271, 8
      %s273 = scalar_lea.vmem %s0, %s272
      %p274 = pneg %p40
      %p275 = pneg %p37
      %p276 = pneg %p61
      %p277 = pneg %p58
      %p278 = pneg %p82
      %p279 = pneg %p79
      %p280 = pneg %p103
      %p281 = pneg %p100
      %p282 = pneg %p124
      %p283 = pneg %p121
      %p284 = pneg %p145
      %p285 = pneg %p142
      %p286 = pneg %p166
      %p287 = pneg %p163
      %p288 = pneg %p187
      %p289 = pneg %p184
      %p290 = pneg %p213
      %p291 = pneg %p210
      %s292 = smul.u32 32, %s19
      %p293 = scmp.lt.s32.totalorder %s292, 63
      %s294 = scalar_select %p293, %s292, 63
      %s295 = smul.addr %s294, 8
      %s296 = scalar_lea.vmem %s8, %s295
      %s297 = smul.u32 32, %s19
      %p298 = scmp.lt.s32.totalorder %s297, 63
      %s299 = scalar_select %p298, %s297, 63
      %s300 = smul.addr %s299, 8
      %s301 = scalar_lea.vmem %s0, %s300
      %s302 = smul.u32 32, %s19
      %s303 = smul.u32 32, %s19
      %p304 = scmp.lt.s32.totalorder %s303, 63
      %s305 = scalar_select %p304, %s303, 63
      %s306 = smul.addr %s305, 8
      %s307 = scalar_lea.vmem %s8, %s306
      %s308 = smul.u32 32, %s19
      %v310 = vld [vmem:[%s301] sm:$0xff]
      %v311 = vld [vmem:[%s301 + $0x8] sm:$0xff]
      %v312 = vld [vmem:[%s301 + $0x10] sm:$0xff]
      %v313 = vld [vmem:[%s301 + $0x18] sm:$0xff]
      %v314 = vld [vmem:[%s301 + $0x20] sm:$0xff]
      %v315 = vld [vmem:[%s301 + $0x28] sm:$0xff]
      %v316 = vld [vmem:[%s301 + $0x30] sm:$0xff]
      %v317 = vld [vmem:[%s301 + $0x38] sm:$0xff]
      %v318 = vld [vmem:[%s301 + $0x40] sm:$0xff]
      %v319 = vld [vmem:[%s301 + $0x48] sm:$0xff]
      %v320 = vld [vmem:[%s301 + $0x50] sm:$0xff]
      %v321 = vld [vmem:[%s301 + $0x58] sm:$0xff]
      %v322 = vld [vmem:[%s301 + $0x60] sm:$0xff]
      %v323 = vld [vmem:[%s301 + $0x68] sm:$0xff]
      %v324 = vld [vmem:[%s301 + $0x70] sm:$0xff]
      %v325 = vld [vmem:[%s301 + $0x78] sm:$0xff]
      %v326 = vld [vmem:[%s301 + $0x80] sm:$0xff]
      %v327 = vld [vmem:[%s301 + $0x88] sm:$0xff]
      %v328 = vld [vmem:[%s301 + $0x90] sm:$0xff]
      %v329 = vld [vmem:[%s301 + $0x98] sm:$0xff]
      %v330 = vld [vmem:[%s301 + $0xa0] sm:$0xff]
      %v331 = vld [vmem:[%s301 + $0xa8] sm:$0xff]
      %v332 = vld [vmem:[%s301 + $0xb0] sm:$0xff]
      %v333 = vld [vmem:[%s301 + $0xb8] sm:$0xff]
      %v334 = vld [vmem:[%s301 + $0xc0] sm:$0xff]
      %v335 = vld [vmem:[%s301 + $0xc8] sm:$0xff]
      %v336 = vld [vmem:[%s301 + $0xd0] sm:$0xff]
      %v337 = vld [vmem:[%s301 + $0xd8] sm:$0xff]
      %v338 = vld [vmem:[%s301 + $0xe0] sm:$0xff]
      %v339 = vld [vmem:[%s301 + $0xe8] sm:$0xff]
      %v340 = vld [vmem:[%s301 + $0xf0] sm:$0xff]
      %v341 = vld [vmem:[%s301 + $0xf8] sm:$0xff]
      %v342 = vpack.c.bf16 %v311, %v310
      %v343 = vpack.c.bf16 %v313, %v312
      %v344 = vpack.c.bf16 %v315, %v314
      %v345 = vpack.c.bf16 %v317, %v316
      %v346 = vpack.c.bf16 %v319, %v318
      %v347 = vpack.c.bf16 %v321, %v320
      %v348 = vpack.c.bf16 %v323, %v322
      %v349 = vpack.c.bf16 %v325, %v324
      %v350 = vpack.c.bf16 %v327, %v326
      %v351 = vpack.c.bf16 %v329, %v328
      %v352 = vpack.c.bf16 %v331, %v330
      %v353 = vpack.c.bf16 %v333, %v332
      %v354 = vpack.c.bf16 %v335, %v334
      %v355 = vpack.c.bf16 %v337, %v336
      %v356 = vpack.c.bf16 %v339, %v338
      %v357 = vpack.c.bf16 %v341, %v340
      %v358 = vld [vmem:[%s1] sm:$0xff]
      %v359 = vld [vmem:[%s1 + $0x8] sm:$0xff]
      %v360 = vld [vmem:[%s1 + $0x10] sm:$0xff]
      %v361 = vld [vmem:[%s1 + $0x18] sm:$0xff]
      %v362 = vld [vmem:[%s1 + $0x20] sm:$0xff]
      %v363 = vld [vmem:[%s1 + $0x28] sm:$0xff]
      %v364 = vld [vmem:[%s1 + $0x30] sm:$0xff]
      %v365 = vld [vmem:[%s1 + $0x38] sm:$0xff]
      %v366 = vld [vmem:[%s2] sm:$0xf]
      %v368 = vlaneseq
      %v369 = vshrl.u32 %v368, 7
      %v370 = vsub.s32 0, %v369
      %v371 = vrot.slane %v366, %v370
      %v372 = vlaneseq
      %v373 = vshrl.u32 %v372, 7
      %v374 = vsub.s32 1, %v373
      %v375 = vrot.slane %v366, %v374
      %v376 = vlaneseq
      %v377 = vshrl.u32 %v376, 7
      %v378 = vsub.s32 2, %v377
      %v379 = vrot.slane %v366, %v378
      %v380 = vlaneseq
      %v381 = vshrl.u32 %v380, 7
      %v382 = vsub.s32 3, %v381
      %v383 = vrot.slane %v366, %v382
      %v396 = vunpack.c.l.b16 %v358
      %v397 = vunpack.c.h.b16 %v358
      %v398 = vunpack.c.l.b16 %v359
      %v399 = vunpack.c.h.b16 %v359
      %v400 = vunpack.c.l.b16 %v360
      %v401 = vunpack.c.h.b16 %v360
      %v402 = vunpack.c.l.b16 %v361
      %v403 = vunpack.c.h.b16 %v361
      %v404 = vunpack.c.l.b16 %v362
      %v405 = vunpack.c.h.b16 %v362
      %v406 = vunpack.c.l.b16 %v363
      %v407 = vunpack.c.h.b16 %v363
      %v408 = vunpack.c.l.b16 %v364
      %v409 = vunpack.c.h.b16 %v364
      %v410 = vunpack.c.l.b16 %v365
      %v411 = vunpack.c.h.b16 %v365
      %v412 = vpack.c.b16 %v400, %v396
      %v413 = vpack.c.b16 %v401, %v397
      %v414 = vpack.c.b16 %v402, %v398
      %v415 = vpack.c.b16 %v403, %v399
      %v416 = vpack.c.b16 %v408, %v404
      %v417 = vpack.c.b16 %v409, %v405
      %v418 = vpack.c.b16 %v410, %v406
      %v419 = vpack.c.b16 %v411, %v407
      %vm428 = vcmask 261120
      %v430 = vsel %vm428, %v342, 0
      %v433 = vsel %vm428, %v343, 0
      %v436 = vsel %vm428, %v344, 0
      %v439 = vsel %vm428, %v345, 0
      %v442 = vsel %vm428, %v346, 0
      %v445 = vsel %vm428, %v347, 0
      %v448 = vsel %vm428, %v348, 0
      %v451 = vsel %vm428, %v349, 0
      %v454 = vsel %vm428, %v350, 0
      %v457 = vsel %vm428, %v351, 0
      %v460 = vsel %vm428, %v352, 0
      %v463 = vsel %vm428, %v353, 0
      %v466 = vsel %vm428, %v354, 0
      %v469 = vsel %vm428, %v355, 0
      %v472 = vsel %vm428, %v356, 0
      %v475 = vsel %vm428, %v357, 0
      %477 = vmatprep.subr.bf16.mxu0 0
      %478 = vmatpush1.bf16.msra.mxu0 0
      %479 = vmatprep.subr.bf16.mxu0 0
      %480 = vmatpush1.bf16.msra.mxu0 0
      %481 = vmatprep.subr.bf16.mxu0 0
      %482 = vmatpush1.bf16.msra.mxu0 0
      %483 = vmatprep.subr.bf16.mxu0 0
      %484 = vmatpush1.bf16.msra.mxu0 0
      %485 = vmatprep.subr.bf16.mxu0 0
      %486 = vmatpush1.bf16.msra.mxu0 0
      %487 = vmatprep.subr.bf16.mxu0 0
      %488 = vmatpush1.bf16.msra.mxu0 0
      %489 = vmatprep.subr.bf16.mxu0 %v417
      %490 = vmatpush1.bf16.msra.mxu0 %v416
      %491 = vmatprep.subr.bf16.mxu0 %v413
      %492 = vmatpush1.bf16.msra.mxu0 %v412
      %493 = vmatprep.subr.bf16.mxu0 0
      %494 = vmatpush2.bf16.msra.mxu0 0
      %495 = vmatprep.subr.bf16.mxu0 0
      %496 = vmatpush2.bf16.msra.mxu0 0
      %497 = vmatprep.subr.bf16.mxu0 0
      %498 = vmatpush2.bf16.msra.mxu0 0
      %499 = vmatprep.subr.bf16.mxu0 0
      %500 = vmatpush2.bf16.msra.mxu0 0
      %501 = vmatprep.subr.bf16.mxu0 0
      %502 = vmatpush2.bf16.msra.mxu0 0
      %503 = vmatprep.subr.bf16.mxu0 0
      %504 = vmatpush2.bf16.msra.mxu0 0
      %505 = vmatprep.subr.bf16.mxu0 0
      %506 = vmatpush2.bf16.msra.mxu0 0
      %507 = vmatprep.subr.bf16.mxu0 0
      %508 = vmatpush2.bf16.msra.mxu0 0
      %509 = vmatprep.mubr.bf16.mxu0 0
      %510 = vmatmul.mubr.bf16.gmra.mxu0 %v430
      %v511 = vpop.f32.mrf.mxu0
      %v512 = vadd.f32 %v371, %v511
      %v513 = vpop.f32.mrf.mxu0
      %v514 = vadd.f32 %v375, %v513
      %v515 = vpop.f32.mrf.mxu0
      %v516 = vadd.f32 %v371, %v515
      %v517 = vpop.f32.mrf.mxu0
      %v518 = vadd.f32 %v375, %v517
      %519 = vmatprep.mubr.bf16.mxu0 0
      %520 = vmatmul.mubr.bf16.gmra.mxu0 %v433
      %v521 = vpop.f32.mrf.mxu0
      %v522 = vadd.f32 %v371, %v521
      %v523 = vpop.f32.mrf.mxu0
      %v524 = vadd.f32 %v375, %v523
      %v525 = vpop.f32.mrf.mxu0
      %v526 = vadd.f32 %v371, %v525
      %v527 = vpop.f32.mrf.mxu0
      %v528 = vadd.f32 %v375, %v527
      %529 = vmatprep.mubr.bf16.mxu0 0
      %530 = vmatmul.mubr.bf16.gmra.mxu0 %v436
      %v531 = vpop.f32.mrf.mxu0
      %v532 = vadd.f32 %v371, %v531
      %v533 = vpop.f32.mrf.mxu0
      %v534 = vadd.f32 %v375, %v533
      %v535 = vpop.f32.mrf.mxu0
      %v536 = vadd.f32 %v371, %v535
      %v537 = vpop.f32.mrf.mxu0
      %v538 = vadd.f32 %v375, %v537
      %539 = vmatprep.mubr.bf16.mxu0 0
      %540 = vmatmul.mubr.bf16.gmra.mxu0 %v439
      %v541 = vpop.f32.mrf.mxu0
      %v542 = vadd.f32 %v371, %v541
      %v543 = vpop.f32.mrf.mxu0
      %v544 = vadd.f32 %v375, %v543
      %v545 = vpop.f32.mrf.mxu0
      %v546 = vadd.f32 %v371, %v545
      %v547 = vpop.f32.mrf.mxu0
      %v548 = vadd.f32 %v375, %v547
      %549 = vmatprep.mubr.bf16.mxu0 0
      %550 = vmatmul.mubr.bf16.gmra.mxu0 %v442
      %v551 = vpop.f32.mrf.mxu0
      %v552 = vadd.f32 %v371, %v551
      %v553 = vpop.f32.mrf.mxu0
      %v554 = vadd.f32 %v375, %v553
      %v555 = vpop.f32.mrf.mxu0
      %v556 = vadd.f32 %v371, %v555
      %v557 = vpop.f32.mrf.mxu0
      %v558 = vadd.f32 %v375, %v557
      %559 = vmatprep.mubr.bf16.mxu0 0
      %560 = vmatmul.mubr.bf16.gmra.mxu0 %v445
      %v561 = vpop.f32.mrf.mxu0
      %v562 = vadd.f32 %v371, %v561
      %v563 = vpop.f32.mrf.mxu0
      %v564 = vadd.f32 %v375, %v563
      %v565 = vpop.f32.mrf.mxu0
      %v566 = vadd.f32 %v371, %v565
      %v567 = vpop.f32.mrf.mxu0
      %v568 = vadd.f32 %v375, %v567
      %569 = vmatprep.mubr.bf16.mxu0 0
      %570 = vmatmul.mubr.bf16.gmra.mxu0 %v448
      %v571 = vpop.f32.mrf.mxu0
      %v572 = vadd.f32 %v371, %v571
      %v573 = vpop.f32.mrf.mxu0
      %v574 = vadd.f32 %v375, %v573
      %v575 = vpop.f32.mrf.mxu0
      %v576 = vadd.f32 %v371, %v575
      %v577 = vpop.f32.mrf.mxu0
      %v578 = vadd.f32 %v375, %v577
      %579 = vmatprep.mubr.bf16.mxu0 0
      %580 = vmatmul.mubr.bf16.gmra.mxu0 %v451
      %v581 = vpop.f32.mrf.mxu0
      %v582 = vadd.f32 %v371, %v581
      %v583 = vpop.f32.mrf.mxu0
      %v584 = vadd.f32 %v375, %v583
      %v585 = vpop.f32.mrf.mxu0
      %v586 = vadd.f32 %v371, %v585
      %v587 = vpop.f32.mrf.mxu0
      %v588 = vadd.f32 %v375, %v587
      %589 = vmatprep.mubr.bf16.mxu0 0
      %590 = vmatmul.mubr.bf16.gmra.mxu0 %v454
      %v591 = vpop.f32.mrf.mxu0
      %v592 = vadd.f32 %v371, %v591
      %v593 = vpop.f32.mrf.mxu0
      %v594 = vadd.f32 %v375, %v593
      %v595 = vpop.f32.mrf.mxu0
      %v596 = vadd.f32 %v371, %v595
      %v597 = vpop.f32.mrf.mxu0
      %v598 = vadd.f32 %v375, %v597
      %599 = vmatprep.mubr.bf16.mxu0 0
      %600 = vmatmul.mubr.bf16.gmra.mxu0 %v457
      %v601 = vpop.f32.mrf.mxu0
      %v602 = vadd.f32 %v371, %v601
      %v603 = vpop.f32.mrf.mxu0
      %v604 = vadd.f32 %v375, %v603
      %v605 = vpop.f32.mrf.mxu0
      %v606 = vadd.f32 %v371, %v605
      %v607 = vpop.f32.mrf.mxu0
      %v608 = vadd.f32 %v375, %v607
      %609 = vmatprep.mubr.bf16.mxu0 0
      %610 = vmatmul.mubr.bf16.gmra.mxu0 %v460
      %v611 = vpop.f32.mrf.mxu0
      %v612 = vadd.f32 %v371, %v611
      %v613 = vpop.f32.mrf.mxu0
      %v614 = vadd.f32 %v375, %v613
      %v615 = vpop.f32.mrf.mxu0
      %v616 = vadd.f32 %v371, %v615
      %v617 = vpop.f32.mrf.mxu0
      %v618 = vadd.f32 %v375, %v617
      %619 = vmatprep.mubr.bf16.mxu0 0
      %620 = vmatmul.mubr.bf16.gmra.mxu0 %v463
      %v621 = vpop.f32.mrf.mxu0
      %v622 = vadd.f32 %v371, %v621
      %v623 = vpop.f32.mrf.mxu0
      %v624 = vadd.f32 %v375, %v623
      %v625 = vpop.f32.mrf.mxu0
      %v626 = vadd.f32 %v371, %v625
      %v627 = vpop.f32.mrf.mxu0
      %v628 = vadd.f32 %v375, %v627
      %629 = vmatprep.mubr.bf16.mxu0 0
      %630 = vmatmul.mubr.bf16.gmra.mxu0 %v466
      %v631 = vpop.f32.mrf.mxu0
      %v632 = vadd.f32 %v371, %v631
      %v633 = vpop.f32.mrf.mxu0
      %v634 = vadd.f32 %v375, %v633
      %v635 = vpop.f32.mrf.mxu0
      %v636 = vadd.f32 %v371, %v635
      %v637 = vpop.f32.mrf.mxu0
      %v638 = vadd.f32 %v375, %v637
      %639 = vmatprep.mubr.bf16.mxu0 0
      %640 = vmatmul.mubr.bf16.gmra.mxu0 %v469
      %v641 = vpop.f32.mrf.mxu0
      %v642 = vadd.f32 %v371, %v641
      %v643 = vpop.f32.mrf.mxu0
      %v644 = vadd.f32 %v375, %v643
      %v645 = vpop.f32.mrf.mxu0
      %v646 = vadd.f32 %v371, %v645
      %v647 = vpop.f32.mrf.mxu0
      %v648 = vadd.f32 %v375, %v647
      %649 = vmatprep.mubr.bf16.mxu0 0
      %650 = vmatmul.mubr.bf16.gmra.mxu0 %v472
      %v651 = vpop.f32.mrf.mxu0
      %v652 = vadd.f32 %v371, %v651
      %v653 = vpop.f32.mrf.mxu0
      %v654 = vadd.f32 %v375, %v653
      %v655 = vpop.f32.mrf.mxu0
      %v656 = vadd.f32 %v371, %v655
      %v657 = vpop.f32.mrf.mxu0
      %v658 = vadd.f32 %v375, %v657
      %659 = vmatprep.mubr.bf16.mxu0 0
      %660 = vmatmul.mubr.bf16.gmra.mxu0 %v475
      %v661 = vpop.f32.mrf.mxu0
      %v662 = vadd.f32 %v371, %v661
      %v663 = vpop.f32.mrf.mxu0
      %v664 = vadd.f32 %v375, %v663
      %v665 = vpop.f32.mrf.mxu0
      %v666 = vadd.f32 %v371, %v665
      %v667 = vpop.f32.mrf.mxu0
      %v668 = vadd.f32 %v375, %v667
      %669 = vdwg.mxu0
      %670 = vmatprep.subr.bf16.mxu0 0
      %671 = vmatpush1.bf16.msra.mxu0 0
      %672 = vmatprep.subr.bf16.mxu0 0
      %673 = vmatpush1.bf16.msra.mxu0 0
      %674 = vmatprep.subr.bf16.mxu0 0
      %675 = vmatpush1.bf16.msra.mxu0 0
      %676 = vmatprep.subr.bf16.mxu0 0
      %677 = vmatpush1.bf16.msra.mxu0 0
      %678 = vmatprep.subr.bf16.mxu0 0
      %679 = vmatpush1.bf16.msra.mxu0 0
      %680 = vmatprep.subr.bf16.mxu0 0
      %681 = vmatpush1.bf16.msra.mxu0 0
      %682 = vmatprep.subr.bf16.mxu0 %v419
      %683 = vmatpush1.bf16.msra.mxu0 %v418
      %684 = vmatprep.subr.bf16.mxu0 %v415
      %685 = vmatpush1.bf16.msra.mxu0 %v414
      %686 = vmatprep.subr.bf16.mxu0 0
      %687 = vmatpush2.bf16.msra.mxu0 0
      %688 = vmatprep.subr.bf16.mxu0 0
      %689 = vmatpush2.bf16.msra.mxu0 0
      %690 = vmatprep.subr.bf16.mxu0 0
      %691 = vmatpush2.bf16.msra.mxu0 0
      %692 = vmatprep.subr.bf16.mxu0 0
      %693 = vmatpush2.bf16.msra.mxu0 0
      %694 = vmatprep.subr.bf16.mxu0 0
      %695 = vmatpush2.bf16.msra.mxu0 0
      %696 = vmatprep.subr.bf16.mxu0 0
      %697 = vmatpush2.bf16.msra.mxu0 0
      %698 = vmatprep.subr.bf16.mxu0 0
      %699 = vmatpush2.bf16.msra.mxu0 0
      %700 = vmatprep.subr.bf16.mxu0 0
      %701 = vmatpush2.bf16.msra.mxu0 0
      %702 = vmatprep.mubr.bf16.mxu0 0
      %703 = vmatmul.mubr.bf16.gmra.mxu0 %v430
      %v704 = vpop.f32.mrf.mxu0
      %v705 = vadd.f32 %v379, %v704
      %v706 = vpop.f32.mrf.mxu0
      %v707 = vadd.f32 %v383, %v706
      %v708 = vpop.f32.mrf.mxu0
      %v709 = vadd.f32 %v379, %v708
      %v710 = vpop.f32.mrf.mxu0
      %v711 = vadd.f32 %v383, %v710
      %712 = vmatprep.mubr.bf16.mxu0 0
      %713 = vmatmul.mubr.bf16.gmra.mxu0 %v433
      %v714 = vpop.f32.mrf.mxu0
      %v715 = vadd.f32 %v379, %v714
      %v716 = vpop.f32.mrf.mxu0
      %v717 = vadd.f32 %v383, %v716
      %v718 = vpop.f32.mrf.mxu0
      %v719 = vadd.f32 %v379, %v718
      %v720 = vpop.f32.mrf.mxu0
      %v721 = vadd.f32 %v383, %v720
      %722 = vmatprep.mubr.bf16.mxu0 0
      %723 = vmatmul.mubr.bf16.gmra.mxu0 %v436
      %v724 = vpop.f32.mrf.mxu0
      %v725 = vadd.f32 %v379, %v724
      %v726 = vpop.f32.mrf.mxu0
      %v727 = vadd.f32 %v383, %v726
      %v728 = vpop.f32.mrf.mxu0
      %v729 = vadd.f32 %v379, %v728
      %v730 = vpop.f32.mrf.mxu0
      %v731 = vadd.f32 %v383, %v730
      %732 = vmatprep.mubr.bf16.mxu0 0
      %733 = vmatmul.mubr.bf16.gmra.mxu0 %v439
      %v734 = vpop.f32.mrf.mxu0
      %v735 = vadd.f32 %v379, %v734
      %v736 = vpop.f32.mrf.mxu0
      %v737 = vadd.f32 %v383, %v736
      %v738 = vpop.f32.mrf.mxu0
      %v739 = vadd.f32 %v379, %v738
      %v740 = vpop.f32.mrf.mxu0
      %v741 = vadd.f32 %v383, %v740
      %742 = vmatprep.mubr.bf16.mxu0 0
      %743 = vmatmul.mubr.bf16.gmra.mxu0 %v442
      %v744 = vpop.f32.mrf.mxu0
      %v745 = vadd.f32 %v379, %v744
      %v746 = vpop.f32.mrf.mxu0
      %v747 = vadd.f32 %v383, %v746
      %v748 = vpop.f32.mrf.mxu0
      %v749 = vadd.f32 %v379, %v748
      %v750 = vpop.f32.mrf.mxu0
      %v751 = vadd.f32 %v383, %v750
      %752 = vmatprep.mubr.bf16.mxu0 0
      %753 = vmatmul.mubr.bf16.gmra.mxu0 %v445
      %v754 = vpop.f32.mrf.mxu0
      %v755 = vadd.f32 %v379, %v754
      %v756 = vpop.f32.mrf.mxu0
      %v757 = vadd.f32 %v383, %v756
      %v758 = vpop.f32.mrf.mxu0
      %v759 = vadd.f32 %v379, %v758
      %v760 = vpop.f32.mrf.mxu0
      %v761 = vadd.f32 %v383, %v760
      %762 = vmatprep.mubr.bf16.mxu0 0
      %763 = vmatmul.mubr.bf16.gmra.mxu0 %v448
      %v764 = vpop.f32.mrf.mxu0
      %v765 = vadd.f32 %v379, %v764
      %v766 = vpop.f32.mrf.mxu0
      %v767 = vadd.f32 %v383, %v766
      %v768 = vpop.f32.mrf.mxu0
      %v769 = vadd.f32 %v379, %v768
      %v770 = vpop.f32.mrf.mxu0
      %v771 = vadd.f32 %v383, %v770
      %772 = vmatprep.mubr.bf16.mxu0 0
      %773 = vmatmul.mubr.bf16.gmra.mxu0 %v451
      %v774 = vpop.f32.mrf.mxu0
      %v775 = vadd.f32 %v379, %v774
      %v776 = vpop.f32.mrf.mxu0
      %v777 = vadd.f32 %v383, %v776
      %v778 = vpop.f32.mrf.mxu0
      %v779 = vadd.f32 %v379, %v778
      %v780 = vpop.f32.mrf.mxu0
      %v781 = vadd.f32 %v383, %v780
      %782 = vmatprep.mubr.bf16.mxu0 0
      %783 = vmatmul.mubr.bf16.gmra.mxu0 %v454
      %v784 = vpop.f32.mrf.mxu0
      %v785 = vadd.f32 %v379, %v784
      %v786 = vpop.f32.mrf.mxu0
      %v787 = vadd.f32 %v383, %v786
      %v788 = vpop.f32.mrf.mxu0
      %v789 = vadd.f32 %v379, %v788
      %v790 = vpop.f32.mrf.mxu0
      %v791 = vadd.f32 %v383, %v790
      %792 = vmatprep.mubr.bf16.mxu0 0
      %793 = vmatmul.mubr.bf16.gmra.mxu0 %v457
      %v794 = vpop.f32.mrf.mxu0
      %v795 = vadd.f32 %v379, %v794
      %v796 = vpop.f32.mrf.mxu0
      %v797 = vadd.f32 %v383, %v796
      %v798 = vpop.f32.mrf.mxu0
      %v799 = vadd.f32 %v379, %v798
      %v800 = vpop.f32.mrf.mxu0
      %v801 = vadd.f32 %v383, %v800
      %802 = vmatprep.mubr.bf16.mxu0 0
      %803 = vmatmul.mubr.bf16.gmra.mxu0 %v460
      %v804 = vpop.f32.mrf.mxu0
      %v805 = vadd.f32 %v379, %v804
      %v806 = vpop.f32.mrf.mxu0
      %v807 = vadd.f32 %v383, %v806
      %v808 = vpop.f32.mrf.mxu0
      %v809 = vadd.f32 %v379, %v808
      %v810 = vpop.f32.mrf.mxu0
      %v811 = vadd.f32 %v383, %v810
      %812 = vmatprep.mubr.bf16.mxu0 0
      %813 = vmatmul.mubr.bf16.gmra.mxu0 %v463
      %v814 = vpop.f32.mrf.mxu0
      %v815 = vadd.f32 %v379, %v814
      %v816 = vpop.f32.mrf.mxu0
      %v817 = vadd.f32 %v383, %v816
      %v818 = vpop.f32.mrf.mxu0
      %v819 = vadd.f32 %v379, %v818
      %v820 = vpop.f32.mrf.mxu0
      %v821 = vadd.f32 %v383, %v820
      %822 = vmatprep.mubr.bf16.mxu0 0
      %823 = vmatmul.mubr.bf16.gmra.mxu0 %v466
      %v824 = vpop.f32.mrf.mxu0
      %v825 = vadd.f32 %v379, %v824
      %v826 = vpop.f32.mrf.mxu0
      %v827 = vadd.f32 %v383, %v826
      %v828 = vpop.f32.mrf.mxu0
      %v829 = vadd.f32 %v379, %v828
      %v830 = vpop.f32.mrf.mxu0
      %v831 = vadd.f32 %v383, %v830
      %832 = vmatprep.mubr.bf16.mxu0 0
      %833 = vmatmul.mubr.bf16.gmra.mxu0 %v469
      %v834 = vpop.f32.mrf.mxu0
      %v835 = vadd.f32 %v379, %v834
      %v836 = vpop.f32.mrf.mxu0
      %v837 = vadd.f32 %v383, %v836
      %v838 = vpop.f32.mrf.mxu0
      %v839 = vadd.f32 %v379, %v838
      %v840 = vpop.f32.mrf.mxu0
      %v841 = vadd.f32 %v383, %v840
      %842 = vmatprep.mubr.bf16.mxu0 0
      %843 = vmatmul.mubr.bf16.gmra.mxu0 %v472
      %v844 = vpop.f32.mrf.mxu0
      %v845 = vadd.f32 %v379, %v844
      %v846 = vpop.f32.mrf.mxu0
      %v847 = vadd.f32 %v383, %v846
      %v848 = vpop.f32.mrf.mxu0
      %v849 = vadd.f32 %v379, %v848
      %v850 = vpop.f32.mrf.mxu0
      %v851 = vadd.f32 %v383, %v850
      %852 = vmatprep.mubr.bf16.mxu0 0
      %853 = vmatmul.mubr.bf16.gmra.mxu0 %v475
      %v854 = vpop.f32.mrf.mxu0
      %v855 = vadd.f32 %v379, %v854
      %v856 = vpop.f32.mrf.mxu0
      %v857 = vadd.f32 %v383, %v856
      %v858 = vpop.f32.mrf.mxu0
      %v859 = vadd.f32 %v379, %v858
      %v860 = vpop.f32.mrf.mxu0
      %v861 = vadd.f32 %v383, %v860
      %862 = vdwg.mxu0
      %v863 = vxor.u32 %v512, 2147483648
      %v864 = vxor.u32 %v516, 2147483648
      %v865 = vxor.u32 %v522, 2147483648
      %v866 = vxor.u32 %v526, 2147483648
      %v867 = vxor.u32 %v532, 2147483648
      %v868 = vxor.u32 %v536, 2147483648
      %v869 = vxor.u32 %v542, 2147483648
      %v870 = vxor.u32 %v546, 2147483648
      %v871 = vxor.u32 %v552, 2147483648
      %v872 = vxor.u32 %v556, 2147483648
      %v873 = vxor.u32 %v562, 2147483648
      %v874 = vxor.u32 %v566, 2147483648
      %v875 = vxor.u32 %v572, 2147483648
      %v876 = vxor.u32 %v576, 2147483648
      %v877 = vxor.u32 %v582, 2147483648
      %v878 = vxor.u32 %v586, 2147483648
      %v879 = vxor.u32 %v592, 2147483648
      %v880 = vxor.u32 %v596, 2147483648
      %v881 = vxor.u32 %v602, 2147483648
      %v882 = vxor.u32 %v606, 2147483648
      %v883 = vxor.u32 %v612, 2147483648
      %v884 = vxor.u32 %v616, 2147483648
      %v885 = vxor.u32 %v622, 2147483648
      %v886 = vxor.u32 %v626, 2147483648
      %v887 = vxor.u32 %v632, 2147483648
      %v888 = vxor.u32 %v636, 2147483648
      %v889 = vxor.u32 %v642, 2147483648
      %v890 = vxor.u32 %v646, 2147483648
      %v891 = vxor.u32 %v652, 2147483648
      %v892 = vxor.u32 %v656, 2147483648
      %v893 = vxor.u32 %v662, 2147483648
      %v894 = vxor.u32 %v666, 2147483648
      %v895 = vmul.f32 %v863, 1.442695
      %v896 = vpow.pop %v895
      %v897 = vmul.f32 %v864, 1.442695
      %v898 = vpow.pop %v897
      %v899 = vmul.f32 %v865, 1.442695
      %v900 = vpow.pop %v899
      %v901 = vmul.f32 %v866, 1.442695
      %v902 = vpow.pop %v901
      %v903 = vmul.f32 %v867, 1.442695
      %v904 = vpow.pop %v903
      %v905 = vmul.f32 %v868, 1.442695
      %v906 = vpow.pop %v905
      %v907 = vmul.f32 %v869, 1.442695
      %v908 = vpow.pop %v907
      %v909 = vmul.f32 %v870, 1.442695
      %v910 = vpow.pop %v909
      %v911 = vmul.f32 %v871, 1.442695
      %v912 = vpow.pop %v911
      %v913 = vmul.f32 %v872, 1.442695
      %v914 = vpow.pop %v913
      %v915 = vmul.f32 %v873, 1.442695
      %v916 = vpow.pop %v915
      %v917 = vmul.f32 %v874, 1.442695
      %v918 = vpow.pop %v917
      %v919 = vmul.f32 %v875, 1.442695
      %v920 = vpow.pop %v919
      %v921 = vmul.f32 %v876, 1.442695
      %v922 = vpow.pop %v921
      %v923 = vmul.f32 %v877, 1.442695
      %v924 = vpow.pop %v923
      %v925 = vmul.f32 %v878, 1.442695
      %v926 = vpow.pop %v925
      %v927 = vmul.f32 %v879, 1.442695
      %v928 = vpow.pop %v927
      %v929 = vmul.f32 %v880, 1.442695
      %v930 = vpow.pop %v929
      %v931 = vmul.f32 %v881, 1.442695
      %v932 = vpow.pop %v931
      %v933 = vmul.f32 %v882, 1.442695
      %v934 = vpow.pop %v933
      %v935 = vmul.f32 %v883, 1.442695
      %v936 = vpow.pop %v935
      %v937 = vmul.f32 %v884, 1.442695
      %v938 = vpow.pop %v937
      %v939 = vmul.f32 %v885, 1.442695
      %v940 = vpow.pop %v939
      %v941 = vmul.f32 %v886, 1.442695
      %v942 = vpow.pop %v941
      %v943 = vmul.f32 %v887, 1.442695
      %v944 = vpow.pop %v943
      %v945 = vmul.f32 %v888, 1.442695
      %v946 = vpow.pop %v945
      %v947 = vmul.f32 %v889, 1.442695
      %v948 = vpow.pop %v947
      %v949 = vmul.f32 %v890, 1.442695
      %v950 = vpow.pop %v949
      %v951 = vmul.f32 %v891, 1.442695
      %v952 = vpow.pop %v951
      %v953 = vmul.f32 %v892, 1.442695
      %v954 = vpow.pop %v953
      %v955 = vmul.f32 %v893, 1.442695
      %v956 = vpow.pop %v955
      %v957 = vmul.f32 %v894, 1.442695
      %v958 = vpow.pop %v957
      %v959 = vadd.f32 %v896, 1.0
      %v960 = vadd.f32 %v898, 1.0
      %v961 = vadd.f32 %v900, 1.0
      %v962 = vadd.f32 %v902, 1.0
      %v963 = vadd.f32 %v904, 1.0
      %v964 = vadd.f32 %v906, 1.0
      %v965 = vadd.f32 %v908, 1.0
      %v966 = vadd.f32 %v910, 1.0
      %v967 = vadd.f32 %v912, 1.0
      %v968 = vadd.f32 %v914, 1.0
      %v969 = vadd.f32 %v916, 1.0
      %v970 = vadd.f32 %v918, 1.0
      %v971 = vadd.f32 %v920, 1.0
      %v972 = vadd.f32 %v922, 1.0
      %v973 = vadd.f32 %v924, 1.0
      %v974 = vadd.f32 %v926, 1.0
      %v975 = vadd.f32 %v928, 1.0
      %v976 = vadd.f32 %v930, 1.0
      %v977 = vadd.f32 %v932, 1.0
      %v978 = vadd.f32 %v934, 1.0
      %v979 = vadd.f32 %v936, 1.0
      %v980 = vadd.f32 %v938, 1.0
      %v981 = vadd.f32 %v940, 1.0
      %v982 = vadd.f32 %v942, 1.0
      %v983 = vadd.f32 %v944, 1.0
      %v984 = vadd.f32 %v946, 1.0
      %v985 = vadd.f32 %v948, 1.0
      %v986 = vadd.f32 %v950, 1.0
      %v987 = vadd.f32 %v952, 1.0
      %v988 = vadd.f32 %v954, 1.0
      %v989 = vadd.f32 %v956, 1.0
      %v990 = vadd.f32 %v958, 1.0
      %v991 = vrcp.pop %v959
      %v992 = vmul.f32 1.0, %v991
      %v993 = vrcp.pop %v960
      %v994 = vmul.f32 1.0, %v993
      %v995 = vrcp.pop %v961
      %v996 = vmul.f32 1.0, %v995
      %v997 = vrcp.pop %v962
      %v998 = vmul.f32 1.0, %v997
      %v999 = vrcp.pop %v963
      %v1000 = vmul.f32 1.0, %v999
      %v1001 = vrcp.pop %v964
      %v1002 = vmul.f32 1.0, %v1001
      %v1003 = vrcp.pop %v965
      %v1004 = vmul.f32 1.0, %v1003
      %v1005 = vrcp.pop %v966
      %v1006 = vmul.f32 1.0, %v1005
      %v1007 = vrcp.pop %v967
      %v1008 = vmul.f32 1.0, %v1007
      %v1009 = vrcp.pop %v968
      %v1010 = vmul.f32 1.0, %v1009
      %v1011 = vrcp.pop %v969
      %v1012 = vmul.f32 1.0, %v1011
      %v1013 = vrcp.pop %v970
      %v1014 = vmul.f32 1.0, %v1013
      %v1015 = vrcp.pop %v971
      %v1016 = vmul.f32 1.0, %v1015
      %v1017 = vrcp.pop %v972
      %v1018 = vmul.f32 1.0, %v1017
      %v1019 = vrcp.pop %v973
      %v1020 = vmul.f32 1.0, %v1019
      %v1021 = vrcp.pop %v974
      %v1022 = vmul.f32 1.0, %v1021
      %v1023 = vrcp.pop %v975
      %v1024 = vmul.f32 1.0, %v1023
      %v1025 = vrcp.pop %v976
      %v1026 = vmul.f32 1.0, %v1025
      %v1027 = vrcp.pop %v977
      %v1028 = vmul.f32 1.0, %v1027
      %v1029 = vrcp.pop %v978
      %v1030 = vmul.f32 1.0, %v1029
      %v1031 = vrcp.pop %v979
      %v1032 = vmul.f32 1.0, %v1031
      %v1033 = vrcp.pop %v980
      %v1034 = vmul.f32 1.0, %v1033
      %v1035 = vrcp.pop %v981
      %v1036 = vmul.f32 1.0, %v1035
      %v1037 = vrcp.pop %v982
      %v1038 = vmul.f32 1.0, %v1037
      %v1039 = vrcp.pop %v983
      %v1040 = vmul.f32 1.0, %v1039
      %v1041 = vrcp.pop %v984
      %v1042 = vmul.f32 1.0, %v1041
      %v1043 = vrcp.pop %v985
      %v1044 = vmul.f32 1.0, %v1043
      %v1045 = vrcp.pop %v986
      %v1046 = vmul.f32 1.0, %v1045
      %v1047 = vrcp.pop %v987
      %v1048 = vmul.f32 1.0, %v1047
      %v1049 = vrcp.pop %v988
      %v1050 = vmul.f32 1.0, %v1049
      %v1051 = vrcp.pop %v989
      %v1052 = vmul.f32 1.0, %v1051
      %v1053 = vrcp.pop %v990
      %v1054 = vmul.f32 1.0, %v1053
      %v1055 = vtanh.pop %v512
      %v1056 = vtanh.pop %v516
      %v1057 = vtanh.pop %v522
      %v1058 = vtanh.pop %v526
      %v1059 = vtanh.pop %v532
      %v1060 = vtanh.pop %v536
      %v1061 = vtanh.pop %v542
      %v1062 = vtanh.pop %v546
      %v1063 = vtanh.pop %v552
      %v1064 = vtanh.pop %v556
      %v1065 = vtanh.pop %v562
      %v1066 = vtanh.pop %v566
      %v1067 = vtanh.pop %v572
      %v1068 = vtanh.pop %v576
      %v1069 = vtanh.pop %v582
      %v1070 = vtanh.pop %v586
      %v1071 = vtanh.pop %v592
      %v1072 = vtanh.pop %v596
      %v1073 = vtanh.pop %v602
      %v1074 = vtanh.pop %v606
      %v1075 = vtanh.pop %v612
      %v1076 = vtanh.pop %v616
      %v1077 = vtanh.pop %v622
      %v1078 = vtanh.pop %v626
      %v1079 = vtanh.pop %v632
      %v1080 = vtanh.pop %v636
      %v1081 = vtanh.pop %v642
      %v1082 = vtanh.pop %v646
      %v1083 = vtanh.pop %v652
      %v1084 = vtanh.pop %v656
      %v1085 = vtanh.pop %v662
      %v1086 = vtanh.pop %v666
      %1119 = vrot.lane.b32.xlu0 %v1055, 64
      %v1120 = vpop.permute.xlu0 %1119
      %1121 = vrot.lane.b32.xlu0 %v1056, 64
      %v1122 = vpop.permute.xlu0 %1121
      %1123 = vrot.lane.b32.xlu0 %v1057, 64
      %v1124 = vpop.permute.xlu0 %1123
      %1125 = vrot.lane.b32.xlu0 %v1058, 64
      %v1126 = vpop.permute.xlu0 %1125
      %1127 = vrot.lane.b32.xlu0 %v1059, 64
      %v1128 = vpop.permute.xlu0 %1127
      %1129 = vrot.lane.b32.xlu0 %v1060, 64
      %v1130 = vpop.permute.xlu0 %1129
      %1131 = vrot.lane.b32.xlu0 %v1061, 64
      %v1132 = vpop.permute.xlu0 %1131
      %1133 = vrot.lane.b32.xlu0 %v1062, 64
      %v1134 = vpop.permute.xlu0 %1133
      %1135 = vrot.lane.b32.xlu0 %v1063, 64
      %v1136 = vpop.permute.xlu0 %1135
      %1137 = vrot.lane.b32.xlu0 %v1064, 64
      %v1138 = vpop.permute.xlu0 %1137
      %1139 = vrot.lane.b32.xlu0 %v1065, 64
      %v1140 = vpop.permute.xlu0 %1139
      %1141 = vrot.lane.b32.xlu0 %v1066, 64
      %v1142 = vpop.permute.xlu0 %1141
      %1143 = vrot.lane.b32.xlu0 %v1067, 64
      %v1144 = vpop.permute.xlu0 %1143
      %1145 = vrot.lane.b32.xlu0 %v1068, 64
      %v1146 = vpop.permute.xlu0 %1145
      %1147 = vrot.lane.b32.xlu0 %v1069, 64
      %v1148 = vpop.permute.xlu0 %1147
      %1149 = vrot.lane.b32.xlu0 %v1070, 64
      %v1150 = vpop.permute.xlu0 %1149
      %1151 = vrot.lane.b32.xlu0 %v1071, 64
      %v1152 = vpop.permute.xlu0 %1151
      %1153 = vrot.lane.b32.xlu0 %v1072, 64
      %v1154 = vpop.permute.xlu0 %1153
      %1155 = vrot.lane.b32.xlu0 %v1073, 64
      %v1156 = vpop.permute.xlu0 %1155
      %1157 = vrot.lane.b32.xlu0 %v1074, 64
      %v1158 = vpop.permute.xlu0 %1157
      %1159 = vrot.lane.b32.xlu0 %v1075, 64
      %v1160 = vpop.permute.xlu0 %1159
      %1161 = vrot.lane.b32.xlu0 %v1076, 64
      %v1162 = vpop.permute.xlu0 %1161
      %1163 = vrot.lane.b32.xlu0 %v1077, 64
      %v1164 = vpop.permute.xlu0 %1163
      %1165 = vrot.lane.b32.xlu0 %v1078, 64
      %v1166 = vpop.permute.xlu0 %1165
      %1167 = vrot.lane.b32.xlu0 %v1079, 64
      %v1168 = vpop.permute.xlu0 %1167
      %1169 = vrot.lane.b32.xlu0 %v1080, 64
      %v1170 = vpop.permute.xlu0 %1169
      %1171 = vrot.lane.b32.xlu0 %v1081, 64
      %v1172 = vpop.permute.xlu0 %1171
      %1173 = vrot.lane.b32.xlu0 %v1082, 64
      %v1174 = vpop.permute.xlu0 %1173
      %1175 = vrot.lane.b32.xlu0 %v1083, 64
      %v1176 = vpop.permute.xlu0 %1175
      %1177 = vrot.lane.b32.xlu0 %v1084, 64
      %v1178 = vpop.permute.xlu0 %1177
      %1179 = vrot.lane.b32.xlu0 %v1085, 64
      %v1180 = vpop.permute.xlu0 %1179
      %1181 = vrot.lane.b32.xlu0 %v1086, 64
      %v1182 = vpop.permute.xlu0 %1181
      %v1215 = vmul.f32 %v992, %v1120
      %v1216 = vmul.f32 %v994, %v1122
      %v1217 = vmul.f32 %v996, %v1124
      %v1218 = vmul.f32 %v998, %v1126
      %v1219 = vmul.f32 %v1000, %v1128
      %v1220 = vmul.f32 %v1002, %v1130
      %v1221 = vmul.f32 %v1004, %v1132
      %v1222 = vmul.f32 %v1006, %v1134
      %v1223 = vmul.f32 %v1008, %v1136
      %v1224 = vmul.f32 %v1010, %v1138
      %v1225 = vmul.f32 %v1012, %v1140
      %v1226 = vmul.f32 %v1014, %v1142
      %v1227 = vmul.f32 %v1016, %v1144
      %v1228 = vmul.f32 %v1018, %v1146
      %v1229 = vmul.f32 %v1020, %v1148
      %v1230 = vmul.f32 %v1022, %v1150
      %v1231 = vmul.f32 %v1024, %v1152
      %v1232 = vmul.f32 %v1026, %v1154
      %v1233 = vmul.f32 %v1028, %v1156
      %v1234 = vmul.f32 %v1030, %v1158
      %v1235 = vmul.f32 %v1032, %v1160
      %v1236 = vmul.f32 %v1034, %v1162
      %v1237 = vmul.f32 %v1036, %v1164
      %v1238 = vmul.f32 %v1038, %v1166
      %v1239 = vmul.f32 %v1040, %v1168
      %v1240 = vmul.f32 %v1042, %v1170
      %v1241 = vmul.f32 %v1044, %v1172
      %v1242 = vmul.f32 %v1046, %v1174
      %v1243 = vmul.f32 %v1048, %v1176
      %v1244 = vmul.f32 %v1050, %v1178
      %v1245 = vmul.f32 %v1052, %v1180
      %v1246 = vmul.f32 %v1054, %v1182
      %v1247 = vtanh.pop %v1215
      %v1248 = vtanh.pop %v1216
      %v1249 = vtanh.pop %v1217
      %v1250 = vtanh.pop %v1218
      %v1251 = vtanh.pop %v1219
      %v1252 = vtanh.pop %v1220
      %v1253 = vtanh.pop %v1221
      %v1254 = vtanh.pop %v1222
      %v1255 = vtanh.pop %v1223
      %v1256 = vtanh.pop %v1224
      %v1257 = vtanh.pop %v1225
      %v1258 = vtanh.pop %v1226
      %v1259 = vtanh.pop %v1227
      %v1260 = vtanh.pop %v1228
      %v1261 = vtanh.pop %v1229
      %v1262 = vtanh.pop %v1230
      %v1263 = vtanh.pop %v1231
      %v1264 = vtanh.pop %v1232
      %v1265 = vtanh.pop %v1233
      %v1266 = vtanh.pop %v1234
      %v1267 = vtanh.pop %v1235
      %v1268 = vtanh.pop %v1236
      %v1269 = vtanh.pop %v1237
      %v1270 = vtanh.pop %v1238
      %v1271 = vtanh.pop %v1239
      %v1272 = vtanh.pop %v1240
      %v1273 = vtanh.pop %v1241
      %v1274 = vtanh.pop %v1242
      %v1275 = vtanh.pop %v1243
      %v1276 = vtanh.pop %v1244
      %v1277 = vtanh.pop %v1245
      %v1278 = vtanh.pop %v1246
      %1311 = vrot.lane.b32.xlu0 %v1247, 96
      %v1312 = vpop.permute.xlu0 %1311
      %1313 = vrot.lane.b32.xlu0 %v1248, 96
      %v1314 = vpop.permute.xlu0 %1313
      %1315 = vrot.lane.b32.xlu0 %v1249, 96
      %v1316 = vpop.permute.xlu0 %1315
      %1317 = vrot.lane.b32.xlu0 %v1250, 96
      %v1318 = vpop.permute.xlu0 %1317
      %1319 = vrot.lane.b32.xlu0 %v1251, 96
      %v1320 = vpop.permute.xlu0 %1319
      %1321 = vrot.lane.b32.xlu0 %v1252, 96
      %v1322 = vpop.permute.xlu0 %1321
      %1323 = vrot.lane.b32.xlu0 %v1253, 96
      %v1324 = vpop.permute.xlu0 %1323
      %1325 = vrot.lane.b32.xlu0 %v1254, 96
      %v1326 = vpop.permute.xlu0 %1325
      %1327 = vrot.lane.b32.xlu0 %v1255, 96
      %v1328 = vpop.permute.xlu0 %1327
      %1329 = vrot.lane.b32.xlu0 %v1256, 96
      %v1330 = vpop.permute.xlu0 %1329
      %1331 = vrot.lane.b32.xlu0 %v1257, 96
      %v1332 = vpop.permute.xlu0 %1331
      %1333 = vrot.lane.b32.xlu0 %v1258, 96
      %v1334 = vpop.permute.xlu0 %1333
      %1335 = vrot.lane.b32.xlu0 %v1259, 96
      %v1336 = vpop.permute.xlu0 %1335
      %1337 = vrot.lane.b32.xlu0 %v1260, 96
      %v1338 = vpop.permute.xlu0 %1337
      %1339 = vrot.lane.b32.xlu0 %v1261, 96
      %v1340 = vpop.permute.xlu0 %1339
      %1341 = vrot.lane.b32.xlu0 %v1262, 96
      %v1342 = vpop.permute.xlu0 %1341
      %1343 = vrot.lane.b32.xlu0 %v1263, 96
      %v1344 = vpop.permute.xlu0 %1343
      %1345 = vrot.lane.b32.xlu0 %v1264, 96
      %v1346 = vpop.permute.xlu0 %1345
      %1347 = vrot.lane.b32.xlu0 %v1265, 96
      %v1348 = vpop.permute.xlu0 %1347
      %1349 = vrot.lane.b32.xlu0 %v1266, 96
      %v1350 = vpop.permute.xlu0 %1349
      %1351 = vrot.lane.b32.xlu0 %v1267, 96
      %v1352 = vpop.permute.xlu0 %1351
      %1353 = vrot.lane.b32.xlu0 %v1268, 96
      %v1354 = vpop.permute.xlu0 %1353
      %1355 = vrot.lane.b32.xlu0 %v1269, 96
      %v1356 = vpop.permute.xlu0 %1355
      %1357 = vrot.lane.b32.xlu0 %v1270, 96
      %v1358 = vpop.permute.xlu0 %1357
      %1359 = vrot.lane.b32.xlu0 %v1271, 96
      %v1360 = vpop.permute.xlu0 %1359
      %1361 = vrot.lane.b32.xlu0 %v1272, 96
      %v1362 = vpop.permute.xlu0 %1361
      %1363 = vrot.lane.b32.xlu0 %v1273, 96
      %v1364 = vpop.permute.xlu0 %1363
      %1365 = vrot.lane.b32.xlu0 %v1274, 96
      %v1366 = vpop.permute.xlu0 %1365
      %1367 = vrot.lane.b32.xlu0 %v1275, 96
      %v1368 = vpop.permute.xlu0 %1367
      %1369 = vrot.lane.b32.xlu0 %v1276, 96
      %v1370 = vpop.permute.xlu0 %1369
      %1371 = vrot.lane.b32.xlu0 %v1277, 96
      %v1372 = vpop.permute.xlu0 %1371
      %1373 = vrot.lane.b32.xlu0 %v1278, 96
      %v1374 = vpop.permute.xlu0 %1373
      %v1407 = vmul.f32 %v992, %v1312
      %v1408 = vmul.f32 %v994, %v1314
      %v1409 = vmul.f32 %v996, %v1316
      %v1410 = vmul.f32 %v998, %v1318
      %v1411 = vmul.f32 %v1000, %v1320
      %v1412 = vmul.f32 %v1002, %v1322
      %v1413 = vmul.f32 %v1004, %v1324
      %v1414 = vmul.f32 %v1006, %v1326
      %v1415 = vmul.f32 %v1008, %v1328
      %v1416 = vmul.f32 %v1010, %v1330
      %v1417 = vmul.f32 %v1012, %v1332
      %v1418 = vmul.f32 %v1014, %v1334
      %v1419 = vmul.f32 %v1016, %v1336
      %v1420 = vmul.f32 %v1018, %v1338
      %v1421 = vmul.f32 %v1020, %v1340
      %v1422 = vmul.f32 %v1022, %v1342
      %v1423 = vmul.f32 %v1024, %v1344
      %v1424 = vmul.f32 %v1026, %v1346
      %v1425 = vmul.f32 %v1028, %v1348
      %v1426 = vmul.f32 %v1030, %v1350
      %v1427 = vmul.f32 %v1032, %v1352
      %v1428 = vmul.f32 %v1034, %v1354
      %v1429 = vmul.f32 %v1036, %v1356
      %v1430 = vmul.f32 %v1038, %v1358
      %v1431 = vmul.f32 %v1040, %v1360
      %v1432 = vmul.f32 %v1042, %v1362
      %v1433 = vmul.f32 %v1044, %v1364
      %v1434 = vmul.f32 %v1046, %v1366
      %v1435 = vmul.f32 %v1048, %v1368
      %v1436 = vmul.f32 %v1050, %v1370
      %v1437 = vmul.f32 %v1052, %v1372
      %v1438 = vmul.f32 %v1054, %v1374
      %1471 = vrot.lane.b32.xlu0 %v1407, 32
      %v1472 = vpop.permute.xlu0 %1471
      %1473 = vrot.lane.b32.xlu0 %v1408, 32
      %v1474 = vpop.permute.xlu0 %1473
      %1475 = vrot.lane.b32.xlu0 %v1409, 32
      %v1476 = vpop.permute.xlu0 %1475
      %1477 = vrot.lane.b32.xlu0 %v1410, 32
      %v1478 = vpop.permute.xlu0 %1477
      %1479 = vrot.lane.b32.xlu0 %v1411, 32
      %v1480 = vpop.permute.xlu0 %1479
      %1481 = vrot.lane.b32.xlu0 %v1412, 32
      %v1482 = vpop.permute.xlu0 %1481
      %1483 = vrot.lane.b32.xlu0 %v1413, 32
      %v1484 = vpop.permute.xlu0 %1483
      %1485 = vrot.lane.b32.xlu0 %v1414, 32
      %v1486 = vpop.permute.xlu0 %1485
      %1487 = vrot.lane.b32.xlu0 %v1415, 32
      %v1488 = vpop.permute.xlu0 %1487
      %1489 = vrot.lane.b32.xlu0 %v1416, 32
      %v1490 = vpop.permute.xlu0 %1489
      %1491 = vrot.lane.b32.xlu0 %v1417, 32
      %v1492 = vpop.permute.xlu0 %1491
      %1493 = vrot.lane.b32.xlu0 %v1418, 32
      %v1494 = vpop.permute.xlu0 %1493
      %1495 = vrot.lane.b32.xlu0 %v1419, 32
      %v1496 = vpop.permute.xlu0 %1495
      %1497 = vrot.lane.b32.xlu0 %v1420, 32
      %v1498 = vpop.permute.xlu0 %1497
      %1499 = vrot.lane.b32.xlu0 %v1421, 32
      %v1500 = vpop.permute.xlu0 %1499
      %1501 = vrot.lane.b32.xlu0 %v1422, 32
      %v1502 = vpop.permute.xlu0 %1501
      %1503 = vrot.lane.b32.xlu0 %v1423, 32
      %v1504 = vpop.permute.xlu0 %1503
      %1505 = vrot.lane.b32.xlu0 %v1424, 32
      %v1506 = vpop.permute.xlu0 %1505
      %1507 = vrot.lane.b32.xlu0 %v1425, 32
      %v1508 = vpop.permute.xlu0 %1507
      %1509 = vrot.lane.b32.xlu0 %v1426, 32
      %v1510 = vpop.permute.xlu0 %1509
      %1511 = vrot.lane.b32.xlu0 %v1427, 32
      %v1512 = vpop.permute.xlu0 %1511
      %1513 = vrot.lane.b32.xlu0 %v1428, 32
      %v1514 = vpop.permute.xlu0 %1513
      %1515 = vrot.lane.b32.xlu0 %v1429, 32
      %v1516 = vpop.permute.xlu0 %1515
      %1517 = vrot.lane.b32.xlu0 %v1430, 32
      %v1518 = vpop.permute.xlu0 %1517
      %1519 = vrot.lane.b32.xlu0 %v1431, 32
      %v1520 = vpop.permute.xlu0 %1519
      %1521 = vrot.lane.b32.xlu0 %v1432, 32
      %v1522 = vpop.permute.xlu0 %1521
      %1523 = vrot.lane.b32.xlu0 %v1433, 32
      %v1524 = vpop.permute.xlu0 %1523
      %1525 = vrot.lane.b32.xlu0 %v1434, 32
      %v1526 = vpop.permute.xlu0 %1525
      %1527 = vrot.lane.b32.xlu0 %v1435, 32
      %v1528 = vpop.permute.xlu0 %1527
      %1529 = vrot.lane.b32.xlu0 %v1436, 32
      %v1530 = vpop.permute.xlu0 %1529
      %1531 = vrot.lane.b32.xlu0 %v1437, 32
      %v1532 = vpop.permute.xlu0 %1531
      %1533 = vrot.lane.b32.xlu0 %v1438, 32
      %v1534 = vpop.permute.xlu0 %1533
      %1599 = vrot.lane.b32.xlu0 %v1215, 32
      %v1600 = vpop.permute.xlu0 %1599
      %1601 = vrot.lane.b32.xlu0 %v1216, 32
      %v1602 = vpop.permute.xlu0 %1601
      %1603 = vrot.lane.b32.xlu0 %v1217, 32
      %v1604 = vpop.permute.xlu0 %1603
      %1605 = vrot.lane.b32.xlu0 %v1218, 32
      %v1606 = vpop.permute.xlu0 %1605
      %1607 = vrot.lane.b32.xlu0 %v1219, 32
      %v1608 = vpop.permute.xlu0 %1607
      %1609 = vrot.lane.b32.xlu0 %v1220, 32
      %v1610 = vpop.permute.xlu0 %1609
      %1611 = vrot.lane.b32.xlu0 %v1221, 32
      %v1612 = vpop.permute.xlu0 %1611
      %1613 = vrot.lane.b32.xlu0 %v1222, 32
      %v1614 = vpop.permute.xlu0 %1613
      %1615 = vrot.lane.b32.xlu0 %v1223, 32
      %v1616 = vpop.permute.xlu0 %1615
      %1617 = vrot.lane.b32.xlu0 %v1224, 32
      %v1618 = vpop.permute.xlu0 %1617
      %1619 = vrot.lane.b32.xlu0 %v1225, 32
      %v1620 = vpop.permute.xlu0 %1619
      %1621 = vrot.lane.b32.xlu0 %v1226, 32
      %v1622 = vpop.permute.xlu0 %1621
      %1623 = vrot.lane.b32.xlu0 %v1227, 32
      %v1624 = vpop.permute.xlu0 %1623
      %1625 = vrot.lane.b32.xlu0 %v1228, 32
      %v1626 = vpop.permute.xlu0 %1625
      %1627 = vrot.lane.b32.xlu0 %v1229, 32
      %v1628 = vpop.permute.xlu0 %1627
      %1629 = vrot.lane.b32.xlu0 %v1230, 32
      %v1630 = vpop.permute.xlu0 %1629
      %1631 = vrot.lane.b32.xlu0 %v1231, 32
      %v1632 = vpop.permute.xlu0 %1631
      %1633 = vrot.lane.b32.xlu0 %v1232, 32
      %v1634 = vpop.permute.xlu0 %1633
      %1635 = vrot.lane.b32.xlu0 %v1233, 32
      %v1636 = vpop.permute.xlu0 %1635
      %1637 = vrot.lane.b32.xlu0 %v1234, 32
      %v1638 = vpop.permute.xlu0 %1637
      %1639 = vrot.lane.b32.xlu0 %v1235, 32
      %v1640 = vpop.permute.xlu0 %1639
      %1641 = vrot.lane.b32.xlu0 %v1236, 32
      %v1642 = vpop.permute.xlu0 %1641
      %1643 = vrot.lane.b32.xlu0 %v1237, 32
      %v1644 = vpop.permute.xlu0 %1643
      %1645 = vrot.lane.b32.xlu0 %v1238, 32
      %v1646 = vpop.permute.xlu0 %1645
      %1647 = vrot.lane.b32.xlu0 %v1239, 32
      %v1648 = vpop.permute.xlu0 %1647
      %1649 = vrot.lane.b32.xlu0 %v1240, 32
      %v1650 = vpop.permute.xlu0 %1649
      %1651 = vrot.lane.b32.xlu0 %v1241, 32
      %v1652 = vpop.permute.xlu0 %1651
      %1653 = vrot.lane.b32.xlu0 %v1242, 32
      %v1654 = vpop.permute.xlu0 %1653
      %1655 = vrot.lane.b32.xlu0 %v1243, 32
      %v1656 = vpop.permute.xlu0 %1655
      %1657 = vrot.lane.b32.xlu0 %v1244, 32
      %v1658 = vpop.permute.xlu0 %1657
      %1659 = vrot.lane.b32.xlu0 %v1245, 32
      %v1660 = vpop.permute.xlu0 %1659
      %1661 = vrot.lane.b32.xlu0 %v1246, 32
      %v1662 = vpop.permute.xlu0 %1661
      %v1695 = vsel %vm428, %v1472, %v1600
      %v1696 = vsel %vm428, %v1474, %v1602
      %v1697 = vsel %vm428, %v1476, %v1604
      %v1698 = vsel %vm428, %v1478, %v1606
      %v1699 = vsel %vm428, %v1480, %v1608
      %v1700 = vsel %vm428, %v1482, %v1610
      %v1701 = vsel %vm428, %v1484, %v1612
      %v1702 = vsel %vm428, %v1486, %v1614
      %v1703 = vsel %vm428, %v1488, %v1616
      %v1704 = vsel %vm428, %v1490, %v1618
      %v1705 = vsel %vm428, %v1492, %v1620
      %v1706 = vsel %vm428, %v1494, %v1622
      %v1707 = vsel %vm428, %v1496, %v1624
      %v1708 = vsel %vm428, %v1498, %v1626
      %v1709 = vsel %vm428, %v1500, %v1628
      %v1710 = vsel %vm428, %v1502, %v1630
      %v1711 = vsel %vm428, %v1504, %v1632
      %v1712 = vsel %vm428, %v1506, %v1634
      %v1713 = vsel %vm428, %v1508, %v1636
      %v1714 = vsel %vm428, %v1510, %v1638
      %v1715 = vsel %vm428, %v1512, %v1640
      %v1716 = vsel %vm428, %v1514, %v1642
      %v1717 = vsel %vm428, %v1516, %v1644
      %v1718 = vsel %vm428, %v1518, %v1646
      %v1719 = vsel %vm428, %v1520, %v1648
      %v1720 = vsel %vm428, %v1522, %v1650
      %v1721 = vsel %vm428, %v1524, %v1652
      %v1722 = vsel %vm428, %v1526, %v1654
      %v1723 = vsel %vm428, %v1528, %v1656
      %v1724 = vsel %vm428, %v1530, %v1658
      %v1725 = vsel %vm428, %v1532, %v1660
      %v1726 = vsel %vm428, %v1534, %v1662
      %v1727 = vld [vmem:[%s6] sm:$0x7]
      %v1728 = vlaneseq
      %v1729 = vand.u32 %v1728, 127
      %v1730 = vand.u32 %v1729, 7
      %vm1731 = vcmp.ne.s32.totalorder %v1730, 0
      %vm1732 = vcmask 1048064
      %1733 = vrot.lane.b32.xlu0 %v1695, 64
      %v1734 = vpop.permute.xlu0 %1733
      %v1735 = vsel %vm1732, %v1734, %v1695
      %1736 = vrot.lane.b32.xlu0 %v1696, 64
      %v1737 = vpop.permute.xlu0 %1736
      %v1738 = vsel %vm1732, %v1737, %v1696
      %1739 = vrot.lane.b32.xlu0 %v1697, 64
      %v1740 = vpop.permute.xlu0 %1739
      %v1741 = vsel %vm1732, %v1740, %v1697
      %1742 = vrot.lane.b32.xlu0 %v1698, 64
      %v1743 = vpop.permute.xlu0 %1742
      %v1744 = vsel %vm1732, %v1743, %v1698
      %1745 = vrot.lane.b32.xlu0 %v1699, 64
      %v1746 = vpop.permute.xlu0 %1745
      %v1747 = vsel %vm1732, %v1746, %v1699
      %1748 = vrot.lane.b32.xlu0 %v1700, 64
      %v1749 = vpop.permute.xlu0 %1748
      %v1750 = vsel %vm1732, %v1749, %v1700
      %1751 = vrot.lane.b32.xlu0 %v1701, 64
      %v1752 = vpop.permute.xlu0 %1751
      %v1753 = vsel %vm1732, %v1752, %v1701
      %1754 = vrot.lane.b32.xlu0 %v1702, 64
      %v1755 = vpop.permute.xlu0 %1754
      %v1756 = vsel %vm1732, %v1755, %v1702
      %1757 = vrot.lane.b32.xlu0 %v1703, 64
      %v1758 = vpop.permute.xlu0 %1757
      %v1759 = vsel %vm1732, %v1758, %v1703
      %1760 = vrot.lane.b32.xlu0 %v1704, 64
      %v1761 = vpop.permute.xlu0 %1760
      %v1762 = vsel %vm1732, %v1761, %v1704
      %1763 = vrot.lane.b32.xlu0 %v1705, 64
      %v1764 = vpop.permute.xlu0 %1763
      %v1765 = vsel %vm1732, %v1764, %v1705
      %1766 = vrot.lane.b32.xlu0 %v1706, 64
      %v1767 = vpop.permute.xlu0 %1766
      %v1768 = vsel %vm1732, %v1767, %v1706
      %1769 = vrot.lane.b32.xlu0 %v1707, 64
      %v1770 = vpop.permute.xlu0 %1769
      %v1771 = vsel %vm1732, %v1770, %v1707
      %1772 = vrot.lane.b32.xlu0 %v1708, 64
      %v1773 = vpop.permute.xlu0 %1772
      %v1774 = vsel %vm1732, %v1773, %v1708
      %1775 = vrot.lane.b32.xlu0 %v1709, 64
      %v1776 = vpop.permute.xlu0 %1775
      %v1777 = vsel %vm1732, %v1776, %v1709
      %1778 = vrot.lane.b32.xlu0 %v1710, 64
      %v1779 = vpop.permute.xlu0 %1778
      %v1780 = vsel %vm1732, %v1779, %v1710
      %1781 = vrot.lane.b32.xlu0 %v1711, 64
      %v1782 = vpop.permute.xlu0 %1781
      %v1783 = vsel %vm1732, %v1782, %v1711
      %1784 = vrot.lane.b32.xlu0 %v1712, 64
      %v1785 = vpop.permute.xlu0 %1784
      %v1786 = vsel %vm1732, %v1785, %v1712
      %1787 = vrot.lane.b32.xlu0 %v1713, 64
      %v1788 = vpop.permute.xlu0 %1787
      %v1789 = vsel %vm1732, %v1788, %v1713
      %1790 = vrot.lane.b32.xlu0 %v1714, 64
      %v1791 = vpop.permute.xlu0 %1790
      %v1792 = vsel %vm1732, %v1791, %v1714
      %1793 = vrot.lane.b32.xlu0 %v1715, 64
      %v1794 = vpop.permute.xlu0 %1793
      %v1795 = vsel %vm1732, %v1794, %v1715
      %1796 = vrot.lane.b32.xlu0 %v1716, 64
      %v1797 = vpop.permute.xlu0 %1796
      %v1798 = vsel %vm1732, %v1797, %v1716
      %1799 = vrot.lane.b32.xlu0 %v1717, 64
      %v1800 = vpop.permute.xlu0 %1799
      %v1801 = vsel %vm1732, %v1800, %v1717
      %1802 = vrot.lane.b32.xlu0 %v1718, 64
      %v1803 = vpop.permute.xlu0 %1802
      %v1804 = vsel %vm1732, %v1803, %v1718
      %1805 = vrot.lane.b32.xlu0 %v1719, 64
      %v1806 = vpop.permute.xlu0 %1805
      %v1807 = vsel %vm1732, %v1806, %v1719
      %1808 = vrot.lane.b32.xlu0 %v1720, 64
      %v1809 = vpop.permute.xlu0 %1808
      %v1810 = vsel %vm1732, %v1809, %v1720
      %1811 = vrot.lane.b32.xlu0 %v1721, 64
      %v1812 = vpop.permute.xlu0 %1811
      %v1813 = vsel %vm1732, %v1812, %v1721
      %1814 = vrot.lane.b32.xlu0 %v1722, 64
      %v1815 = vpop.permute.xlu0 %1814
      %v1816 = vsel %vm1732, %v1815, %v1722
      %1817 = vrot.lane.b32.xlu0 %v1723, 64
      %v1818 = vpop.permute.xlu0 %1817
      %v1819 = vsel %vm1732, %v1818, %v1723
      %1820 = vrot.lane.b32.xlu0 %v1724, 64
      %v1821 = vpop.permute.xlu0 %1820
      %v1822 = vsel %vm1732, %v1821, %v1724
      %1823 = vrot.lane.b32.xlu0 %v1725, 64
      %v1824 = vpop.permute.xlu0 %1823
      %v1825 = vsel %vm1732, %v1824, %v1725
      %1826 = vrot.lane.b32.xlu0 %v1726, 64
      %v1827 = vpop.permute.xlu0 %1826
      %v1828 = vsel %vm1732, %v1827, %v1726
      %1829 = vrot.lane.b32.xlu0 %v1735, 64
      %v1830 = vpop.permute.xlu0 %1829
      %1831 = vrot.lane.b32.xlu0 %v1738, 64
      %v1832 = vpop.permute.xlu0 %1831
      %1833 = vrot.lane.b32.xlu0 %v1741, 64
      %v1834 = vpop.permute.xlu0 %1833
      %1835 = vrot.lane.b32.xlu0 %v1744, 64
      %v1836 = vpop.permute.xlu0 %1835
      %1837 = vrot.lane.b32.xlu0 %v1747, 64
      %v1838 = vpop.permute.xlu0 %1837
      %1839 = vrot.lane.b32.xlu0 %v1750, 64
      %v1840 = vpop.permute.xlu0 %1839
      %1841 = vrot.lane.b32.xlu0 %v1753, 64
      %v1842 = vpop.permute.xlu0 %1841
      %1843 = vrot.lane.b32.xlu0 %v1756, 64
      %v1844 = vpop.permute.xlu0 %1843
      %1845 = vrot.lane.b32.xlu0 %v1759, 64
      %v1846 = vpop.permute.xlu0 %1845
      %1847 = vrot.lane.b32.xlu0 %v1762, 64
      %v1848 = vpop.permute.xlu0 %1847
      %1849 = vrot.lane.b32.xlu0 %v1765, 64
      %v1850 = vpop.permute.xlu0 %1849
      %1851 = vrot.lane.b32.xlu0 %v1768, 64
      %v1852 = vpop.permute.xlu0 %1851
      %1853 = vrot.lane.b32.xlu0 %v1771, 64
      %v1854 = vpop.permute.xlu0 %1853
      %1855 = vrot.lane.b32.xlu0 %v1774, 64
      %v1856 = vpop.permute.xlu0 %1855
      %1857 = vrot.lane.b32.xlu0 %v1777, 64
      %v1858 = vpop.permute.xlu0 %1857
      %1859 = vrot.lane.b32.xlu0 %v1780, 64
      %v1860 = vpop.permute.xlu0 %1859
      %1861 = vrot.lane.b32.xlu0 %v1783, 64
      %v1862 = vpop.permute.xlu0 %1861
      %1863 = vrot.lane.b32.xlu0 %v1786, 64
      %v1864 = vpop.permute.xlu0 %1863
      %1865 = vrot.lane.b32.xlu0 %v1789, 64
      %v1866 = vpop.permute.xlu0 %1865
      %1867 = vrot.lane.b32.xlu0 %v1792, 64
      %v1868 = vpop.permute.xlu0 %1867
      %1869 = vrot.lane.b32.xlu0 %v1795, 64
      %v1870 = vpop.permute.xlu0 %1869
      %1871 = vrot.lane.b32.xlu0 %v1798, 64
      %v1872 = vpop.permute.xlu0 %1871
      %1873 = vrot.lane.b32.xlu0 %v1801, 64
      %v1874 = vpop.permute.xlu0 %1873
      %1875 = vrot.lane.b32.xlu0 %v1804, 64
      %v1876 = vpop.permute.xlu0 %1875
      %1877 = vrot.lane.b32.xlu0 %v1807, 64
      %v1878 = vpop.permute.xlu0 %1877
      %1879 = vrot.lane.b32.xlu0 %v1810, 64
      %v1880 = vpop.permute.xlu0 %1879
      %1881 = vrot.lane.b32.xlu0 %v1813, 64
      %v1882 = vpop.permute.xlu0 %1881
      %1883 = vrot.lane.b32.xlu0 %v1816, 64
      %v1884 = vpop.permute.xlu0 %1883
      %1885 = vrot.lane.b32.xlu0 %v1819, 64
      %v1886 = vpop.permute.xlu0 %1885
      %1887 = vrot.lane.b32.xlu0 %v1822, 64
      %v1888 = vpop.permute.xlu0 %1887
      %1889 = vrot.lane.b32.xlu0 %v1825, 64
      %v1890 = vpop.permute.xlu0 %1889
      %1891 = vrot.lane.b32.xlu0 %v1828, 64
      %v1892 = vpop.permute.xlu0 %1891
      %v1893 = vsel %vm1732, %v1830, %v1695
      %v1894 = vsel %vm1732, %v1832, %v1696
      %v1895 = vsel %vm1732, %v1834, %v1697
      %v1896 = vsel %vm1732, %v1836, %v1698
      %v1897 = vsel %vm1732, %v1838, %v1699
      %v1898 = vsel %vm1732, %v1840, %v1700
      %v1899 = vsel %vm1732, %v1842, %v1701
      %v1900 = vsel %vm1732, %v1844, %v1702
      %v1901 = vsel %vm1732, %v1846, %v1703
      %v1902 = vsel %vm1732, %v1848, %v1704
      %v1903 = vsel %vm1732, %v1850, %v1705
      %v1904 = vsel %vm1732, %v1852, %v1706
      %v1905 = vsel %vm1732, %v1854, %v1707
      %v1906 = vsel %vm1732, %v1856, %v1708
      %v1907 = vsel %vm1732, %v1858, %v1709
      %v1908 = vsel %vm1732, %v1860, %v1710
      %v1909 = vsel %vm1732, %v1862, %v1711
      %v1910 = vsel %vm1732, %v1864, %v1712
      %v1911 = vsel %vm1732, %v1866, %v1713
      %v1912 = vsel %vm1732, %v1868, %v1714
      %v1913 = vsel %vm1732, %v1870, %v1715
      %v1914 = vsel %vm1732, %v1872, %v1716
      %v1915 = vsel %vm1732, %v1874, %v1717
      %v1916 = vsel %vm1732, %v1876, %v1718
      %v1917 = vsel %vm1732, %v1878, %v1719
      %v1918 = vsel %vm1732, %v1880, %v1720
      %v1919 = vsel %vm1732, %v1882, %v1721
      %v1920 = vsel %vm1732, %v1884, %v1722
      %v1921 = vsel %vm1732, %v1886, %v1723
      %v1922 = vsel %vm1732, %v1888, %v1724
      %v1923 = vsel %vm1732, %v1890, %v1725
      %v1924 = vsel %vm1732, %v1892, %v1726
      %v1925 = vsel %vm1731, 1, 0
      %vm1926 = vcmp.eq.s32.totalorder %v1925, 1
      %1959 = vrot.lane.b32.xlu0 %v1893, 65
      %v1960 = vpop.permute.xlu0 %1959
      %1961 = vrot.lane.b32.xlu0 %v1894, 65
      %v1962 = vpop.permute.xlu0 %1961
      %1963 = vrot.lane.b32.xlu0 %v1895, 65
      %v1964 = vpop.permute.xlu0 %1963
      %1965 = vrot.lane.b32.xlu0 %v1896, 65
      %v1966 = vpop.permute.xlu0 %1965
      %1967 = vrot.lane.b32.xlu0 %v1897, 65
      %v1968 = vpop.permute.xlu0 %1967
      %1969 = vrot.lane.b32.xlu0 %v1898, 65
      %v1970 = vpop.permute.xlu0 %1969
      %1971 = vrot.lane.b32.xlu0 %v1899, 65
      %v1972 = vpop.permute.xlu0 %1971
      %1973 = vrot.lane.b32.xlu0 %v1900, 65
      %v1974 = vpop.permute.xlu0 %1973
      %1975 = vrot.lane.b32.xlu0 %v1901, 65
      %v1976 = vpop.permute.xlu0 %1975
      %1977 = vrot.lane.b32.xlu0 %v1902, 65
      %v1978 = vpop.permute.xlu0 %1977
      %1979 = vrot.lane.b32.xlu0 %v1903, 65
      %v1980 = vpop.permute.xlu0 %1979
      %1981 = vrot.lane.b32.xlu0 %v1904, 65
      %v1982 = vpop.permute.xlu0 %1981
      %1983 = vrot.lane.b32.xlu0 %v1905, 65
      %v1984 = vpop.permute.xlu0 %1983
      %1985 = vrot.lane.b32.xlu0 %v1906, 65
      %v1986 = vpop.permute.xlu0 %1985
      %1987 = vrot.lane.b32.xlu0 %v1907, 65
      %v1988 = vpop.permute.xlu0 %1987
      %1989 = vrot.lane.b32.xlu0 %v1908, 65
      %v1990 = vpop.permute.xlu0 %1989
      %1991 = vrot.lane.b32.xlu0 %v1909, 65
      %v1992 = vpop.permute.xlu0 %1991
      %1993 = vrot.lane.b32.xlu0 %v1910, 65
      %v1994 = vpop.permute.xlu0 %1993
      %1995 = vrot.lane.b32.xlu0 %v1911, 65
      %v1996 = vpop.permute.xlu0 %1995
      %1997 = vrot.lane.b32.xlu0 %v1912, 65
      %v1998 = vpop.permute.xlu0 %1997
      %1999 = vrot.lane.b32.xlu0 %v1913, 65
      %v2000 = vpop.permute.xlu0 %1999
      %2001 = vrot.lane.b32.xlu0 %v1914, 65
      %v2002 = vpop.permute.xlu0 %2001
      %2003 = vrot.lane.b32.xlu0 %v1915, 65
      %v2004 = vpop.permute.xlu0 %2003
      %2005 = vrot.lane.b32.xlu0 %v1916, 65
      %v2006 = vpop.permute.xlu0 %2005
      %2007 = vrot.lane.b32.xlu0 %v1917, 65
      %v2008 = vpop.permute.xlu0 %2007
      %2009 = vrot.lane.b32.xlu0 %v1918, 65
      %v2010 = vpop.permute.xlu0 %2009
      %2011 = vrot.lane.b32.xlu0 %v1919, 65
      %v2012 = vpop.permute.xlu0 %2011
      %2013 = vrot.lane.b32.xlu0 %v1920, 65
      %v2014 = vpop.permute.xlu0 %2013
      %2015 = vrot.lane.b32.xlu0 %v1921, 65
      %v2016 = vpop.permute.xlu0 %2015
      %2017 = vrot.lane.b32.xlu0 %v1922, 65
      %v2018 = vpop.permute.xlu0 %2017
      %2019 = vrot.lane.b32.xlu0 %v1923, 65
      %v2020 = vpop.permute.xlu0 %2019
      %2021 = vrot.lane.b32.xlu0 %v1924, 65
      %v2022 = vpop.permute.xlu0 %2021
      %v2055 = vsel %vm1926, %v1960, 0.0
      %v2056 = vsel %vm1926, %v1962, 0.0
      %v2057 = vsel %vm1926, %v1964, 0.0
      %v2058 = vsel %vm1926, %v1966, 0.0
      %v2059 = vsel %vm1926, %v1968, 0.0
      %v2060 = vsel %vm1926, %v1970, 0.0
      %v2061 = vsel %vm1926, %v1972, 0.0
      %v2062 = vsel %vm1926, %v1974, 0.0
      %v2063 = vsel %vm1926, %v1976, 0.0
      %v2064 = vsel %vm1926, %v1978, 0.0
      %v2065 = vsel %vm1926, %v1980, 0.0
      %v2066 = vsel %vm1926, %v1982, 0.0
      %v2067 = vsel %vm1926, %v1984, 0.0
      %v2068 = vsel %vm1926, %v1986, 0.0
      %v2069 = vsel %vm1926, %v1988, 0.0
      %v2070 = vsel %vm1926, %v1990, 0.0
      %v2071 = vsel %vm1926, %v1992, 0.0
      %v2072 = vsel %vm1926, %v1994, 0.0
      %v2073 = vsel %vm1926, %v1996, 0.0
      %v2074 = vsel %vm1926, %v1998, 0.0
      %v2075 = vsel %vm1926, %v2000, 0.0
      %v2076 = vsel %vm1926, %v2002, 0.0
      %v2077 = vsel %vm1926, %v2004, 0.0
      %v2078 = vsel %vm1926, %v2006, 0.0
      %v2079 = vsel %vm1926, %v2008, 0.0
      %v2080 = vsel %vm1926, %v2010, 0.0
      %v2081 = vsel %vm1926, %v2012, 0.0
      %v2082 = vsel %vm1926, %v2014, 0.0
      %v2083 = vsel %vm1926, %v2016, 0.0
      %v2084 = vsel %vm1926, %v2018, 0.0
      %v2085 = vsel %vm1926, %v2020, 0.0
      %v2086 = vsel %vm1926, %v2022, 0.0
      %vm2087 = vcmp.ne.s32.totalorder %v1730, 7
      %v2088 = vsel %vm2087, 1, 0
      %vm2089 = vcmp.eq.s32.totalorder %v2088, 1
      %2090 = vrot.lane.b32.xlu0 %v1893, 127
      %v2091 = vpop.permute.xlu0 %2090
      %2092 = vrot.lane.b32.xlu0 %v1894, 127
      %v2093 = vpop.permute.xlu0 %2092
      %2094 = vrot.lane.b32.xlu0 %v1895, 127
      %v2095 = vpop.permute.xlu0 %2094
      %2096 = vrot.lane.b32.xlu0 %v1896, 127
      %v2097 = vpop.permute.xlu0 %2096
      %2098 = vrot.lane.b32.xlu0 %v1897, 127
      %v2099 = vpop.permute.xlu0 %2098
      %2100 = vrot.lane.b32.xlu0 %v1898, 127
      %v2101 = vpop.permute.xlu0 %2100
      %2102 = vrot.lane.b32.xlu0 %v1899, 127
      %v2103 = vpop.permute.xlu0 %2102
      %2104 = vrot.lane.b32.xlu0 %v1900, 127
      %v2105 = vpop.permute.xlu0 %2104
      %2106 = vrot.lane.b32.xlu0 %v1901, 127
      %v2107 = vpop.permute.xlu0 %2106
      %2108 = vrot.lane.b32.xlu0 %v1902, 127
      %v2109 = vpop.permute.xlu0 %2108
      %2110 = vrot.lane.b32.xlu0 %v1903, 127
      %v2111 = vpop.permute.xlu0 %2110
      %2112 = vrot.lane.b32.xlu0 %v1904, 127
      %v2113 = vpop.permute.xlu0 %2112
      %2114 = vrot.lane.b32.xlu0 %v1905, 127
      %v2115 = vpop.permute.xlu0 %2114
      %2116 = vrot.lane.b32.xlu0 %v1906, 127
      %v2117 = vpop.permute.xlu0 %2116
      %2118 = vrot.lane.b32.xlu0 %v1907, 127
      %v2119 = vpop.permute.xlu0 %2118
      %2120 = vrot.lane.b32.xlu0 %v1908, 127
      %v2121 = vpop.permute.xlu0 %2120
      %2122 = vrot.lane.b32.xlu0 %v1909, 127
      %v2123 = vpop.permute.xlu0 %2122
      %2124 = vrot.lane.b32.xlu0 %v1910, 127
      %v2125 = vpop.permute.xlu0 %2124
      %2126 = vrot.lane.b32.xlu0 %v1911, 127
      %v2127 = vpop.permute.xlu0 %2126
      %2128 = vrot.lane.b32.xlu0 %v1912, 127
      %v2129 = vpop.permute.xlu0 %2128
      %2130 = vrot.lane.b32.xlu0 %v1913, 127
      %v2131 = vpop.permute.xlu0 %2130
      %2132 = vrot.lane.b32.xlu0 %v1914, 127
      %v2133 = vpop.permute.xlu0 %2132
      %2134 = vrot.lane.b32.xlu0 %v1915, 127
      %v2135 = vpop.permute.xlu0 %2134
      %2136 = vrot.lane.b32.xlu0 %v1916, 127
      %v2137 = vpop.permute.xlu0 %2136
      %2138 = vrot.lane.b32.xlu0 %v1917, 127
      %v2139 = vpop.permute.xlu0 %2138
      %2140 = vrot.lane.b32.xlu0 %v1918, 127
      %v2141 = vpop.permute.xlu0 %2140
      %2142 = vrot.lane.b32.xlu0 %v1919, 127
      %v2143 = vpop.permute.xlu0 %2142
      %2144 = vrot.lane.b32.xlu0 %v1920, 127
      %v2145 = vpop.permute.xlu0 %2144
      %2146 = vrot.lane.b32.xlu0 %v1921, 127
      %v2147 = vpop.permute.xlu0 %2146
      %2148 = vrot.lane.b32.xlu0 %v1922, 127
      %v2149 = vpop.permute.xlu0 %2148
      %2150 = vrot.lane.b32.xlu0 %v1923, 127
      %v2151 = vpop.permute.xlu0 %2150
      %2152 = vrot.lane.b32.xlu0 %v1924, 127
      %v2153 = vpop.permute.xlu0 %2152
      %v2186 = vsel %vm2089, %v2091, 0.0
      %v2187 = vsel %vm2089, %v2093, 0.0
      %v2188 = vsel %vm2089, %v2095, 0.0
      %v2189 = vsel %vm2089, %v2097, 0.0
      %v2190 = vsel %vm2089, %v2099, 0.0
      %v2191 = vsel %vm2089, %v2101, 0.0
      %v2192 = vsel %vm2089, %v2103, 0.0
      %v2193 = vsel %vm2089, %v2105, 0.0
      %v2194 = vsel %vm2089, %v2107, 0.0
      %v2195 = vsel %vm2089, %v2109, 0.0
      %v2196 = vsel %vm2089, %v2111, 0.0
      %v2197 = vsel %vm2089, %v2113, 0.0
      %v2198 = vsel %vm2089, %v2115, 0.0
      %v2199 = vsel %vm2089, %v2117, 0.0
      %v2200 = vsel %vm2089, %v2119, 0.0
      %v2201 = vsel %vm2089, %v2121, 0.0
      %v2202 = vsel %vm2089, %v2123, 0.0
      %v2203 = vsel %vm2089, %v2125, 0.0
      %v2204 = vsel %vm2089, %v2127, 0.0
      %v2205 = vsel %vm2089, %v2129, 0.0
      %v2206 = vsel %vm2089, %v2131, 0.0
      %v2207 = vsel %vm2089, %v2133, 0.0
      %v2208 = vsel %vm2089, %v2135, 0.0
      %v2209 = vsel %vm2089, %v2137, 0.0
      %v2210 = vsel %vm2089, %v2139, 0.0
      %v2211 = vsel %vm2089, %v2141, 0.0
      %v2212 = vsel %vm2089, %v2143, 0.0
      %v2213 = vsel %vm2089, %v2145, 0.0
      %v2214 = vsel %vm2089, %v2147, 0.0
      %v2215 = vsel %vm2089, %v2149, 0.0
      %v2216 = vsel %vm2089, %v2151, 0.0
      %v2217 = vsel %vm2089, %v2153, 0.0
      %v2218 = vlaneseq
      %v2219 = vshrl.u32 %v2218, 7
      %v2220 = vsub.s32 1, %v2219
      %v2221 = vrot.slane %v1727, %v2220
      %v2222 = vmul.f32 %v2221, %v1695
      %v2223 = vmul.f32 %v2221, %v1696
      %v2224 = vmul.f32 %v2221, %v1697
      %v2225 = vmul.f32 %v2221, %v1698
      %v2226 = vmul.f32 %v2221, %v1699
      %v2227 = vmul.f32 %v2221, %v1700
      %v2228 = vmul.f32 %v2221, %v1701
      %v2229 = vmul.f32 %v2221, %v1702
      %v2230 = vmul.f32 %v2221, %v1703
      %v2231 = vmul.f32 %v2221, %v1704
      %v2232 = vmul.f32 %v2221, %v1705
      %v2233 = vmul.f32 %v2221, %v1706
      %v2234 = vmul.f32 %v2221, %v1707
      %v2235 = vmul.f32 %v2221, %v1708
      %v2236 = vmul.f32 %v2221, %v1709
      %v2237 = vmul.f32 %v2221, %v1710
      %v2238 = vmul.f32 %v2221, %v1711
      %v2239 = vmul.f32 %v2221, %v1712
      %v2240 = vmul.f32 %v2221, %v1713
      %v2241 = vmul.f32 %v2221, %v1714
      %v2242 = vmul.f32 %v2221, %v1715
      %v2243 = vmul.f32 %v2221, %v1716
      %v2244 = vmul.f32 %v2221, %v1717
      %v2245 = vmul.f32 %v2221, %v1718
      %v2246 = vmul.f32 %v2221, %v1719
      %v2247 = vmul.f32 %v2221, %v1720
      %v2248 = vmul.f32 %v2221, %v1721
      %v2249 = vmul.f32 %v2221, %v1722
      %v2250 = vmul.f32 %v2221, %v1723
      %v2251 = vmul.f32 %v2221, %v1724
      %v2252 = vmul.f32 %v2221, %v1725
      %v2253 = vmul.f32 %v2221, %v1726
      %v2254 = vlaneseq
      %v2255 = vshrl.u32 %v2254, 7
      %v2256 = vsub.s32 0, %v2255
      %v2257 = vrot.slane %v1727, %v2256
      %v2258 = vmul.f32 %v2257, %v2055
      %v2259 = vmul.f32 %v2257, %v2056
      %v2260 = vmul.f32 %v2257, %v2057
      %v2261 = vmul.f32 %v2257, %v2058
      %v2262 = vmul.f32 %v2257, %v2059
      %v2263 = vmul.f32 %v2257, %v2060
      %v2264 = vmul.f32 %v2257, %v2061
      %v2265 = vmul.f32 %v2257, %v2062
      %v2266 = vmul.f32 %v2257, %v2063
      %v2267 = vmul.f32 %v2257, %v2064
      %v2268 = vmul.f32 %v2257, %v2065
      %v2269 = vmul.f32 %v2257, %v2066
      %v2270 = vmul.f32 %v2257, %v2067
      %v2271 = vmul.f32 %v2257, %v2068
      %v2272 = vmul.f32 %v2257, %v2069
      %v2273 = vmul.f32 %v2257, %v2070
      %v2274 = vmul.f32 %v2257, %v2071
      %v2275 = vmul.f32 %v2257, %v2072
      %v2276 = vmul.f32 %v2257, %v2073
      %v2277 = vmul.f32 %v2257, %v2074
      %v2278 = vmul.f32 %v2257, %v2075
      %v2279 = vmul.f32 %v2257, %v2076
      %v2280 = vmul.f32 %v2257, %v2077
      %v2281 = vmul.f32 %v2257, %v2078
      %v2282 = vmul.f32 %v2257, %v2079
      %v2283 = vmul.f32 %v2257, %v2080
      %v2284 = vmul.f32 %v2257, %v2081
      %v2285 = vmul.f32 %v2257, %v2082
      %v2286 = vmul.f32 %v2257, %v2083
      %v2287 = vmul.f32 %v2257, %v2084
      %v2288 = vmul.f32 %v2257, %v2085
      %v2289 = vmul.f32 %v2257, %v2086
      %v2290 = vadd.f32 %v2222, %v2258
      %v2291 = vadd.f32 %v2223, %v2259
      %v2292 = vadd.f32 %v2224, %v2260
      %v2293 = vadd.f32 %v2225, %v2261
      %v2294 = vadd.f32 %v2226, %v2262
      %v2295 = vadd.f32 %v2227, %v2263
      %v2296 = vadd.f32 %v2228, %v2264
      %v2297 = vadd.f32 %v2229, %v2265
      %v2298 = vadd.f32 %v2230, %v2266
      %v2299 = vadd.f32 %v2231, %v2267
      %v2300 = vadd.f32 %v2232, %v2268
      %v2301 = vadd.f32 %v2233, %v2269
      %v2302 = vadd.f32 %v2234, %v2270
      %v2303 = vadd.f32 %v2235, %v2271
      %v2304 = vadd.f32 %v2236, %v2272
      %v2305 = vadd.f32 %v2237, %v2273
      %v2306 = vadd.f32 %v2238, %v2274
      %v2307 = vadd.f32 %v2239, %v2275
      %v2308 = vadd.f32 %v2240, %v2276
      %v2309 = vadd.f32 %v2241, %v2277
      %v2310 = vadd.f32 %v2242, %v2278
      %v2311 = vadd.f32 %v2243, %v2279
      %v2312 = vadd.f32 %v2244, %v2280
      %v2313 = vadd.f32 %v2245, %v2281
      %v2314 = vadd.f32 %v2246, %v2282
      %v2315 = vadd.f32 %v2247, %v2283
      %v2316 = vadd.f32 %v2248, %v2284
      %v2317 = vadd.f32 %v2249, %v2285
      %v2318 = vadd.f32 %v2250, %v2286
      %v2319 = vadd.f32 %v2251, %v2287
      %v2320 = vadd.f32 %v2252, %v2288
      %v2321 = vadd.f32 %v2253, %v2289
      %v2322 = vlaneseq
      %v2323 = vshrl.u32 %v2322, 7
      %v2324 = vsub.s32 2, %v2323
      %v2325 = vrot.slane %v1727, %v2324
      %v2326 = vmul.f32 %v2325, %v2186
      %v2327 = vmul.f32 %v2325, %v2187
      %v2328 = vmul.f32 %v2325, %v2188
      %v2329 = vmul.f32 %v2325, %v2189
      %v2330 = vmul.f32 %v2325, %v2190
      %v2331 = vmul.f32 %v2325, %v2191
      %v2332 = vmul.f32 %v2325, %v2192
      %v2333 = vmul.f32 %v2325, %v2193
      %v2334 = vmul.f32 %v2325, %v2194
      %v2335 = vmul.f32 %v2325, %v2195
      %v2336 = vmul.f32 %v2325, %v2196
      %v2337 = vmul.f32 %v2325, %v2197
      %v2338 = vmul.f32 %v2325, %v2198
      %v2339 = vmul.f32 %v2325, %v2199
      %v2340 = vmul.f32 %v2325, %v2200
      %v2341 = vmul.f32 %v2325, %v2201
      %v2342 = vmul.f32 %v2325, %v2202
      %v2343 = vmul.f32 %v2325, %v2203
      %v2344 = vmul.f32 %v2325, %v2204
      %v2345 = vmul.f32 %v2325, %v2205
      %v2346 = vmul.f32 %v2325, %v2206
      %v2347 = vmul.f32 %v2325, %v2207
      %v2348 = vmul.f32 %v2325, %v2208
      %v2349 = vmul.f32 %v2325, %v2209
      %v2350 = vmul.f32 %v2325, %v2210
      %v2351 = vmul.f32 %v2325, %v2211
      %v2352 = vmul.f32 %v2325, %v2212
      %v2353 = vmul.f32 %v2325, %v2213
      %v2354 = vmul.f32 %v2325, %v2214
      %v2355 = vmul.f32 %v2325, %v2215
      %v2356 = vmul.f32 %v2325, %v2216
      %v2357 = vmul.f32 %v2325, %v2217
      %v2358 = vadd.f32 %v2290, %v2326
      %v2359 = vadd.f32 %v2291, %v2327
      %v2360 = vadd.f32 %v2292, %v2328
      %v2361 = vadd.f32 %v2293, %v2329
      %v2362 = vadd.f32 %v2294, %v2330
      %v2363 = vadd.f32 %v2295, %v2331
      %v2364 = vadd.f32 %v2296, %v2332
      %v2365 = vadd.f32 %v2297, %v2333
      %v2366 = vadd.f32 %v2298, %v2334
      %v2367 = vadd.f32 %v2299, %v2335
      %v2368 = vadd.f32 %v2300, %v2336
      %v2369 = vadd.f32 %v2301, %v2337
      %v2370 = vadd.f32 %v2302, %v2338
      %v2371 = vadd.f32 %v2303, %v2339
      %v2372 = vadd.f32 %v2304, %v2340
      %v2373 = vadd.f32 %v2305, %v2341
      %v2374 = vadd.f32 %v2306, %v2342
      %v2375 = vadd.f32 %v2307, %v2343
      %v2376 = vadd.f32 %v2308, %v2344
      %v2377 = vadd.f32 %v2309, %v2345
      %v2378 = vadd.f32 %v2310, %v2346
      %v2379 = vadd.f32 %v2311, %v2347
      %v2380 = vadd.f32 %v2312, %v2348
      %v2381 = vadd.f32 %v2313, %v2349
      %v2382 = vadd.f32 %v2314, %v2350
      %v2383 = vadd.f32 %v2315, %v2351
      %v2384 = vadd.f32 %v2316, %v2352
      %v2385 = vadd.f32 %v2317, %v2353
      %v2386 = vadd.f32 %v2318, %v2354
      %v2387 = vadd.f32 %v2319, %v2355
      %v2388 = vadd.f32 %v2320, %v2356
      %v2389 = vadd.f32 %v2321, %v2357
      %vm2390 = vcmask 523264
      %v2391 = vsel %vm2390, %v2358, -inf
      %2392 = vmax.xlane.f32.xlu0 %v2391
      %v2393 = vpop.xlane.xlu0 %2392
      %v2394 = vsel %vm2390, %v2359, -inf
      %2395 = vmax.xlane.f32.xlu0 %v2394
      %v2396 = vpop.xlane.xlu0 %2395
      %v2397 = vsel %vm2390, %v2360, -inf
      %2398 = vmax.xlane.f32.xlu0 %v2397
      %v2399 = vpop.xlane.xlu0 %2398
      %v2400 = vsel %vm2390, %v2361, -inf
      %2401 = vmax.xlane.f32.xlu0 %v2400
      %v2402 = vpop.xlane.xlu0 %2401
      %v2403 = vsel %vm2390, %v2362, -inf
      %2404 = vmax.xlane.f32.xlu0 %v2403
      %v2405 = vpop.xlane.xlu0 %2404
      %v2406 = vsel %vm2390, %v2363, -inf
      %2407 = vmax.xlane.f32.xlu0 %v2406
      %v2408 = vpop.xlane.xlu0 %2407
      %v2409 = vsel %vm2390, %v2364, -inf
      %2410 = vmax.xlane.f32.xlu0 %v2409
      %v2411 = vpop.xlane.xlu0 %2410
      %v2412 = vsel %vm2390, %v2365, -inf
      %2413 = vmax.xlane.f32.xlu0 %v2412
      %v2414 = vpop.xlane.xlu0 %2413
      %v2415 = vsel %vm2390, %v2366, -inf
      %2416 = vmax.xlane.f32.xlu0 %v2415
      %v2417 = vpop.xlane.xlu0 %2416
      %v2418 = vsel %vm2390, %v2367, -inf
      %2419 = vmax.xlane.f32.xlu0 %v2418
      %v2420 = vpop.xlane.xlu0 %2419
      %v2421 = vsel %vm2390, %v2368, -inf
      %2422 = vmax.xlane.f32.xlu0 %v2421
      %v2423 = vpop.xlane.xlu0 %2422
      %v2424 = vsel %vm2390, %v2369, -inf
      %2425 = vmax.xlane.f32.xlu0 %v2424
      %v2426 = vpop.xlane.xlu0 %2425
      %v2427 = vsel %vm2390, %v2370, -inf
      %2428 = vmax.xlane.f32.xlu0 %v2427
      %v2429 = vpop.xlane.xlu0 %2428
      %v2430 = vsel %vm2390, %v2371, -inf
      %2431 = vmax.xlane.f32.xlu0 %v2430
      %v2432 = vpop.xlane.xlu0 %2431
      %v2433 = vsel %vm2390, %v2372, -inf
      %2434 = vmax.xlane.f32.xlu0 %v2433
      %v2435 = vpop.xlane.xlu0 %2434
      %v2436 = vsel %vm2390, %v2373, -inf
      %2437 = vmax.xlane.f32.xlu0 %v2436
      %v2438 = vpop.xlane.xlu0 %2437
      %v2439 = vsel %vm2390, %v2374, -inf
      %2440 = vmax.xlane.f32.xlu0 %v2439
      %v2441 = vpop.xlane.xlu0 %2440
      %v2442 = vsel %vm2390, %v2375, -inf
      %2443 = vmax.xlane.f32.xlu0 %v2442
      %v2444 = vpop.xlane.xlu0 %2443
      %v2445 = vsel %vm2390, %v2376, -inf
      %2446 = vmax.xlane.f32.xlu0 %v2445
      %v2447 = vpop.xlane.xlu0 %2446
      %v2448 = vsel %vm2390, %v2377, -inf
      %2449 = vmax.xlane.f32.xlu0 %v2448
      %v2450 = vpop.xlane.xlu0 %2449
      %v2451 = vsel %vm2390, %v2378, -inf
      %2452 = vmax.xlane.f32.xlu0 %v2451
      %v2453 = vpop.xlane.xlu0 %2452
      %v2454 = vsel %vm2390, %v2379, -inf
      %2455 = vmax.xlane.f32.xlu0 %v2454
      %v2456 = vpop.xlane.xlu0 %2455
      %v2457 = vsel %vm2390, %v2380, -inf
      %2458 = vmax.xlane.f32.xlu0 %v2457
      %v2459 = vpop.xlane.xlu0 %2458
      %v2460 = vsel %vm2390, %v2381, -inf
      %2461 = vmax.xlane.f32.xlu0 %v2460
      %v2462 = vpop.xlane.xlu0 %2461
      %v2463 = vsel %vm2390, %v2382, -inf
      %2464 = vmax.xlane.f32.xlu0 %v2463
      %v2465 = vpop.xlane.xlu0 %2464
      %v2466 = vsel %vm2390, %v2383, -inf
      %2467 = vmax.xlane.f32.xlu0 %v2466
      %v2468 = vpop.xlane.xlu0 %2467
      %v2469 = vsel %vm2390, %v2384, -inf
      %2470 = vmax.xlane.f32.xlu0 %v2469
      %v2471 = vpop.xlane.xlu0 %2470
      %v2472 = vsel %vm2390, %v2385, -inf
      %2473 = vmax.xlane.f32.xlu0 %v2472
      %v2474 = vpop.xlane.xlu0 %2473
      %v2475 = vsel %vm2390, %v2386, -inf
      %2476 = vmax.xlane.f32.xlu0 %v2475
      %v2477 = vpop.xlane.xlu0 %2476
      %v2478 = vsel %vm2390, %v2387, -inf
      %2479 = vmax.xlane.f32.xlu0 %v2478
      %v2480 = vpop.xlane.xlu0 %2479
      %v2481 = vsel %vm2390, %v2388, -inf
      %2482 = vmax.xlane.f32.xlu0 %v2481
      %v2483 = vpop.xlane.xlu0 %2482
      %v2484 = vsel %vm2390, %v2389, -inf
      %2485 = vmax.xlane.f32.xlu0 %v2484
      %v2486 = vpop.xlane.xlu0 %2485
      %v2487 = vsub.f32 %v2358, %v2393
      %v2488 = vsub.f32 %v2359, %v2396
      %v2489 = vsub.f32 %v2360, %v2399
      %v2490 = vsub.f32 %v2361, %v2402
      %v2491 = vsub.f32 %v2362, %v2405
      %v2492 = vsub.f32 %v2363, %v2408
      %v2493 = vsub.f32 %v2364, %v2411
      %v2494 = vsub.f32 %v2365, %v2414
      %v2495 = vsub.f32 %v2366, %v2417
      %v2496 = vsub.f32 %v2367, %v2420
      %v2497 = vsub.f32 %v2368, %v2423
      %v2498 = vsub.f32 %v2369, %v2426
      %v2499 = vsub.f32 %v2370, %v2429
      %v2500 = vsub.f32 %v2371, %v2432
      %v2501 = vsub.f32 %v2372, %v2435
      %v2502 = vsub.f32 %v2373, %v2438
      %v2503 = vsub.f32 %v2374, %v2441
      %v2504 = vsub.f32 %v2375, %v2444
      %v2505 = vsub.f32 %v2376, %v2447
      %v2506 = vsub.f32 %v2377, %v2450
      %v2507 = vsub.f32 %v2378, %v2453
      %v2508 = vsub.f32 %v2379, %v2456
      %v2509 = vsub.f32 %v2380, %v2459
      %v2510 = vsub.f32 %v2381, %v2462
      %v2511 = vsub.f32 %v2382, %v2465
      %v2512 = vsub.f32 %v2383, %v2468
      %v2513 = vsub.f32 %v2384, %v2471
      %v2514 = vsub.f32 %v2385, %v2474
      %v2515 = vsub.f32 %v2386, %v2477
      %v2516 = vsub.f32 %v2387, %v2480
      %v2517 = vsub.f32 %v2388, %v2483
      %v2518 = vsub.f32 %v2389, %v2486
      %v2519 = vmul.f32 %v2487, 1.442695
      %v2520 = vpow.pop %v2519
      %v2521 = vmul.f32 %v2488, 1.442695
      %v2522 = vpow.pop %v2521
      %v2523 = vmul.f32 %v2489, 1.442695
      %v2524 = vpow.pop %v2523
      %v2525 = vmul.f32 %v2490, 1.442695
      %v2526 = vpow.pop %v2525
      %v2527 = vmul.f32 %v2491, 1.442695
      %v2528 = vpow.pop %v2527
      %v2529 = vmul.f32 %v2492, 1.442695
      %v2530 = vpow.pop %v2529
      %v2531 = vmul.f32 %v2493, 1.442695
      %v2532 = vpow.pop %v2531
      %v2533 = vmul.f32 %v2494, 1.442695
      %v2534 = vpow.pop %v2533
      %v2535 = vmul.f32 %v2495, 1.442695
      %v2536 = vpow.pop %v2535
      %v2537 = vmul.f32 %v2496, 1.442695
      %v2538 = vpow.pop %v2537
      %v2539 = vmul.f32 %v2497, 1.442695
      %v2540 = vpow.pop %v2539
      %v2541 = vmul.f32 %v2498, 1.442695
      %v2542 = vpow.pop %v2541
      %v2543 = vmul.f32 %v2499, 1.442695
      %v2544 = vpow.pop %v2543
      %v2545 = vmul.f32 %v2500, 1.442695
      %v2546 = vpow.pop %v2545
      %v2547 = vmul.f32 %v2501, 1.442695
      %v2548 = vpow.pop %v2547
      %v2549 = vmul.f32 %v2502, 1.442695
      %v2550 = vpow.pop %v2549
      %v2551 = vmul.f32 %v2503, 1.442695
      %v2552 = vpow.pop %v2551
      %v2553 = vmul.f32 %v2504, 1.442695
      %v2554 = vpow.pop %v2553
      %v2555 = vmul.f32 %v2505, 1.442695
      %v2556 = vpow.pop %v2555
      %v2557 = vmul.f32 %v2506, 1.442695
      %v2558 = vpow.pop %v2557
      %v2559 = vmul.f32 %v2507, 1.442695
      %v2560 = vpow.pop %v2559
      %v2561 = vmul.f32 %v2508, 1.442695
      %v2562 = vpow.pop %v2561
      %v2563 = vmul.f32 %v2509, 1.442695
      %v2564 = vpow.pop %v2563
      %v2565 = vmul.f32 %v2510, 1.442695
      %v2566 = vpow.pop %v2565
      %v2567 = vmul.f32 %v2511, 1.442695
      %v2568 = vpow.pop %v2567
      %v2569 = vmul.f32 %v2512, 1.442695
      %v2570 = vpow.pop %v2569
      %v2571 = vmul.f32 %v2513, 1.442695
      %v2572 = vpow.pop %v2571
      %v2573 = vmul.f32 %v2514, 1.442695
      %v2574 = vpow.pop %v2573
      %v2575 = vmul.f32 %v2515, 1.442695
      %v2576 = vpow.pop %v2575
      %v2577 = vmul.f32 %v2516, 1.442695
      %v2578 = vpow.pop %v2577
      %v2579 = vmul.f32 %v2517, 1.442695
      %v2580 = vpow.pop %v2579
      %v2581 = vmul.f32 %v2518, 1.442695
      %v2582 = vpow.pop %v2581
      %v2583 = vld [vmem:[%s7] sm:$0xff]
      %v2584 = vld [vmem:[%s7 + $0x8] sm:$0xff]
      %v2585 = vld [vmem:[%s7 + $0x10] sm:$0xff]
      %v2586 = vld [vmem:[%s7 + $0x18] sm:$0xff]
      %v2587 = vld [vmem:[%s7 + $0x20] sm:$0xff]
      %v2588 = vld [vmem:[%s7 + $0x28] sm:$0xff]
      %v2589 = vld [vmem:[%s7 + $0x30] sm:$0xff]
      %v2590 = vld [vmem:[%s7 + $0x38] sm:$0xff]
      %v2592 = vsel %vm2390, %v2520, 0
      %v2595 = vsel %vm2390, %v2522, 0
      %v2598 = vsel %vm2390, %v2524, 0
      %v2601 = vsel %vm2390, %v2526, 0
      %v2604 = vsel %vm2390, %v2528, 0
      %v2607 = vsel %vm2390, %v2530, 0
      %v2610 = vsel %vm2390, %v2532, 0
      %v2613 = vsel %vm2390, %v2534, 0
      %v2616 = vsel %vm2390, %v2536, 0
      %v2619 = vsel %vm2390, %v2538, 0
      %v2622 = vsel %vm2390, %v2540, 0
      %v2625 = vsel %vm2390, %v2542, 0
      %v2628 = vsel %vm2390, %v2544, 0
      %v2631 = vsel %vm2390, %v2546, 0
      %v2634 = vsel %vm2390, %v2548, 0
      %v2637 = vsel %vm2390, %v2550, 0
      %v2640 = vsel %vm2390, %v2552, 0
      %v2643 = vsel %vm2390, %v2554, 0
      %v2646 = vsel %vm2390, %v2556, 0
      %v2649 = vsel %vm2390, %v2558, 0
      %v2652 = vsel %vm2390, %v2560, 0
      %v2655 = vsel %vm2390, %v2562, 0
      %v2658 = vsel %vm2390, %v2564, 0
      %v2661 = vsel %vm2390, %v2566, 0
      %v2664 = vsel %vm2390, %v2568, 0
      %v2667 = vsel %vm2390, %v2570, 0
      %v2670 = vsel %vm2390, %v2572, 0
      %v2673 = vsel %vm2390, %v2574, 0
      %v2676 = vsel %vm2390, %v2576, 0
      %v2679 = vsel %vm2390, %v2578, 0
      %v2682 = vsel %vm2390, %v2580, 0
      %v2685 = vsel %vm2390, %v2582, 0
      %2687 = vmatprep.subr.mxu0 0.0
      %2688 = vmatpush1.msra.mxu0 0.0
      %2689 = vmatprep.subr.mxu0 0.0
      %2690 = vmatpush1.msra.mxu0 0.0
      %2691 = vmatprep.subr.mxu0 0.0
      %2692 = vmatpush1.msra.mxu0 0.0
      %2693 = vmatprep.subr.mxu0 0.0
      %2694 = vmatpush1.msra.mxu0 0.0
      %2695 = vmatprep.subr.mxu0 0.0
      %2696 = vmatpush1.msra.mxu0 0.0
      %2697 = vmatprep.subr.mxu0 0.0
      %2698 = vmatpush1.msra.mxu0 0.0
      %2699 = vmatprep.subr.mxu0 0.0
      %2700 = vmatpush1.msra.mxu0 0.0
      %2701 = vmatprep.subr.mxu0 0.0
      %2702 = vmatpush1.msra.mxu0 0.0
      %2703 = vmatprep.subr.mxu0 0.0
      %2704 = vmatpush1.msra.mxu0 %v2590
      %2705 = vmatprep.subr.mxu0 0.0
      %2706 = vmatpush1.msra.mxu0 %v2589
      %2707 = vmatprep.subr.mxu0 0.0
      %2708 = vmatpush1.msra.mxu0 %v2588
      %2709 = vmatprep.subr.mxu0 0.0
      %2710 = vmatpush1.msra.mxu0 %v2587
      %2711 = vmatprep.subr.mxu0 0.0
      %2712 = vmatpush1.msra.mxu0 %v2586
      %2713 = vmatprep.subr.mxu0 0.0
      %2714 = vmatpush1.msra.mxu0 %v2585
      %2715 = vmatprep.subr.mxu0 0.0
      %2716 = vmatpush1.msra.mxu0 %v2584
      %2717 = vmatprep.subr.mxu0 0.0
      %2718 = vmatpush1.msra.mxu0 %v2583
      %2719 = vmatprep.subr.mxu0 0.0
      %2720 = vmatpush2.msra.mxu0 0.0
      %2721 = vmatprep.subr.mxu0 0.0
      %2722 = vmatpush2.msra.mxu0 0.0
      %2723 = vmatprep.subr.mxu0 0.0
      %2724 = vmatpush2.msra.mxu0 0.0
      %2725 = vmatprep.subr.mxu0 0.0
      %2726 = vmatpush2.msra.mxu0 0.0
      %2727 = vmatprep.subr.mxu0 0.0
      %2728 = vmatpush2.msra.mxu0 0.0
      %2729 = vmatprep.subr.mxu0 0.0
      %2730 = vmatpush2.msra.mxu0 0.0
      %2731 = vmatprep.subr.mxu0 0.0
      %2732 = vmatpush2.msra.mxu0 0.0
      %2733 = vmatprep.subr.mxu0 0.0
      %2734 = vmatpush2.msra.mxu0 0.0
      %2735 = vmatprep.subr.mxu0 0.0
      %2736 = vmatpush2.msra.mxu0 0.0
      %2737 = vmatprep.subr.mxu0 0.0
      %2738 = vmatpush2.msra.mxu0 0.0
      %2739 = vmatprep.subr.mxu0 0.0
      %2740 = vmatpush2.msra.mxu0 0.0
      %2741 = vmatprep.subr.mxu0 0.0
      %2742 = vmatpush2.msra.mxu0 0.0
      %2743 = vmatprep.subr.mxu0 0.0
      %2744 = vmatpush2.msra.mxu0 0.0
      %2745 = vmatprep.subr.mxu0 0.0
      %2746 = vmatpush2.msra.mxu0 0.0
      %2747 = vmatprep.subr.mxu0 0.0
      %2748 = vmatpush2.msra.mxu0 0.0
      %2749 = vmatprep.subr.mxu0 0.0
      %2750 = vmatpush2.msra.mxu0 0.0
      %2751 = vmatprep.mubr.f32.mxu0 0.0
      %2752 = vmatmul.mubr.f32.gmra.mxu0 %v2592
      %v2753 = vpop.f32.mrf.mxu0
      %v2754 = vadd.f32 0.0, %v2753
      %v2755 = vpop.f32.mrf.mxu0
      %2756 = vmatprep.mubr.f32.mxu0 0.0
      %2757 = vmatmul.mubr.f32.gmra.mxu0 %v2595
      %v2758 = vpop.f32.mrf.mxu0
      %v2759 = vadd.f32 0.0, %v2758
      %v2760 = vpop.f32.mrf.mxu0
      %2761 = vmatprep.mubr.f32.mxu0 0.0
      %2762 = vmatmul.mubr.f32.gmra.mxu0 %v2598
      %v2763 = vpop.f32.mrf.mxu0
      %v2764 = vadd.f32 0.0, %v2763
      %v2765 = vpop.f32.mrf.mxu0
      %2766 = vmatprep.mubr.f32.mxu0 0.0
      %2767 = vmatmul.mubr.f32.gmra.mxu0 %v2601
      %v2768 = vpop.f32.mrf.mxu0
      %v2769 = vadd.f32 0.0, %v2768
      %v2770 = vpop.f32.mrf.mxu0
      %2771 = vmatprep.mubr.f32.mxu0 0.0
      %2772 = vmatmul.mubr.f32.gmra.mxu0 %v2604
      %v2773 = vpop.f32.mrf.mxu0
      %v2774 = vadd.f32 0.0, %v2773
      %v2775 = vpop.f32.mrf.mxu0
      %2776 = vmatprep.mubr.f32.mxu0 0.0
      %2777 = vmatmul.mubr.f32.gmra.mxu0 %v2607
      %v2778 = vpop.f32.mrf.mxu0
      %v2779 = vadd.f32 0.0, %v2778
      %v2780 = vpop.f32.mrf.mxu0
      %2781 = vmatprep.mubr.f32.mxu0 0.0
      %2782 = vmatmul.mubr.f32.gmra.mxu0 %v2610
      %v2783 = vpop.f32.mrf.mxu0
      %v2784 = vadd.f32 0.0, %v2783
      %v2785 = vpop.f32.mrf.mxu0
      %2786 = vmatprep.mubr.f32.mxu0 0.0
      %2787 = vmatmul.mubr.f32.gmra.mxu0 %v2613
      %v2788 = vpop.f32.mrf.mxu0
      %v2789 = vadd.f32 0.0, %v2788
      %v2790 = vpop.f32.mrf.mxu0
      %2791 = vmatprep.mubr.f32.mxu0 0.0
      %2792 = vmatmul.mubr.f32.gmra.mxu0 %v2616
      %v2793 = vpop.f32.mrf.mxu0
      %v2794 = vadd.f32 0.0, %v2793
      %v2795 = vpop.f32.mrf.mxu0
      %2796 = vmatprep.mubr.f32.mxu0 0.0
      %2797 = vmatmul.mubr.f32.gmra.mxu0 %v2619
      %v2798 = vpop.f32.mrf.mxu0
      %v2799 = vadd.f32 0.0, %v2798
      %v2800 = vpop.f32.mrf.mxu0
      %2801 = vmatprep.mubr.f32.mxu0 0.0
      %2802 = vmatmul.mubr.f32.gmra.mxu0 %v2622
      %v2803 = vpop.f32.mrf.mxu0
      %v2804 = vadd.f32 0.0, %v2803
      %v2805 = vpop.f32.mrf.mxu0
      %2806 = vmatprep.mubr.f32.mxu0 0.0
      %2807 = vmatmul.mubr.f32.gmra.mxu0 %v2625
      %v2808 = vpop.f32.mrf.mxu0
      %v2809 = vadd.f32 0.0, %v2808
      %v2810 = vpop.f32.mrf.mxu0
      %2811 = vmatprep.mubr.f32.mxu0 0.0
      %2812 = vmatmul.mubr.f32.gmra.mxu0 %v2628
      %v2813 = vpop.f32.mrf.mxu0
      %v2814 = vadd.f32 0.0, %v2813
      %v2815 = vpop.f32.mrf.mxu0
      %2816 = vmatprep.mubr.f32.mxu0 0.0
      %2817 = vmatmul.mubr.f32.gmra.mxu0 %v2631
      %v2818 = vpop.f32.mrf.mxu0
      %v2819 = vadd.f32 0.0, %v2818
      %v2820 = vpop.f32.mrf.mxu0
      %2821 = vmatprep.mubr.f32.mxu0 0.0
      %2822 = vmatmul.mubr.f32.gmra.mxu0 %v2634
      %v2823 = vpop.f32.mrf.mxu0
      %v2824 = vadd.f32 0.0, %v2823
      %v2825 = vpop.f32.mrf.mxu0
      %2826 = vmatprep.mubr.f32.mxu0 0.0
      %2827 = vmatmul.mubr.f32.gmra.mxu0 %v2637
      %v2828 = vpop.f32.mrf.mxu0
      %v2829 = vadd.f32 0.0, %v2828
      %v2830 = vpop.f32.mrf.mxu0
      %2831 = vmatprep.mubr.f32.mxu0 0.0
      %2832 = vmatmul.mubr.f32.gmra.mxu0 %v2640
      %v2833 = vpop.f32.mrf.mxu0
      %v2834 = vadd.f32 0.0, %v2833
      %v2835 = vpop.f32.mrf.mxu0
      %2836 = vmatprep.mubr.f32.mxu0 0.0
      %2837 = vmatmul.mubr.f32.gmra.mxu0 %v2643
      %v2838 = vpop.f32.mrf.mxu0
      %v2839 = vadd.f32 0.0, %v2838
      %v2840 = vpop.f32.mrf.mxu0
      %2841 = vmatprep.mubr.f32.mxu0 0.0
      %2842 = vmatmul.mubr.f32.gmra.mxu0 %v2646
      %v2843 = vpop.f32.mrf.mxu0
      %v2844 = vadd.f32 0.0, %v2843
      %v2845 = vpop.f32.mrf.mxu0
      %2846 = vmatprep.mubr.f32.mxu0 0.0
      %2847 = vmatmul.mubr.f32.gmra.mxu0 %v2649
      %v2848 = vpop.f32.mrf.mxu0
      %v2849 = vadd.f32 0.0, %v2848
      %v2850 = vpop.f32.mrf.mxu0
      %2851 = vmatprep.mubr.f32.mxu0 0.0
      %2852 = vmatmul.mubr.f32.gmra.mxu0 %v2652
      %v2853 = vpop.f32.mrf.mxu0
      %v2854 = vadd.f32 0.0, %v2853
      %v2855 = vpop.f32.mrf.mxu0
      %2856 = vmatprep.mubr.f32.mxu0 0.0
      %2857 = vmatmul.mubr.f32.gmra.mxu0 %v2655
      %v2858 = vpop.f32.mrf.mxu0
      %v2859 = vadd.f32 0.0, %v2858
      %v2860 = vpop.f32.mrf.mxu0
      %2861 = vmatprep.mubr.f32.mxu0 0.0
      %2862 = vmatmul.mubr.f32.gmra.mxu0 %v2658
      %v2863 = vpop.f32.mrf.mxu0
      %v2864 = vadd.f32 0.0, %v2863
      %v2865 = vpop.f32.mrf.mxu0
      %2866 = vmatprep.mubr.f32.mxu0 0.0
      %2867 = vmatmul.mubr.f32.gmra.mxu0 %v2661
      %v2868 = vpop.f32.mrf.mxu0
      %v2869 = vadd.f32 0.0, %v2868
      %v2870 = vpop.f32.mrf.mxu0
      %2871 = vmatprep.mubr.f32.mxu0 0.0
      %2872 = vmatmul.mubr.f32.gmra.mxu0 %v2664
      %v2873 = vpop.f32.mrf.mxu0
      %v2874 = vadd.f32 0.0, %v2873
      %v2875 = vpop.f32.mrf.mxu0
      %2876 = vmatprep.mubr.f32.mxu0 0.0
      %2877 = vmatmul.mubr.f32.gmra.mxu0 %v2667
      %v2878 = vpop.f32.mrf.mxu0
      %v2879 = vadd.f32 0.0, %v2878
      %v2880 = vpop.f32.mrf.mxu0
      %2881 = vmatprep.mubr.f32.mxu0 0.0
      %2882 = vmatmul.mubr.f32.gmra.mxu0 %v2670
      %v2883 = vpop.f32.mrf.mxu0
      %v2884 = vadd.f32 0.0, %v2883
      %v2885 = vpop.f32.mrf.mxu0
      %2886 = vmatprep.mubr.f32.mxu0 0.0
      %2887 = vmatmul.mubr.f32.gmra.mxu0 %v2673
      %v2888 = vpop.f32.mrf.mxu0
      %v2889 = vadd.f32 0.0, %v2888
      %v2890 = vpop.f32.mrf.mxu0
      %2891 = vmatprep.mubr.f32.mxu0 0.0
      %2892 = vmatmul.mubr.f32.gmra.mxu0 %v2676
      %v2893 = vpop.f32.mrf.mxu0
      %v2894 = vadd.f32 0.0, %v2893
      %v2895 = vpop.f32.mrf.mxu0
      %2896 = vmatprep.mubr.f32.mxu0 0.0
      %2897 = vmatmul.mubr.f32.gmra.mxu0 %v2679
      %v2898 = vpop.f32.mrf.mxu0
      %v2899 = vadd.f32 0.0, %v2898
      %v2900 = vpop.f32.mrf.mxu0
      %2901 = vmatprep.mubr.f32.mxu0 0.0
      %2902 = vmatmul.mubr.f32.gmra.mxu0 %v2682
      %v2903 = vpop.f32.mrf.mxu0
      %v2904 = vadd.f32 0.0, %v2903
      %v2905 = vpop.f32.mrf.mxu0
      %2906 = vmatprep.mubr.f32.mxu0 0.0
      %2907 = vmatmul.mubr.f32.gmra.mxu0 %v2685
      %v2908 = vpop.f32.mrf.mxu0
      %v2909 = vadd.f32 0.0, %v2908
      %v2910 = vpop.f32.mrf.mxu0
      %2911 = vdwg.mxu0
      %v2912 = vrcp.pop %v2754
      %v2913 = vrcp.pop %v2759
      %v2914 = vrcp.pop %v2764
      %v2915 = vrcp.pop %v2769
      %v2916 = vrcp.pop %v2774
      %v2917 = vrcp.pop %v2779
      %v2918 = vrcp.pop %v2784
      %v2919 = vrcp.pop %v2789
      %v2920 = vrcp.pop %v2794
      %v2921 = vrcp.pop %v2799
      %v2922 = vrcp.pop %v2804
      %v2923 = vrcp.pop %v2809
      %v2924 = vrcp.pop %v2814
      %v2925 = vrcp.pop %v2819
      %v2926 = vrcp.pop %v2824
      %v2927 = vrcp.pop %v2829
      %v2928 = vrcp.pop %v2834
      %v2929 = vrcp.pop %v2839
      %v2930 = vrcp.pop %v2844
      %v2931 = vrcp.pop %v2849
      %v2932 = vrcp.pop %v2854
      %v2933 = vrcp.pop %v2859
      %v2934 = vrcp.pop %v2864
      %v2935 = vrcp.pop %v2869
      %v2936 = vrcp.pop %v2874
      %v2937 = vrcp.pop %v2879
      %v2938 = vrcp.pop %v2884
      %v2939 = vrcp.pop %v2889
      %v2940 = vrcp.pop %v2894
      %v2941 = vrcp.pop %v2899
      %v2942 = vrcp.pop %v2904
      %v2943 = vrcp.pop %v2909
      %v2944 = vmul.f32 %v2520, %v2912
      %v2945 = vmul.f32 %v2522, %v2913
      %v2946 = vmul.f32 %v2524, %v2914
      %v2947 = vmul.f32 %v2526, %v2915
      %v2948 = vmul.f32 %v2528, %v2916
      %v2949 = vmul.f32 %v2530, %v2917
      %v2950 = vmul.f32 %v2532, %v2918
      %v2951 = vmul.f32 %v2534, %v2919
      %v2952 = vmul.f32 %v2536, %v2920
      %v2953 = vmul.f32 %v2538, %v2921
      %v2954 = vmul.f32 %v2540, %v2922
      %v2955 = vmul.f32 %v2542, %v2923
      %v2956 = vmul.f32 %v2544, %v2924
      %v2957 = vmul.f32 %v2546, %v2925
      %v2958 = vmul.f32 %v2548, %v2926
      %v2959 = vmul.f32 %v2550, %v2927
      %v2960 = vmul.f32 %v2552, %v2928
      %v2961 = vmul.f32 %v2554, %v2929
      %v2962 = vmul.f32 %v2556, %v2930
      %v2963 = vmul.f32 %v2558, %v2931
      %v2964 = vmul.f32 %v2560, %v2932
      %v2965 = vmul.f32 %v2562, %v2933
      %v2966 = vmul.f32 %v2564, %v2934
      %v2967 = vmul.f32 %v2566, %v2935
      %v2968 = vmul.f32 %v2568, %v2936
      %v2969 = vmul.f32 %v2570, %v2937
      %v2970 = vmul.f32 %v2572, %v2938
      %v2971 = vmul.f32 %v2574, %v2939
      %v2972 = vmul.f32 %v2576, %v2940
      %v2973 = vmul.f32 %v2578, %v2941
      %v2974 = vmul.f32 %v2580, %v2942
      %v2975 = vmul.f32 %v2582, %v2943
      %v2976 = vpack.c.bf16 %v2945, %v2944
      %v2977 = vpack.c.bf16 %v2947, %v2946
      %v2978 = vpack.c.bf16 %v2949, %v2948
      %v2979 = vpack.c.bf16 %v2951, %v2950
      %v2980 = vpack.c.bf16 %v2953, %v2952
      %v2981 = vpack.c.bf16 %v2955, %v2954
      %v2982 = vpack.c.bf16 %v2957, %v2956
      %v2983 = vpack.c.bf16 %v2959, %v2958
      %v2984 = vpack.c.bf16 %v2961, %v2960
      %v2985 = vpack.c.bf16 %v2963, %v2962
      %v2986 = vpack.c.bf16 %v2965, %v2964
      %v2987 = vpack.c.bf16 %v2967, %v2966
      %v2988 = vpack.c.bf16 %v2969, %v2968
      %v2989 = vpack.c.bf16 %v2971, %v2970
      %v2990 = vpack.c.bf16 %v2973, %v2972
      %v2991 = vpack.c.bf16 %v2975, %v2974
      %v2992 = vld [vmem:[%s3] sm:$0xf]
      %v2993 = vld [vmem:[%s3 + $0x4] sm:$0xf]
      %v2994 = vld [vmem:[%s3 + $0x8] sm:$0xf]
      %v2995 = vld [vmem:[%s3 + $0xc] sm:$0xf]
      %v3000 = vunpack.c.l.b16 %v2992
      %v3001 = vunpack.c.l.b16 %v2993
      %v3002 = vunpack.c.l.b16 %v2994
      %v3003 = vunpack.c.l.b16 %v2995
      %v3004 = vpack.c.b16 %v3001, %v3000
      %v3005 = vpack.c.b16 %v3003, %v3002
      %v3009 = vsel %vm428, %v2976, 0
      %v3012 = vsel %vm428, %v2977, 0
      %v3015 = vsel %vm428, %v2978, 0
      %v3018 = vsel %vm428, %v2979, 0
      %v3021 = vsel %vm428, %v2980, 0
      %v3024 = vsel %vm428, %v2981, 0
      %v3027 = vsel %vm428, %v2982, 0
      %v3030 = vsel %vm428, %v2983, 0
      %v3033 = vsel %vm428, %v2984, 0
      %v3036 = vsel %vm428, %v2985, 0
      %v3039 = vsel %vm428, %v2986, 0
      %v3042 = vsel %vm428, %v2987, 0
      %v3045 = vsel %vm428, %v2988, 0
      %v3048 = vsel %vm428, %v2989, 0
      %v3051 = vsel %vm428, %v2990, 0
      %v3054 = vsel %vm428, %v2991, 0
      %3056 = vmatprep.subr.bf16.mxu0 0
      %3057 = vmatpush1.bf16.msra.mxu0 0
      %3058 = vmatprep.subr.bf16.mxu0 0
      %3059 = vmatpush1.bf16.msra.mxu0 0
      %3060 = vmatprep.subr.bf16.mxu0 0
      %3061 = vmatpush1.bf16.msra.mxu0 0
      %3062 = vmatprep.subr.bf16.mxu0 0
      %3063 = vmatpush1.bf16.msra.mxu0 0
      %3064 = vmatprep.subr.bf16.mxu0 0
      %3065 = vmatpush1.bf16.msra.mxu0 0
      %3066 = vmatprep.subr.bf16.mxu0 0
      %3067 = vmatpush1.bf16.msra.mxu0 0
      %3068 = vmatprep.subr.bf16.mxu0 0
      %3069 = vmatpush1.bf16.msra.mxu0 %v3005
      %3070 = vmatprep.subr.bf16.mxu0 0
      %3071 = vmatpush1.bf16.msra.mxu0 %v3004
      %3072 = vmatprep.subr.bf16.mxu0 0
      %3073 = vmatpush2.bf16.msra.mxu0 0
      %3074 = vmatprep.subr.bf16.mxu0 0
      %3075 = vmatpush2.bf16.msra.mxu0 0
      %3076 = vmatprep.subr.bf16.mxu0 0
      %3077 = vmatpush2.bf16.msra.mxu0 0
      %3078 = vmatprep.subr.bf16.mxu0 0
      %3079 = vmatpush2.bf16.msra.mxu0 0
      %3080 = vmatprep.subr.bf16.mxu0 0
      %3081 = vmatpush2.bf16.msra.mxu0 0
      %3082 = vmatprep.subr.bf16.mxu0 0
      %3083 = vmatpush2.bf16.msra.mxu0 0
      %3084 = vmatprep.subr.bf16.mxu0 0
      %3085 = vmatpush2.bf16.msra.mxu0 0
      %3086 = vmatprep.subr.bf16.mxu0 0
      %3087 = vmatpush2.bf16.msra.mxu0 0
      %3088 = vmatprep.mubr.bf16.mxu0 0
      %3089 = vmatmul.mubr.bf16.gmra.mxu0 %v3009
      %v3090 = vpop.f32.mrf.mxu0
      %v3091 = vadd.f32 0.0, %v3090
      %v3092 = vpop.f32.mrf.mxu0
      %v3093 = vpop.f32.mrf.mxu0
      %v3094 = vadd.f32 0.0, %v3093
      %v3095 = vpop.f32.mrf.mxu0
      %3096 = vmatprep.mubr.bf16.mxu0 0
      %3097 = vmatmul.mubr.bf16.gmra.mxu0 %v3012
      %v3098 = vpop.f32.mrf.mxu0
      %v3099 = vadd.f32 0.0, %v3098
      %v3100 = vpop.f32.mrf.mxu0
      %v3101 = vpop.f32.mrf.mxu0
      %v3102 = vadd.f32 0.0, %v3101
      %v3103 = vpop.f32.mrf.mxu0
      %3104 = vmatprep.mubr.bf16.mxu0 0
      %3105 = vmatmul.mubr.bf16.gmra.mxu0 %v3015
      %v3106 = vpop.f32.mrf.mxu0
      %v3107 = vadd.f32 0.0, %v3106
      %v3108 = vpop.f32.mrf.mxu0
      %v3109 = vpop.f32.mrf.mxu0
      %v3110 = vadd.f32 0.0, %v3109
      %v3111 = vpop.f32.mrf.mxu0
      %3112 = vmatprep.mubr.bf16.mxu0 0
      %3113 = vmatmul.mubr.bf16.gmra.mxu0 %v3018
      %v3114 = vpop.f32.mrf.mxu0
      %v3115 = vadd.f32 0.0, %v3114
      %v3116 = vpop.f32.mrf.mxu0
      %v3117 = vpop.f32.mrf.mxu0
      %v3118 = vadd.f32 0.0, %v3117
      %v3119 = vpop.f32.mrf.mxu0
      %3120 = vmatprep.mubr.bf16.mxu0 0
      %3121 = vmatmul.mubr.bf16.gmra.mxu0 %v3021
      %v3122 = vpop.f32.mrf.mxu0
      %v3123 = vadd.f32 0.0, %v3122
      %v3124 = vpop.f32.mrf.mxu0
      %v3125 = vpop.f32.mrf.mxu0
      %v3126 = vadd.f32 0.0, %v3125
      %v3127 = vpop.f32.mrf.mxu0
      %3128 = vmatprep.mubr.bf16.mxu0 0
      %3129 = vmatmul.mubr.bf16.gmra.mxu0 %v3024
      %v3130 = vpop.f32.mrf.mxu0
      %v3131 = vadd.f32 0.0, %v3130
      %v3132 = vpop.f32.mrf.mxu0
      %v3133 = vpop.f32.mrf.mxu0
      %v3134 = vadd.f32 0.0, %v3133
      %v3135 = vpop.f32.mrf.mxu0
      %3136 = vmatprep.mubr.bf16.mxu0 0
      %3137 = vmatmul.mubr.bf16.gmra.mxu0 %v3027
      %v3138 = vpop.f32.mrf.mxu0
      %v3139 = vadd.f32 0.0, %v3138
      %v3140 = vpop.f32.mrf.mxu0
      %v3141 = vpop.f32.mrf.mxu0
      %v3142 = vadd.f32 0.0, %v3141
      %v3143 = vpop.f32.mrf.mxu0
      %3144 = vmatprep.mubr.bf16.mxu0 0
      %3145 = vmatmul.mubr.bf16.gmra.mxu0 %v3030
      %v3146 = vpop.f32.mrf.mxu0
      %v3147 = vadd.f32 0.0, %v3146
      %v3148 = vpop.f32.mrf.mxu0
      %v3149 = vpop.f32.mrf.mxu0
      %v3150 = vadd.f32 0.0, %v3149
      %v3151 = vpop.f32.mrf.mxu0
      %3152 = vmatprep.mubr.bf16.mxu0 0
      %3153 = vmatmul.mubr.bf16.gmra.mxu0 %v3033
      %v3154 = vpop.f32.mrf.mxu0
      %v3155 = vadd.f32 0.0, %v3154
      %v3156 = vpop.f32.mrf.mxu0
      %v3157 = vpop.f32.mrf.mxu0
      %v3158 = vadd.f32 0.0, %v3157
      %v3159 = vpop.f32.mrf.mxu0
      %3160 = vmatprep.mubr.bf16.mxu0 0
      %3161 = vmatmul.mubr.bf16.gmra.mxu0 %v3036
      %v3162 = vpop.f32.mrf.mxu0
      %v3163 = vadd.f32 0.0, %v3162
      %v3164 = vpop.f32.mrf.mxu0
      %v3165 = vpop.f32.mrf.mxu0
      %v3166 = vadd.f32 0.0, %v3165
      %v3167 = vpop.f32.mrf.mxu0
      %3168 = vmatprep.mubr.bf16.mxu0 0
      %3169 = vmatmul.mubr.bf16.gmra.mxu0 %v3039
      %v3170 = vpop.f32.mrf.mxu0
      %v3171 = vadd.f32 0.0, %v3170
      %v3172 = vpop.f32.mrf.mxu0
      %v3173 = vpop.f32.mrf.mxu0
      %v3174 = vadd.f32 0.0, %v3173
      %v3175 = vpop.f32.mrf.mxu0
      %3176 = vmatprep.mubr.bf16.mxu0 0
      %3177 = vmatmul.mubr.bf16.gmra.mxu0 %v3042
      %v3178 = vpop.f32.mrf.mxu0
      %v3179 = vadd.f32 0.0, %v3178
      %v3180 = vpop.f32.mrf.mxu0
      %v3181 = vpop.f32.mrf.mxu0
      %v3182 = vadd.f32 0.0, %v3181
      %v3183 = vpop.f32.mrf.mxu0
      %3184 = vmatprep.mubr.bf16.mxu0 0
      %3185 = vmatmul.mubr.bf16.gmra.mxu0 %v3045
      %v3186 = vpop.f32.mrf.mxu0
      %v3187 = vadd.f32 0.0, %v3186
      %v3188 = vpop.f32.mrf.mxu0
      %v3189 = vpop.f32.mrf.mxu0
      %v3190 = vadd.f32 0.0, %v3189
      %v3191 = vpop.f32.mrf.mxu0
      %3192 = vmatprep.mubr.bf16.mxu0 0
      %3193 = vmatmul.mubr.bf16.gmra.mxu0 %v3048
      %v3194 = vpop.f32.mrf.mxu0
      %v3195 = vadd.f32 0.0, %v3194
      %v3196 = vpop.f32.mrf.mxu0
      %v3197 = vpop.f32.mrf.mxu0
      %v3198 = vadd.f32 0.0, %v3197
      %v3199 = vpop.f32.mrf.mxu0
      %3200 = vmatprep.mubr.bf16.mxu0 0
      %3201 = vmatmul.mubr.bf16.gmra.mxu0 %v3051
      %v3202 = vpop.f32.mrf.mxu0
      %v3203 = vadd.f32 0.0, %v3202
      %v3204 = vpop.f32.mrf.mxu0
      %v3205 = vpop.f32.mrf.mxu0
      %v3206 = vadd.f32 0.0, %v3205
      %v3207 = vpop.f32.mrf.mxu0
      %3208 = vmatprep.mubr.bf16.mxu0 0
      %3209 = vmatmul.mubr.bf16.gmra.mxu0 %v3054
      %v3210 = vpop.f32.mrf.mxu0
      %v3211 = vadd.f32 0.0, %v3210
      %v3212 = vpop.f32.mrf.mxu0
      %v3213 = vpop.f32.mrf.mxu0
      %v3214 = vadd.f32 0.0, %v3213
      %v3215 = vpop.f32.mrf.mxu0
      %3216 = vdwg.mxu0
      %v3217 = vadd.f32 %v514, %v3091
      %v3218 = vadd.f32 %v518, %v3094
      %v3219 = vadd.f32 %v524, %v3099
      %v3220 = vadd.f32 %v528, %v3102
      %v3221 = vadd.f32 %v534, %v3107
      %v3222 = vadd.f32 %v538, %v3110
      %v3223 = vadd.f32 %v544, %v3115
      %v3224 = vadd.f32 %v548, %v3118
      %v3225 = vadd.f32 %v554, %v3123
      %v3226 = vadd.f32 %v558, %v3126
      %v3227 = vadd.f32 %v564, %v3131
      %v3228 = vadd.f32 %v568, %v3134
      %v3229 = vadd.f32 %v574, %v3139
      %v3230 = vadd.f32 %v578, %v3142
      %v3231 = vadd.f32 %v584, %v3147
      %v3232 = vadd.f32 %v588, %v3150
      %v3233 = vadd.f32 %v594, %v3155
      %v3234 = vadd.f32 %v598, %v3158
      %v3235 = vadd.f32 %v604, %v3163
      %v3236 = vadd.f32 %v608, %v3166
      %v3237 = vadd.f32 %v614, %v3171
      %v3238 = vadd.f32 %v618, %v3174
      %v3239 = vadd.f32 %v624, %v3179
      %v3240 = vadd.f32 %v628, %v3182
      %v3241 = vadd.f32 %v634, %v3187
      %v3242 = vadd.f32 %v638, %v3190
      %v3243 = vadd.f32 %v644, %v3195
      %v3244 = vadd.f32 %v648, %v3198
      %v3245 = vadd.f32 %v654, %v3203
      %v3246 = vadd.f32 %v658, %v3206
      %v3247 = vadd.f32 %v664, %v3211
      %v3248 = vadd.f32 %v668, %v3214
      %v3249 = vxor.u32 %v3217, 2147483648
      %v3250 = vxor.u32 %v3218, 2147483648
      %v3251 = vxor.u32 %v3219, 2147483648
      %v3252 = vxor.u32 %v3220, 2147483648
      %v3253 = vxor.u32 %v3221, 2147483648
      %v3254 = vxor.u32 %v3222, 2147483648
      %v3255 = vxor.u32 %v3223, 2147483648
      %v3256 = vxor.u32 %v3224, 2147483648
      %v3257 = vxor.u32 %v3225, 2147483648
      %v3258 = vxor.u32 %v3226, 2147483648
      %v3259 = vxor.u32 %v3227, 2147483648
      %v3260 = vxor.u32 %v3228, 2147483648
      %v3261 = vxor.u32 %v3229, 2147483648
      %v3262 = vxor.u32 %v3230, 2147483648
      %v3263 = vxor.u32 %v3231, 2147483648
      %v3264 = vxor.u32 %v3232, 2147483648
      %v3265 = vxor.u32 %v3233, 2147483648
      %v3266 = vxor.u32 %v3234, 2147483648
      %v3267 = vxor.u32 %v3235, 2147483648
      %v3268 = vxor.u32 %v3236, 2147483648
      %v3269 = vxor.u32 %v3237, 2147483648
      %v3270 = vxor.u32 %v3238, 2147483648
      %v3271 = vxor.u32 %v3239, 2147483648
      %v3272 = vxor.u32 %v3240, 2147483648
      %v3273 = vxor.u32 %v3241, 2147483648
      %v3274 = vxor.u32 %v3242, 2147483648
      %v3275 = vxor.u32 %v3243, 2147483648
      %v3276 = vxor.u32 %v3244, 2147483648
      %v3277 = vxor.u32 %v3245, 2147483648
      %v3278 = vxor.u32 %v3246, 2147483648
      %v3279 = vxor.u32 %v3247, 2147483648
      %v3280 = vxor.u32 %v3248, 2147483648
      %v3281 = vmul.f32 %v3249, 1.442695
      %v3282 = vpow.pop %v3281
      %v3283 = vmul.f32 %v3250, 1.442695
      %v3284 = vpow.pop %v3283
      %v3285 = vmul.f32 %v3251, 1.442695
      %v3286 = vpow.pop %v3285
      %v3287 = vmul.f32 %v3252, 1.442695
      %v3288 = vpow.pop %v3287
      %v3289 = vmul.f32 %v3253, 1.442695
      %v3290 = vpow.pop %v3289
      %v3291 = vmul.f32 %v3254, 1.442695
      %v3292 = vpow.pop %v3291
      %v3293 = vmul.f32 %v3255, 1.442695
      %v3294 = vpow.pop %v3293
      %v3295 = vmul.f32 %v3256, 1.442695
      %v3296 = vpow.pop %v3295
      %v3297 = vmul.f32 %v3257, 1.442695
      %v3298 = vpow.pop %v3297
      %v3299 = vmul.f32 %v3258, 1.442695
      %v3300 = vpow.pop %v3299
      %v3301 = vmul.f32 %v3259, 1.442695
      %v3302 = vpow.pop %v3301
      %v3303 = vmul.f32 %v3260, 1.442695
      %v3304 = vpow.pop %v3303
      %v3305 = vmul.f32 %v3261, 1.442695
      %v3306 = vpow.pop %v3305
      %v3307 = vmul.f32 %v3262, 1.442695
      %v3308 = vpow.pop %v3307
      %v3309 = vmul.f32 %v3263, 1.442695
      %v3310 = vpow.pop %v3309
      %v3311 = vmul.f32 %v3264, 1.442695
      %v3312 = vpow.pop %v3311
      %v3313 = vmul.f32 %v3265, 1.442695
      %v3314 = vpow.pop %v3313
      %v3315 = vmul.f32 %v3266, 1.442695
      %v3316 = vpow.pop %v3315
      %v3317 = vmul.f32 %v3267, 1.442695
      %v3318 = vpow.pop %v3317
      %v3319 = vmul.f32 %v3268, 1.442695
      %v3320 = vpow.pop %v3319
      %v3321 = vmul.f32 %v3269, 1.442695
      %v3322 = vpow.pop %v3321
      %v3323 = vmul.f32 %v3270, 1.442695
      %v3324 = vpow.pop %v3323
      %v3325 = vmul.f32 %v3271, 1.442695
      %v3326 = vpow.pop %v3325
      %v3327 = vmul.f32 %v3272, 1.442695
      %v3328 = vpow.pop %v3327
      %v3329 = vmul.f32 %v3273, 1.442695
      %v3330 = vpow.pop %v3329
      %v3331 = vmul.f32 %v3274, 1.442695
      %v3332 = vpow.pop %v3331
      %v3333 = vmul.f32 %v3275, 1.442695
      %v3334 = vpow.pop %v3333
      %v3335 = vmul.f32 %v3276, 1.442695
      %v3336 = vpow.pop %v3335
      %v3337 = vmul.f32 %v3277, 1.442695
      %v3338 = vpow.pop %v3337
      %v3339 = vmul.f32 %v3278, 1.442695
      %v3340 = vpow.pop %v3339
      %v3341 = vmul.f32 %v3279, 1.442695
      %v3342 = vpow.pop %v3341
      %v3343 = vmul.f32 %v3280, 1.442695
      %v3344 = vpow.pop %v3343
      %v3345 = vadd.f32 %v3282, 1.0
      %v3346 = vadd.f32 %v3284, 1.0
      %v3347 = vadd.f32 %v3286, 1.0
      %v3348 = vadd.f32 %v3288, 1.0
      %v3349 = vadd.f32 %v3290, 1.0
      %v3350 = vadd.f32 %v3292, 1.0
      %v3351 = vadd.f32 %v3294, 1.0
      %v3352 = vadd.f32 %v3296, 1.0
      %v3353 = vadd.f32 %v3298, 1.0
      %v3354 = vadd.f32 %v3300, 1.0
      %v3355 = vadd.f32 %v3302, 1.0
      %v3356 = vadd.f32 %v3304, 1.0
      %v3357 = vadd.f32 %v3306, 1.0
      %v3358 = vadd.f32 %v3308, 1.0
      %v3359 = vadd.f32 %v3310, 1.0
      %v3360 = vadd.f32 %v3312, 1.0
      %v3361 = vadd.f32 %v3314, 1.0
      %v3362 = vadd.f32 %v3316, 1.0
      %v3363 = vadd.f32 %v3318, 1.0
      %v3364 = vadd.f32 %v3320, 1.0
      %v3365 = vadd.f32 %v3322, 1.0
      %v3366 = vadd.f32 %v3324, 1.0
      %v3367 = vadd.f32 %v3326, 1.0
      %v3368 = vadd.f32 %v3328, 1.0
      %v3369 = vadd.f32 %v3330, 1.0
      %v3370 = vadd.f32 %v3332, 1.0
      %v3371 = vadd.f32 %v3334, 1.0
      %v3372 = vadd.f32 %v3336, 1.0
      %v3373 = vadd.f32 %v3338, 1.0
      %v3374 = vadd.f32 %v3340, 1.0
      %v3375 = vadd.f32 %v3342, 1.0
      %v3376 = vadd.f32 %v3344, 1.0
      %v3377 = vrcp.pop %v3345
      %v3378 = vmul.f32 1.0, %v3377
      %v3379 = vrcp.pop %v3346
      %v3380 = vmul.f32 1.0, %v3379
      %v3381 = vrcp.pop %v3347
      %v3382 = vmul.f32 1.0, %v3381
      %v3383 = vrcp.pop %v3348
      %v3384 = vmul.f32 1.0, %v3383
      %v3385 = vrcp.pop %v3349
      %v3386 = vmul.f32 1.0, %v3385
      %v3387 = vrcp.pop %v3350
      %v3388 = vmul.f32 1.0, %v3387
      %v3389 = vrcp.pop %v3351
      %v3390 = vmul.f32 1.0, %v3389
      %v3391 = vrcp.pop %v3352
      %v3392 = vmul.f32 1.0, %v3391
      %v3393 = vrcp.pop %v3353
      %v3394 = vmul.f32 1.0, %v3393
      %v3395 = vrcp.pop %v3354
      %v3396 = vmul.f32 1.0, %v3395
      %v3397 = vrcp.pop %v3355
      %v3398 = vmul.f32 1.0, %v3397
      %v3399 = vrcp.pop %v3356
      %v3400 = vmul.f32 1.0, %v3399
      %v3401 = vrcp.pop %v3357
      %v3402 = vmul.f32 1.0, %v3401
      %v3403 = vrcp.pop %v3358
      %v3404 = vmul.f32 1.0, %v3403
      %v3405 = vrcp.pop %v3359
      %v3406 = vmul.f32 1.0, %v3405
      %v3407 = vrcp.pop %v3360
      %v3408 = vmul.f32 1.0, %v3407
      %v3409 = vrcp.pop %v3361
      %v3410 = vmul.f32 1.0, %v3409
      %v3411 = vrcp.pop %v3362
      %v3412 = vmul.f32 1.0, %v3411
      %v3413 = vrcp.pop %v3363
      %v3414 = vmul.f32 1.0, %v3413
      %v3415 = vrcp.pop %v3364
      %v3416 = vmul.f32 1.0, %v3415
      %v3417 = vrcp.pop %v3365
      %v3418 = vmul.f32 1.0, %v3417
      %v3419 = vrcp.pop %v3366
      %v3420 = vmul.f32 1.0, %v3419
      %v3421 = vrcp.pop %v3367
      %v3422 = vmul.f32 1.0, %v3421
      %v3423 = vrcp.pop %v3368
      %v3424 = vmul.f32 1.0, %v3423
      %v3425 = vrcp.pop %v3369
      %v3426 = vmul.f32 1.0, %v3425
      %v3427 = vrcp.pop %v3370
      %v3428 = vmul.f32 1.0, %v3427
      %v3429 = vrcp.pop %v3371
      %v3430 = vmul.f32 1.0, %v3429
      %v3431 = vrcp.pop %v3372
      %v3432 = vmul.f32 1.0, %v3431
      %v3433 = vrcp.pop %v3373
      %v3434 = vmul.f32 1.0, %v3433
      %v3435 = vrcp.pop %v3374
      %v3436 = vmul.f32 1.0, %v3435
      %v3437 = vrcp.pop %v3375
      %v3438 = vmul.f32 1.0, %v3437
      %v3439 = vrcp.pop %v3376
      %v3440 = vmul.f32 1.0, %v3439
      %v3441 = vtanh.pop %v3217
      %v3442 = vtanh.pop %v3218
      %v3443 = vtanh.pop %v3219
      %v3444 = vtanh.pop %v3220
      %v3445 = vtanh.pop %v3221
      %v3446 = vtanh.pop %v3222
      %v3447 = vtanh.pop %v3223
      %v3448 = vtanh.pop %v3224
      %v3449 = vtanh.pop %v3225
      %v3450 = vtanh.pop %v3226
      %v3451 = vtanh.pop %v3227
      %v3452 = vtanh.pop %v3228
      %v3453 = vtanh.pop %v3229
      %v3454 = vtanh.pop %v3230
      %v3455 = vtanh.pop %v3231
      %v3456 = vtanh.pop %v3232
      %v3457 = vtanh.pop %v3233
      %v3458 = vtanh.pop %v3234
      %v3459 = vtanh.pop %v3235
      %v3460 = vtanh.pop %v3236
      %v3461 = vtanh.pop %v3237
      %v3462 = vtanh.pop %v3238
      %v3463 = vtanh.pop %v3239
      %v3464 = vtanh.pop %v3240
      %v3465 = vtanh.pop %v3241
      %v3466 = vtanh.pop %v3242
      %v3467 = vtanh.pop %v3243
      %v3468 = vtanh.pop %v3244
      %v3469 = vtanh.pop %v3245
      %v3470 = vtanh.pop %v3246
      %v3471 = vtanh.pop %v3247
      %v3472 = vtanh.pop %v3248
      %v3473 = vmul.f32 %v3378, %v2944
      %v3474 = vmul.f32 %v3380, %v2945
      %v3475 = vmul.f32 %v3382, %v2946
      %v3476 = vmul.f32 %v3384, %v2947
      %v3477 = vmul.f32 %v3386, %v2948
      %v3478 = vmul.f32 %v3388, %v2949
      %v3479 = vmul.f32 %v3390, %v2950
      %v3480 = vmul.f32 %v3392, %v2951
      %v3481 = vmul.f32 %v3394, %v2952
      %v3482 = vmul.f32 %v3396, %v2953
      %v3483 = vmul.f32 %v3398, %v2954
      %v3484 = vmul.f32 %v3400, %v2955
      %v3485 = vmul.f32 %v3402, %v2956
      %v3486 = vmul.f32 %v3404, %v2957
      %v3487 = vmul.f32 %v3406, %v2958
      %v3488 = vmul.f32 %v3408, %v2959
      %v3489 = vmul.f32 %v3410, %v2960
      %v3490 = vmul.f32 %v3412, %v2961
      %v3491 = vmul.f32 %v3414, %v2962
      %v3492 = vmul.f32 %v3416, %v2963
      %v3493 = vmul.f32 %v3418, %v2964
      %v3494 = vmul.f32 %v3420, %v2965
      %v3495 = vmul.f32 %v3422, %v2966
      %v3496 = vmul.f32 %v3424, %v2967
      %v3497 = vmul.f32 %v3426, %v2968
      %v3498 = vmul.f32 %v3428, %v2969
      %v3499 = vmul.f32 %v3430, %v2970
      %v3500 = vmul.f32 %v3432, %v2971
      %v3501 = vmul.f32 %v3434, %v2972
      %v3502 = vmul.f32 %v3436, %v2973
      %v3503 = vmul.f32 %v3438, %v2974
      %v3504 = vmul.f32 %v3440, %v2975
      %3537 = vrot.lane.b32.xlu0 %v3441, 64
      %v3538 = vpop.permute.xlu0 %3537
      %3539 = vrot.lane.b32.xlu0 %v3442, 64
      %v3540 = vpop.permute.xlu0 %3539
      %3541 = vrot.lane.b32.xlu0 %v3443, 64
      %v3542 = vpop.permute.xlu0 %3541
      %3543 = vrot.lane.b32.xlu0 %v3444, 64
      %v3544 = vpop.permute.xlu0 %3543
      %3545 = vrot.lane.b32.xlu0 %v3445, 64
      %v3546 = vpop.permute.xlu0 %3545
      %3547 = vrot.lane.b32.xlu0 %v3446, 64
      %v3548 = vpop.permute.xlu0 %3547
      %3549 = vrot.lane.b32.xlu0 %v3447, 64
      %v3550 = vpop.permute.xlu0 %3549
      %3551 = vrot.lane.b32.xlu0 %v3448, 64
      %v3552 = vpop.permute.xlu0 %3551
      %3553 = vrot.lane.b32.xlu0 %v3449, 64
      %v3554 = vpop.permute.xlu0 %3553
      %3555 = vrot.lane.b32.xlu0 %v3450, 64
      %v3556 = vpop.permute.xlu0 %3555
      %3557 = vrot.lane.b32.xlu0 %v3451, 64
      %v3558 = vpop.permute.xlu0 %3557
      %3559 = vrot.lane.b32.xlu0 %v3452, 64
      %v3560 = vpop.permute.xlu0 %3559
      %3561 = vrot.lane.b32.xlu0 %v3453, 64
      %v3562 = vpop.permute.xlu0 %3561
      %3563 = vrot.lane.b32.xlu0 %v3454, 64
      %v3564 = vpop.permute.xlu0 %3563
      %3565 = vrot.lane.b32.xlu0 %v3455, 64
      %v3566 = vpop.permute.xlu0 %3565
      %3567 = vrot.lane.b32.xlu0 %v3456, 64
      %v3568 = vpop.permute.xlu0 %3567
      %3569 = vrot.lane.b32.xlu0 %v3457, 64
      %v3570 = vpop.permute.xlu0 %3569
      %3571 = vrot.lane.b32.xlu0 %v3458, 64
      %v3572 = vpop.permute.xlu0 %3571
      %3573 = vrot.lane.b32.xlu0 %v3459, 64
      %v3574 = vpop.permute.xlu0 %3573
      %3575 = vrot.lane.b32.xlu0 %v3460, 64
      %v3576 = vpop.permute.xlu0 %3575
      %3577 = vrot.lane.b32.xlu0 %v3461, 64
      %v3578 = vpop.permute.xlu0 %3577
      %3579 = vrot.lane.b32.xlu0 %v3462, 64
      %v3580 = vpop.permute.xlu0 %3579
      %3581 = vrot.lane.b32.xlu0 %v3463, 64
      %v3582 = vpop.permute.xlu0 %3581
      %3583 = vrot.lane.b32.xlu0 %v3464, 64
      %v3584 = vpop.permute.xlu0 %3583
      %3585 = vrot.lane.b32.xlu0 %v3465, 64
      %v3586 = vpop.permute.xlu0 %3585
      %3587 = vrot.lane.b32.xlu0 %v3466, 64
      %v3588 = vpop.permute.xlu0 %3587
      %3589 = vrot.lane.b32.xlu0 %v3467, 64
      %v3590 = vpop.permute.xlu0 %3589
      %3591 = vrot.lane.b32.xlu0 %v3468, 64
      %v3592 = vpop.permute.xlu0 %3591
      %3593 = vrot.lane.b32.xlu0 %v3469, 64
      %v3594 = vpop.permute.xlu0 %3593
      %3595 = vrot.lane.b32.xlu0 %v3470, 64
      %v3596 = vpop.permute.xlu0 %3595
      %3597 = vrot.lane.b32.xlu0 %v3471, 64
      %v3598 = vpop.permute.xlu0 %3597
      %3599 = vrot.lane.b32.xlu0 %v3472, 64
      %v3600 = vpop.permute.xlu0 %3599
      %v3633 = vmul.f32 %v3378, %v3538
      %v3634 = vmul.f32 %v3380, %v3540
      %v3635 = vmul.f32 %v3382, %v3542
      %v3636 = vmul.f32 %v3384, %v3544
      %v3637 = vmul.f32 %v3386, %v3546
      %v3638 = vmul.f32 %v3388, %v3548
      %v3639 = vmul.f32 %v3390, %v3550
      %v3640 = vmul.f32 %v3392, %v3552
      %v3641 = vmul.f32 %v3394, %v3554
      %v3642 = vmul.f32 %v3396, %v3556
      %v3643 = vmul.f32 %v3398, %v3558
      %v3644 = vmul.f32 %v3400, %v3560
      %v3645 = vmul.f32 %v3402, %v3562
      %v3646 = vmul.f32 %v3404, %v3564
      %v3647 = vmul.f32 %v3406, %v3566
      %v3648 = vmul.f32 %v3408, %v3568
      %v3649 = vmul.f32 %v3410, %v3570
      %v3650 = vmul.f32 %v3412, %v3572
      %v3651 = vmul.f32 %v3414, %v3574
      %v3652 = vmul.f32 %v3416, %v3576
      %v3653 = vmul.f32 %v3418, %v3578
      %v3654 = vmul.f32 %v3420, %v3580
      %v3655 = vmul.f32 %v3422, %v3582
      %v3656 = vmul.f32 %v3424, %v3584
      %v3657 = vmul.f32 %v3426, %v3586
      %v3658 = vmul.f32 %v3428, %v3588
      %v3659 = vmul.f32 %v3430, %v3590
      %v3660 = vmul.f32 %v3432, %v3592
      %v3661 = vmul.f32 %v3434, %v3594
      %v3662 = vmul.f32 %v3436, %v3596
      %v3663 = vmul.f32 %v3438, %v3598
      %v3664 = vmul.f32 %v3440, %v3600
      %3697 = vrot.lane.b32.xlu0 %v3633, 32
      %v3698 = vpop.permute.xlu0 %3697
      %3699 = vrot.lane.b32.xlu0 %v3634, 32
      %v3700 = vpop.permute.xlu0 %3699
      %3701 = vrot.lane.b32.xlu0 %v3635, 32
      %v3702 = vpop.permute.xlu0 %3701
      %3703 = vrot.lane.b32.xlu0 %v3636, 32
      %v3704 = vpop.permute.xlu0 %3703
      %3705 = vrot.lane.b32.xlu0 %v3637, 32
      %v3706 = vpop.permute.xlu0 %3705
      %3707 = vrot.lane.b32.xlu0 %v3638, 32
      %v3708 = vpop.permute.xlu0 %3707
      %3709 = vrot.lane.b32.xlu0 %v3639, 32
      %v3710 = vpop.permute.xlu0 %3709
      %3711 = vrot.lane.b32.xlu0 %v3640, 32
      %v3712 = vpop.permute.xlu0 %3711
      %3713 = vrot.lane.b32.xlu0 %v3641, 32
      %v3714 = vpop.permute.xlu0 %3713
      %3715 = vrot.lane.b32.xlu0 %v3642, 32
      %v3716 = vpop.permute.xlu0 %3715
      %3717 = vrot.lane.b32.xlu0 %v3643, 32
      %v3718 = vpop.permute.xlu0 %3717
      %3719 = vrot.lane.b32.xlu0 %v3644, 32
      %v3720 = vpop.permute.xlu0 %3719
      %3721 = vrot.lane.b32.xlu0 %v3645, 32
      %v3722 = vpop.permute.xlu0 %3721
      %3723 = vrot.lane.b32.xlu0 %v3646, 32
      %v3724 = vpop.permute.xlu0 %3723
      %3725 = vrot.lane.b32.xlu0 %v3647, 32
      %v3726 = vpop.permute.xlu0 %3725
      %3727 = vrot.lane.b32.xlu0 %v3648, 32
      %v3728 = vpop.permute.xlu0 %3727
      %3729 = vrot.lane.b32.xlu0 %v3649, 32
      %v3730 = vpop.permute.xlu0 %3729
      %3731 = vrot.lane.b32.xlu0 %v3650, 32
      %v3732 = vpop.permute.xlu0 %3731
      %3733 = vrot.lane.b32.xlu0 %v3651, 32
      %v3734 = vpop.permute.xlu0 %3733
      %3735 = vrot.lane.b32.xlu0 %v3652, 32
      %v3736 = vpop.permute.xlu0 %3735
      %3737 = vrot.lane.b32.xlu0 %v3653, 32
      %v3738 = vpop.permute.xlu0 %3737
      %3739 = vrot.lane.b32.xlu0 %v3654, 32
      %v3740 = vpop.permute.xlu0 %3739
      %3741 = vrot.lane.b32.xlu0 %v3655, 32
      %v3742 = vpop.permute.xlu0 %3741
      %3743 = vrot.lane.b32.xlu0 %v3656, 32
      %v3744 = vpop.permute.xlu0 %3743
      %3745 = vrot.lane.b32.xlu0 %v3657, 32
      %v3746 = vpop.permute.xlu0 %3745
      %3747 = vrot.lane.b32.xlu0 %v3658, 32
      %v3748 = vpop.permute.xlu0 %3747
      %3749 = vrot.lane.b32.xlu0 %v3659, 32
      %v3750 = vpop.permute.xlu0 %3749
      %3751 = vrot.lane.b32.xlu0 %v3660, 32
      %v3752 = vpop.permute.xlu0 %3751
      %3753 = vrot.lane.b32.xlu0 %v3661, 32
      %v3754 = vpop.permute.xlu0 %3753
      %3755 = vrot.lane.b32.xlu0 %v3662, 32
      %v3756 = vpop.permute.xlu0 %3755
      %3757 = vrot.lane.b32.xlu0 %v3663, 32
      %v3758 = vpop.permute.xlu0 %3757
      %3759 = vrot.lane.b32.xlu0 %v3664, 32
      %v3760 = vpop.permute.xlu0 %3759
      %v3793 = vadd.f32 %v3473, %v3698
      %v3794 = vadd.f32 %v3474, %v3700
      %v3795 = vadd.f32 %v3475, %v3702
      %v3796 = vadd.f32 %v3476, %v3704
      %v3797 = vadd.f32 %v3477, %v3706
      %v3798 = vadd.f32 %v3478, %v3708
      %v3799 = vadd.f32 %v3479, %v3710
      %v3800 = vadd.f32 %v3480, %v3712
      %v3801 = vadd.f32 %v3481, %v3714
      %v3802 = vadd.f32 %v3482, %v3716
      %v3803 = vadd.f32 %v3483, %v3718
      %v3804 = vadd.f32 %v3484, %v3720
      %v3805 = vadd.f32 %v3485, %v3722
      %v3806 = vadd.f32 %v3486, %v3724
      %v3807 = vadd.f32 %v3487, %v3726
      %v3808 = vadd.f32 %v3488, %v3728
      %v3809 = vadd.f32 %v3489, %v3730
      %v3810 = vadd.f32 %v3490, %v3732
      %v3811 = vadd.f32 %v3491, %v3734
      %v3812 = vadd.f32 %v3492, %v3736
      %v3813 = vadd.f32 %v3493, %v3738
      %v3814 = vadd.f32 %v3494, %v3740
      %v3815 = vadd.f32 %v3495, %v3742
      %v3816 = vadd.f32 %v3496, %v3744
      %v3817 = vadd.f32 %v3497, %v3746
      %v3818 = vadd.f32 %v3498, %v3748
      %v3819 = vadd.f32 %v3499, %v3750
      %v3820 = vadd.f32 %v3500, %v3752
      %v3821 = vadd.f32 %v3501, %v3754
      %v3822 = vadd.f32 %v3502, %v3756
      %v3823 = vadd.f32 %v3503, %v3758
      %v3824 = vadd.f32 %v3504, %v3760
      %v3825 = vtanh.pop %v3793
      %v3826 = vtanh.pop %v3794
      %v3827 = vtanh.pop %v3795
      %v3828 = vtanh.pop %v3796
      %v3829 = vtanh.pop %v3797
      %v3830 = vtanh.pop %v3798
      %v3831 = vtanh.pop %v3799
      %v3832 = vtanh.pop %v3800
      %v3833 = vtanh.pop %v3801
      %v3834 = vtanh.pop %v3802
      %v3835 = vtanh.pop %v3803
      %v3836 = vtanh.pop %v3804
      %v3837 = vtanh.pop %v3805
      %v3838 = vtanh.pop %v3806
      %v3839 = vtanh.pop %v3807
      %v3840 = vtanh.pop %v3808
      %v3841 = vtanh.pop %v3809
      %v3842 = vtanh.pop %v3810
      %v3843 = vtanh.pop %v3811
      %v3844 = vtanh.pop %v3812
      %v3845 = vtanh.pop %v3813
      %v3846 = vtanh.pop %v3814
      %v3847 = vtanh.pop %v3815
      %v3848 = vtanh.pop %v3816
      %v3849 = vtanh.pop %v3817
      %v3850 = vtanh.pop %v3818
      %v3851 = vtanh.pop %v3819
      %v3852 = vtanh.pop %v3820
      %v3853 = vtanh.pop %v3821
      %v3854 = vtanh.pop %v3822
      %v3855 = vtanh.pop %v3823
      %v3856 = vtanh.pop %v3824
      %3889 = vrot.lane.b32.xlu0 %v3825, 64
      %v3890 = vpop.permute.xlu0 %3889
      %3891 = vrot.lane.b32.xlu0 %v3826, 64
      %v3892 = vpop.permute.xlu0 %3891
      %3893 = vrot.lane.b32.xlu0 %v3827, 64
      %v3894 = vpop.permute.xlu0 %3893
      %3895 = vrot.lane.b32.xlu0 %v3828, 64
      %v3896 = vpop.permute.xlu0 %3895
      %3897 = vrot.lane.b32.xlu0 %v3829, 64
      %v3898 = vpop.permute.xlu0 %3897
      %3899 = vrot.lane.b32.xlu0 %v3830, 64
      %v3900 = vpop.permute.xlu0 %3899
      %3901 = vrot.lane.b32.xlu0 %v3831, 64
      %v3902 = vpop.permute.xlu0 %3901
      %3903 = vrot.lane.b32.xlu0 %v3832, 64
      %v3904 = vpop.permute.xlu0 %3903
      %3905 = vrot.lane.b32.xlu0 %v3833, 64
      %v3906 = vpop.permute.xlu0 %3905
      %3907 = vrot.lane.b32.xlu0 %v3834, 64
      %v3908 = vpop.permute.xlu0 %3907
      %3909 = vrot.lane.b32.xlu0 %v3835, 64
      %v3910 = vpop.permute.xlu0 %3909
      %3911 = vrot.lane.b32.xlu0 %v3836, 64
      %v3912 = vpop.permute.xlu0 %3911
      %3913 = vrot.lane.b32.xlu0 %v3837, 64
      %v3914 = vpop.permute.xlu0 %3913
      %3915 = vrot.lane.b32.xlu0 %v3838, 64
      %v3916 = vpop.permute.xlu0 %3915
      %3917 = vrot.lane.b32.xlu0 %v3839, 64
      %v3918 = vpop.permute.xlu0 %3917
      %3919 = vrot.lane.b32.xlu0 %v3840, 64
      %v3920 = vpop.permute.xlu0 %3919
      %3921 = vrot.lane.b32.xlu0 %v3841, 64
      %v3922 = vpop.permute.xlu0 %3921
      %3923 = vrot.lane.b32.xlu0 %v3842, 64
      %v3924 = vpop.permute.xlu0 %3923
      %3925 = vrot.lane.b32.xlu0 %v3843, 64
      %v3926 = vpop.permute.xlu0 %3925
      %3927 = vrot.lane.b32.xlu0 %v3844, 64
      %v3928 = vpop.permute.xlu0 %3927
      %3929 = vrot.lane.b32.xlu0 %v3845, 64
      %v3930 = vpop.permute.xlu0 %3929
      %3931 = vrot.lane.b32.xlu0 %v3846, 64
      %v3932 = vpop.permute.xlu0 %3931
      %3933 = vrot.lane.b32.xlu0 %v3847, 64
      %v3934 = vpop.permute.xlu0 %3933
      %3935 = vrot.lane.b32.xlu0 %v3848, 64
      %v3936 = vpop.permute.xlu0 %3935
      %3937 = vrot.lane.b32.xlu0 %v3849, 64
      %v3938 = vpop.permute.xlu0 %3937
      %3939 = vrot.lane.b32.xlu0 %v3850, 64
      %v3940 = vpop.permute.xlu0 %3939
      %3941 = vrot.lane.b32.xlu0 %v3851, 64
      %v3942 = vpop.permute.xlu0 %3941
      %3943 = vrot.lane.b32.xlu0 %v3852, 64
      %v3944 = vpop.permute.xlu0 %3943
      %3945 = vrot.lane.b32.xlu0 %v3853, 64
      %v3946 = vpop.permute.xlu0 %3945
      %3947 = vrot.lane.b32.xlu0 %v3854, 64
      %v3948 = vpop.permute.xlu0 %3947
      %3949 = vrot.lane.b32.xlu0 %v3855, 64
      %v3950 = vpop.permute.xlu0 %3949
      %3951 = vrot.lane.b32.xlu0 %v3856, 64
      %v3952 = vpop.permute.xlu0 %3951
      %v3985 = vmul.f32 %v3378, %v3890
      %v3986 = vmul.f32 %v3380, %v3892
      %v3987 = vmul.f32 %v3382, %v3894
      %v3988 = vmul.f32 %v3384, %v3896
      %v3989 = vmul.f32 %v3386, %v3898
      %v3990 = vmul.f32 %v3388, %v3900
      %v3991 = vmul.f32 %v3390, %v3902
      %v3992 = vmul.f32 %v3392, %v3904
      %v3993 = vmul.f32 %v3394, %v3906
      %v3994 = vmul.f32 %v3396, %v3908
      %v3995 = vmul.f32 %v3398, %v3910
      %v3996 = vmul.f32 %v3400, %v3912
      %v3997 = vmul.f32 %v3402, %v3914
      %v3998 = vmul.f32 %v3404, %v3916
      %v3999 = vmul.f32 %v3406, %v3918
      %v4000 = vmul.f32 %v3408, %v3920
      %v4001 = vmul.f32 %v3410, %v3922
      %v4002 = vmul.f32 %v3412, %v3924
      %v4003 = vmul.f32 %v3414, %v3926
      %v4004 = vmul.f32 %v3416, %v3928
      %v4005 = vmul.f32 %v3418, %v3930
      %v4006 = vmul.f32 %v3420, %v3932
      %v4007 = vmul.f32 %v3422, %v3934
      %v4008 = vmul.f32 %v3424, %v3936
      %v4009 = vmul.f32 %v3426, %v3938
      %v4010 = vmul.f32 %v3428, %v3940
      %v4011 = vmul.f32 %v3430, %v3942
      %v4012 = vmul.f32 %v3432, %v3944
      %v4013 = vmul.f32 %v3434, %v3946
      %v4014 = vmul.f32 %v3436, %v3948
      %v4015 = vmul.f32 %v3438, %v3950
      %v4016 = vmul.f32 %v3440, %v3952
      %4049 = vrot.lane.b32.xlu0 %v3985, 32
      %v4050 = vpop.permute.xlu0 %4049
      %4051 = vrot.lane.b32.xlu0 %v3986, 32
      %v4052 = vpop.permute.xlu0 %4051
      %4053 = vrot.lane.b32.xlu0 %v3987, 32
      %v4054 = vpop.permute.xlu0 %4053
      %4055 = vrot.lane.b32.xlu0 %v3988, 32
      %v4056 = vpop.permute.xlu0 %4055
      %4057 = vrot.lane.b32.xlu0 %v3989, 32
      %v4058 = vpop.permute.xlu0 %4057
      %4059 = vrot.lane.b32.xlu0 %v3990, 32
      %v4060 = vpop.permute.xlu0 %4059
      %4061 = vrot.lane.b32.xlu0 %v3991, 32
      %v4062 = vpop.permute.xlu0 %4061
      %4063 = vrot.lane.b32.xlu0 %v3992, 32
      %v4064 = vpop.permute.xlu0 %4063
      %4065 = vrot.lane.b32.xlu0 %v3993, 32
      %v4066 = vpop.permute.xlu0 %4065
      %4067 = vrot.lane.b32.xlu0 %v3994, 32
      %v4068 = vpop.permute.xlu0 %4067
      %4069 = vrot.lane.b32.xlu0 %v3995, 32
      %v4070 = vpop.permute.xlu0 %4069
      %4071 = vrot.lane.b32.xlu0 %v3996, 32
      %v4072 = vpop.permute.xlu0 %4071
      %4073 = vrot.lane.b32.xlu0 %v3997, 32
      %v4074 = vpop.permute.xlu0 %4073
      %4075 = vrot.lane.b32.xlu0 %v3998, 32
      %v4076 = vpop.permute.xlu0 %4075
      %4077 = vrot.lane.b32.xlu0 %v3999, 32
      %v4078 = vpop.permute.xlu0 %4077
      %4079 = vrot.lane.b32.xlu0 %v4000, 32
      %v4080 = vpop.permute.xlu0 %4079
      %4081 = vrot.lane.b32.xlu0 %v4001, 32
      %v4082 = vpop.permute.xlu0 %4081
      %4083 = vrot.lane.b32.xlu0 %v4002, 32
      %v4084 = vpop.permute.xlu0 %4083
      %4085 = vrot.lane.b32.xlu0 %v4003, 32
      %v4086 = vpop.permute.xlu0 %4085
      %4087 = vrot.lane.b32.xlu0 %v4004, 32
      %v4088 = vpop.permute.xlu0 %4087
      %4089 = vrot.lane.b32.xlu0 %v4005, 32
      %v4090 = vpop.permute.xlu0 %4089
      %4091 = vrot.lane.b32.xlu0 %v4006, 32
      %v4092 = vpop.permute.xlu0 %4091
      %4093 = vrot.lane.b32.xlu0 %v4007, 32
      %v4094 = vpop.permute.xlu0 %4093
      %4095 = vrot.lane.b32.xlu0 %v4008, 32
      %v4096 = vpop.permute.xlu0 %4095
      %4097 = vrot.lane.b32.xlu0 %v4009, 32
      %v4098 = vpop.permute.xlu0 %4097
      %4099 = vrot.lane.b32.xlu0 %v4010, 32
      %v4100 = vpop.permute.xlu0 %4099
      %4101 = vrot.lane.b32.xlu0 %v4011, 32
      %v4102 = vpop.permute.xlu0 %4101
      %4103 = vrot.lane.b32.xlu0 %v4012, 32
      %v4104 = vpop.permute.xlu0 %4103
      %4105 = vrot.lane.b32.xlu0 %v4013, 32
      %v4106 = vpop.permute.xlu0 %4105
      %4107 = vrot.lane.b32.xlu0 %v4014, 32
      %v4108 = vpop.permute.xlu0 %4107
      %4109 = vrot.lane.b32.xlu0 %v4015, 32
      %v4110 = vpop.permute.xlu0 %4109
      %4111 = vrot.lane.b32.xlu0 %v4016, 32
      %v4112 = vpop.permute.xlu0 %4111
      %v4145 = vsel %vm428, %v4050, %v3793
      %v4146 = vsel %vm428, %v4052, %v3794
      %v4147 = vsel %vm428, %v4054, %v3795
      %v4148 = vsel %vm428, %v4056, %v3796
      %v4149 = vsel %vm428, %v4058, %v3797
      %v4150 = vsel %vm428, %v4060, %v3798
      %v4151 = vsel %vm428, %v4062, %v3799
      %v4152 = vsel %vm428, %v4064, %v3800
      %v4153 = vsel %vm428, %v4066, %v3801
      %v4154 = vsel %vm428, %v4068, %v3802
      %v4155 = vsel %vm428, %v4070, %v3803
      %v4156 = vsel %vm428, %v4072, %v3804
      %v4157 = vsel %vm428, %v4074, %v3805
      %v4158 = vsel %vm428, %v4076, %v3806
      %v4159 = vsel %vm428, %v4078, %v3807
      %v4160 = vsel %vm428, %v4080, %v3808
      %v4161 = vsel %vm428, %v4082, %v3809
      %v4162 = vsel %vm428, %v4084, %v3810
      %v4163 = vsel %vm428, %v4086, %v3811
      %v4164 = vsel %vm428, %v4088, %v3812
      %v4165 = vsel %vm428, %v4090, %v3813
      %v4166 = vsel %vm428, %v4092, %v3814
      %v4167 = vsel %vm428, %v4094, %v3815
      %v4168 = vsel %vm428, %v4096, %v3816
      %v4169 = vsel %vm428, %v4098, %v3817
      %v4170 = vsel %vm428, %v4100, %v3818
      %v4171 = vsel %vm428, %v4102, %v3819
      %v4172 = vsel %vm428, %v4104, %v3820
      %v4173 = vsel %vm428, %v4106, %v3821
      %v4174 = vsel %vm428, %v4108, %v3822
      %v4175 = vsel %vm428, %v4110, %v3823
      %v4176 = vsel %vm428, %v4112, %v3824
      %s4177 = scalar_lea.vmem %s6, 4
      %v4178 = vld [vmem:[%s4177] sm:$0x7]
      %v4179 = vand.u32 %v1729, 15
      %vm4180 = vcmp.ne.s32.totalorder %v4179, 0
      %4181 = vrot.lane.b32.xlu0 %v4145, 64
      %v4182 = vpop.permute.xlu0 %4181
      %v4183 = vsel %vm1732, %v4182, %v4145
      %4184 = vrot.lane.b32.xlu0 %v4146, 64
      %v4185 = vpop.permute.xlu0 %4184
      %v4186 = vsel %vm1732, %v4185, %v4146
      %4187 = vrot.lane.b32.xlu0 %v4147, 64
      %v4188 = vpop.permute.xlu0 %4187
      %v4189 = vsel %vm1732, %v4188, %v4147
      %4190 = vrot.lane.b32.xlu0 %v4148, 64
      %v4191 = vpop.permute.xlu0 %4190
      %v4192 = vsel %vm1732, %v4191, %v4148
      %4193 = vrot.lane.b32.xlu0 %v4149, 64
      %v4194 = vpop.permute.xlu0 %4193
      %v4195 = vsel %vm1732, %v4194, %v4149
      %4196 = vrot.lane.b32.xlu0 %v4150, 64
      %v4197 = vpop.permute.xlu0 %4196
      %v4198 = vsel %vm1732, %v4197, %v4150
      %4199 = vrot.lane.b32.xlu0 %v4151, 64
      %v4200 = vpop.permute.xlu0 %4199
      %v4201 = vsel %vm1732, %v4200, %v4151
      %4202 = vrot.lane.b32.xlu0 %v4152, 64
      %v4203 = vpop.permute.xlu0 %4202
      %v4204 = vsel %vm1732, %v4203, %v4152
      %4205 = vrot.lane.b32.xlu0 %v4153, 64
      %v4206 = vpop.permute.xlu0 %4205
      %v4207 = vsel %vm1732, %v4206, %v4153
      %4208 = vrot.lane.b32.xlu0 %v4154, 64
      %v4209 = vpop.permute.xlu0 %4208
      %v4210 = vsel %vm1732, %v4209, %v4154
      %4211 = vrot.lane.b32.xlu0 %v4155, 64
      %v4212 = vpop.permute.xlu0 %4211
      %v4213 = vsel %vm1732, %v4212, %v4155
      %4214 = vrot.lane.b32.xlu0 %v4156, 64
      %v4215 = vpop.permute.xlu0 %4214
      %v4216 = vsel %vm1732, %v4215, %v4156
      %4217 = vrot.lane.b32.xlu0 %v4157, 64
      %v4218 = vpop.permute.xlu0 %4217
      %v4219 = vsel %vm1732, %v4218, %v4157
      %4220 = vrot.lane.b32.xlu0 %v4158, 64
      %v4221 = vpop.permute.xlu0 %4220
      %v4222 = vsel %vm1732, %v4221, %v4158
      %4223 = vrot.lane.b32.xlu0 %v4159, 64
      %v4224 = vpop.permute.xlu0 %4223
      %v4225 = vsel %vm1732, %v4224, %v4159
      %4226 = vrot.lane.b32.xlu0 %v4160, 64
      %v4227 = vpop.permute.xlu0 %4226
      %v4228 = vsel %vm1732, %v4227, %v4160
      %4229 = vrot.lane.b32.xlu0 %v4161, 64
      %v4230 = vpop.permute.xlu0 %4229
      %v4231 = vsel %vm1732, %v4230, %v4161
      %4232 = vrot.lane.b32.xlu0 %v4162, 64
      %v4233 = vpop.permute.xlu0 %4232
      %v4234 = vsel %vm1732, %v4233, %v4162
      %4235 = vrot.lane.b32.xlu0 %v4163, 64
      %v4236 = vpop.permute.xlu0 %4235
      %v4237 = vsel %vm1732, %v4236, %v4163
      %4238 = vrot.lane.b32.xlu0 %v4164, 64
      %v4239 = vpop.permute.xlu0 %4238
      %v4240 = vsel %vm1732, %v4239, %v4164
      %4241 = vrot.lane.b32.xlu0 %v4165, 64
      %v4242 = vpop.permute.xlu0 %4241
      %v4243 = vsel %vm1732, %v4242, %v4165
      %4244 = vrot.lane.b32.xlu0 %v4166, 64
      %v4245 = vpop.permute.xlu0 %4244
      %v4246 = vsel %vm1732, %v4245, %v4166
      %4247 = vrot.lane.b32.xlu0 %v4167, 64
      %v4248 = vpop.permute.xlu0 %4247
      %v4249 = vsel %vm1732, %v4248, %v4167
      %4250 = vrot.lane.b32.xlu0 %v4168, 64
      %v4251 = vpop.permute.xlu0 %4250
      %v4252 = vsel %vm1732, %v4251, %v4168
      %4253 = vrot.lane.b32.xlu0 %v4169, 64
      %v4254 = vpop.permute.xlu0 %4253
      %v4255 = vsel %vm1732, %v4254, %v4169
      %4256 = vrot.lane.b32.xlu0 %v4170, 64
      %v4257 = vpop.permute.xlu0 %4256
      %v4258 = vsel %vm1732, %v4257, %v4170
      %4259 = vrot.lane.b32.xlu0 %v4171, 64
      %v4260 = vpop.permute.xlu0 %4259
      %v4261 = vsel %vm1732, %v4260, %v4171
      %4262 = vrot.lane.b32.xlu0 %v4172, 64
      %v4263 = vpop.permute.xlu0 %4262
      %v4264 = vsel %vm1732, %v4263, %v4172
      %4265 = vrot.lane.b32.xlu0 %v4173, 64
      %v4266 = vpop.permute.xlu0 %4265
      %v4267 = vsel %vm1732, %v4266, %v4173
      %4268 = vrot.lane.b32.xlu0 %v4174, 64
      %v4269 = vpop.permute.xlu0 %4268
      %v4270 = vsel %vm1732, %v4269, %v4174
      %4271 = vrot.lane.b32.xlu0 %v4175, 64
      %v4272 = vpop.permute.xlu0 %4271
      %v4273 = vsel %vm1732, %v4272, %v4175
      %4274 = vrot.lane.b32.xlu0 %v4176, 64
      %v4275 = vpop.permute.xlu0 %4274
      %v4276 = vsel %vm1732, %v4275, %v4176
      %4277 = vrot.lane.b32.xlu0 %v4183, 64
      %v4278 = vpop.permute.xlu0 %4277
      %4279 = vrot.lane.b32.xlu0 %v4186, 64
      %v4280 = vpop.permute.xlu0 %4279
      %4281 = vrot.lane.b32.xlu0 %v4189, 64
      %v4282 = vpop.permute.xlu0 %4281
      %4283 = vrot.lane.b32.xlu0 %v4192, 64
      %v4284 = vpop.permute.xlu0 %4283
      %4285 = vrot.lane.b32.xlu0 %v4195, 64
      %v4286 = vpop.permute.xlu0 %4285
      %4287 = vrot.lane.b32.xlu0 %v4198, 64
      %v4288 = vpop.permute.xlu0 %4287
      %4289 = vrot.lane.b32.xlu0 %v4201, 64
      %v4290 = vpop.permute.xlu0 %4289
      %4291 = vrot.lane.b32.xlu0 %v4204, 64
      %v4292 = vpop.permute.xlu0 %4291
      %4293 = vrot.lane.b32.xlu0 %v4207, 64
      %v4294 = vpop.permute.xlu0 %4293
      %4295 = vrot.lane.b32.xlu0 %v4210, 64
      %v4296 = vpop.permute.xlu0 %4295
      %4297 = vrot.lane.b32.xlu0 %v4213, 64
      %v4298 = vpop.permute.xlu0 %4297
      %4299 = vrot.lane.b32.xlu0 %v4216, 64
      %v4300 = vpop.permute.xlu0 %4299
      %4301 = vrot.lane.b32.xlu0 %v4219, 64
      %v4302 = vpop.permute.xlu0 %4301
      %4303 = vrot.lane.b32.xlu0 %v4222, 64
      %v4304 = vpop.permute.xlu0 %4303
      %4305 = vrot.lane.b32.xlu0 %v4225, 64
      %v4306 = vpop.permute.xlu0 %4305
      %4307 = vrot.lane.b32.xlu0 %v4228, 64
      %v4308 = vpop.permute.xlu0 %4307
      %4309 = vrot.lane.b32.xlu0 %v4231, 64
      %v4310 = vpop.permute.xlu0 %4309
      %4311 = vrot.lane.b32.xlu0 %v4234, 64
      %v4312 = vpop.permute.xlu0 %4311
      %4313 = vrot.lane.b32.xlu0 %v4237, 64
      %v4314 = vpop.permute.xlu0 %4313
      %4315 = vrot.lane.b32.xlu0 %v4240, 64
      %v4316 = vpop.permute.xlu0 %4315
      %4317 = vrot.lane.b32.xlu0 %v4243, 64
      %v4318 = vpop.permute.xlu0 %4317
      %4319 = vrot.lane.b32.xlu0 %v4246, 64
      %v4320 = vpop.permute.xlu0 %4319
      %4321 = vrot.lane.b32.xlu0 %v4249, 64
      %v4322 = vpop.permute.xlu0 %4321
      %4323 = vrot.lane.b32.xlu0 %v4252, 64
      %v4324 = vpop.permute.xlu0 %4323
      %4325 = vrot.lane.b32.xlu0 %v4255, 64
      %v4326 = vpop.permute.xlu0 %4325
      %4327 = vrot.lane.b32.xlu0 %v4258, 64
      %v4328 = vpop.permute.xlu0 %4327
      %4329 = vrot.lane.b32.xlu0 %v4261, 64
      %v4330 = vpop.permute.xlu0 %4329
      %4331 = vrot.lane.b32.xlu0 %v4264, 64
      %v4332 = vpop.permute.xlu0 %4331
      %4333 = vrot.lane.b32.xlu0 %v4267, 64
      %v4334 = vpop.permute.xlu0 %4333
      %4335 = vrot.lane.b32.xlu0 %v4270, 64
      %v4336 = vpop.permute.xlu0 %4335
      %4337 = vrot.lane.b32.xlu0 %v4273, 64
      %v4338 = vpop.permute.xlu0 %4337
      %4339 = vrot.lane.b32.xlu0 %v4276, 64
      %v4340 = vpop.permute.xlu0 %4339
      %v4341 = vsel %vm1732, %v4278, %v4145
      %v4342 = vsel %vm1732, %v4280, %v4146
      %v4343 = vsel %vm1732, %v4282, %v4147
      %v4344 = vsel %vm1732, %v4284, %v4148
      %v4345 = vsel %vm1732, %v4286, %v4149
      %v4346 = vsel %vm1732, %v4288, %v4150
      %v4347 = vsel %vm1732, %v4290, %v4151
      %v4348 = vsel %vm1732, %v4292, %v4152
      %v4349 = vsel %vm1732, %v4294, %v4153
      %v4350 = vsel %vm1732, %v4296, %v4154
      %v4351 = vsel %vm1732, %v4298, %v4155
      %v4352 = vsel %vm1732, %v4300, %v4156
      %v4353 = vsel %vm1732, %v4302, %v4157
      %v4354 = vsel %vm1732, %v4304, %v4158
      %v4355 = vsel %vm1732, %v4306, %v4159
      %v4356 = vsel %vm1732, %v4308, %v4160
      %v4357 = vsel %vm1732, %v4310, %v4161
      %v4358 = vsel %vm1732, %v4312, %v4162
      %v4359 = vsel %vm1732, %v4314, %v4163
      %v4360 = vsel %vm1732, %v4316, %v4164
      %v4361 = vsel %vm1732, %v4318, %v4165
      %v4362 = vsel %vm1732, %v4320, %v4166
      %v4363 = vsel %vm1732, %v4322, %v4167
      %v4364 = vsel %vm1732, %v4324, %v4168
      %v4365 = vsel %vm1732, %v4326, %v4169
      %v4366 = vsel %vm1732, %v4328, %v4170
      %v4367 = vsel %vm1732, %v4330, %v4171
      %v4368 = vsel %vm1732, %v4332, %v4172
      %v4369 = vsel %vm1732, %v4334, %v4173
      %v4370 = vsel %vm1732, %v4336, %v4174
      %v4371 = vsel %vm1732, %v4338, %v4175
      %v4372 = vsel %vm1732, %v4340, %v4176
      %v4373 = vsel %vm4180, 1, 0
      %vm4374 = vcmp.eq.s32.totalorder %v4373, 1
      %4407 = vrot.lane.b32.xlu0 %v4341, 65
      %v4408 = vpop.permute.xlu0 %4407
      %4409 = vrot.lane.b32.xlu0 %v4342, 65
      %v4410 = vpop.permute.xlu0 %4409
      %4411 = vrot.lane.b32.xlu0 %v4343, 65
      %v4412 = vpop.permute.xlu0 %4411
      %4413 = vrot.lane.b32.xlu0 %v4344, 65
      %v4414 = vpop.permute.xlu0 %4413
      %4415 = vrot.lane.b32.xlu0 %v4345, 65
      %v4416 = vpop.permute.xlu0 %4415
      %4417 = vrot.lane.b32.xlu0 %v4346, 65
      %v4418 = vpop.permute.xlu0 %4417
      %4419 = vrot.lane.b32.xlu0 %v4347, 65
      %v4420 = vpop.permute.xlu0 %4419
      %4421 = vrot.lane.b32.xlu0 %v4348, 65
      %v4422 = vpop.permute.xlu0 %4421
      %4423 = vrot.lane.b32.xlu0 %v4349, 65
      %v4424 = vpop.permute.xlu0 %4423
      %4425 = vrot.lane.b32.xlu0 %v4350, 65
      %v4426 = vpop.permute.xlu0 %4425
      %4427 = vrot.lane.b32.xlu0 %v4351, 65
      %v4428 = vpop.permute.xlu0 %4427
      %4429 = vrot.lane.b32.xlu0 %v4352, 65
      %v4430 = vpop.permute.xlu0 %4429
      %4431 = vrot.lane.b32.xlu0 %v4353, 65
      %v4432 = vpop.permute.xlu0 %4431
      %4433 = vrot.lane.b32.xlu0 %v4354, 65
      %v4434 = vpop.permute.xlu0 %4433
      %4435 = vrot.lane.b32.xlu0 %v4355, 65
      %v4436 = vpop.permute.xlu0 %4435
      %4437 = vrot.lane.b32.xlu0 %v4356, 65
      %v4438 = vpop.permute.xlu0 %4437
      %4439 = vrot.lane.b32.xlu0 %v4357, 65
      %v4440 = vpop.permute.xlu0 %4439
      %4441 = vrot.lane.b32.xlu0 %v4358, 65
      %v4442 = vpop.permute.xlu0 %4441
      %4443 = vrot.lane.b32.xlu0 %v4359, 65
      %v4444 = vpop.permute.xlu0 %4443
      %4445 = vrot.lane.b32.xlu0 %v4360, 65
      %v4446 = vpop.permute.xlu0 %4445
      %4447 = vrot.lane.b32.xlu0 %v4361, 65
      %v4448 = vpop.permute.xlu0 %4447
      %4449 = vrot.lane.b32.xlu0 %v4362, 65
      %v4450 = vpop.permute.xlu0 %4449
      %4451 = vrot.lane.b32.xlu0 %v4363, 65
      %v4452 = vpop.permute.xlu0 %4451
      %4453 = vrot.lane.b32.xlu0 %v4364, 65
      %v4454 = vpop.permute.xlu0 %4453
      %4455 = vrot.lane.b32.xlu0 %v4365, 65
      %v4456 = vpop.permute.xlu0 %4455
      %4457 = vrot.lane.b32.xlu0 %v4366, 65
      %v4458 = vpop.permute.xlu0 %4457
      %4459 = vrot.lane.b32.xlu0 %v4367, 65
      %v4460 = vpop.permute.xlu0 %4459
      %4461 = vrot.lane.b32.xlu0 %v4368, 65
      %v4462 = vpop.permute.xlu0 %4461
      %4463 = vrot.lane.b32.xlu0 %v4369, 65
      %v4464 = vpop.permute.xlu0 %4463
      %4465 = vrot.lane.b32.xlu0 %v4370, 65
      %v4466 = vpop.permute.xlu0 %4465
      %4467 = vrot.lane.b32.xlu0 %v4371, 65
      %v4468 = vpop.permute.xlu0 %4467
      %4469 = vrot.lane.b32.xlu0 %v4372, 65
      %v4470 = vpop.permute.xlu0 %4469
      %v4503 = vsel %vm4374, %v4408, 0.0
      %v4504 = vsel %vm4374, %v4410, 0.0
      %v4505 = vsel %vm4374, %v4412, 0.0
      %v4506 = vsel %vm4374, %v4414, 0.0
      %v4507 = vsel %vm4374, %v4416, 0.0
      %v4508 = vsel %vm4374, %v4418, 0.0
      %v4509 = vsel %vm4374, %v4420, 0.0
      %v4510 = vsel %vm4374, %v4422, 0.0
      %v4511 = vsel %vm4374, %v4424, 0.0
      %v4512 = vsel %vm4374, %v4426, 0.0
      %v4513 = vsel %vm4374, %v4428, 0.0
      %v4514 = vsel %vm4374, %v4430, 0.0
      %v4515 = vsel %vm4374, %v4432, 0.0
      %v4516 = vsel %vm4374, %v4434, 0.0
      %v4517 = vsel %vm4374, %v4436, 0.0
      %v4518 = vsel %vm4374, %v4438, 0.0
      %v4519 = vsel %vm4374, %v4440, 0.0
      %v4520 = vsel %vm4374, %v4442, 0.0
      %v4521 = vsel %vm4374, %v4444, 0.0
      %v4522 = vsel %vm4374, %v4446, 0.0
      %v4523 = vsel %vm4374, %v4448, 0.0
      %v4524 = vsel %vm4374, %v4450, 0.0
      %v4525 = vsel %vm4374, %v4452, 0.0
      %v4526 = vsel %vm4374, %v4454, 0.0
      %v4527 = vsel %vm4374, %v4456, 0.0
      %v4528 = vsel %vm4374, %v4458, 0.0
      %v4529 = vsel %vm4374, %v4460, 0.0
      %v4530 = vsel %vm4374, %v4462, 0.0
      %v4531 = vsel %vm4374, %v4464, 0.0
      %v4532 = vsel %vm4374, %v4466, 0.0
      %v4533 = vsel %vm4374, %v4468, 0.0
      %v4534 = vsel %vm4374, %v4470, 0.0
      %vm4535 = vcmp.ne.s32.totalorder %v4179, 15
      %v4536 = vsel %vm4535, 1, 0
      %vm4537 = vcmp.eq.s32.totalorder %v4536, 1
      %4538 = vrot.lane.b32.xlu0 %v4341, 127
      %v4539 = vpop.permute.xlu0 %4538
      %4540 = vrot.lane.b32.xlu0 %v4342, 127
      %v4541 = vpop.permute.xlu0 %4540
      %4542 = vrot.lane.b32.xlu0 %v4343, 127
      %v4543 = vpop.permute.xlu0 %4542
      %4544 = vrot.lane.b32.xlu0 %v4344, 127
      %v4545 = vpop.permute.xlu0 %4544
      %4546 = vrot.lane.b32.xlu0 %v4345, 127
      %v4547 = vpop.permute.xlu0 %4546
      %4548 = vrot.lane.b32.xlu0 %v4346, 127
      %v4549 = vpop.permute.xlu0 %4548
      %4550 = vrot.lane.b32.xlu0 %v4347, 127
      %v4551 = vpop.permute.xlu0 %4550
      %4552 = vrot.lane.b32.xlu0 %v4348, 127
      %v4553 = vpop.permute.xlu0 %4552
      %4554 = vrot.lane.b32.xlu0 %v4349, 127
      %v4555 = vpop.permute.xlu0 %4554
      %4556 = vrot.lane.b32.xlu0 %v4350, 127
      %v4557 = vpop.permute.xlu0 %4556
      %4558 = vrot.lane.b32.xlu0 %v4351, 127
      %v4559 = vpop.permute.xlu0 %4558
      %4560 = vrot.lane.b32.xlu0 %v4352, 127
      %v4561 = vpop.permute.xlu0 %4560
      %4562 = vrot.lane.b32.xlu0 %v4353, 127
      %v4563 = vpop.permute.xlu0 %4562
      %4564 = vrot.lane.b32.xlu0 %v4354, 127
      %v4565 = vpop.permute.xlu0 %4564
      %4566 = vrot.lane.b32.xlu0 %v4355, 127
      %v4567 = vpop.permute.xlu0 %4566
      %4568 = vrot.lane.b32.xlu0 %v4356, 127
      %v4569 = vpop.permute.xlu0 %4568
      %4570 = vrot.lane.b32.xlu0 %v4357, 127
      %v4571 = vpop.permute.xlu0 %4570
      %4572 = vrot.lane.b32.xlu0 %v4358, 127
      %v4573 = vpop.permute.xlu0 %4572
      %4574 = vrot.lane.b32.xlu0 %v4359, 127
      %v4575 = vpop.permute.xlu0 %4574
      %4576 = vrot.lane.b32.xlu0 %v4360, 127
      %v4577 = vpop.permute.xlu0 %4576
      %4578 = vrot.lane.b32.xlu0 %v4361, 127
      %v4579 = vpop.permute.xlu0 %4578
      %4580 = vrot.lane.b32.xlu0 %v4362, 127
      %v4581 = vpop.permute.xlu0 %4580
      %4582 = vrot.lane.b32.xlu0 %v4363, 127
      %v4583 = vpop.permute.xlu0 %4582
      %4584 = vrot.lane.b32.xlu0 %v4364, 127
      %v4585 = vpop.permute.xlu0 %4584
      %4586 = vrot.lane.b32.xlu0 %v4365, 127
      %v4587 = vpop.permute.xlu0 %4586
      %4588 = vrot.lane.b32.xlu0 %v4366, 127
      %v4589 = vpop.permute.xlu0 %4588
      %4590 = vrot.lane.b32.xlu0 %v4367, 127
      %v4591 = vpop.permute.xlu0 %4590
      %4592 = vrot.lane.b32.xlu0 %v4368, 127
      %v4593 = vpop.permute.xlu0 %4592
      %4594 = vrot.lane.b32.xlu0 %v4369, 127
      %v4595 = vpop.permute.xlu0 %4594
      %4596 = vrot.lane.b32.xlu0 %v4370, 127
      %v4597 = vpop.permute.xlu0 %4596
      %4598 = vrot.lane.b32.xlu0 %v4371, 127
      %v4599 = vpop.permute.xlu0 %4598
      %4600 = vrot.lane.b32.xlu0 %v4372, 127
      %v4601 = vpop.permute.xlu0 %4600
      %v4634 = vsel %vm4537, %v4539, 0.0
      %v4635 = vsel %vm4537, %v4541, 0.0
      %v4636 = vsel %vm4537, %v4543, 0.0
      %v4637 = vsel %vm4537, %v4545, 0.0
      %v4638 = vsel %vm4537, %v4547, 0.0
      %v4639 = vsel %vm4537, %v4549, 0.0
      %v4640 = vsel %vm4537, %v4551, 0.0
      %v4641 = vsel %vm4537, %v4553, 0.0
      %v4642 = vsel %vm4537, %v4555, 0.0
      %v4643 = vsel %vm4537, %v4557, 0.0
      %v4644 = vsel %vm4537, %v4559, 0.0
      %v4645 = vsel %vm4537, %v4561, 0.0
      %v4646 = vsel %vm4537, %v4563, 0.0
      %v4647 = vsel %vm4537, %v4565, 0.0
      %v4648 = vsel %vm4537, %v4567, 0.0
      %v4649 = vsel %vm4537, %v4569, 0.0
      %v4650 = vsel %vm4537, %v4571, 0.0
      %v4651 = vsel %vm4537, %v4573, 0.0
      %v4652 = vsel %vm4537, %v4575, 0.0
      %v4653 = vsel %vm4537, %v4577, 0.0
      %v4654 = vsel %vm4537, %v4579, 0.0
      %v4655 = vsel %vm4537, %v4581, 0.0
      %v4656 = vsel %vm4537, %v4583, 0.0
      %v4657 = vsel %vm4537, %v4585, 0.0
      %v4658 = vsel %vm4537, %v4587, 0.0
      %v4659 = vsel %vm4537, %v4589, 0.0
      %v4660 = vsel %vm4537, %v4591, 0.0
      %v4661 = vsel %vm4537, %v4593, 0.0
      %v4662 = vsel %vm4537, %v4595, 0.0
      %v4663 = vsel %vm4537, %v4597, 0.0
      %v4664 = vsel %vm4537, %v4599, 0.0
      %v4665 = vsel %vm4537, %v4601, 0.0
      %v4666 = vlaneseq
      %v4667 = vshrl.u32 %v4666, 7
      %v4668 = vsub.s32 1, %v4667
      %v4669 = vrot.slane %v4178, %v4668
      %v4670 = vmul.f32 %v4669, %v4145
      %v4671 = vmul.f32 %v4669, %v4146
      %v4672 = vmul.f32 %v4669, %v4147
      %v4673 = vmul.f32 %v4669, %v4148
      %v4674 = vmul.f32 %v4669, %v4149
      %v4675 = vmul.f32 %v4669, %v4150
      %v4676 = vmul.f32 %v4669, %v4151
      %v4677 = vmul.f32 %v4669, %v4152
      %v4678 = vmul.f32 %v4669, %v4153
      %v4679 = vmul.f32 %v4669, %v4154
      %v4680 = vmul.f32 %v4669, %v4155
      %v4681 = vmul.f32 %v4669, %v4156
      %v4682 = vmul.f32 %v4669, %v4157
      %v4683 = vmul.f32 %v4669, %v4158
      %v4684 = vmul.f32 %v4669, %v4159
      %v4685 = vmul.f32 %v4669, %v4160
      %v4686 = vmul.f32 %v4669, %v4161
      %v4687 = vmul.f32 %v4669, %v4162
      %v4688 = vmul.f32 %v4669, %v4163
      %v4689 = vmul.f32 %v4669, %v4164
      %v4690 = vmul.f32 %v4669, %v4165
      %v4691 = vmul.f32 %v4669, %v4166
      %v4692 = vmul.f32 %v4669, %v4167
      %v4693 = vmul.f32 %v4669, %v4168
      %v4694 = vmul.f32 %v4669, %v4169
      %v4695 = vmul.f32 %v4669, %v4170
      %v4696 = vmul.f32 %v4669, %v4171
      %v4697 = vmul.f32 %v4669, %v4172
      %v4698 = vmul.f32 %v4669, %v4173
      %v4699 = vmul.f32 %v4669, %v4174
      %v4700 = vmul.f32 %v4669, %v4175
      %v4701 = vmul.f32 %v4669, %v4176
      %v4702 = vlaneseq
      %v4703 = vshrl.u32 %v4702, 7
      %v4704 = vsub.s32 0, %v4703
      %v4705 = vrot.slane %v4178, %v4704
      %v4706 = vmul.f32 %v4705, %v4503
      %v4707 = vmul.f32 %v4705, %v4504
      %v4708 = vmul.f32 %v4705, %v4505
      %v4709 = vmul.f32 %v4705, %v4506
      %v4710 = vmul.f32 %v4705, %v4507
      %v4711 = vmul.f32 %v4705, %v4508
      %v4712 = vmul.f32 %v4705, %v4509
      %v4713 = vmul.f32 %v4705, %v4510
      %v4714 = vmul.f32 %v4705, %v4511
      %v4715 = vmul.f32 %v4705, %v4512
      %v4716 = vmul.f32 %v4705, %v4513
      %v4717 = vmul.f32 %v4705, %v4514
      %v4718 = vmul.f32 %v4705, %v4515
      %v4719 = vmul.f32 %v4705, %v4516
      %v4720 = vmul.f32 %v4705, %v4517
      %v4721 = vmul.f32 %v4705, %v4518
      %v4722 = vmul.f32 %v4705, %v4519
      %v4723 = vmul.f32 %v4705, %v4520
      %v4724 = vmul.f32 %v4705, %v4521
      %v4725 = vmul.f32 %v4705, %v4522
      %v4726 = vmul.f32 %v4705, %v4523
      %v4727 = vmul.f32 %v4705, %v4524
      %v4728 = vmul.f32 %v4705, %v4525
      %v4729 = vmul.f32 %v4705, %v4526
      %v4730 = vmul.f32 %v4705, %v4527
      %v4731 = vmul.f32 %v4705, %v4528
      %v4732 = vmul.f32 %v4705, %v4529
      %v4733 = vmul.f32 %v4705, %v4530
      %v4734 = vmul.f32 %v4705, %v4531
      %v4735 = vmul.f32 %v4705, %v4532
      %v4736 = vmul.f32 %v4705, %v4533
      %v4737 = vmul.f32 %v4705, %v4534
      %v4738 = vadd.f32 %v4670, %v4706
      %v4739 = vadd.f32 %v4671, %v4707
      %v4740 = vadd.f32 %v4672, %v4708
      %v4741 = vadd.f32 %v4673, %v4709
      %v4742 = vadd.f32 %v4674, %v4710
      %v4743 = vadd.f32 %v4675, %v4711
      %v4744 = vadd.f32 %v4676, %v4712
      %v4745 = vadd.f32 %v4677, %v4713
      %v4746 = vadd.f32 %v4678, %v4714
      %v4747 = vadd.f32 %v4679, %v4715
      %v4748 = vadd.f32 %v4680, %v4716
      %v4749 = vadd.f32 %v4681, %v4717
      %v4750 = vadd.f32 %v4682, %v4718
      %v4751 = vadd.f32 %v4683, %v4719
      %v4752 = vadd.f32 %v4684, %v4720
      %v4753 = vadd.f32 %v4685, %v4721
      %v4754 = vadd.f32 %v4686, %v4722
      %v4755 = vadd.f32 %v4687, %v4723
      %v4756 = vadd.f32 %v4688, %v4724
      %v4757 = vadd.f32 %v4689, %v4725
      %v4758 = vadd.f32 %v4690, %v4726
      %v4759 = vadd.f32 %v4691, %v4727
      %v4760 = vadd.f32 %v4692, %v4728
      %v4761 = vadd.f32 %v4693, %v4729
      %v4762 = vadd.f32 %v4694, %v4730
      %v4763 = vadd.f32 %v4695, %v4731
      %v4764 = vadd.f32 %v4696, %v4732
      %v4765 = vadd.f32 %v4697, %v4733
      %v4766 = vadd.f32 %v4698, %v4734
      %v4767 = vadd.f32 %v4699, %v4735
      %v4768 = vadd.f32 %v4700, %v4736
      %v4769 = vadd.f32 %v4701, %v4737
      %v4770 = vlaneseq
      %v4771 = vshrl.u32 %v4770, 7
      %v4772 = vsub.s32 2, %v4771
      %v4773 = vrot.slane %v4178, %v4772
      %v4774 = vmul.f32 %v4773, %v4634
      %v4775 = vmul.f32 %v4773, %v4635
      %v4776 = vmul.f32 %v4773, %v4636
      %v4777 = vmul.f32 %v4773, %v4637
      %v4778 = vmul.f32 %v4773, %v4638
      %v4779 = vmul.f32 %v4773, %v4639
      %v4780 = vmul.f32 %v4773, %v4640
      %v4781 = vmul.f32 %v4773, %v4641
      %v4782 = vmul.f32 %v4773, %v4642
      %v4783 = vmul.f32 %v4773, %v4643
      %v4784 = vmul.f32 %v4773, %v4644
      %v4785 = vmul.f32 %v4773, %v4645
      %v4786 = vmul.f32 %v4773, %v4646
      %v4787 = vmul.f32 %v4773, %v4647
      %v4788 = vmul.f32 %v4773, %v4648
      %v4789 = vmul.f32 %v4773, %v4649
      %v4790 = vmul.f32 %v4773, %v4650
      %v4791 = vmul.f32 %v4773, %v4651
      %v4792 = vmul.f32 %v4773, %v4652
      %v4793 = vmul.f32 %v4773, %v4653
      %v4794 = vmul.f32 %v4773, %v4654
      %v4795 = vmul.f32 %v4773, %v4655
      %v4796 = vmul.f32 %v4773, %v4656
      %v4797 = vmul.f32 %v4773, %v4657
      %v4798 = vmul.f32 %v4773, %v4658
      %v4799 = vmul.f32 %v4773, %v4659
      %v4800 = vmul.f32 %v4773, %v4660
      %v4801 = vmul.f32 %v4773, %v4661
      %v4802 = vmul.f32 %v4773, %v4662
      %v4803 = vmul.f32 %v4773, %v4663
      %v4804 = vmul.f32 %v4773, %v4664
      %v4805 = vmul.f32 %v4773, %v4665
      %v4806 = vadd.f32 %v4738, %v4774
      %v4807 = vadd.f32 %v4739, %v4775
      %v4808 = vadd.f32 %v4740, %v4776
      %v4809 = vadd.f32 %v4741, %v4777
      %v4810 = vadd.f32 %v4742, %v4778
      %v4811 = vadd.f32 %v4743, %v4779
      %v4812 = vadd.f32 %v4744, %v4780
      %v4813 = vadd.f32 %v4745, %v4781
      %v4814 = vadd.f32 %v4746, %v4782
      %v4815 = vadd.f32 %v4747, %v4783
      %v4816 = vadd.f32 %v4748, %v4784
      %v4817 = vadd.f32 %v4749, %v4785
      %v4818 = vadd.f32 %v4750, %v4786
      %v4819 = vadd.f32 %v4751, %v4787
      %v4820 = vadd.f32 %v4752, %v4788
      %v4821 = vadd.f32 %v4753, %v4789
      %v4822 = vadd.f32 %v4754, %v4790
      %v4823 = vadd.f32 %v4755, %v4791
      %v4824 = vadd.f32 %v4756, %v4792
      %v4825 = vadd.f32 %v4757, %v4793
      %v4826 = vadd.f32 %v4758, %v4794
      %v4827 = vadd.f32 %v4759, %v4795
      %v4828 = vadd.f32 %v4760, %v4796
      %v4829 = vadd.f32 %v4761, %v4797
      %v4830 = vadd.f32 %v4762, %v4798
      %v4831 = vadd.f32 %v4763, %v4799
      %v4832 = vadd.f32 %v4764, %v4800
      %v4833 = vadd.f32 %v4765, %v4801
      %v4834 = vadd.f32 %v4766, %v4802
      %v4835 = vadd.f32 %v4767, %v4803
      %v4836 = vadd.f32 %v4768, %v4804
      %v4837 = vadd.f32 %v4769, %v4805
      %v4838 = vsel %vm2390, %v4806, -inf
      %4839 = vmax.xlane.f32.xlu0 %v4838
      %v4840 = vpop.xlane.xlu0 %4839
      %v4841 = vsel %vm2390, %v4807, -inf
      %4842 = vmax.xlane.f32.xlu0 %v4841
      %v4843 = vpop.xlane.xlu0 %4842
      %v4844 = vsel %vm2390, %v4808, -inf
      %4845 = vmax.xlane.f32.xlu0 %v4844
      %v4846 = vpop.xlane.xlu0 %4845
      %v4847 = vsel %vm2390, %v4809, -inf
      %4848 = vmax.xlane.f32.xlu0 %v4847
      %v4849 = vpop.xlane.xlu0 %4848
      %v4850 = vsel %vm2390, %v4810, -inf
      %4851 = vmax.xlane.f32.xlu0 %v4850
      %v4852 = vpop.xlane.xlu0 %4851
      %v4853 = vsel %vm2390, %v4811, -inf
      %4854 = vmax.xlane.f32.xlu0 %v4853
      %v4855 = vpop.xlane.xlu0 %4854
      %v4856 = vsel %vm2390, %v4812, -inf
      %4857 = vmax.xlane.f32.xlu0 %v4856
      %v4858 = vpop.xlane.xlu0 %4857
      %v4859 = vsel %vm2390, %v4813, -inf
      %4860 = vmax.xlane.f32.xlu0 %v4859
      %v4861 = vpop.xlane.xlu0 %4860
      %v4862 = vsel %vm2390, %v4814, -inf
      %4863 = vmax.xlane.f32.xlu0 %v4862
      %v4864 = vpop.xlane.xlu0 %4863
      %v4865 = vsel %vm2390, %v4815, -inf
      %4866 = vmax.xlane.f32.xlu0 %v4865
      %v4867 = vpop.xlane.xlu0 %4866
      %v4868 = vsel %vm2390, %v4816, -inf
      %4869 = vmax.xlane.f32.xlu0 %v4868
      %v4870 = vpop.xlane.xlu0 %4869
      %v4871 = vsel %vm2390, %v4817, -inf
      %4872 = vmax.xlane.f32.xlu0 %v4871
      %v4873 = vpop.xlane.xlu0 %4872
      %v4874 = vsel %vm2390, %v4818, -inf
      %4875 = vmax.xlane.f32.xlu0 %v4874
      %v4876 = vpop.xlane.xlu0 %4875
      %v4877 = vsel %vm2390, %v4819, -inf
      %4878 = vmax.xlane.f32.xlu0 %v4877
      %v4879 = vpop.xlane.xlu0 %4878
      %v4880 = vsel %vm2390, %v4820, -inf
      %4881 = vmax.xlane.f32.xlu0 %v4880
      %v4882 = vpop.xlane.xlu0 %4881
      %v4883 = vsel %vm2390, %v4821, -inf
      %4884 = vmax.xlane.f32.xlu0 %v4883
      %v4885 = vpop.xlane.xlu0 %4884
      %v4886 = vsel %vm2390, %v4822, -inf
      %4887 = vmax.xlane.f32.xlu0 %v4886
      %v4888 = vpop.xlane.xlu0 %4887
      %v4889 = vsel %vm2390, %v4823, -inf
      %4890 = vmax.xlane.f32.xlu0 %v4889
      %v4891 = vpop.xlane.xlu0 %4890
      %v4892 = vsel %vm2390, %v4824, -inf
      %4893 = vmax.xlane.f32.xlu0 %v4892
      %v4894 = vpop.xlane.xlu0 %4893
      %v4895 = vsel %vm2390, %v4825, -inf
      %4896 = vmax.xlane.f32.xlu0 %v4895
      %v4897 = vpop.xlane.xlu0 %4896
      %v4898 = vsel %vm2390, %v4826, -inf
      %4899 = vmax.xlane.f32.xlu0 %v4898
      %v4900 = vpop.xlane.xlu0 %4899
      %v4901 = vsel %vm2390, %v4827, -inf
      %4902 = vmax.xlane.f32.xlu0 %v4901
      %v4903 = vpop.xlane.xlu0 %4902
      %v4904 = vsel %vm2390, %v4828, -inf
      %4905 = vmax.xlane.f32.xlu0 %v4904
      %v4906 = vpop.xlane.xlu0 %4905
      %v4907 = vsel %vm2390, %v4829, -inf
      %4908 = vmax.xlane.f32.xlu0 %v4907
      %v4909 = vpop.xlane.xlu0 %4908
      %v4910 = vsel %vm2390, %v4830, -inf
      %4911 = vmax.xlane.f32.xlu0 %v4910
      %v4912 = vpop.xlane.xlu0 %4911
      %v4913 = vsel %vm2390, %v4831, -inf
      %4914 = vmax.xlane.f32.xlu0 %v4913
      %v4915 = vpop.xlane.xlu0 %4914
      %v4916 = vsel %vm2390, %v4832, -inf
      %4917 = vmax.xlane.f32.xlu0 %v4916
      %v4918 = vpop.xlane.xlu0 %4917
      %v4919 = vsel %vm2390, %v4833, -inf
      %4920 = vmax.xlane.f32.xlu0 %v4919
      %v4921 = vpop.xlane.xlu0 %4920
      %v4922 = vsel %vm2390, %v4834, -inf
      %4923 = vmax.xlane.f32.xlu0 %v4922
      %v4924 = vpop.xlane.xlu0 %4923
      %v4925 = vsel %vm2390, %v4835, -inf
      %4926 = vmax.xlane.f32.xlu0 %v4925
      %v4927 = vpop.xlane.xlu0 %4926
      %v4928 = vsel %vm2390, %v4836, -inf
      %4929 = vmax.xlane.f32.xlu0 %v4928
      %v4930 = vpop.xlane.xlu0 %4929
      %v4931 = vsel %vm2390, %v4837, -inf
      %4932 = vmax.xlane.f32.xlu0 %v4931
      %v4933 = vpop.xlane.xlu0 %4932
      %v4934 = vsub.f32 %v4806, %v4840
      %v4935 = vsub.f32 %v4807, %v4843
      %v4936 = vsub.f32 %v4808, %v4846
      %v4937 = vsub.f32 %v4809, %v4849
      %v4938 = vsub.f32 %v4810, %v4852
      %v4939 = vsub.f32 %v4811, %v4855
      %v4940 = vsub.f32 %v4812, %v4858
      %v4941 = vsub.f32 %v4813, %v4861
      %v4942 = vsub.f32 %v4814, %v4864
      %v4943 = vsub.f32 %v4815, %v4867
      %v4944 = vsub.f32 %v4816, %v4870
      %v4945 = vsub.f32 %v4817, %v4873
      %v4946 = vsub.f32 %v4818, %v4876
      %v4947 = vsub.f32 %v4819, %v4879
      %v4948 = vsub.f32 %v4820, %v4882
      %v4949 = vsub.f32 %v4821, %v4885
      %v4950 = vsub.f32 %v4822, %v4888
      %v4951 = vsub.f32 %v4823, %v4891
      %v4952 = vsub.f32 %v4824, %v4894
      %v4953 = vsub.f32 %v4825, %v4897
      %v4954 = vsub.f32 %v4826, %v4900
      %v4955 = vsub.f32 %v4827, %v4903
      %v4956 = vsub.f32 %v4828, %v4906
      %v4957 = vsub.f32 %v4829, %v4909
      %v4958 = vsub.f32 %v4830, %v4912
      %v4959 = vsub.f32 %v4831, %v4915
      %v4960 = vsub.f32 %v4832, %v4918
      %v4961 = vsub.f32 %v4833, %v4921
      %v4962 = vsub.f32 %v4834, %v4924
      %v4963 = vsub.f32 %v4835, %v4927
      %v4964 = vsub.f32 %v4836, %v4930
      %v4965 = vsub.f32 %v4837, %v4933
      %v4966 = vmul.f32 %v4934, 1.442695
      %v4967 = vpow.pop %v4966
      %v4968 = vmul.f32 %v4935, 1.442695
      %v4969 = vpow.pop %v4968
      %v4970 = vmul.f32 %v4936, 1.442695
      %v4971 = vpow.pop %v4970
      %v4972 = vmul.f32 %v4937, 1.442695
      %v4973 = vpow.pop %v4972
      %v4974 = vmul.f32 %v4938, 1.442695
      %v4975 = vpow.pop %v4974
      %v4976 = vmul.f32 %v4939, 1.442695
      %v4977 = vpow.pop %v4976
      %v4978 = vmul.f32 %v4940, 1.442695
      %v4979 = vpow.pop %v4978
      %v4980 = vmul.f32 %v4941, 1.442695
      %v4981 = vpow.pop %v4980
      %v4982 = vmul.f32 %v4942, 1.442695
      %v4983 = vpow.pop %v4982
      %v4984 = vmul.f32 %v4943, 1.442695
      %v4985 = vpow.pop %v4984
      %v4986 = vmul.f32 %v4944, 1.442695
      %v4987 = vpow.pop %v4986
      %v4988 = vmul.f32 %v4945, 1.442695
      %v4989 = vpow.pop %v4988
      %v4990 = vmul.f32 %v4946, 1.442695
      %v4991 = vpow.pop %v4990
      %v4992 = vmul.f32 %v4947, 1.442695
      %v4993 = vpow.pop %v4992
      %v4994 = vmul.f32 %v4948, 1.442695
      %v4995 = vpow.pop %v4994
      %v4996 = vmul.f32 %v4949, 1.442695
      %v4997 = vpow.pop %v4996
      %v4998 = vmul.f32 %v4950, 1.442695
      %v4999 = vpow.pop %v4998
      %v5000 = vmul.f32 %v4951, 1.442695
      %v5001 = vpow.pop %v5000
      %v5002 = vmul.f32 %v4952, 1.442695
      %v5003 = vpow.pop %v5002
      %v5004 = vmul.f32 %v4953, 1.442695
      %v5005 = vpow.pop %v5004
      %v5006 = vmul.f32 %v4954, 1.442695
      %v5007 = vpow.pop %v5006
      %v5008 = vmul.f32 %v4955, 1.442695
      %v5009 = vpow.pop %v5008
      %v5010 = vmul.f32 %v4956, 1.442695
      %v5011 = vpow.pop %v5010
      %v5012 = vmul.f32 %v4957, 1.442695
      %v5013 = vpow.pop %v5012
      %v5014 = vmul.f32 %v4958, 1.442695
      %v5015 = vpow.pop %v5014
      %v5016 = vmul.f32 %v4959, 1.442695
      %v5017 = vpow.pop %v5016
      %v5018 = vmul.f32 %v4960, 1.442695
      %v5019 = vpow.pop %v5018
      %v5020 = vmul.f32 %v4961, 1.442695
      %v5021 = vpow.pop %v5020
      %v5022 = vmul.f32 %v4962, 1.442695
      %v5023 = vpow.pop %v5022
      %v5024 = vmul.f32 %v4963, 1.442695
      %v5025 = vpow.pop %v5024
      %v5026 = vmul.f32 %v4964, 1.442695
      %v5027 = vpow.pop %v5026
      %v5028 = vmul.f32 %v4965, 1.442695
      %v5029 = vpow.pop %v5028
      %s5030 = scalar_lea.vmem %s7, 64
      %v5031 = vld [vmem:[%s5030] sm:$0xff]
      %v5032 = vld [vmem:[%s5030 + $0x8] sm:$0xff]
      %v5033 = vld [vmem:[%s5030 + $0x10] sm:$0xff]
      %v5034 = vld [vmem:[%s5030 + $0x18] sm:$0xff]
      %v5035 = vld [vmem:[%s5030 + $0x20] sm:$0xff]
      %v5036 = vld [vmem:[%s5030 + $0x28] sm:$0xff]
      %v5037 = vld [vmem:[%s5030 + $0x30] sm:$0xff]
      %v5038 = vld [vmem:[%s5030 + $0x38] sm:$0xff]
      %v5040 = vsel %vm2390, %v4967, 0
      %v5043 = vsel %vm2390, %v4969, 0
      %v5046 = vsel %vm2390, %v4971, 0
      %v5049 = vsel %vm2390, %v4973, 0
      %v5052 = vsel %vm2390, %v4975, 0
      %v5055 = vsel %vm2390, %v4977, 0
      %v5058 = vsel %vm2390, %v4979, 0
      %v5061 = vsel %vm2390, %v4981, 0
      %v5064 = vsel %vm2390, %v4983, 0
      %v5067 = vsel %vm2390, %v4985, 0
      %v5070 = vsel %vm2390, %v4987, 0
      %v5073 = vsel %vm2390, %v4989, 0
      %v5076 = vsel %vm2390, %v4991, 0
      %v5079 = vsel %vm2390, %v4993, 0
      %v5082 = vsel %vm2390, %v4995, 0
      %v5085 = vsel %vm2390, %v4997, 0
      %v5088 = vsel %vm2390, %v4999, 0
      %v5091 = vsel %vm2390, %v5001, 0
      %v5094 = vsel %vm2390, %v5003, 0
      %v5097 = vsel %vm2390, %v5005, 0
      %v5100 = vsel %vm2390, %v5007, 0
      %v5103 = vsel %vm2390, %v5009, 0
      %v5106 = vsel %vm2390, %v5011, 0
      %v5109 = vsel %vm2390, %v5013, 0
      %v5112 = vsel %vm2390, %v5015, 0
      %v5115 = vsel %vm2390, %v5017, 0
      %v5118 = vsel %vm2390, %v5019, 0
      %v5121 = vsel %vm2390, %v5021, 0
      %v5124 = vsel %vm2390, %v5023, 0
      %v5127 = vsel %vm2390, %v5025, 0
      %v5130 = vsel %vm2390, %v5027, 0
      %v5133 = vsel %vm2390, %v5029, 0
      %5135 = vmatprep.subr.mxu0 0.0
      %5136 = vmatpush1.msra.mxu0 0.0
      %5137 = vmatprep.subr.mxu0 0.0
      %5138 = vmatpush1.msra.mxu0 0.0
      %5139 = vmatprep.subr.mxu0 0.0
      %5140 = vmatpush1.msra.mxu0 0.0
      %5141 = vmatprep.subr.mxu0 0.0
      %5142 = vmatpush1.msra.mxu0 0.0
      %5143 = vmatprep.subr.mxu0 0.0
      %5144 = vmatpush1.msra.mxu0 0.0
      %5145 = vmatprep.subr.mxu0 0.0
      %5146 = vmatpush1.msra.mxu0 0.0
      %5147 = vmatprep.subr.mxu0 0.0
      %5148 = vmatpush1.msra.mxu0 0.0
      %5149 = vmatprep.subr.mxu0 0.0
      %5150 = vmatpush1.msra.mxu0 0.0
      %5151 = vmatprep.subr.mxu0 0.0
      %5152 = vmatpush1.msra.mxu0 %v5038
      %5153 = vmatprep.subr.mxu0 0.0
      %5154 = vmatpush1.msra.mxu0 %v5037
      %5155 = vmatprep.subr.mxu0 0.0
      %5156 = vmatpush1.msra.mxu0 %v5036
      %5157 = vmatprep.subr.mxu0 0.0
      %5158 = vmatpush1.msra.mxu0 %v5035
      %5159 = vmatprep.subr.mxu0 0.0
      %5160 = vmatpush1.msra.mxu0 %v5034
      %5161 = vmatprep.subr.mxu0 0.0
      %5162 = vmatpush1.msra.mxu0 %v5033
      %5163 = vmatprep.subr.mxu0 0.0
      %5164 = vmatpush1.msra.mxu0 %v5032
      %5165 = vmatprep.subr.mxu0 0.0
      %5166 = vmatpush1.msra.mxu0 %v5031
      %5167 = vmatprep.subr.mxu0 0.0
      %5168 = vmatpush2.msra.mxu0 0.0
      %5169 = vmatprep.subr.mxu0 0.0
      %5170 = vmatpush2.msra.mxu0 0.0
      %5171 = vmatprep.subr.mxu0 0.0
      %5172 = vmatpush2.msra.mxu0 0.0
      %5173 = vmatprep.subr.mxu0 0.0
      %5174 = vmatpush2.msra.mxu0 0.0
      %5175 = vmatprep.subr.mxu0 0.0
      %5176 = vmatpush2.msra.mxu0 0.0
      %5177 = vmatprep.subr.mxu0 0.0
      %5178 = vmatpush2.msra.mxu0 0.0
      %5179 = vmatprep.subr.mxu0 0.0
      %5180 = vmatpush2.msra.mxu0 0.0
      %5181 = vmatprep.subr.mxu0 0.0
      %5182 = vmatpush2.msra.mxu0 0.0
      %5183 = vmatprep.subr.mxu0 0.0
      %5184 = vmatpush2.msra.mxu0 0.0
      %5185 = vmatprep.subr.mxu0 0.0
      %5186 = vmatpush2.msra.mxu0 0.0
      %5187 = vmatprep.subr.mxu0 0.0
      %5188 = vmatpush2.msra.mxu0 0.0
      %5189 = vmatprep.subr.mxu0 0.0
      %5190 = vmatpush2.msra.mxu0 0.0
      %5191 = vmatprep.subr.mxu0 0.0
      %5192 = vmatpush2.msra.mxu0 0.0
      %5193 = vmatprep.subr.mxu0 0.0
      %5194 = vmatpush2.msra.mxu0 0.0
      %5195 = vmatprep.subr.mxu0 0.0
      %5196 = vmatpush2.msra.mxu0 0.0
      %5197 = vmatprep.subr.mxu0 0.0
      %5198 = vmatpush2.msra.mxu0 0.0
      %5199 = vmatprep.mubr.f32.mxu0 0.0
      %5200 = vmatmul.mubr.f32.gmra.mxu0 %v5040
      %v5201 = vpop.f32.mrf.mxu0
      %v5202 = vadd.f32 0.0, %v5201
      %v5203 = vpop.f32.mrf.mxu0
      %5204 = vmatprep.mubr.f32.mxu0 0.0
      %5205 = vmatmul.mubr.f32.gmra.mxu0 %v5043
      %v5206 = vpop.f32.mrf.mxu0
      %v5207 = vadd.f32 0.0, %v5206
      %v5208 = vpop.f32.mrf.mxu0
      %5209 = vmatprep.mubr.f32.mxu0 0.0
      %5210 = vmatmul.mubr.f32.gmra.mxu0 %v5046
      %v5211 = vpop.f32.mrf.mxu0
      %v5212 = vadd.f32 0.0, %v5211
      %v5213 = vpop.f32.mrf.mxu0
      %5214 = vmatprep.mubr.f32.mxu0 0.0
      %5215 = vmatmul.mubr.f32.gmra.mxu0 %v5049
      %v5216 = vpop.f32.mrf.mxu0
      %v5217 = vadd.f32 0.0, %v5216
      %v5218 = vpop.f32.mrf.mxu0
      %5219 = vmatprep.mubr.f32.mxu0 0.0
      %5220 = vmatmul.mubr.f32.gmra.mxu0 %v5052
      %v5221 = vpop.f32.mrf.mxu0
      %v5222 = vadd.f32 0.0, %v5221
      %v5223 = vpop.f32.mrf.mxu0
      %5224 = vmatprep.mubr.f32.mxu0 0.0
      %5225 = vmatmul.mubr.f32.gmra.mxu0 %v5055
      %v5226 = vpop.f32.mrf.mxu0
      %v5227 = vadd.f32 0.0, %v5226
      %v5228 = vpop.f32.mrf.mxu0
      %5229 = vmatprep.mubr.f32.mxu0 0.0
      %5230 = vmatmul.mubr.f32.gmra.mxu0 %v5058
      %v5231 = vpop.f32.mrf.mxu0
      %v5232 = vadd.f32 0.0, %v5231
      %v5233 = vpop.f32.mrf.mxu0
      %5234 = vmatprep.mubr.f32.mxu0 0.0
      %5235 = vmatmul.mubr.f32.gmra.mxu0 %v5061
      %v5236 = vpop.f32.mrf.mxu0
      %v5237 = vadd.f32 0.0, %v5236
      %v5238 = vpop.f32.mrf.mxu0
      %5239 = vmatprep.mubr.f32.mxu0 0.0
      %5240 = vmatmul.mubr.f32.gmra.mxu0 %v5064
      %v5241 = vpop.f32.mrf.mxu0
      %v5242 = vadd.f32 0.0, %v5241
      %v5243 = vpop.f32.mrf.mxu0
      %5244 = vmatprep.mubr.f32.mxu0 0.0
      %5245 = vmatmul.mubr.f32.gmra.mxu0 %v5067
      %v5246 = vpop.f32.mrf.mxu0
      %v5247 = vadd.f32 0.0, %v5246
      %v5248 = vpop.f32.mrf.mxu0
      %5249 = vmatprep.mubr.f32.mxu0 0.0
      %5250 = vmatmul.mubr.f32.gmra.mxu0 %v5070
      %v5251 = vpop.f32.mrf.mxu0
      %v5252 = vadd.f32 0.0, %v5251
      %v5253 = vpop.f32.mrf.mxu0
      %5254 = vmatprep.mubr.f32.mxu0 0.0
      %5255 = vmatmul.mubr.f32.gmra.mxu0 %v5073
      %v5256 = vpop.f32.mrf.mxu0
      %v5257 = vadd.f32 0.0, %v5256
      %v5258 = vpop.f32.mrf.mxu0
      %5259 = vmatprep.mubr.f32.mxu0 0.0
      %5260 = vmatmul.mubr.f32.gmra.mxu0 %v5076
      %v5261 = vpop.f32.mrf.mxu0
      %v5262 = vadd.f32 0.0, %v5261
      %v5263 = vpop.f32.mrf.mxu0
      %5264 = vmatprep.mubr.f32.mxu0 0.0
      %5265 = vmatmul.mubr.f32.gmra.mxu0 %v5079
      %v5266 = vpop.f32.mrf.mxu0
      %v5267 = vadd.f32 0.0, %v5266
      %v5268 = vpop.f32.mrf.mxu0
      %5269 = vmatprep.mubr.f32.mxu0 0.0
      %5270 = vmatmul.mubr.f32.gmra.mxu0 %v5082
      %v5271 = vpop.f32.mrf.mxu0
      %v5272 = vadd.f32 0.0, %v5271
      %v5273 = vpop.f32.mrf.mxu0
      %5274 = vmatprep.mubr.f32.mxu0 0.0
      %5275 = vmatmul.mubr.f32.gmra.mxu0 %v5085
      %v5276 = vpop.f32.mrf.mxu0
      %v5277 = vadd.f32 0.0, %v5276
      %v5278 = vpop.f32.mrf.mxu0
      %5279 = vmatprep.mubr.f32.mxu0 0.0
      %5280 = vmatmul.mubr.f32.gmra.mxu0 %v5088
      %v5281 = vpop.f32.mrf.mxu0
      %v5282 = vadd.f32 0.0, %v5281
      %v5283 = vpop.f32.mrf.mxu0
      %5284 = vmatprep.mubr.f32.mxu0 0.0
      %5285 = vmatmul.mubr.f32.gmra.mxu0 %v5091
      %v5286 = vpop.f32.mrf.mxu0
      %v5287 = vadd.f32 0.0, %v5286
      %v5288 = vpop.f32.mrf.mxu0
      %5289 = vmatprep.mubr.f32.mxu0 0.0
      %5290 = vmatmul.mubr.f32.gmra.mxu0 %v5094
      %v5291 = vpop.f32.mrf.mxu0
      %v5292 = vadd.f32 0.0, %v5291
      %v5293 = vpop.f32.mrf.mxu0
      %5294 = vmatprep.mubr.f32.mxu0 0.0
      %5295 = vmatmul.mubr.f32.gmra.mxu0 %v5097
      %v5296 = vpop.f32.mrf.mxu0
      %v5297 = vadd.f32 0.0, %v5296
      %v5298 = vpop.f32.mrf.mxu0
      %5299 = vmatprep.mubr.f32.mxu0 0.0
      %5300 = vmatmul.mubr.f32.gmra.mxu0 %v5100
      %v5301 = vpop.f32.mrf.mxu0
      %v5302 = vadd.f32 0.0, %v5301
      %v5303 = vpop.f32.mrf.mxu0
      %5304 = vmatprep.mubr.f32.mxu0 0.0
      %5305 = vmatmul.mubr.f32.gmra.mxu0 %v5103
      %v5306 = vpop.f32.mrf.mxu0
      %v5307 = vadd.f32 0.0, %v5306
      %v5308 = vpop.f32.mrf.mxu0
      %5309 = vmatprep.mubr.f32.mxu0 0.0
      %5310 = vmatmul.mubr.f32.gmra.mxu0 %v5106
      %v5311 = vpop.f32.mrf.mxu0
      %v5312 = vadd.f32 0.0, %v5311
      %v5313 = vpop.f32.mrf.mxu0
      %5314 = vmatprep.mubr.f32.mxu0 0.0
      %5315 = vmatmul.mubr.f32.gmra.mxu0 %v5109
      %v5316 = vpop.f32.mrf.mxu0
      %v5317 = vadd.f32 0.0, %v5316
      %v5318 = vpop.f32.mrf.mxu0
      %5319 = vmatprep.mubr.f32.mxu0 0.0
      %5320 = vmatmul.mubr.f32.gmra.mxu0 %v5112
      %v5321 = vpop.f32.mrf.mxu0
      %v5322 = vadd.f32 0.0, %v5321
      %v5323 = vpop.f32.mrf.mxu0
      %5324 = vmatprep.mubr.f32.mxu0 0.0
      %5325 = vmatmul.mubr.f32.gmra.mxu0 %v5115
      %v5326 = vpop.f32.mrf.mxu0
      %v5327 = vadd.f32 0.0, %v5326
      %v5328 = vpop.f32.mrf.mxu0
      %5329 = vmatprep.mubr.f32.mxu0 0.0
      %5330 = vmatmul.mubr.f32.gmra.mxu0 %v5118
      %v5331 = vpop.f32.mrf.mxu0
      %v5332 = vadd.f32 0.0, %v5331
      %v5333 = vpop.f32.mrf.mxu0
      %5334 = vmatprep.mubr.f32.mxu0 0.0
      %5335 = vmatmul.mubr.f32.gmra.mxu0 %v5121
      %v5336 = vpop.f32.mrf.mxu0
      %v5337 = vadd.f32 0.0, %v5336
      %v5338 = vpop.f32.mrf.mxu0
      %5339 = vmatprep.mubr.f32.mxu0 0.0
      %5340 = vmatmul.mubr.f32.gmra.mxu0 %v5124
      %v5341 = vpop.f32.mrf.mxu0
      %v5342 = vadd.f32 0.0, %v5341
      %v5343 = vpop.f32.mrf.mxu0
      %5344 = vmatprep.mubr.f32.mxu0 0.0
      %5345 = vmatmul.mubr.f32.gmra.mxu0 %v5127
      %v5346 = vpop.f32.mrf.mxu0
      %v5347 = vadd.f32 0.0, %v5346
      %v5348 = vpop.f32.mrf.mxu0
      %5349 = vmatprep.mubr.f32.mxu0 0.0
      %5350 = vmatmul.mubr.f32.gmra.mxu0 %v5130
      %v5351 = vpop.f32.mrf.mxu0
      %v5352 = vadd.f32 0.0, %v5351
      %v5353 = vpop.f32.mrf.mxu0
      %5354 = vmatprep.mubr.f32.mxu0 0.0
      %5355 = vmatmul.mubr.f32.gmra.mxu0 %v5133
      %v5356 = vpop.f32.mrf.mxu0
      %v5357 = vadd.f32 0.0, %v5356
      %v5358 = vpop.f32.mrf.mxu0
      %5359 = vdwg.mxu0
      %v5360 = vrcp.pop %v5202
      %v5361 = vrcp.pop %v5207
      %v5362 = vrcp.pop %v5212
      %v5363 = vrcp.pop %v5217
      %v5364 = vrcp.pop %v5222
      %v5365 = vrcp.pop %v5227
      %v5366 = vrcp.pop %v5232
      %v5367 = vrcp.pop %v5237
      %v5368 = vrcp.pop %v5242
      %v5369 = vrcp.pop %v5247
      %v5370 = vrcp.pop %v5252
      %v5371 = vrcp.pop %v5257
      %v5372 = vrcp.pop %v5262
      %v5373 = vrcp.pop %v5267
      %v5374 = vrcp.pop %v5272
      %v5375 = vrcp.pop %v5277
      %v5376 = vrcp.pop %v5282
      %v5377 = vrcp.pop %v5287
      %v5378 = vrcp.pop %v5292
      %v5379 = vrcp.pop %v5297
      %v5380 = vrcp.pop %v5302
      %v5381 = vrcp.pop %v5307
      %v5382 = vrcp.pop %v5312
      %v5383 = vrcp.pop %v5317
      %v5384 = vrcp.pop %v5322
      %v5385 = vrcp.pop %v5327
      %v5386 = vrcp.pop %v5332
      %v5387 = vrcp.pop %v5337
      %v5388 = vrcp.pop %v5342
      %v5389 = vrcp.pop %v5347
      %v5390 = vrcp.pop %v5352
      %v5391 = vrcp.pop %v5357
      %v5392 = vmul.f32 %v4967, %v5360
      %v5393 = vmul.f32 %v4969, %v5361
      %v5394 = vmul.f32 %v4971, %v5362
      %v5395 = vmul.f32 %v4973, %v5363
      %v5396 = vmul.f32 %v4975, %v5364
      %v5397 = vmul.f32 %v4977, %v5365
      %v5398 = vmul.f32 %v4979, %v5366
      %v5399 = vmul.f32 %v4981, %v5367
      %v5400 = vmul.f32 %v4983, %v5368
      %v5401 = vmul.f32 %v4985, %v5369
      %v5402 = vmul.f32 %v4987, %v5370
      %v5403 = vmul.f32 %v4989, %v5371
      %v5404 = vmul.f32 %v4991, %v5372
      %v5405 = vmul.f32 %v4993, %v5373
      %v5406 = vmul.f32 %v4995, %v5374
      %v5407 = vmul.f32 %v4997, %v5375
      %v5408 = vmul.f32 %v4999, %v5376
      %v5409 = vmul.f32 %v5001, %v5377
      %v5410 = vmul.f32 %v5003, %v5378
      %v5411 = vmul.f32 %v5005, %v5379
      %v5412 = vmul.f32 %v5007, %v5380
      %v5413 = vmul.f32 %v5009, %v5381
      %v5414 = vmul.f32 %v5011, %v5382
      %v5415 = vmul.f32 %v5013, %v5383
      %v5416 = vmul.f32 %v5015, %v5384
      %v5417 = vmul.f32 %v5017, %v5385
      %v5418 = vmul.f32 %v5019, %v5386
      %v5419 = vmul.f32 %v5021, %v5387
      %v5420 = vmul.f32 %v5023, %v5388
      %v5421 = vmul.f32 %v5025, %v5389
      %v5422 = vmul.f32 %v5027, %v5390
      %v5423 = vmul.f32 %v5029, %v5391
      %v5424 = vpack.c.bf16 %v5393, %v5392
      %v5425 = vpack.c.bf16 %v5395, %v5394
      %v5426 = vpack.c.bf16 %v5397, %v5396
      %v5427 = vpack.c.bf16 %v5399, %v5398
      %v5428 = vpack.c.bf16 %v5401, %v5400
      %v5429 = vpack.c.bf16 %v5403, %v5402
      %v5430 = vpack.c.bf16 %v5405, %v5404
      %v5431 = vpack.c.bf16 %v5407, %v5406
      %v5432 = vpack.c.bf16 %v5409, %v5408
      %v5433 = vpack.c.bf16 %v5411, %v5410
      %v5434 = vpack.c.bf16 %v5413, %v5412
      %v5435 = vpack.c.bf16 %v5415, %v5414
      %v5436 = vpack.c.bf16 %v5417, %v5416
      %v5437 = vpack.c.bf16 %v5419, %v5418
      %v5438 = vpack.c.bf16 %v5421, %v5420
      %v5439 = vpack.c.bf16 %v5423, %v5422
      %v5440 = vld [vmem:[%s4] sm:$0xf]
      %v5441 = vld [vmem:[%s4 + $0x4] sm:$0xf]
      %v5442 = vld [vmem:[%s4 + $0x8] sm:$0xf]
      %v5443 = vld [vmem:[%s4 + $0xc] sm:$0xf]
      %v5448 = vunpack.c.l.b16 %v5440
      %v5449 = vunpack.c.l.b16 %v5441
      %v5450 = vunpack.c.l.b16 %v5442
      %v5451 = vunpack.c.l.b16 %v5443
      %v5452 = vpack.c.b16 %v5449, %v5448
      %v5453 = vpack.c.b16 %v5451, %v5450
      %v5457 = vsel %vm428, %v5424, 0
      %v5460 = vsel %vm428, %v5425, 0
      %v5463 = vsel %vm428, %v5426, 0
      %v5466 = vsel %vm428, %v5427, 0
      %v5469 = vsel %vm428, %v5428, 0
      %v5472 = vsel %vm428, %v5429, 0
      %v5475 = vsel %vm428, %v5430, 0
      %v5478 = vsel %vm428, %v5431, 0
      %v5481 = vsel %vm428, %v5432, 0
      %v5484 = vsel %vm428, %v5433, 0
      %v5487 = vsel %vm428, %v5434, 0
      %v5490 = vsel %vm428, %v5435, 0
      %v5493 = vsel %vm428, %v5436, 0
      %v5496 = vsel %vm428, %v5437, 0
      %v5499 = vsel %vm428, %v5438, 0
      %v5502 = vsel %vm428, %v5439, 0
      %5504 = vmatprep.subr.bf16.mxu0 0
      %5505 = vmatpush1.bf16.msra.mxu0 0
      %5506 = vmatprep.subr.bf16.mxu0 0
      %5507 = vmatpush1.bf16.msra.mxu0 0
      %5508 = vmatprep.subr.bf16.mxu0 0
      %5509 = vmatpush1.bf16.msra.mxu0 0
      %5510 = vmatprep.subr.bf16.mxu0 0
      %5511 = vmatpush1.bf16.msra.mxu0 0
      %5512 = vmatprep.subr.bf16.mxu0 0
      %5513 = vmatpush1.bf16.msra.mxu0 0
      %5514 = vmatprep.subr.bf16.mxu0 0
      %5515 = vmatpush1.bf16.msra.mxu0 0
      %5516 = vmatprep.subr.bf16.mxu0 0
      %5517 = vmatpush1.bf16.msra.mxu0 %v5453
      %5518 = vmatprep.subr.bf16.mxu0 0
      %5519 = vmatpush1.bf16.msra.mxu0 %v5452
      %5520 = vmatprep.subr.bf16.mxu0 0
      %5521 = vmatpush2.bf16.msra.mxu0 0
      %5522 = vmatprep.subr.bf16.mxu0 0
      %5523 = vmatpush2.bf16.msra.mxu0 0
      %5524 = vmatprep.subr.bf16.mxu0 0
      %5525 = vmatpush2.bf16.msra.mxu0 0
      %5526 = vmatprep.subr.bf16.mxu0 0
      %5527 = vmatpush2.bf16.msra.mxu0 0
      %5528 = vmatprep.subr.bf16.mxu0 0
      %5529 = vmatpush2.bf16.msra.mxu0 0
      %5530 = vmatprep.subr.bf16.mxu0 0
      %5531 = vmatpush2.bf16.msra.mxu0 0
      %5532 = vmatprep.subr.bf16.mxu0 0
      %5533 = vmatpush2.bf16.msra.mxu0 0
      %5534 = vmatprep.subr.bf16.mxu0 0
      %5535 = vmatpush2.bf16.msra.mxu0 0
      %5536 = vmatprep.mubr.bf16.mxu0 0
      %5537 = vmatmul.mubr.bf16.gmra.mxu0 %v5457
      %v5538 = vpop.f32.mrf.mxu0
      %v5539 = vadd.f32 0.0, %v5538
      %v5540 = vpop.f32.mrf.mxu0
      %v5541 = vpop.f32.mrf.mxu0
      %v5542 = vadd.f32 0.0, %v5541
      %v5543 = vpop.f32.mrf.mxu0
      %5544 = vmatprep.mubr.bf16.mxu0 0
      %5545 = vmatmul.mubr.bf16.gmra.mxu0 %v5460
      %v5546 = vpop.f32.mrf.mxu0
      %v5547 = vadd.f32 0.0, %v5546
      %v5548 = vpop.f32.mrf.mxu0
      %v5549 = vpop.f32.mrf.mxu0
      %v5550 = vadd.f32 0.0, %v5549
      %v5551 = vpop.f32.mrf.mxu0
      %5552 = vmatprep.mubr.bf16.mxu0 0
      %5553 = vmatmul.mubr.bf16.gmra.mxu0 %v5463
      %v5554 = vpop.f32.mrf.mxu0
      %v5555 = vadd.f32 0.0, %v5554
      %v5556 = vpop.f32.mrf.mxu0
      %v5557 = vpop.f32.mrf.mxu0
      %v5558 = vadd.f32 0.0, %v5557
      %v5559 = vpop.f32.mrf.mxu0
      %5560 = vmatprep.mubr.bf16.mxu0 0
      %5561 = vmatmul.mubr.bf16.gmra.mxu0 %v5466
      %v5562 = vpop.f32.mrf.mxu0
      %v5563 = vadd.f32 0.0, %v5562
      %v5564 = vpop.f32.mrf.mxu0
      %v5565 = vpop.f32.mrf.mxu0
      %v5566 = vadd.f32 0.0, %v5565
      %v5567 = vpop.f32.mrf.mxu0
      %5568 = vmatprep.mubr.bf16.mxu0 0
      %5569 = vmatmul.mubr.bf16.gmra.mxu0 %v5469
      %v5570 = vpop.f32.mrf.mxu0
      %v5571 = vadd.f32 0.0, %v5570
      %v5572 = vpop.f32.mrf.mxu0
      %v5573 = vpop.f32.mrf.mxu0
      %v5574 = vadd.f32 0.0, %v5573
      %v5575 = vpop.f32.mrf.mxu0
      %5576 = vmatprep.mubr.bf16.mxu0 0
      %5577 = vmatmul.mubr.bf16.gmra.mxu0 %v5472
      %v5578 = vpop.f32.mrf.mxu0
      %v5579 = vadd.f32 0.0, %v5578
      %v5580 = vpop.f32.mrf.mxu0
      %v5581 = vpop.f32.mrf.mxu0
      %v5582 = vadd.f32 0.0, %v5581
      %v5583 = vpop.f32.mrf.mxu0
      %5584 = vmatprep.mubr.bf16.mxu0 0
      %5585 = vmatmul.mubr.bf16.gmra.mxu0 %v5475
      %v5586 = vpop.f32.mrf.mxu0
      %v5587 = vadd.f32 0.0, %v5586
      %v5588 = vpop.f32.mrf.mxu0
      %v5589 = vpop.f32.mrf.mxu0
      %v5590 = vadd.f32 0.0, %v5589
      %v5591 = vpop.f32.mrf.mxu0
      %5592 = vmatprep.mubr.bf16.mxu0 0
      %5593 = vmatmul.mubr.bf16.gmra.mxu0 %v5478
      %v5594 = vpop.f32.mrf.mxu0
      %v5595 = vadd.f32 0.0, %v5594
      %v5596 = vpop.f32.mrf.mxu0
      %v5597 = vpop.f32.mrf.mxu0
      %v5598 = vadd.f32 0.0, %v5597
      %v5599 = vpop.f32.mrf.mxu0
      %5600 = vmatprep.mubr.bf16.mxu0 0
      %5601 = vmatmul.mubr.bf16.gmra.mxu0 %v5481
      %v5602 = vpop.f32.mrf.mxu0
      %v5603 = vadd.f32 0.0, %v5602
      %v5604 = vpop.f32.mrf.mxu0
      %v5605 = vpop.f32.mrf.mxu0
      %v5606 = vadd.f32 0.0, %v5605
      %v5607 = vpop.f32.mrf.mxu0
      %5608 = vmatprep.mubr.bf16.mxu0 0
      %5609 = vmatmul.mubr.bf16.gmra.mxu0 %v5484
      %v5610 = vpop.f32.mrf.mxu0
      %v5611 = vadd.f32 0.0, %v5610
      %v5612 = vpop.f32.mrf.mxu0
      %v5613 = vpop.f32.mrf.mxu0
      %v5614 = vadd.f32 0.0, %v5613
      %v5615 = vpop.f32.mrf.mxu0
      %5616 = vmatprep.mubr.bf16.mxu0 0
      %5617 = vmatmul.mubr.bf16.gmra.mxu0 %v5487
      %v5618 = vpop.f32.mrf.mxu0
      %v5619 = vadd.f32 0.0, %v5618
      %v5620 = vpop.f32.mrf.mxu0
      %v5621 = vpop.f32.mrf.mxu0
      %v5622 = vadd.f32 0.0, %v5621
      %v5623 = vpop.f32.mrf.mxu0
      %5624 = vmatprep.mubr.bf16.mxu0 0
      %5625 = vmatmul.mubr.bf16.gmra.mxu0 %v5490
      %v5626 = vpop.f32.mrf.mxu0
      %v5627 = vadd.f32 0.0, %v5626
      %v5628 = vpop.f32.mrf.mxu0
      %v5629 = vpop.f32.mrf.mxu0
      %v5630 = vadd.f32 0.0, %v5629
      %v5631 = vpop.f32.mrf.mxu0
      %5632 = vmatprep.mubr.bf16.mxu0 0
      %5633 = vmatmul.mubr.bf16.gmra.mxu0 %v5493
      %v5634 = vpop.f32.mrf.mxu0
      %v5635 = vadd.f32 0.0, %v5634
      %v5636 = vpop.f32.mrf.mxu0
      %v5637 = vpop.f32.mrf.mxu0
      %v5638 = vadd.f32 0.0, %v5637
      %v5639 = vpop.f32.mrf.mxu0
      %5640 = vmatprep.mubr.bf16.mxu0 0
      %5641 = vmatmul.mubr.bf16.gmra.mxu0 %v5496
      %v5642 = vpop.f32.mrf.mxu0
      %v5643 = vadd.f32 0.0, %v5642
      %v5644 = vpop.f32.mrf.mxu0
      %v5645 = vpop.f32.mrf.mxu0
      %v5646 = vadd.f32 0.0, %v5645
      %v5647 = vpop.f32.mrf.mxu0
      %5648 = vmatprep.mubr.bf16.mxu0 0
      %5649 = vmatmul.mubr.bf16.gmra.mxu0 %v5499
      %v5650 = vpop.f32.mrf.mxu0
      %v5651 = vadd.f32 0.0, %v5650
      %v5652 = vpop.f32.mrf.mxu0
      %v5653 = vpop.f32.mrf.mxu0
      %v5654 = vadd.f32 0.0, %v5653
      %v5655 = vpop.f32.mrf.mxu0
      %5656 = vmatprep.mubr.bf16.mxu0 0
      %5657 = vmatmul.mubr.bf16.gmra.mxu0 %v5502
      %v5658 = vpop.f32.mrf.mxu0
      %v5659 = vadd.f32 0.0, %v5658
      %v5660 = vpop.f32.mrf.mxu0
      %v5661 = vpop.f32.mrf.mxu0
      %v5662 = vadd.f32 0.0, %v5661
      %v5663 = vpop.f32.mrf.mxu0
      %5664 = vdwg.mxu0
      %v5665 = vadd.f32 %v705, %v5539
      %v5666 = vadd.f32 %v709, %v5542
      %v5667 = vadd.f32 %v715, %v5547
      %v5668 = vadd.f32 %v719, %v5550
      %v5669 = vadd.f32 %v725, %v5555
      %v5670 = vadd.f32 %v729, %v5558
      %v5671 = vadd.f32 %v735, %v5563
      %v5672 = vadd.f32 %v739, %v5566
      %v5673 = vadd.f32 %v745, %v5571
      %v5674 = vadd.f32 %v749, %v5574
      %v5675 = vadd.f32 %v755, %v5579
      %v5676 = vadd.f32 %v759, %v5582
      %v5677 = vadd.f32 %v765, %v5587
      %v5678 = vadd.f32 %v769, %v5590
      %v5679 = vadd.f32 %v775, %v5595
      %v5680 = vadd.f32 %v779, %v5598
      %v5681 = vadd.f32 %v785, %v5603
      %v5682 = vadd.f32 %v789, %v5606
      %v5683 = vadd.f32 %v795, %v5611
      %v5684 = vadd.f32 %v799, %v5614
      %v5685 = vadd.f32 %v805, %v5619
      %v5686 = vadd.f32 %v809, %v5622
      %v5687 = vadd.f32 %v815, %v5627
      %v5688 = vadd.f32 %v819, %v5630
      %v5689 = vadd.f32 %v825, %v5635
      %v5690 = vadd.f32 %v829, %v5638
      %v5691 = vadd.f32 %v835, %v5643
      %v5692 = vadd.f32 %v839, %v5646
      %v5693 = vadd.f32 %v845, %v5651
      %v5694 = vadd.f32 %v849, %v5654
      %v5695 = vadd.f32 %v855, %v5659
      %v5696 = vadd.f32 %v859, %v5662
      %v5697 = vxor.u32 %v5665, 2147483648
      %v5698 = vxor.u32 %v5666, 2147483648
      %v5699 = vxor.u32 %v5667, 2147483648
      %v5700 = vxor.u32 %v5668, 2147483648
      %v5701 = vxor.u32 %v5669, 2147483648
      %v5702 = vxor.u32 %v5670, 2147483648
      %v5703 = vxor.u32 %v5671, 2147483648
      %v5704 = vxor.u32 %v5672, 2147483648
      %v5705 = vxor.u32 %v5673, 2147483648
      %v5706 = vxor.u32 %v5674, 2147483648
      %v5707 = vxor.u32 %v5675, 2147483648
      %v5708 = vxor.u32 %v5676, 2147483648
      %v5709 = vxor.u32 %v5677, 2147483648
      %v5710 = vxor.u32 %v5678, 2147483648
      %v5711 = vxor.u32 %v5679, 2147483648
      %v5712 = vxor.u32 %v5680, 2147483648
      %v5713 = vxor.u32 %v5681, 2147483648
      %v5714 = vxor.u32 %v5682, 2147483648
      %v5715 = vxor.u32 %v5683, 2147483648
      %v5716 = vxor.u32 %v5684, 2147483648
      %v5717 = vxor.u32 %v5685, 2147483648
      %v5718 = vxor.u32 %v5686, 2147483648
      %v5719 = vxor.u32 %v5687, 2147483648
      %v5720 = vxor.u32 %v5688, 2147483648
      %v5721 = vxor.u32 %v5689, 2147483648
      %v5722 = vxor.u32 %v5690, 2147483648
      %v5723 = vxor.u32 %v5691, 2147483648
      %v5724 = vxor.u32 %v5692, 2147483648
      %v5725 = vxor.u32 %v5693, 2147483648
      %v5726 = vxor.u32 %v5694, 2147483648
      %v5727 = vxor.u32 %v5695, 2147483648
      %v5728 = vxor.u32 %v5696, 2147483648
      %v5729 = vmul.f32 %v5697, 1.442695
      %v5730 = vpow.pop %v5729
      %v5731 = vmul.f32 %v5698, 1.442695
      %v5732 = vpow.pop %v5731
      %v5733 = vmul.f32 %v5699, 1.442695
      %v5734 = vpow.pop %v5733
      %v5735 = vmul.f32 %v5700, 1.442695
      %v5736 = vpow.pop %v5735
      %v5737 = vmul.f32 %v5701, 1.442695
      %v5738 = vpow.pop %v5737
      %v5739 = vmul.f32 %v5702, 1.442695
      %v5740 = vpow.pop %v5739
      %v5741 = vmul.f32 %v5703, 1.442695
      %v5742 = vpow.pop %v5741
      %v5743 = vmul.f32 %v5704, 1.442695
      %v5744 = vpow.pop %v5743
      %v5745 = vmul.f32 %v5705, 1.442695
      %v5746 = vpow.pop %v5745
      %v5747 = vmul.f32 %v5706, 1.442695
      %v5748 = vpow.pop %v5747
      %v5749 = vmul.f32 %v5707, 1.442695
      %v5750 = vpow.pop %v5749
      %v5751 = vmul.f32 %v5708, 1.442695
      %v5752 = vpow.pop %v5751
      %v5753 = vmul.f32 %v5709, 1.442695
      %v5754 = vpow.pop %v5753
      %v5755 = vmul.f32 %v5710, 1.442695
      %v5756 = vpow.pop %v5755
      %v5757 = vmul.f32 %v5711, 1.442695
      %v5758 = vpow.pop %v5757
      %v5759 = vmul.f32 %v5712, 1.442695
      %v5760 = vpow.pop %v5759
      %v5761 = vmul.f32 %v5713, 1.442695
      %v5762 = vpow.pop %v5761
      %v5763 = vmul.f32 %v5714, 1.442695
      %v5764 = vpow.pop %v5763
      %v5765 = vmul.f32 %v5715, 1.442695
      %v5766 = vpow.pop %v5765
      %v5767 = vmul.f32 %v5716, 1.442695
      %v5768 = vpow.pop %v5767
      %v5769 = vmul.f32 %v5717, 1.442695
      %v5770 = vpow.pop %v5769
      %v5771 = vmul.f32 %v5718, 1.442695
      %v5772 = vpow.pop %v5771
      %v5773 = vmul.f32 %v5719, 1.442695
      %v5774 = vpow.pop %v5773
      %v5775 = vmul.f32 %v5720, 1.442695
      %v5776 = vpow.pop %v5775
      %v5777 = vmul.f32 %v5721, 1.442695
      %v5778 = vpow.pop %v5777
      %v5779 = vmul.f32 %v5722, 1.442695
      %v5780 = vpow.pop %v5779
      %v5781 = vmul.f32 %v5723, 1.442695
      %v5782 = vpow.pop %v5781
      %v5783 = vmul.f32 %v5724, 1.442695
      %v5784 = vpow.pop %v5783
      %v5785 = vmul.f32 %v5725, 1.442695
      %v5786 = vpow.pop %v5785
      %v5787 = vmul.f32 %v5726, 1.442695
      %v5788 = vpow.pop %v5787
      %v5789 = vmul.f32 %v5727, 1.442695
      %v5790 = vpow.pop %v5789
      %v5791 = vmul.f32 %v5728, 1.442695
      %v5792 = vpow.pop %v5791
      %v5793 = vadd.f32 %v5730, 1.0
      %v5794 = vadd.f32 %v5732, 1.0
      %v5795 = vadd.f32 %v5734, 1.0
      %v5796 = vadd.f32 %v5736, 1.0
      %v5797 = vadd.f32 %v5738, 1.0
      %v5798 = vadd.f32 %v5740, 1.0
      %v5799 = vadd.f32 %v5742, 1.0
      %v5800 = vadd.f32 %v5744, 1.0
      %v5801 = vadd.f32 %v5746, 1.0
      %v5802 = vadd.f32 %v5748, 1.0
      %v5803 = vadd.f32 %v5750, 1.0
      %v5804 = vadd.f32 %v5752, 1.0
      %v5805 = vadd.f32 %v5754, 1.0
      %v5806 = vadd.f32 %v5756, 1.0
      %v5807 = vadd.f32 %v5758, 1.0
      %v5808 = vadd.f32 %v5760, 1.0
      %v5809 = vadd.f32 %v5762, 1.0
      %v5810 = vadd.f32 %v5764, 1.0
      %v5811 = vadd.f32 %v5766, 1.0
      %v5812 = vadd.f32 %v5768, 1.0
      %v5813 = vadd.f32 %v5770, 1.0
      %v5814 = vadd.f32 %v5772, 1.0
      %v5815 = vadd.f32 %v5774, 1.0
      %v5816 = vadd.f32 %v5776, 1.0
      %v5817 = vadd.f32 %v5778, 1.0
      %v5818 = vadd.f32 %v5780, 1.0
      %v5819 = vadd.f32 %v5782, 1.0
      %v5820 = vadd.f32 %v5784, 1.0
      %v5821 = vadd.f32 %v5786, 1.0
      %v5822 = vadd.f32 %v5788, 1.0
      %v5823 = vadd.f32 %v5790, 1.0
      %v5824 = vadd.f32 %v5792, 1.0
      %v5825 = vrcp.pop %v5793
      %v5826 = vmul.f32 1.0, %v5825
      %v5827 = vrcp.pop %v5794
      %v5828 = vmul.f32 1.0, %v5827
      %v5829 = vrcp.pop %v5795
      %v5830 = vmul.f32 1.0, %v5829
      %v5831 = vrcp.pop %v5796
      %v5832 = vmul.f32 1.0, %v5831
      %v5833 = vrcp.pop %v5797
      %v5834 = vmul.f32 1.0, %v5833
      %v5835 = vrcp.pop %v5798
      %v5836 = vmul.f32 1.0, %v5835
      %v5837 = vrcp.pop %v5799
      %v5838 = vmul.f32 1.0, %v5837
      %v5839 = vrcp.pop %v5800
      %v5840 = vmul.f32 1.0, %v5839
      %v5841 = vrcp.pop %v5801
      %v5842 = vmul.f32 1.0, %v5841
      %v5843 = vrcp.pop %v5802
      %v5844 = vmul.f32 1.0, %v5843
      %v5845 = vrcp.pop %v5803
      %v5846 = vmul.f32 1.0, %v5845
      %v5847 = vrcp.pop %v5804
      %v5848 = vmul.f32 1.0, %v5847
      %v5849 = vrcp.pop %v5805
      %v5850 = vmul.f32 1.0, %v5849
      %v5851 = vrcp.pop %v5806
      %v5852 = vmul.f32 1.0, %v5851
      %v5853 = vrcp.pop %v5807
      %v5854 = vmul.f32 1.0, %v5853
      %v5855 = vrcp.pop %v5808
      %v5856 = vmul.f32 1.0, %v5855
      %v5857 = vrcp.pop %v5809
      %v5858 = vmul.f32 1.0, %v5857
      %v5859 = vrcp.pop %v5810
      %v5860 = vmul.f32 1.0, %v5859
      %v5861 = vrcp.pop %v5811
      %v5862 = vmul.f32 1.0, %v5861
      %v5863 = vrcp.pop %v5812
      %v5864 = vmul.f32 1.0, %v5863
      %v5865 = vrcp.pop %v5813
      %v5866 = vmul.f32 1.0, %v5865
      %v5867 = vrcp.pop %v5814
      %v5868 = vmul.f32 1.0, %v5867
      %v5869 = vrcp.pop %v5815
      %v5870 = vmul.f32 1.0, %v5869
      %v5871 = vrcp.pop %v5816
      %v5872 = vmul.f32 1.0, %v5871
      %v5873 = vrcp.pop %v5817
      %v5874 = vmul.f32 1.0, %v5873
      %v5875 = vrcp.pop %v5818
      %v5876 = vmul.f32 1.0, %v5875
      %v5877 = vrcp.pop %v5819
      %v5878 = vmul.f32 1.0, %v5877
      %v5879 = vrcp.pop %v5820
      %v5880 = vmul.f32 1.0, %v5879
      %v5881 = vrcp.pop %v5821
      %v5882 = vmul.f32 1.0, %v5881
      %v5883 = vrcp.pop %v5822
      %v5884 = vmul.f32 1.0, %v5883
      %v5885 = vrcp.pop %v5823
      %v5886 = vmul.f32 1.0, %v5885
      %v5887 = vrcp.pop %v5824
      %v5888 = vmul.f32 1.0, %v5887
      %v5889 = vtanh.pop %v5665
      %v5890 = vtanh.pop %v5666
      %v5891 = vtanh.pop %v5667
      %v5892 = vtanh.pop %v5668
      %v5893 = vtanh.pop %v5669
      %v5894 = vtanh.pop %v5670
      %v5895 = vtanh.pop %v5671
      %v5896 = vtanh.pop %v5672
      %v5897 = vtanh.pop %v5673
      %v5898 = vtanh.pop %v5674
      %v5899 = vtanh.pop %v5675
      %v5900 = vtanh.pop %v5676
      %v5901 = vtanh.pop %v5677
      %v5902 = vtanh.pop %v5678
      %v5903 = vtanh.pop %v5679
      %v5904 = vtanh.pop %v5680
      %v5905 = vtanh.pop %v5681
      %v5906 = vtanh.pop %v5682
      %v5907 = vtanh.pop %v5683
      %v5908 = vtanh.pop %v5684
      %v5909 = vtanh.pop %v5685
      %v5910 = vtanh.pop %v5686
      %v5911 = vtanh.pop %v5687
      %v5912 = vtanh.pop %v5688
      %v5913 = vtanh.pop %v5689
      %v5914 = vtanh.pop %v5690
      %v5915 = vtanh.pop %v5691
      %v5916 = vtanh.pop %v5692
      %v5917 = vtanh.pop %v5693
      %v5918 = vtanh.pop %v5694
      %v5919 = vtanh.pop %v5695
      %v5920 = vtanh.pop %v5696
      %v5921 = vmul.f32 %v5826, %v5392
      %v5922 = vmul.f32 %v5828, %v5393
      %v5923 = vmul.f32 %v5830, %v5394
      %v5924 = vmul.f32 %v5832, %v5395
      %v5925 = vmul.f32 %v5834, %v5396
      %v5926 = vmul.f32 %v5836, %v5397
      %v5927 = vmul.f32 %v5838, %v5398
      %v5928 = vmul.f32 %v5840, %v5399
      %v5929 = vmul.f32 %v5842, %v5400
      %v5930 = vmul.f32 %v5844, %v5401
      %v5931 = vmul.f32 %v5846, %v5402
      %v5932 = vmul.f32 %v5848, %v5403
      %v5933 = vmul.f32 %v5850, %v5404
      %v5934 = vmul.f32 %v5852, %v5405
      %v5935 = vmul.f32 %v5854, %v5406
      %v5936 = vmul.f32 %v5856, %v5407
      %v5937 = vmul.f32 %v5858, %v5408
      %v5938 = vmul.f32 %v5860, %v5409
      %v5939 = vmul.f32 %v5862, %v5410
      %v5940 = vmul.f32 %v5864, %v5411
      %v5941 = vmul.f32 %v5866, %v5412
      %v5942 = vmul.f32 %v5868, %v5413
      %v5943 = vmul.f32 %v5870, %v5414
      %v5944 = vmul.f32 %v5872, %v5415
      %v5945 = vmul.f32 %v5874, %v5416
      %v5946 = vmul.f32 %v5876, %v5417
      %v5947 = vmul.f32 %v5878, %v5418
      %v5948 = vmul.f32 %v5880, %v5419
      %v5949 = vmul.f32 %v5882, %v5420
      %v5950 = vmul.f32 %v5884, %v5421
      %v5951 = vmul.f32 %v5886, %v5422
      %v5952 = vmul.f32 %v5888, %v5423
      %5985 = vrot.lane.b32.xlu0 %v5889, 64
      %v5986 = vpop.permute.xlu0 %5985
      %5987 = vrot.lane.b32.xlu0 %v5890, 64
      %v5988 = vpop.permute.xlu0 %5987
      %5989 = vrot.lane.b32.xlu0 %v5891, 64
      %v5990 = vpop.permute.xlu0 %5989
      %5991 = vrot.lane.b32.xlu0 %v5892, 64
      %v5992 = vpop.permute.xlu0 %5991
      %5993 = vrot.lane.b32.xlu0 %v5893, 64
      %v5994 = vpop.permute.xlu0 %5993
      %5995 = vrot.lane.b32.xlu0 %v5894, 64
      %v5996 = vpop.permute.xlu0 %5995
      %5997 = vrot.lane.b32.xlu0 %v5895, 64
      %v5998 = vpop.permute.xlu0 %5997
      %5999 = vrot.lane.b32.xlu0 %v5896, 64
      %v6000 = vpop.permute.xlu0 %5999
      %6001 = vrot.lane.b32.xlu0 %v5897, 64
      %v6002 = vpop.permute.xlu0 %6001
      %6003 = vrot.lane.b32.xlu0 %v5898, 64
      %v6004 = vpop.permute.xlu0 %6003
      %6005 = vrot.lane.b32.xlu0 %v5899, 64
      %v6006 = vpop.permute.xlu0 %6005
      %6007 = vrot.lane.b32.xlu0 %v5900, 64
      %v6008 = vpop.permute.xlu0 %6007
      %6009 = vrot.lane.b32.xlu0 %v5901, 64
      %v6010 = vpop.permute.xlu0 %6009
      %6011 = vrot.lane.b32.xlu0 %v5902, 64
      %v6012 = vpop.permute.xlu0 %6011
      %6013 = vrot.lane.b32.xlu0 %v5903, 64
      %v6014 = vpop.permute.xlu0 %6013
      %6015 = vrot.lane.b32.xlu0 %v5904, 64
      %v6016 = vpop.permute.xlu0 %6015
      %6017 = vrot.lane.b32.xlu0 %v5905, 64
      %v6018 = vpop.permute.xlu0 %6017
      %6019 = vrot.lane.b32.xlu0 %v5906, 64
      %v6020 = vpop.permute.xlu0 %6019
      %6021 = vrot.lane.b32.xlu0 %v5907, 64
      %v6022 = vpop.permute.xlu0 %6021
      %6023 = vrot.lane.b32.xlu0 %v5908, 64
      %v6024 = vpop.permute.xlu0 %6023
      %6025 = vrot.lane.b32.xlu0 %v5909, 64
      %v6026 = vpop.permute.xlu0 %6025
      %6027 = vrot.lane.b32.xlu0 %v5910, 64
      %v6028 = vpop.permute.xlu0 %6027
      %6029 = vrot.lane.b32.xlu0 %v5911, 64
      %v6030 = vpop.permute.xlu0 %6029
      %6031 = vrot.lane.b32.xlu0 %v5912, 64
      %v6032 = vpop.permute.xlu0 %6031
      %6033 = vrot.lane.b32.xlu0 %v5913, 64
      %v6034 = vpop.permute.xlu0 %6033
      %6035 = vrot.lane.b32.xlu0 %v5914, 64
      %v6036 = vpop.permute.xlu0 %6035
      %6037 = vrot.lane.b32.xlu0 %v5915, 64
      %v6038 = vpop.permute.xlu0 %6037
      %6039 = vrot.lane.b32.xlu0 %v5916, 64
      %v6040 = vpop.permute.xlu0 %6039
      %6041 = vrot.lane.b32.xlu0 %v5917, 64
      %v6042 = vpop.permute.xlu0 %6041
      %6043 = vrot.lane.b32.xlu0 %v5918, 64
      %v6044 = vpop.permute.xlu0 %6043
      %6045 = vrot.lane.b32.xlu0 %v5919, 64
      %v6046 = vpop.permute.xlu0 %6045
      %6047 = vrot.lane.b32.xlu0 %v5920, 64
      %v6048 = vpop.permute.xlu0 %6047
      %v6081 = vmul.f32 %v5826, %v5986
      %v6082 = vmul.f32 %v5828, %v5988
      %v6083 = vmul.f32 %v5830, %v5990
      %v6084 = vmul.f32 %v5832, %v5992
      %v6085 = vmul.f32 %v5834, %v5994
      %v6086 = vmul.f32 %v5836, %v5996
      %v6087 = vmul.f32 %v5838, %v5998
      %v6088 = vmul.f32 %v5840, %v6000
      %v6089 = vmul.f32 %v5842, %v6002
      %v6090 = vmul.f32 %v5844, %v6004
      %v6091 = vmul.f32 %v5846, %v6006
      %v6092 = vmul.f32 %v5848, %v6008
      %v6093 = vmul.f32 %v5850, %v6010
      %v6094 = vmul.f32 %v5852, %v6012
      %v6095 = vmul.f32 %v5854, %v6014
      %v6096 = vmul.f32 %v5856, %v6016
      %v6097 = vmul.f32 %v5858, %v6018
      %v6098 = vmul.f32 %v5860, %v6020
      %v6099 = vmul.f32 %v5862, %v6022
      %v6100 = vmul.f32 %v5864, %v6024
      %v6101 = vmul.f32 %v5866, %v6026
      %v6102 = vmul.f32 %v5868, %v6028
      %v6103 = vmul.f32 %v5870, %v6030
      %v6104 = vmul.f32 %v5872, %v6032
      %v6105 = vmul.f32 %v5874, %v6034
      %v6106 = vmul.f32 %v5876, %v6036
      %v6107 = vmul.f32 %v5878, %v6038
      %v6108 = vmul.f32 %v5880, %v6040
      %v6109 = vmul.f32 %v5882, %v6042
      %v6110 = vmul.f32 %v5884, %v6044
      %v6111 = vmul.f32 %v5886, %v6046
      %v6112 = vmul.f32 %v5888, %v6048
      %6145 = vrot.lane.b32.xlu0 %v6081, 32
      %v6146 = vpop.permute.xlu0 %6145
      %6147 = vrot.lane.b32.xlu0 %v6082, 32
      %v6148 = vpop.permute.xlu0 %6147
      %6149 = vrot.lane.b32.xlu0 %v6083, 32
      %v6150 = vpop.permute.xlu0 %6149
      %6151 = vrot.lane.b32.xlu0 %v6084, 32
      %v6152 = vpop.permute.xlu0 %6151
      %6153 = vrot.lane.b32.xlu0 %v6085, 32
      %v6154 = vpop.permute.xlu0 %6153
      %6155 = vrot.lane.b32.xlu0 %v6086, 32
      %v6156 = vpop.permute.xlu0 %6155
      %6157 = vrot.lane.b32.xlu0 %v6087, 32
      %v6158 = vpop.permute.xlu0 %6157
      %6159 = vrot.lane.b32.xlu0 %v6088, 32
      %v6160 = vpop.permute.xlu0 %6159
      %6161 = vrot.lane.b32.xlu0 %v6089, 32
      %v6162 = vpop.permute.xlu0 %6161
      %6163 = vrot.lane.b32.xlu0 %v6090, 32
      %v6164 = vpop.permute.xlu0 %6163
      %6165 = vrot.lane.b32.xlu0 %v6091, 32
      %v6166 = vpop.permute.xlu0 %6165
      %6167 = vrot.lane.b32.xlu0 %v6092, 32
      %v6168 = vpop.permute.xlu0 %6167
      %6169 = vrot.lane.b32.xlu0 %v6093, 32
      %v6170 = vpop.permute.xlu0 %6169
      %6171 = vrot.lane.b32.xlu0 %v6094, 32
      %v6172 = vpop.permute.xlu0 %6171
      %6173 = vrot.lane.b32.xlu0 %v6095, 32
      %v6174 = vpop.permute.xlu0 %6173
      %6175 = vrot.lane.b32.xlu0 %v6096, 32
      %v6176 = vpop.permute.xlu0 %6175
      %6177 = vrot.lane.b32.xlu0 %v6097, 32
      %v6178 = vpop.permute.xlu0 %6177
      %6179 = vrot.lane.b32.xlu0 %v6098, 32
      %v6180 = vpop.permute.xlu0 %6179
      %6181 = vrot.lane.b32.xlu0 %v6099, 32
      %v6182 = vpop.permute.xlu0 %6181
      %6183 = vrot.lane.b32.xlu0 %v6100, 32
      %v6184 = vpop.permute.xlu0 %6183
      %6185 = vrot.lane.b32.xlu0 %v6101, 32
      %v6186 = vpop.permute.xlu0 %6185
      %6187 = vrot.lane.b32.xlu0 %v6102, 32
      %v6188 = vpop.permute.xlu0 %6187
      %6189 = vrot.lane.b32.xlu0 %v6103, 32
      %v6190 = vpop.permute.xlu0 %6189
      %6191 = vrot.lane.b32.xlu0 %v6104, 32
      %v6192 = vpop.permute.xlu0 %6191
      %6193 = vrot.lane.b32.xlu0 %v6105, 32
      %v6194 = vpop.permute.xlu0 %6193
      %6195 = vrot.lane.b32.xlu0 %v6106, 32
      %v6196 = vpop.permute.xlu0 %6195
      %6197 = vrot.lane.b32.xlu0 %v6107, 32
      %v6198 = vpop.permute.xlu0 %6197
      %6199 = vrot.lane.b32.xlu0 %v6108, 32
      %v6200 = vpop.permute.xlu0 %6199
      %6201 = vrot.lane.b32.xlu0 %v6109, 32
      %v6202 = vpop.permute.xlu0 %6201
      %6203 = vrot.lane.b32.xlu0 %v6110, 32
      %v6204 = vpop.permute.xlu0 %6203
      %6205 = vrot.lane.b32.xlu0 %v6111, 32
      %v6206 = vpop.permute.xlu0 %6205
      %6207 = vrot.lane.b32.xlu0 %v6112, 32
      %v6208 = vpop.permute.xlu0 %6207
      %v6241 = vadd.f32 %v5921, %v6146
      %v6242 = vadd.f32 %v5922, %v6148
      %v6243 = vadd.f32 %v5923, %v6150
      %v6244 = vadd.f32 %v5924, %v6152
      %v6245 = vadd.f32 %v5925, %v6154
      %v6246 = vadd.f32 %v5926, %v6156
      %v6247 = vadd.f32 %v5927, %v6158
      %v6248 = vadd.f32 %v5928, %v6160
      %v6249 = vadd.f32 %v5929, %v6162
      %v6250 = vadd.f32 %v5930, %v6164
      %v6251 = vadd.f32 %v5931, %v6166
      %v6252 = vadd.f32 %v5932, %v6168
      %v6253 = vadd.f32 %v5933, %v6170
      %v6254 = vadd.f32 %v5934, %v6172
      %v6255 = vadd.f32 %v5935, %v6174
      %v6256 = vadd.f32 %v5936, %v6176
      %v6257 = vadd.f32 %v5937, %v6178
      %v6258 = vadd.f32 %v5938, %v6180
      %v6259 = vadd.f32 %v5939, %v6182
      %v6260 = vadd.f32 %v5940, %v6184
      %v6261 = vadd.f32 %v5941, %v6186
      %v6262 = vadd.f32 %v5942, %v6188
      %v6263 = vadd.f32 %v5943, %v6190
      %v6264 = vadd.f32 %v5944, %v6192
      %v6265 = vadd.f32 %v5945, %v6194
      %v6266 = vadd.f32 %v5946, %v6196
      %v6267 = vadd.f32 %v5947, %v6198
      %v6268 = vadd.f32 %v5948, %v6200
      %v6269 = vadd.f32 %v5949, %v6202
      %v6270 = vadd.f32 %v5950, %v6204
      %v6271 = vadd.f32 %v5951, %v6206
      %v6272 = vadd.f32 %v5952, %v6208
      %v6273 = vtanh.pop %v6241
      %v6274 = vtanh.pop %v6242
      %v6275 = vtanh.pop %v6243
      %v6276 = vtanh.pop %v6244
      %v6277 = vtanh.pop %v6245
      %v6278 = vtanh.pop %v6246
      %v6279 = vtanh.pop %v6247
      %v6280 = vtanh.pop %v6248
      %v6281 = vtanh.pop %v6249
      %v6282 = vtanh.pop %v6250
      %v6283 = vtanh.pop %v6251
      %v6284 = vtanh.pop %v6252
      %v6285 = vtanh.pop %v6253
      %v6286 = vtanh.pop %v6254
      %v6287 = vtanh.pop %v6255
      %v6288 = vtanh.pop %v6256
      %v6289 = vtanh.pop %v6257
      %v6290 = vtanh.pop %v6258
      %v6291 = vtanh.pop %v6259
      %v6292 = vtanh.pop %v6260
      %v6293 = vtanh.pop %v6261
      %v6294 = vtanh.pop %v6262
      %v6295 = vtanh.pop %v6263
      %v6296 = vtanh.pop %v6264
      %v6297 = vtanh.pop %v6265
      %v6298 = vtanh.pop %v6266
      %v6299 = vtanh.pop %v6267
      %v6300 = vtanh.pop %v6268
      %v6301 = vtanh.pop %v6269
      %v6302 = vtanh.pop %v6270
      %v6303 = vtanh.pop %v6271
      %v6304 = vtanh.pop %v6272
      %6337 = vrot.lane.b32.xlu0 %v6273, 64
      %v6338 = vpop.permute.xlu0 %6337
      %6339 = vrot.lane.b32.xlu0 %v6274, 64
      %v6340 = vpop.permute.xlu0 %6339
      %6341 = vrot.lane.b32.xlu0 %v6275, 64
      %v6342 = vpop.permute.xlu0 %6341
      %6343 = vrot.lane.b32.xlu0 %v6276, 64
      %v6344 = vpop.permute.xlu0 %6343
      %6345 = vrot.lane.b32.xlu0 %v6277, 64
      %v6346 = vpop.permute.xlu0 %6345
      %6347 = vrot.lane.b32.xlu0 %v6278, 64
      %v6348 = vpop.permute.xlu0 %6347
      %6349 = vrot.lane.b32.xlu0 %v6279, 64
      %v6350 = vpop.permute.xlu0 %6349
      %6351 = vrot.lane.b32.xlu0 %v6280, 64
      %v6352 = vpop.permute.xlu0 %6351
      %6353 = vrot.lane.b32.xlu0 %v6281, 64
      %v6354 = vpop.permute.xlu0 %6353
      %6355 = vrot.lane.b32.xlu0 %v6282, 64
      %v6356 = vpop.permute.xlu0 %6355
      %6357 = vrot.lane.b32.xlu0 %v6283, 64
      %v6358 = vpop.permute.xlu0 %6357
      %6359 = vrot.lane.b32.xlu0 %v6284, 64
      %v6360 = vpop.permute.xlu0 %6359
      %6361 = vrot.lane.b32.xlu0 %v6285, 64
      %v6362 = vpop.permute.xlu0 %6361
      %6363 = vrot.lane.b32.xlu0 %v6286, 64
      %v6364 = vpop.permute.xlu0 %6363
      %6365 = vrot.lane.b32.xlu0 %v6287, 64
      %v6366 = vpop.permute.xlu0 %6365
      %6367 = vrot.lane.b32.xlu0 %v6288, 64
      %v6368 = vpop.permute.xlu0 %6367
      %6369 = vrot.lane.b32.xlu0 %v6289, 64
      %v6370 = vpop.permute.xlu0 %6369
      %6371 = vrot.lane.b32.xlu0 %v6290, 64
      %v6372 = vpop.permute.xlu0 %6371
      %6373 = vrot.lane.b32.xlu0 %v6291, 64
      %v6374 = vpop.permute.xlu0 %6373
      %6375 = vrot.lane.b32.xlu0 %v6292, 64
      %v6376 = vpop.permute.xlu0 %6375
      %6377 = vrot.lane.b32.xlu0 %v6293, 64
      %v6378 = vpop.permute.xlu0 %6377
      %6379 = vrot.lane.b32.xlu0 %v6294, 64
      %v6380 = vpop.permute.xlu0 %6379
      %6381 = vrot.lane.b32.xlu0 %v6295, 64
      %v6382 = vpop.permute.xlu0 %6381
      %6383 = vrot.lane.b32.xlu0 %v6296, 64
      %v6384 = vpop.permute.xlu0 %6383
      %6385 = vrot.lane.b32.xlu0 %v6297, 64
      %v6386 = vpop.permute.xlu0 %6385
      %6387 = vrot.lane.b32.xlu0 %v6298, 64
      %v6388 = vpop.permute.xlu0 %6387
      %6389 = vrot.lane.b32.xlu0 %v6299, 64
      %v6390 = vpop.permute.xlu0 %6389
      %6391 = vrot.lane.b32.xlu0 %v6300, 64
      %v6392 = vpop.permute.xlu0 %6391
      %6393 = vrot.lane.b32.xlu0 %v6301, 64
      %v6394 = vpop.permute.xlu0 %6393
      %6395 = vrot.lane.b32.xlu0 %v6302, 64
      %v6396 = vpop.permute.xlu0 %6395
      %6397 = vrot.lane.b32.xlu0 %v6303, 64
      %v6398 = vpop.permute.xlu0 %6397
      %6399 = vrot.lane.b32.xlu0 %v6304, 64
      %v6400 = vpop.permute.xlu0 %6399
      %v6433 = vmul.f32 %v5826, %v6338
      %v6434 = vmul.f32 %v5828, %v6340
      %v6435 = vmul.f32 %v5830, %v6342
      %v6436 = vmul.f32 %v5832, %v6344
      %v6437 = vmul.f32 %v5834, %v6346
      %v6438 = vmul.f32 %v5836, %v6348
      %v6439 = vmul.f32 %v5838, %v6350
      %v6440 = vmul.f32 %v5840, %v6352
      %v6441 = vmul.f32 %v5842, %v6354
      %v6442 = vmul.f32 %v5844, %v6356
      %v6443 = vmul.f32 %v5846, %v6358
      %v6444 = vmul.f32 %v5848, %v6360
      %v6445 = vmul.f32 %v5850, %v6362
      %v6446 = vmul.f32 %v5852, %v6364
      %v6447 = vmul.f32 %v5854, %v6366
      %v6448 = vmul.f32 %v5856, %v6368
      %v6449 = vmul.f32 %v5858, %v6370
      %v6450 = vmul.f32 %v5860, %v6372
      %v6451 = vmul.f32 %v5862, %v6374
      %v6452 = vmul.f32 %v5864, %v6376
      %v6453 = vmul.f32 %v5866, %v6378
      %v6454 = vmul.f32 %v5868, %v6380
      %v6455 = vmul.f32 %v5870, %v6382
      %v6456 = vmul.f32 %v5872, %v6384
      %v6457 = vmul.f32 %v5874, %v6386
      %v6458 = vmul.f32 %v5876, %v6388
      %v6459 = vmul.f32 %v5878, %v6390
      %v6460 = vmul.f32 %v5880, %v6392
      %v6461 = vmul.f32 %v5882, %v6394
      %v6462 = vmul.f32 %v5884, %v6396
      %v6463 = vmul.f32 %v5886, %v6398
      %v6464 = vmul.f32 %v5888, %v6400
      %6497 = vrot.lane.b32.xlu0 %v6433, 32
      %v6498 = vpop.permute.xlu0 %6497
      %6499 = vrot.lane.b32.xlu0 %v6434, 32
      %v6500 = vpop.permute.xlu0 %6499
      %6501 = vrot.lane.b32.xlu0 %v6435, 32
      %v6502 = vpop.permute.xlu0 %6501
      %6503 = vrot.lane.b32.xlu0 %v6436, 32
      %v6504 = vpop.permute.xlu0 %6503
      %6505 = vrot.lane.b32.xlu0 %v6437, 32
      %v6506 = vpop.permute.xlu0 %6505
      %6507 = vrot.lane.b32.xlu0 %v6438, 32
      %v6508 = vpop.permute.xlu0 %6507
      %6509 = vrot.lane.b32.xlu0 %v6439, 32
      %v6510 = vpop.permute.xlu0 %6509
      %6511 = vrot.lane.b32.xlu0 %v6440, 32
      %v6512 = vpop.permute.xlu0 %6511
      %6513 = vrot.lane.b32.xlu0 %v6441, 32
      %v6514 = vpop.permute.xlu0 %6513
      %6515 = vrot.lane.b32.xlu0 %v6442, 32
      %v6516 = vpop.permute.xlu0 %6515
      %6517 = vrot.lane.b32.xlu0 %v6443, 32
      %v6518 = vpop.permute.xlu0 %6517
      %6519 = vrot.lane.b32.xlu0 %v6444, 32
      %v6520 = vpop.permute.xlu0 %6519
      %6521 = vrot.lane.b32.xlu0 %v6445, 32
      %v6522 = vpop.permute.xlu0 %6521
      %6523 = vrot.lane.b32.xlu0 %v6446, 32
      %v6524 = vpop.permute.xlu0 %6523
      %6525 = vrot.lane.b32.xlu0 %v6447, 32
      %v6526 = vpop.permute.xlu0 %6525
      %6527 = vrot.lane.b32.xlu0 %v6448, 32
      %v6528 = vpop.permute.xlu0 %6527
      %6529 = vrot.lane.b32.xlu0 %v6449, 32
      %v6530 = vpop.permute.xlu0 %6529
      %6531 = vrot.lane.b32.xlu0 %v6450, 32
      %v6532 = vpop.permute.xlu0 %6531
      %6533 = vrot.lane.b32.xlu0 %v6451, 32
      %v6534 = vpop.permute.xlu0 %6533
      %6535 = vrot.lane.b32.xlu0 %v6452, 32
      %v6536 = vpop.permute.xlu0 %6535
      %6537 = vrot.lane.b32.xlu0 %v6453, 32
      %v6538 = vpop.permute.xlu0 %6537
      %6539 = vrot.lane.b32.xlu0 %v6454, 32
      %v6540 = vpop.permute.xlu0 %6539
      %6541 = vrot.lane.b32.xlu0 %v6455, 32
      %v6542 = vpop.permute.xlu0 %6541
      %6543 = vrot.lane.b32.xlu0 %v6456, 32
      %v6544 = vpop.permute.xlu0 %6543
      %6545 = vrot.lane.b32.xlu0 %v6457, 32
      %v6546 = vpop.permute.xlu0 %6545
      %6547 = vrot.lane.b32.xlu0 %v6458, 32
      %v6548 = vpop.permute.xlu0 %6547
      %6549 = vrot.lane.b32.xlu0 %v6459, 32
      %v6550 = vpop.permute.xlu0 %6549
      %6551 = vrot.lane.b32.xlu0 %v6460, 32
      %v6552 = vpop.permute.xlu0 %6551
      %6553 = vrot.lane.b32.xlu0 %v6461, 32
      %v6554 = vpop.permute.xlu0 %6553
      %6555 = vrot.lane.b32.xlu0 %v6462, 32
      %v6556 = vpop.permute.xlu0 %6555
      %6557 = vrot.lane.b32.xlu0 %v6463, 32
      %v6558 = vpop.permute.xlu0 %6557
      %6559 = vrot.lane.b32.xlu0 %v6464, 32
      %v6560 = vpop.permute.xlu0 %6559
      %v6593 = vsel %vm428, %v6498, %v6241
      %v6594 = vsel %vm428, %v6500, %v6242
      %v6595 = vsel %vm428, %v6502, %v6243
      %v6596 = vsel %vm428, %v6504, %v6244
      %v6597 = vsel %vm428, %v6506, %v6245
      %v6598 = vsel %vm428, %v6508, %v6246
      %v6599 = vsel %vm428, %v6510, %v6247
      %v6600 = vsel %vm428, %v6512, %v6248
      %v6601 = vsel %vm428, %v6514, %v6249
      %v6602 = vsel %vm428, %v6516, %v6250
      %v6603 = vsel %vm428, %v6518, %v6251
      %v6604 = vsel %vm428, %v6520, %v6252
      %v6605 = vsel %vm428, %v6522, %v6253
      %v6606 = vsel %vm428, %v6524, %v6254
      %v6607 = vsel %vm428, %v6526, %v6255
      %v6608 = vsel %vm428, %v6528, %v6256
      %v6609 = vsel %vm428, %v6530, %v6257
      %v6610 = vsel %vm428, %v6532, %v6258
      %v6611 = vsel %vm428, %v6534, %v6259
      %v6612 = vsel %vm428, %v6536, %v6260
      %v6613 = vsel %vm428, %v6538, %v6261
      %v6614 = vsel %vm428, %v6540, %v6262
      %v6615 = vsel %vm428, %v6542, %v6263
      %v6616 = vsel %vm428, %v6544, %v6264
      %v6617 = vsel %vm428, %v6546, %v6265
      %v6618 = vsel %vm428, %v6548, %v6266
      %v6619 = vsel %vm428, %v6550, %v6267
      %v6620 = vsel %vm428, %v6552, %v6268
      %v6621 = vsel %vm428, %v6554, %v6269
      %v6622 = vsel %vm428, %v6556, %v6270
      %v6623 = vsel %vm428, %v6558, %v6271
      %v6624 = vsel %vm428, %v6560, %v6272
      %s6625 = scalar_lea.vmem %s6, 8
      %v6626 = vld [vmem:[%s6625] sm:$0x7]
      %v6627 = vand.u32 %v1729, 31
      %vm6628 = vcmp.ne.s32.totalorder %v6627, 0
      %6629 = vrot.lane.b32.xlu0 %v6593, 64
      %v6630 = vpop.permute.xlu0 %6629
      %v6631 = vsel %vm1732, %v6630, %v6593
      %6632 = vrot.lane.b32.xlu0 %v6594, 64
      %v6633 = vpop.permute.xlu0 %6632
      %v6634 = vsel %vm1732, %v6633, %v6594
      %6635 = vrot.lane.b32.xlu0 %v6595, 64
      %v6636 = vpop.permute.xlu0 %6635
      %v6637 = vsel %vm1732, %v6636, %v6595
      %6638 = vrot.lane.b32.xlu0 %v6596, 64
      %v6639 = vpop.permute.xlu0 %6638
      %v6640 = vsel %vm1732, %v6639, %v6596
      %6641 = vrot.lane.b32.xlu0 %v6597, 64
      %v6642 = vpop.permute.xlu0 %6641
      %v6643 = vsel %vm1732, %v6642, %v6597
      %6644 = vrot.lane.b32.xlu0 %v6598, 64
      %v6645 = vpop.permute.xlu0 %6644
      %v6646 = vsel %vm1732, %v6645, %v6598
      %6647 = vrot.lane.b32.xlu0 %v6599, 64
      %v6648 = vpop.permute.xlu0 %6647
      %v6649 = vsel %vm1732, %v6648, %v6599
      %6650 = vrot.lane.b32.xlu0 %v6600, 64
      %v6651 = vpop.permute.xlu0 %6650
      %v6652 = vsel %vm1732, %v6651, %v6600
      %6653 = vrot.lane.b32.xlu0 %v6601, 64
      %v6654 = vpop.permute.xlu0 %6653
      %v6655 = vsel %vm1732, %v6654, %v6601
      %6656 = vrot.lane.b32.xlu0 %v6602, 64
      %v6657 = vpop.permute.xlu0 %6656
      %v6658 = vsel %vm1732, %v6657, %v6602
      %6659 = vrot.lane.b32.xlu0 %v6603, 64
      %v6660 = vpop.permute.xlu0 %6659
      %v6661 = vsel %vm1732, %v6660, %v6603
      %6662 = vrot.lane.b32.xlu0 %v6604, 64
      %v6663 = vpop.permute.xlu0 %6662
      %v6664 = vsel %vm1732, %v6663, %v6604
      %6665 = vrot.lane.b32.xlu0 %v6605, 64
      %v6666 = vpop.permute.xlu0 %6665
      %v6667 = vsel %vm1732, %v6666, %v6605
      %6668 = vrot.lane.b32.xlu0 %v6606, 64
      %v6669 = vpop.permute.xlu0 %6668
      %v6670 = vsel %vm1732, %v6669, %v6606
      %6671 = vrot.lane.b32.xlu0 %v6607, 64
      %v6672 = vpop.permute.xlu0 %6671
      %v6673 = vsel %vm1732, %v6672, %v6607
      %6674 = vrot.lane.b32.xlu0 %v6608, 64
      %v6675 = vpop.permute.xlu0 %6674
      %v6676 = vsel %vm1732, %v6675, %v6608
      %6677 = vrot.lane.b32.xlu0 %v6609, 64
      %v6678 = vpop.permute.xlu0 %6677
      %v6679 = vsel %vm1732, %v6678, %v6609
      %6680 = vrot.lane.b32.xlu0 %v6610, 64
      %v6681 = vpop.permute.xlu0 %6680
      %v6682 = vsel %vm1732, %v6681, %v6610
      %6683 = vrot.lane.b32.xlu0 %v6611, 64
      %v6684 = vpop.permute.xlu0 %6683
      %v6685 = vsel %vm1732, %v6684, %v6611
      %6686 = vrot.lane.b32.xlu0 %v6612, 64
      %v6687 = vpop.permute.xlu0 %6686
      %v6688 = vsel %vm1732, %v6687, %v6612
      %6689 = vrot.lane.b32.xlu0 %v6613, 64
      %v6690 = vpop.permute.xlu0 %6689
      %v6691 = vsel %vm1732, %v6690, %v6613
      %6692 = vrot.lane.b32.xlu0 %v6614, 64
      %v6693 = vpop.permute.xlu0 %6692
      %v6694 = vsel %vm1732, %v6693, %v6614
      %6695 = vrot.lane.b32.xlu0 %v6615, 64
      %v6696 = vpop.permute.xlu0 %6695
      %v6697 = vsel %vm1732, %v6696, %v6615
      %6698 = vrot.lane.b32.xlu0 %v6616, 64
      %v6699 = vpop.permute.xlu0 %6698
      %v6700 = vsel %vm1732, %v6699, %v6616
      %6701 = vrot.lane.b32.xlu0 %v6617, 64
      %v6702 = vpop.permute.xlu0 %6701
      %v6703 = vsel %vm1732, %v6702, %v6617
      %6704 = vrot.lane.b32.xlu0 %v6618, 64
      %v6705 = vpop.permute.xlu0 %6704
      %v6706 = vsel %vm1732, %v6705, %v6618
      %6707 = vrot.lane.b32.xlu0 %v6619, 64
      %v6708 = vpop.permute.xlu0 %6707
      %v6709 = vsel %vm1732, %v6708, %v6619
      %6710 = vrot.lane.b32.xlu0 %v6620, 64
      %v6711 = vpop.permute.xlu0 %6710
      %v6712 = vsel %vm1732, %v6711, %v6620
      %6713 = vrot.lane.b32.xlu0 %v6621, 64
      %v6714 = vpop.permute.xlu0 %6713
      %v6715 = vsel %vm1732, %v6714, %v6621
      %6716 = vrot.lane.b32.xlu0 %v6622, 64
      %v6717 = vpop.permute.xlu0 %6716
      %v6718 = vsel %vm1732, %v6717, %v6622
      %6719 = vrot.lane.b32.xlu0 %v6623, 64
      %v6720 = vpop.permute.xlu0 %6719
      %v6721 = vsel %vm1732, %v6720, %v6623
      %6722 = vrot.lane.b32.xlu0 %v6624, 64
      %v6723 = vpop.permute.xlu0 %6722
      %v6724 = vsel %vm1732, %v6723, %v6624
      %6725 = vrot.lane.b32.xlu0 %v6631, 64
      %v6726 = vpop.permute.xlu0 %6725
      %6727 = vrot.lane.b32.xlu0 %v6634, 64
      %v6728 = vpop.permute.xlu0 %6727
      %6729 = vrot.lane.b32.xlu0 %v6637, 64
      %v6730 = vpop.permute.xlu0 %6729
      %6731 = vrot.lane.b32.xlu0 %v6640, 64
      %v6732 = vpop.permute.xlu0 %6731
      %6733 = vrot.lane.b32.xlu0 %v6643, 64
      %v6734 = vpop.permute.xlu0 %6733
      %6735 = vrot.lane.b32.xlu0 %v6646, 64
      %v6736 = vpop.permute.xlu0 %6735
      %6737 = vrot.lane.b32.xlu0 %v6649, 64
      %v6738 = vpop.permute.xlu0 %6737
      %6739 = vrot.lane.b32.xlu0 %v6652, 64
      %v6740 = vpop.permute.xlu0 %6739
      %6741 = vrot.lane.b32.xlu0 %v6655, 64
      %v6742 = vpop.permute.xlu0 %6741
      %6743 = vrot.lane.b32.xlu0 %v6658, 64
      %v6744 = vpop.permute.xlu0 %6743
      %6745 = vrot.lane.b32.xlu0 %v6661, 64
      %v6746 = vpop.permute.xlu0 %6745
      %6747 = vrot.lane.b32.xlu0 %v6664, 64
      %v6748 = vpop.permute.xlu0 %6747
      %6749 = vrot.lane.b32.xlu0 %v6667, 64
      %v6750 = vpop.permute.xlu0 %6749
      %6751 = vrot.lane.b32.xlu0 %v6670, 64
      %v6752 = vpop.permute.xlu0 %6751
      %6753 = vrot.lane.b32.xlu0 %v6673, 64
      %v6754 = vpop.permute.xlu0 %6753
      %6755 = vrot.lane.b32.xlu0 %v6676, 64
      %v6756 = vpop.permute.xlu0 %6755
      %6757 = vrot.lane.b32.xlu0 %v6679, 64
      %v6758 = vpop.permute.xlu0 %6757
      %6759 = vrot.lane.b32.xlu0 %v6682, 64
      %v6760 = vpop.permute.xlu0 %6759
      %6761 = vrot.lane.b32.xlu0 %v6685, 64
      %v6762 = vpop.permute.xlu0 %6761
      %6763 = vrot.lane.b32.xlu0 %v6688, 64
      %v6764 = vpop.permute.xlu0 %6763
      %6765 = vrot.lane.b32.xlu0 %v6691, 64
      %v6766 = vpop.permute.xlu0 %6765
      %6767 = vrot.lane.b32.xlu0 %v6694, 64
      %v6768 = vpop.permute.xlu0 %6767
      %6769 = vrot.lane.b32.xlu0 %v6697, 64
      %v6770 = vpop.permute.xlu0 %6769
      %6771 = vrot.lane.b32.xlu0 %v6700, 64
      %v6772 = vpop.permute.xlu0 %6771
      %6773 = vrot.lane.b32.xlu0 %v6703, 64
      %v6774 = vpop.permute.xlu0 %6773
      %6775 = vrot.lane.b32.xlu0 %v6706, 64
      %v6776 = vpop.permute.xlu0 %6775
      %6777 = vrot.lane.b32.xlu0 %v6709, 64
      %v6778 = vpop.permute.xlu0 %6777
      %6779 = vrot.lane.b32.xlu0 %v6712, 64
      %v6780 = vpop.permute.xlu0 %6779
      %6781 = vrot.lane.b32.xlu0 %v6715, 64
      %v6782 = vpop.permute.xlu0 %6781
      %6783 = vrot.lane.b32.xlu0 %v6718, 64
      %v6784 = vpop.permute.xlu0 %6783
      %6785 = vrot.lane.b32.xlu0 %v6721, 64
      %v6786 = vpop.permute.xlu0 %6785
      %6787 = vrot.lane.b32.xlu0 %v6724, 64
      %v6788 = vpop.permute.xlu0 %6787
      %v6789 = vsel %vm1732, %v6726, %v6593
      %v6790 = vsel %vm1732, %v6728, %v6594
      %v6791 = vsel %vm1732, %v6730, %v6595
      %v6792 = vsel %vm1732, %v6732, %v6596
      %v6793 = vsel %vm1732, %v6734, %v6597
      %v6794 = vsel %vm1732, %v6736, %v6598
      %v6795 = vsel %vm1732, %v6738, %v6599
      %v6796 = vsel %vm1732, %v6740, %v6600
      %v6797 = vsel %vm1732, %v6742, %v6601
      %v6798 = vsel %vm1732, %v6744, %v6602
      %v6799 = vsel %vm1732, %v6746, %v6603
      %v6800 = vsel %vm1732, %v6748, %v6604
      %v6801 = vsel %vm1732, %v6750, %v6605
      %v6802 = vsel %vm1732, %v6752, %v6606
      %v6803 = vsel %vm1732, %v6754, %v6607
      %v6804 = vsel %vm1732, %v6756, %v6608
      %v6805 = vsel %vm1732, %v6758, %v6609
      %v6806 = vsel %vm1732, %v6760, %v6610
      %v6807 = vsel %vm1732, %v6762, %v6611
      %v6808 = vsel %vm1732, %v6764, %v6612
      %v6809 = vsel %vm1732, %v6766, %v6613
      %v6810 = vsel %vm1732, %v6768, %v6614
      %v6811 = vsel %vm1732, %v6770, %v6615
      %v6812 = vsel %vm1732, %v6772, %v6616
      %v6813 = vsel %vm1732, %v6774, %v6617
      %v6814 = vsel %vm1732, %v6776, %v6618
      %v6815 = vsel %vm1732, %v6778, %v6619
      %v6816 = vsel %vm1732, %v6780, %v6620
      %v6817 = vsel %vm1732, %v6782, %v6621
      %v6818 = vsel %vm1732, %v6784, %v6622
      %v6819 = vsel %vm1732, %v6786, %v6623
      %v6820 = vsel %vm1732, %v6788, %v6624
      %v6821 = vsel %vm6628, 1, 0
      %vm6822 = vcmp.eq.s32.totalorder %v6821, 1
      %6855 = vrot.lane.b32.xlu0 %v6789, 65
      %v6856 = vpop.permute.xlu0 %6855
      %6857 = vrot.lane.b32.xlu0 %v6790, 65
      %v6858 = vpop.permute.xlu0 %6857
      %6859 = vrot.lane.b32.xlu0 %v6791, 65
      %v6860 = vpop.permute.xlu0 %6859
      %6861 = vrot.lane.b32.xlu0 %v6792, 65
      %v6862 = vpop.permute.xlu0 %6861
      %6863 = vrot.lane.b32.xlu0 %v6793, 65
      %v6864 = vpop.permute.xlu0 %6863
      %6865 = vrot.lane.b32.xlu0 %v6794, 65
      %v6866 = vpop.permute.xlu0 %6865
      %6867 = vrot.lane.b32.xlu0 %v6795, 65
      %v6868 = vpop.permute.xlu0 %6867
      %6869 = vrot.lane.b32.xlu0 %v6796, 65
      %v6870 = vpop.permute.xlu0 %6869
      %6871 = vrot.lane.b32.xlu0 %v6797, 65
      %v6872 = vpop.permute.xlu0 %6871
      %6873 = vrot.lane.b32.xlu0 %v6798, 65
      %v6874 = vpop.permute.xlu0 %6873
      %6875 = vrot.lane.b32.xlu0 %v6799, 65
      %v6876 = vpop.permute.xlu0 %6875
      %6877 = vrot.lane.b32.xlu0 %v6800, 65
      %v6878 = vpop.permute.xlu0 %6877
      %6879 = vrot.lane.b32.xlu0 %v6801, 65
      %v6880 = vpop.permute.xlu0 %6879
      %6881 = vrot.lane.b32.xlu0 %v6802, 65
      %v6882 = vpop.permute.xlu0 %6881
      %6883 = vrot.lane.b32.xlu0 %v6803, 65
      %v6884 = vpop.permute.xlu0 %6883
      %6885 = vrot.lane.b32.xlu0 %v6804, 65
      %v6886 = vpop.permute.xlu0 %6885
      %6887 = vrot.lane.b32.xlu0 %v6805, 65
      %v6888 = vpop.permute.xlu0 %6887
      %6889 = vrot.lane.b32.xlu0 %v6806, 65
      %v6890 = vpop.permute.xlu0 %6889
      %6891 = vrot.lane.b32.xlu0 %v6807, 65
      %v6892 = vpop.permute.xlu0 %6891
      %6893 = vrot.lane.b32.xlu0 %v6808, 65
      %v6894 = vpop.permute.xlu0 %6893
      %6895 = vrot.lane.b32.xlu0 %v6809, 65
      %v6896 = vpop.permute.xlu0 %6895
      %6897 = vrot.lane.b32.xlu0 %v6810, 65
      %v6898 = vpop.permute.xlu0 %6897
      %6899 = vrot.lane.b32.xlu0 %v6811, 65
      %v6900 = vpop.permute.xlu0 %6899
      %6901 = vrot.lane.b32.xlu0 %v6812, 65
      %v6902 = vpop.permute.xlu0 %6901
      %6903 = vrot.lane.b32.xlu0 %v6813, 65
      %v6904 = vpop.permute.xlu0 %6903
      %6905 = vrot.lane.b32.xlu0 %v6814, 65
      %v6906 = vpop.permute.xlu0 %6905
      %6907 = vrot.lane.b32.xlu0 %v6815, 65
      %v6908 = vpop.permute.xlu0 %6907
      %6909 = vrot.lane.b32.xlu0 %v6816, 65
      %v6910 = vpop.permute.xlu0 %6909
      %6911 = vrot.lane.b32.xlu0 %v6817, 65
      %v6912 = vpop.permute.xlu0 %6911
      %6913 = vrot.lane.b32.xlu0 %v6818, 65
      %v6914 = vpop.permute.xlu0 %6913
      %6915 = vrot.lane.b32.xlu0 %v6819, 65
      %v6916 = vpop.permute.xlu0 %6915
      %6917 = vrot.lane.b32.xlu0 %v6820, 65
      %v6918 = vpop.permute.xlu0 %6917
      %v6951 = vsel %vm6822, %v6856, 0.0
      %v6952 = vsel %vm6822, %v6858, 0.0
      %v6953 = vsel %vm6822, %v6860, 0.0
      %v6954 = vsel %vm6822, %v6862, 0.0
      %v6955 = vsel %vm6822, %v6864, 0.0
      %v6956 = vsel %vm6822, %v6866, 0.0
      %v6957 = vsel %vm6822, %v6868, 0.0
      %v6958 = vsel %vm6822, %v6870, 0.0
      %v6959 = vsel %vm6822, %v6872, 0.0
      %v6960 = vsel %vm6822, %v6874, 0.0
      %v6961 = vsel %vm6822, %v6876, 0.0
      %v6962 = vsel %vm6822, %v6878, 0.0
      %v6963 = vsel %vm6822, %v6880, 0.0
      %v6964 = vsel %vm6822, %v6882, 0.0
      %v6965 = vsel %vm6822, %v6884, 0.0
      %v6966 = vsel %vm6822, %v6886, 0.0
      %v6967 = vsel %vm6822, %v6888, 0.0
      %v6968 = vsel %vm6822, %v6890, 0.0
      %v6969 = vsel %vm6822, %v6892, 0.0
      %v6970 = vsel %vm6822, %v6894, 0.0
      %v6971 = vsel %vm6822, %v6896, 0.0
      %v6972 = vsel %vm6822, %v6898, 0.0
      %v6973 = vsel %vm6822, %v6900, 0.0
      %v6974 = vsel %vm6822, %v6902, 0.0
      %v6975 = vsel %vm6822, %v6904, 0.0
      %v6976 = vsel %vm6822, %v6906, 0.0
      %v6977 = vsel %vm6822, %v6908, 0.0
      %v6978 = vsel %vm6822, %v6910, 0.0
      %v6979 = vsel %vm6822, %v6912, 0.0
      %v6980 = vsel %vm6822, %v6914, 0.0
      %v6981 = vsel %vm6822, %v6916, 0.0
      %v6982 = vsel %vm6822, %v6918, 0.0
      %vm6983 = vcmp.ne.s32.totalorder %v6627, 31
      %v6984 = vsel %vm6983, 1, 0
      %vm6985 = vcmp.eq.s32.totalorder %v6984, 1
      %6986 = vrot.lane.b32.xlu0 %v6789, 127
      %v6987 = vpop.permute.xlu0 %6986
      %6988 = vrot.lane.b32.xlu0 %v6790, 127
      %v6989 = vpop.permute.xlu0 %6988
      %6990 = vrot.lane.b32.xlu0 %v6791, 127
      %v6991 = vpop.permute.xlu0 %6990
      %6992 = vrot.lane.b32.xlu0 %v6792, 127
      %v6993 = vpop.permute.xlu0 %6992
      %6994 = vrot.lane.b32.xlu0 %v6793, 127
      %v6995 = vpop.permute.xlu0 %6994
      %6996 = vrot.lane.b32.xlu0 %v6794, 127
      %v6997 = vpop.permute.xlu0 %6996
      %6998 = vrot.lane.b32.xlu0 %v6795, 127
      %v6999 = vpop.permute.xlu0 %6998
      %7000 = vrot.lane.b32.xlu0 %v6796, 127
      %v7001 = vpop.permute.xlu0 %7000
      %7002 = vrot.lane.b32.xlu0 %v6797, 127
      %v7003 = vpop.permute.xlu0 %7002
      %7004 = vrot.lane.b32.xlu0 %v6798, 127
      %v7005 = vpop.permute.xlu0 %7004
      %7006 = vrot.lane.b32.xlu0 %v6799, 127
      %v7007 = vpop.permute.xlu0 %7006
      %7008 = vrot.lane.b32.xlu0 %v6800, 127
      %v7009 = vpop.permute.xlu0 %7008
      %7010 = vrot.lane.b32.xlu0 %v6801, 127
      %v7011 = vpop.permute.xlu0 %7010
      %7012 = vrot.lane.b32.xlu0 %v6802, 127
      %v7013 = vpop.permute.xlu0 %7012
      %7014 = vrot.lane.b32.xlu0 %v6803, 127
      %v7015 = vpop.permute.xlu0 %7014
      %7016 = vrot.lane.b32.xlu0 %v6804, 127
      %v7017 = vpop.permute.xlu0 %7016
      %7018 = vrot.lane.b32.xlu0 %v6805, 127
      %v7019 = vpop.permute.xlu0 %7018
      %7020 = vrot.lane.b32.xlu0 %v6806, 127
      %v7021 = vpop.permute.xlu0 %7020
      %7022 = vrot.lane.b32.xlu0 %v6807, 127
      %v7023 = vpop.permute.xlu0 %7022
      %7024 = vrot.lane.b32.xlu0 %v6808, 127
      %v7025 = vpop.permute.xlu0 %7024
      %7026 = vrot.lane.b32.xlu0 %v6809, 127
      %v7027 = vpop.permute.xlu0 %7026
      %7028 = vrot.lane.b32.xlu0 %v6810, 127
      %v7029 = vpop.permute.xlu0 %7028
      %7030 = vrot.lane.b32.xlu0 %v6811, 127
      %v7031 = vpop.permute.xlu0 %7030
      %7032 = vrot.lane.b32.xlu0 %v6812, 127
      %v7033 = vpop.permute.xlu0 %7032
      %7034 = vrot.lane.b32.xlu0 %v6813, 127
      %v7035 = vpop.permute.xlu0 %7034
      %7036 = vrot.lane.b32.xlu0 %v6814, 127
      %v7037 = vpop.permute.xlu0 %7036
      %7038 = vrot.lane.b32.xlu0 %v6815, 127
      %v7039 = vpop.permute.xlu0 %7038
      %7040 = vrot.lane.b32.xlu0 %v6816, 127
      %v7041 = vpop.permute.xlu0 %7040
      %7042 = vrot.lane.b32.xlu0 %v6817, 127
      %v7043 = vpop.permute.xlu0 %7042
      %7044 = vrot.lane.b32.xlu0 %v6818, 127
      %v7045 = vpop.permute.xlu0 %7044
      %7046 = vrot.lane.b32.xlu0 %v6819, 127
      %v7047 = vpop.permute.xlu0 %7046
      %7048 = vrot.lane.b32.xlu0 %v6820, 127
      %v7049 = vpop.permute.xlu0 %7048
      %v7082 = vsel %vm6985, %v6987, 0.0
      %v7083 = vsel %vm6985, %v6989, 0.0
      %v7084 = vsel %vm6985, %v6991, 0.0
      %v7085 = vsel %vm6985, %v6993, 0.0
      %v7086 = vsel %vm6985, %v6995, 0.0
      %v7087 = vsel %vm6985, %v6997, 0.0
      %v7088 = vsel %vm6985, %v6999, 0.0
      %v7089 = vsel %vm6985, %v7001, 0.0
      %v7090 = vsel %vm6985, %v7003, 0.0
      %v7091 = vsel %vm6985, %v7005, 0.0
      %v7092 = vsel %vm6985, %v7007, 0.0
      %v7093 = vsel %vm6985, %v7009, 0.0
      %v7094 = vsel %vm6985, %v7011, 0.0
      %v7095 = vsel %vm6985, %v7013, 0.0
      %v7096 = vsel %vm6985, %v7015, 0.0
      %v7097 = vsel %vm6985, %v7017, 0.0
      %v7098 = vsel %vm6985, %v7019, 0.0
      %v7099 = vsel %vm6985, %v7021, 0.0
      %v7100 = vsel %vm6985, %v7023, 0.0
      %v7101 = vsel %vm6985, %v7025, 0.0
      %v7102 = vsel %vm6985, %v7027, 0.0
      %v7103 = vsel %vm6985, %v7029, 0.0
      %v7104 = vsel %vm6985, %v7031, 0.0
      %v7105 = vsel %vm6985, %v7033, 0.0
      %v7106 = vsel %vm6985, %v7035, 0.0
      %v7107 = vsel %vm6985, %v7037, 0.0
      %v7108 = vsel %vm6985, %v7039, 0.0
      %v7109 = vsel %vm6985, %v7041, 0.0
      %v7110 = vsel %vm6985, %v7043, 0.0
      %v7111 = vsel %vm6985, %v7045, 0.0
      %v7112 = vsel %vm6985, %v7047, 0.0
      %v7113 = vsel %vm6985, %v7049, 0.0
      %v7114 = vlaneseq
      %v7115 = vshrl.u32 %v7114, 7
      %v7116 = vsub.s32 1, %v7115
      %v7117 = vrot.slane %v6626, %v7116
      %v7118 = vmul.f32 %v7117, %v6593
      %v7119 = vmul.f32 %v7117, %v6594
      %v7120 = vmul.f32 %v7117, %v6595
      %v7121 = vmul.f32 %v7117, %v6596
      %v7122 = vmul.f32 %v7117, %v6597
      %v7123 = vmul.f32 %v7117, %v6598
      %v7124 = vmul.f32 %v7117, %v6599
      %v7125 = vmul.f32 %v7117, %v6600
      %v7126 = vmul.f32 %v7117, %v6601
      %v7127 = vmul.f32 %v7117, %v6602
      %v7128 = vmul.f32 %v7117, %v6603
      %v7129 = vmul.f32 %v7117, %v6604
      %v7130 = vmul.f32 %v7117, %v6605
      %v7131 = vmul.f32 %v7117, %v6606
      %v7132 = vmul.f32 %v7117, %v6607
      %v7133 = vmul.f32 %v7117, %v6608
      %v7134 = vmul.f32 %v7117, %v6609
      %v7135 = vmul.f32 %v7117, %v6610
      %v7136 = vmul.f32 %v7117, %v6611
      %v7137 = vmul.f32 %v7117, %v6612
      %v7138 = vmul.f32 %v7117, %v6613
      %v7139 = vmul.f32 %v7117, %v6614
      %v7140 = vmul.f32 %v7117, %v6615
      %v7141 = vmul.f32 %v7117, %v6616
      %v7142 = vmul.f32 %v7117, %v6617
      %v7143 = vmul.f32 %v7117, %v6618
      %v7144 = vmul.f32 %v7117, %v6619
      %v7145 = vmul.f32 %v7117, %v6620
      %v7146 = vmul.f32 %v7117, %v6621
      %v7147 = vmul.f32 %v7117, %v6622
      %v7148 = vmul.f32 %v7117, %v6623
      %v7149 = vmul.f32 %v7117, %v6624
      %v7150 = vlaneseq
      %v7151 = vshrl.u32 %v7150, 7
      %v7152 = vsub.s32 0, %v7151
      %v7153 = vrot.slane %v6626, %v7152
      %v7154 = vmul.f32 %v7153, %v6951
      %v7155 = vmul.f32 %v7153, %v6952
      %v7156 = vmul.f32 %v7153, %v6953
      %v7157 = vmul.f32 %v7153, %v6954
      %v7158 = vmul.f32 %v7153, %v6955
      %v7159 = vmul.f32 %v7153, %v6956
      %v7160 = vmul.f32 %v7153, %v6957
      %v7161 = vmul.f32 %v7153, %v6958
      %v7162 = vmul.f32 %v7153, %v6959
      %v7163 = vmul.f32 %v7153, %v6960
      %v7164 = vmul.f32 %v7153, %v6961
      %v7165 = vmul.f32 %v7153, %v6962
      %v7166 = vmul.f32 %v7153, %v6963
      %v7167 = vmul.f32 %v7153, %v6964
      %v7168 = vmul.f32 %v7153, %v6965
      %v7169 = vmul.f32 %v7153, %v6966
      %v7170 = vmul.f32 %v7153, %v6967
      %v7171 = vmul.f32 %v7153, %v6968
      %v7172 = vmul.f32 %v7153, %v6969
      %v7173 = vmul.f32 %v7153, %v6970
      %v7174 = vmul.f32 %v7153, %v6971
      %v7175 = vmul.f32 %v7153, %v6972
      %v7176 = vmul.f32 %v7153, %v6973
      %v7177 = vmul.f32 %v7153, %v6974
      %v7178 = vmul.f32 %v7153, %v6975
      %v7179 = vmul.f32 %v7153, %v6976
      %v7180 = vmul.f32 %v7153, %v6977
      %v7181 = vmul.f32 %v7153, %v6978
      %v7182 = vmul.f32 %v7153, %v6979
      %v7183 = vmul.f32 %v7153, %v6980
      %v7184 = vmul.f32 %v7153, %v6981
      %v7185 = vmul.f32 %v7153, %v6982
      %v7186 = vadd.f32 %v7118, %v7154
      %v7187 = vadd.f32 %v7119, %v7155
      %v7188 = vadd.f32 %v7120, %v7156
      %v7189 = vadd.f32 %v7121, %v7157
      %v7190 = vadd.f32 %v7122, %v7158
      %v7191 = vadd.f32 %v7123, %v7159
      %v7192 = vadd.f32 %v7124, %v7160
      %v7193 = vadd.f32 %v7125, %v7161
      %v7194 = vadd.f32 %v7126, %v7162
      %v7195 = vadd.f32 %v7127, %v7163
      %v7196 = vadd.f32 %v7128, %v7164
      %v7197 = vadd.f32 %v7129, %v7165
      %v7198 = vadd.f32 %v7130, %v7166
      %v7199 = vadd.f32 %v7131, %v7167
      %v7200 = vadd.f32 %v7132, %v7168
      %v7201 = vadd.f32 %v7133, %v7169
      %v7202 = vadd.f32 %v7134, %v7170
      %v7203 = vadd.f32 %v7135, %v7171
      %v7204 = vadd.f32 %v7136, %v7172
      %v7205 = vadd.f32 %v7137, %v7173
      %v7206 = vadd.f32 %v7138, %v7174
      %v7207 = vadd.f32 %v7139, %v7175
      %v7208 = vadd.f32 %v7140, %v7176
      %v7209 = vadd.f32 %v7141, %v7177
      %v7210 = vadd.f32 %v7142, %v7178
      %v7211 = vadd.f32 %v7143, %v7179
      %v7212 = vadd.f32 %v7144, %v7180
      %v7213 = vadd.f32 %v7145, %v7181
      %v7214 = vadd.f32 %v7146, %v7182
      %v7215 = vadd.f32 %v7147, %v7183
      %v7216 = vadd.f32 %v7148, %v7184
      %v7217 = vadd.f32 %v7149, %v7185
      %v7218 = vlaneseq
      %v7219 = vshrl.u32 %v7218, 7
      %v7220 = vsub.s32 2, %v7219
      %v7221 = vrot.slane %v6626, %v7220
      %v7222 = vmul.f32 %v7221, %v7082
      %v7223 = vmul.f32 %v7221, %v7083
      %v7224 = vmul.f32 %v7221, %v7084
      %v7225 = vmul.f32 %v7221, %v7085
      %v7226 = vmul.f32 %v7221, %v7086
      %v7227 = vmul.f32 %v7221, %v7087
      %v7228 = vmul.f32 %v7221, %v7088
      %v7229 = vmul.f32 %v7221, %v7089
      %v7230 = vmul.f32 %v7221, %v7090
      %v7231 = vmul.f32 %v7221, %v7091
      %v7232 = vmul.f32 %v7221, %v7092
      %v7233 = vmul.f32 %v7221, %v7093
      %v7234 = vmul.f32 %v7221, %v7094
      %v7235 = vmul.f32 %v7221, %v7095
      %v7236 = vmul.f32 %v7221, %v7096
      %v7237 = vmul.f32 %v7221, %v7097
      %v7238 = vmul.f32 %v7221, %v7098
      %v7239 = vmul.f32 %v7221, %v7099
      %v7240 = vmul.f32 %v7221, %v7100
      %v7241 = vmul.f32 %v7221, %v7101
      %v7242 = vmul.f32 %v7221, %v7102
      %v7243 = vmul.f32 %v7221, %v7103
      %v7244 = vmul.f32 %v7221, %v7104
      %v7245 = vmul.f32 %v7221, %v7105
      %v7246 = vmul.f32 %v7221, %v7106
      %v7247 = vmul.f32 %v7221, %v7107
      %v7248 = vmul.f32 %v7221, %v7108
      %v7249 = vmul.f32 %v7221, %v7109
      %v7250 = vmul.f32 %v7221, %v7110
      %v7251 = vmul.f32 %v7221, %v7111
      %v7252 = vmul.f32 %v7221, %v7112
      %v7253 = vmul.f32 %v7221, %v7113
      %v7254 = vadd.f32 %v7186, %v7222
      %v7255 = vadd.f32 %v7187, %v7223
      %v7256 = vadd.f32 %v7188, %v7224
      %v7257 = vadd.f32 %v7189, %v7225
      %v7258 = vadd.f32 %v7190, %v7226
      %v7259 = vadd.f32 %v7191, %v7227
      %v7260 = vadd.f32 %v7192, %v7228
      %v7261 = vadd.f32 %v7193, %v7229
      %v7262 = vadd.f32 %v7194, %v7230
      %v7263 = vadd.f32 %v7195, %v7231
      %v7264 = vadd.f32 %v7196, %v7232
      %v7265 = vadd.f32 %v7197, %v7233
      %v7266 = vadd.f32 %v7198, %v7234
      %v7267 = vadd.f32 %v7199, %v7235
      %v7268 = vadd.f32 %v7200, %v7236
      %v7269 = vadd.f32 %v7201, %v7237
      %v7270 = vadd.f32 %v7202, %v7238
      %v7271 = vadd.f32 %v7203, %v7239
      %v7272 = vadd.f32 %v7204, %v7240
      %v7273 = vadd.f32 %v7205, %v7241
      %v7274 = vadd.f32 %v7206, %v7242
      %v7275 = vadd.f32 %v7207, %v7243
      %v7276 = vadd.f32 %v7208, %v7244
      %v7277 = vadd.f32 %v7209, %v7245
      %v7278 = vadd.f32 %v7210, %v7246
      %v7279 = vadd.f32 %v7211, %v7247
      %v7280 = vadd.f32 %v7212, %v7248
      %v7281 = vadd.f32 %v7213, %v7249
      %v7282 = vadd.f32 %v7214, %v7250
      %v7283 = vadd.f32 %v7215, %v7251
      %v7284 = vadd.f32 %v7216, %v7252
      %v7285 = vadd.f32 %v7217, %v7253
      %v7286 = vsel %vm2390, %v7254, -inf
      %7287 = vmax.xlane.f32.xlu0 %v7286
      %v7288 = vpop.xlane.xlu0 %7287
      %v7289 = vsel %vm2390, %v7255, -inf
      %7290 = vmax.xlane.f32.xlu0 %v7289
      %v7291 = vpop.xlane.xlu0 %7290
      %v7292 = vsel %vm2390, %v7256, -inf
      %7293 = vmax.xlane.f32.xlu0 %v7292
      %v7294 = vpop.xlane.xlu0 %7293
      %v7295 = vsel %vm2390, %v7257, -inf
      %7296 = vmax.xlane.f32.xlu0 %v7295
      %v7297 = vpop.xlane.xlu0 %7296
      %v7298 = vsel %vm2390, %v7258, -inf
      %7299 = vmax.xlane.f32.xlu0 %v7298
      %v7300 = vpop.xlane.xlu0 %7299
      %v7301 = vsel %vm2390, %v7259, -inf
      %7302 = vmax.xlane.f32.xlu0 %v7301
      %v7303 = vpop.xlane.xlu0 %7302
      %v7304 = vsel %vm2390, %v7260, -inf
      %7305 = vmax.xlane.f32.xlu0 %v7304
      %v7306 = vpop.xlane.xlu0 %7305
      %v7307 = vsel %vm2390, %v7261, -inf
      %7308 = vmax.xlane.f32.xlu0 %v7307
      %v7309 = vpop.xlane.xlu0 %7308
      %v7310 = vsel %vm2390, %v7262, -inf
      %7311 = vmax.xlane.f32.xlu0 %v7310
      %v7312 = vpop.xlane.xlu0 %7311
      %v7313 = vsel %vm2390, %v7263, -inf
      %7314 = vmax.xlane.f32.xlu0 %v7313
      %v7315 = vpop.xlane.xlu0 %7314
      %v7316 = vsel %vm2390, %v7264, -inf
      %7317 = vmax.xlane.f32.xlu0 %v7316
      %v7318 = vpop.xlane.xlu0 %7317
      %v7319 = vsel %vm2390, %v7265, -inf
      %7320 = vmax.xlane.f32.xlu0 %v7319
      %v7321 = vpop.xlane.xlu0 %7320
      %v7322 = vsel %vm2390, %v7266, -inf
      %7323 = vmax.xlane.f32.xlu0 %v7322
      %v7324 = vpop.xlane.xlu0 %7323
      %v7325 = vsel %vm2390, %v7267, -inf
      %7326 = vmax.xlane.f32.xlu0 %v7325
      %v7327 = vpop.xlane.xlu0 %7326
      %v7328 = vsel %vm2390, %v7268, -inf
      %7329 = vmax.xlane.f32.xlu0 %v7328
      %v7330 = vpop.xlane.xlu0 %7329
      %v7331 = vsel %vm2390, %v7269, -inf
      %7332 = vmax.xlane.f32.xlu0 %v7331
      %v7333 = vpop.xlane.xlu0 %7332
      %v7334 = vsel %vm2390, %v7270, -inf
      %7335 = vmax.xlane.f32.xlu0 %v7334
      %v7336 = vpop.xlane.xlu0 %7335
      %v7337 = vsel %vm2390, %v7271, -inf
      %7338 = vmax.xlane.f32.xlu0 %v7337
      %v7339 = vpop.xlane.xlu0 %7338
      %v7340 = vsel %vm2390, %v7272, -inf
      %7341 = vmax.xlane.f32.xlu0 %v7340
      %v7342 = vpop.xlane.xlu0 %7341
      %v7343 = vsel %vm2390, %v7273, -inf
      %7344 = vmax.xlane.f32.xlu0 %v7343
      %v7345 = vpop.xlane.xlu0 %7344
      %v7346 = vsel %vm2390, %v7274, -inf
      %7347 = vmax.xlane.f32.xlu0 %v7346
      %v7348 = vpop.xlane.xlu0 %7347
      %v7349 = vsel %vm2390, %v7275, -inf
      %7350 = vmax.xlane.f32.xlu0 %v7349
      %v7351 = vpop.xlane.xlu0 %7350
      %v7352 = vsel %vm2390, %v7276, -inf
      %7353 = vmax.xlane.f32.xlu0 %v7352
      %v7354 = vpop.xlane.xlu0 %7353
      %v7355 = vsel %vm2390, %v7277, -inf
      %7356 = vmax.xlane.f32.xlu0 %v7355
      %v7357 = vpop.xlane.xlu0 %7356
      %v7358 = vsel %vm2390, %v7278, -inf
      %7359 = vmax.xlane.f32.xlu0 %v7358
      %v7360 = vpop.xlane.xlu0 %7359
      %v7361 = vsel %vm2390, %v7279, -inf
      %7362 = vmax.xlane.f32.xlu0 %v7361
      %v7363 = vpop.xlane.xlu0 %7362
      %v7364 = vsel %vm2390, %v7280, -inf
      %7365 = vmax.xlane.f32.xlu0 %v7364
      %v7366 = vpop.xlane.xlu0 %7365
      %v7367 = vsel %vm2390, %v7281, -inf
      %7368 = vmax.xlane.f32.xlu0 %v7367
      %v7369 = vpop.xlane.xlu0 %7368
      %v7370 = vsel %vm2390, %v7282, -inf
      %7371 = vmax.xlane.f32.xlu0 %v7370
      %v7372 = vpop.xlane.xlu0 %7371
      %v7373 = vsel %vm2390, %v7283, -inf
      %7374 = vmax.xlane.f32.xlu0 %v7373
      %v7375 = vpop.xlane.xlu0 %7374
      %v7376 = vsel %vm2390, %v7284, -inf
      %7377 = vmax.xlane.f32.xlu0 %v7376
      %v7378 = vpop.xlane.xlu0 %7377
      %v7379 = vsel %vm2390, %v7285, -inf
      %7380 = vmax.xlane.f32.xlu0 %v7379
      %v7381 = vpop.xlane.xlu0 %7380
      %v7382 = vsub.f32 %v7254, %v7288
      %v7383 = vsub.f32 %v7255, %v7291
      %v7384 = vsub.f32 %v7256, %v7294
      %v7385 = vsub.f32 %v7257, %v7297
      %v7386 = vsub.f32 %v7258, %v7300
      %v7387 = vsub.f32 %v7259, %v7303
      %v7388 = vsub.f32 %v7260, %v7306
      %v7389 = vsub.f32 %v7261, %v7309
      %v7390 = vsub.f32 %v7262, %v7312
      %v7391 = vsub.f32 %v7263, %v7315
      %v7392 = vsub.f32 %v7264, %v7318
      %v7393 = vsub.f32 %v7265, %v7321
      %v7394 = vsub.f32 %v7266, %v7324
      %v7395 = vsub.f32 %v7267, %v7327
      %v7396 = vsub.f32 %v7268, %v7330
      %v7397 = vsub.f32 %v7269, %v7333
      %v7398 = vsub.f32 %v7270, %v7336
      %v7399 = vsub.f32 %v7271, %v7339
      %v7400 = vsub.f32 %v7272, %v7342
      %v7401 = vsub.f32 %v7273, %v7345
      %v7402 = vsub.f32 %v7274, %v7348
      %v7403 = vsub.f32 %v7275, %v7351
      %v7404 = vsub.f32 %v7276, %v7354
      %v7405 = vsub.f32 %v7277, %v7357
      %v7406 = vsub.f32 %v7278, %v7360
      %v7407 = vsub.f32 %v7279, %v7363
      %v7408 = vsub.f32 %v7280, %v7366
      %v7409 = vsub.f32 %v7281, %v7369
      %v7410 = vsub.f32 %v7282, %v7372
      %v7411 = vsub.f32 %v7283, %v7375
      %v7412 = vsub.f32 %v7284, %v7378
      %v7413 = vsub.f32 %v7285, %v7381
      %v7414 = vmul.f32 %v7382, 1.442695
      %v7415 = vpow.pop %v7414
      %v7416 = vmul.f32 %v7383, 1.442695
      %v7417 = vpow.pop %v7416
      %v7418 = vmul.f32 %v7384, 1.442695
      %v7419 = vpow.pop %v7418
      %v7420 = vmul.f32 %v7385, 1.442695
      %v7421 = vpow.pop %v7420
      %v7422 = vmul.f32 %v7386, 1.442695
      %v7423 = vpow.pop %v7422
      %v7424 = vmul.f32 %v7387, 1.442695
      %v7425 = vpow.pop %v7424
      %v7426 = vmul.f32 %v7388, 1.442695
      %v7427 = vpow.pop %v7426
      %v7428 = vmul.f32 %v7389, 1.442695
      %v7429 = vpow.pop %v7428
      %v7430 = vmul.f32 %v7390, 1.442695
      %v7431 = vpow.pop %v7430
      %v7432 = vmul.f32 %v7391, 1.442695
      %v7433 = vpow.pop %v7432
      %v7434 = vmul.f32 %v7392, 1.442695
      %v7435 = vpow.pop %v7434
      %v7436 = vmul.f32 %v7393, 1.442695
      %v7437 = vpow.pop %v7436
      %v7438 = vmul.f32 %v7394, 1.442695
      %v7439 = vpow.pop %v7438
      %v7440 = vmul.f32 %v7395, 1.442695
      %v7441 = vpow.pop %v7440
      %v7442 = vmul.f32 %v7396, 1.442695
      %v7443 = vpow.pop %v7442
      %v7444 = vmul.f32 %v7397, 1.442695
      %v7445 = vpow.pop %v7444
      %v7446 = vmul.f32 %v7398, 1.442695
      %v7447 = vpow.pop %v7446
      %v7448 = vmul.f32 %v7399, 1.442695
      %v7449 = vpow.pop %v7448
      %v7450 = vmul.f32 %v7400, 1.442695
      %v7451 = vpow.pop %v7450
      %v7452 = vmul.f32 %v7401, 1.442695
      %v7453 = vpow.pop %v7452
      %v7454 = vmul.f32 %v7402, 1.442695
      %v7455 = vpow.pop %v7454
      %v7456 = vmul.f32 %v7403, 1.442695
      %v7457 = vpow.pop %v7456
      %v7458 = vmul.f32 %v7404, 1.442695
      %v7459 = vpow.pop %v7458
      %v7460 = vmul.f32 %v7405, 1.442695
      %v7461 = vpow.pop %v7460
      %v7462 = vmul.f32 %v7406, 1.442695
      %v7463 = vpow.pop %v7462
      %v7464 = vmul.f32 %v7407, 1.442695
      %v7465 = vpow.pop %v7464
      %v7466 = vmul.f32 %v7408, 1.442695
      %v7467 = vpow.pop %v7466
      %v7468 = vmul.f32 %v7409, 1.442695
      %v7469 = vpow.pop %v7468
      %v7470 = vmul.f32 %v7410, 1.442695
      %v7471 = vpow.pop %v7470
      %v7472 = vmul.f32 %v7411, 1.442695
      %v7473 = vpow.pop %v7472
      %v7474 = vmul.f32 %v7412, 1.442695
      %v7475 = vpow.pop %v7474
      %v7476 = vmul.f32 %v7413, 1.442695
      %v7477 = vpow.pop %v7476
      %s7478 = scalar_lea.vmem %s7, 128
      %v7479 = vld [vmem:[%s7478] sm:$0xff]
      %v7480 = vld [vmem:[%s7478 + $0x8] sm:$0xff]
      %v7481 = vld [vmem:[%s7478 + $0x10] sm:$0xff]
      %v7482 = vld [vmem:[%s7478 + $0x18] sm:$0xff]
      %v7483 = vld [vmem:[%s7478 + $0x20] sm:$0xff]
      %v7484 = vld [vmem:[%s7478 + $0x28] sm:$0xff]
      %v7485 = vld [vmem:[%s7478 + $0x30] sm:$0xff]
      %v7486 = vld [vmem:[%s7478 + $0x38] sm:$0xff]
      %v7488 = vsel %vm2390, %v7415, 0
      %v7491 = vsel %vm2390, %v7417, 0
      %v7494 = vsel %vm2390, %v7419, 0
      %v7497 = vsel %vm2390, %v7421, 0
      %v7500 = vsel %vm2390, %v7423, 0
      %v7503 = vsel %vm2390, %v7425, 0
      %v7506 = vsel %vm2390, %v7427, 0
      %v7509 = vsel %vm2390, %v7429, 0
      %v7512 = vsel %vm2390, %v7431, 0
      %v7515 = vsel %vm2390, %v7433, 0
      %v7518 = vsel %vm2390, %v7435, 0
      %v7521 = vsel %vm2390, %v7437, 0
      %v7524 = vsel %vm2390, %v7439, 0
      %v7527 = vsel %vm2390, %v7441, 0
      %v7530 = vsel %vm2390, %v7443, 0
      %v7533 = vsel %vm2390, %v7445, 0
      %v7536 = vsel %vm2390, %v7447, 0
      %v7539 = vsel %vm2390, %v7449, 0
      %v7542 = vsel %vm2390, %v7451, 0
      %v7545 = vsel %vm2390, %v7453, 0
      %v7548 = vsel %vm2390, %v7455, 0
      %v7551 = vsel %vm2390, %v7457, 0
      %v7554 = vsel %vm2390, %v7459, 0
      %v7557 = vsel %vm2390, %v7461, 0
      %v7560 = vsel %vm2390, %v7463, 0
      %v7563 = vsel %vm2390, %v7465, 0
      %v7566 = vsel %vm2390, %v7467, 0
      %v7569 = vsel %vm2390, %v7469, 0
      %v7572 = vsel %vm2390, %v7471, 0
      %v7575 = vsel %vm2390, %v7473, 0
      %v7578 = vsel %vm2390, %v7475, 0
      %v7581 = vsel %vm2390, %v7477, 0
      %7583 = vmatprep.subr.mxu0 0.0
      %7584 = vmatpush1.msra.mxu0 0.0
      %7585 = vmatprep.subr.mxu0 0.0
      %7586 = vmatpush1.msra.mxu0 0.0
      %7587 = vmatprep.subr.mxu0 0.0
      %7588 = vmatpush1.msra.mxu0 0.0
      %7589 = vmatprep.subr.mxu0 0.0
      %7590 = vmatpush1.msra.mxu0 0.0
      %7591 = vmatprep.subr.mxu0 0.0
      %7592 = vmatpush1.msra.mxu0 0.0
      %7593 = vmatprep.subr.mxu0 0.0
      %7594 = vmatpush1.msra.mxu0 0.0
      %7595 = vmatprep.subr.mxu0 0.0
      %7596 = vmatpush1.msra.mxu0 0.0
      %7597 = vmatprep.subr.mxu0 0.0
      %7598 = vmatpush1.msra.mxu0 0.0
      %7599 = vmatprep.subr.mxu0 0.0
      %7600 = vmatpush1.msra.mxu0 %v7486
      %7601 = vmatprep.subr.mxu0 0.0
      %7602 = vmatpush1.msra.mxu0 %v7485
      %7603 = vmatprep.subr.mxu0 0.0
      %7604 = vmatpush1.msra.mxu0 %v7484
      %7605 = vmatprep.subr.mxu0 0.0
      %7606 = vmatpush1.msra.mxu0 %v7483
      %7607 = vmatprep.subr.mxu0 0.0
      %7608 = vmatpush1.msra.mxu0 %v7482
      %7609 = vmatprep.subr.mxu0 0.0
      %7610 = vmatpush1.msra.mxu0 %v7481
      %7611 = vmatprep.subr.mxu0 0.0
      %7612 = vmatpush1.msra.mxu0 %v7480
      %7613 = vmatprep.subr.mxu0 0.0
      %7614 = vmatpush1.msra.mxu0 %v7479
      %7615 = vmatprep.subr.mxu0 0.0
      %7616 = vmatpush2.msra.mxu0 0.0
      %7617 = vmatprep.subr.mxu0 0.0
      %7618 = vmatpush2.msra.mxu0 0.0
      %7619 = vmatprep.subr.mxu0 0.0
      %7620 = vmatpush2.msra.mxu0 0.0
      %7621 = vmatprep.subr.mxu0 0.0
      %7622 = vmatpush2.msra.mxu0 0.0
      %7623 = vmatprep.subr.mxu0 0.0
      %7624 = vmatpush2.msra.mxu0 0.0
      %7625 = vmatprep.subr.mxu0 0.0
      %7626 = vmatpush2.msra.mxu0 0.0
      %7627 = vmatprep.subr.mxu0 0.0
      %7628 = vmatpush2.msra.mxu0 0.0
      %7629 = vmatprep.subr.mxu0 0.0
      %7630 = vmatpush2.msra.mxu0 0.0
      %7631 = vmatprep.subr.mxu0 0.0
      %7632 = vmatpush2.msra.mxu0 0.0
      %7633 = vmatprep.subr.mxu0 0.0
      %7634 = vmatpush2.msra.mxu0 0.0
      %7635 = vmatprep.subr.mxu0 0.0
      %7636 = vmatpush2.msra.mxu0 0.0
      %7637 = vmatprep.subr.mxu0 0.0
      %7638 = vmatpush2.msra.mxu0 0.0
      %7639 = vmatprep.subr.mxu0 0.0
      %7640 = vmatpush2.msra.mxu0 0.0
      %7641 = vmatprep.subr.mxu0 0.0
      %7642 = vmatpush2.msra.mxu0 0.0
      %7643 = vmatprep.subr.mxu0 0.0
      %7644 = vmatpush2.msra.mxu0 0.0
      %7645 = vmatprep.subr.mxu0 0.0
      %7646 = vmatpush2.msra.mxu0 0.0
      %7647 = vmatprep.mubr.f32.mxu0 0.0
      %7648 = vmatmul.mubr.f32.gmra.mxu0 %v7488
      %v7649 = vpop.f32.mrf.mxu0
      %v7650 = vadd.f32 0.0, %v7649
      %v7651 = vpop.f32.mrf.mxu0
      %7652 = vmatprep.mubr.f32.mxu0 0.0
      %7653 = vmatmul.mubr.f32.gmra.mxu0 %v7491
      %v7654 = vpop.f32.mrf.mxu0
      %v7655 = vadd.f32 0.0, %v7654
      %v7656 = vpop.f32.mrf.mxu0
      %7657 = vmatprep.mubr.f32.mxu0 0.0
      %7658 = vmatmul.mubr.f32.gmra.mxu0 %v7494
      %v7659 = vpop.f32.mrf.mxu0
      %v7660 = vadd.f32 0.0, %v7659
      %v7661 = vpop.f32.mrf.mxu0
      %7662 = vmatprep.mubr.f32.mxu0 0.0
      %7663 = vmatmul.mubr.f32.gmra.mxu0 %v7497
      %v7664 = vpop.f32.mrf.mxu0
      %v7665 = vadd.f32 0.0, %v7664
      %v7666 = vpop.f32.mrf.mxu0
      %7667 = vmatprep.mubr.f32.mxu0 0.0
      %7668 = vmatmul.mubr.f32.gmra.mxu0 %v7500
      %v7669 = vpop.f32.mrf.mxu0
      %v7670 = vadd.f32 0.0, %v7669
      %v7671 = vpop.f32.mrf.mxu0
      %7672 = vmatprep.mubr.f32.mxu0 0.0
      %7673 = vmatmul.mubr.f32.gmra.mxu0 %v7503
      %v7674 = vpop.f32.mrf.mxu0
      %v7675 = vadd.f32 0.0, %v7674
      %v7676 = vpop.f32.mrf.mxu0
      %7677 = vmatprep.mubr.f32.mxu0 0.0
      %7678 = vmatmul.mubr.f32.gmra.mxu0 %v7506
      %v7679 = vpop.f32.mrf.mxu0
      %v7680 = vadd.f32 0.0, %v7679
      %v7681 = vpop.f32.mrf.mxu0
      %7682 = vmatprep.mubr.f32.mxu0 0.0
      %7683 = vmatmul.mubr.f32.gmra.mxu0 %v7509
      %v7684 = vpop.f32.mrf.mxu0
      %v7685 = vadd.f32 0.0, %v7684
      %v7686 = vpop.f32.mrf.mxu0
      %7687 = vmatprep.mubr.f32.mxu0 0.0
      %7688 = vmatmul.mubr.f32.gmra.mxu0 %v7512
      %v7689 = vpop.f32.mrf.mxu0
      %v7690 = vadd.f32 0.0, %v7689
      %v7691 = vpop.f32.mrf.mxu0
      %7692 = vmatprep.mubr.f32.mxu0 0.0
      %7693 = vmatmul.mubr.f32.gmra.mxu0 %v7515
      %v7694 = vpop.f32.mrf.mxu0
      %v7695 = vadd.f32 0.0, %v7694
      %v7696 = vpop.f32.mrf.mxu0
      %7697 = vmatprep.mubr.f32.mxu0 0.0
      %7698 = vmatmul.mubr.f32.gmra.mxu0 %v7518
      %v7699 = vpop.f32.mrf.mxu0
      %v7700 = vadd.f32 0.0, %v7699
      %v7701 = vpop.f32.mrf.mxu0
      %7702 = vmatprep.mubr.f32.mxu0 0.0
      %7703 = vmatmul.mubr.f32.gmra.mxu0 %v7521
      %v7704 = vpop.f32.mrf.mxu0
      %v7705 = vadd.f32 0.0, %v7704
      %v7706 = vpop.f32.mrf.mxu0
      %7707 = vmatprep.mubr.f32.mxu0 0.0
      %7708 = vmatmul.mubr.f32.gmra.mxu0 %v7524
      %v7709 = vpop.f32.mrf.mxu0
      %v7710 = vadd.f32 0.0, %v7709
      %v7711 = vpop.f32.mrf.mxu0
      %7712 = vmatprep.mubr.f32.mxu0 0.0
      %7713 = vmatmul.mubr.f32.gmra.mxu0 %v7527
      %v7714 = vpop.f32.mrf.mxu0
      %v7715 = vadd.f32 0.0, %v7714
      %v7716 = vpop.f32.mrf.mxu0
      %7717 = vmatprep.mubr.f32.mxu0 0.0
      %7718 = vmatmul.mubr.f32.gmra.mxu0 %v7530
      %v7719 = vpop.f32.mrf.mxu0
      %v7720 = vadd.f32 0.0, %v7719
      %v7721 = vpop.f32.mrf.mxu0
      %7722 = vmatprep.mubr.f32.mxu0 0.0
      %7723 = vmatmul.mubr.f32.gmra.mxu0 %v7533
      %v7724 = vpop.f32.mrf.mxu0
      %v7725 = vadd.f32 0.0, %v7724
      %v7726 = vpop.f32.mrf.mxu0
      %7727 = vmatprep.mubr.f32.mxu0 0.0
      %7728 = vmatmul.mubr.f32.gmra.mxu0 %v7536
      %v7729 = vpop.f32.mrf.mxu0
      %v7730 = vadd.f32 0.0, %v7729
      %v7731 = vpop.f32.mrf.mxu0
      %7732 = vmatprep.mubr.f32.mxu0 0.0
      %7733 = vmatmul.mubr.f32.gmra.mxu0 %v7539
      %v7734 = vpop.f32.mrf.mxu0
      %v7735 = vadd.f32 0.0, %v7734
      %v7736 = vpop.f32.mrf.mxu0
      %7737 = vmatprep.mubr.f32.mxu0 0.0
      %7738 = vmatmul.mubr.f32.gmra.mxu0 %v7542
      %v7739 = vpop.f32.mrf.mxu0
      %v7740 = vadd.f32 0.0, %v7739
      %v7741 = vpop.f32.mrf.mxu0
      %7742 = vmatprep.mubr.f32.mxu0 0.0
      %7743 = vmatmul.mubr.f32.gmra.mxu0 %v7545
      %v7744 = vpop.f32.mrf.mxu0
      %v7745 = vadd.f32 0.0, %v7744
      %v7746 = vpop.f32.mrf.mxu0
      %7747 = vmatprep.mubr.f32.mxu0 0.0
      %7748 = vmatmul.mubr.f32.gmra.mxu0 %v7548
      %v7749 = vpop.f32.mrf.mxu0
      %v7750 = vadd.f32 0.0, %v7749
      %v7751 = vpop.f32.mrf.mxu0
      %7752 = vmatprep.mubr.f32.mxu0 0.0
      %7753 = vmatmul.mubr.f32.gmra.mxu0 %v7551
      %v7754 = vpop.f32.mrf.mxu0
      %v7755 = vadd.f32 0.0, %v7754
      %v7756 = vpop.f32.mrf.mxu0
      %7757 = vmatprep.mubr.f32.mxu0 0.0
      %7758 = vmatmul.mubr.f32.gmra.mxu0 %v7554
      %v7759 = vpop.f32.mrf.mxu0
      %v7760 = vadd.f32 0.0, %v7759
      %v7761 = vpop.f32.mrf.mxu0
      %7762 = vmatprep.mubr.f32.mxu0 0.0
      %7763 = vmatmul.mubr.f32.gmra.mxu0 %v7557
      %v7764 = vpop.f32.mrf.mxu0
      %v7765 = vadd.f32 0.0, %v7764
      %v7766 = vpop.f32.mrf.mxu0
      %7767 = vmatprep.mubr.f32.mxu0 0.0
      %7768 = vmatmul.mubr.f32.gmra.mxu0 %v7560
      %v7769 = vpop.f32.mrf.mxu0
      %v7770 = vadd.f32 0.0, %v7769
      %v7771 = vpop.f32.mrf.mxu0
      %7772 = vmatprep.mubr.f32.mxu0 0.0
      %7773 = vmatmul.mubr.f32.gmra.mxu0 %v7563
      %v7774 = vpop.f32.mrf.mxu0
      %v7775 = vadd.f32 0.0, %v7774
      %v7776 = vpop.f32.mrf.mxu0
      %7777 = vmatprep.mubr.f32.mxu0 0.0
      %7778 = vmatmul.mubr.f32.gmra.mxu0 %v7566
      %v7779 = vpop.f32.mrf.mxu0
      %v7780 = vadd.f32 0.0, %v7779
      %v7781 = vpop.f32.mrf.mxu0
      %7782 = vmatprep.mubr.f32.mxu0 0.0
      %7783 = vmatmul.mubr.f32.gmra.mxu0 %v7569
      %v7784 = vpop.f32.mrf.mxu0
      %v7785 = vadd.f32 0.0, %v7784
      %v7786 = vpop.f32.mrf.mxu0
      %7787 = vmatprep.mubr.f32.mxu0 0.0
      %7788 = vmatmul.mubr.f32.gmra.mxu0 %v7572
      %v7789 = vpop.f32.mrf.mxu0
      %v7790 = vadd.f32 0.0, %v7789
      %v7791 = vpop.f32.mrf.mxu0
      %7792 = vmatprep.mubr.f32.mxu0 0.0
      %7793 = vmatmul.mubr.f32.gmra.mxu0 %v7575
      %v7794 = vpop.f32.mrf.mxu0
      %v7795 = vadd.f32 0.0, %v7794
      %v7796 = vpop.f32.mrf.mxu0
      %7797 = vmatprep.mubr.f32.mxu0 0.0
      %7798 = vmatmul.mubr.f32.gmra.mxu0 %v7578
      %v7799 = vpop.f32.mrf.mxu0
      %v7800 = vadd.f32 0.0, %v7799
      %v7801 = vpop.f32.mrf.mxu0
      %7802 = vmatprep.mubr.f32.mxu0 0.0
      %7803 = vmatmul.mubr.f32.gmra.mxu0 %v7581
      %v7804 = vpop.f32.mrf.mxu0
      %v7805 = vadd.f32 0.0, %v7804
      %v7806 = vpop.f32.mrf.mxu0
      %7807 = vdwg.mxu0
      %v7808 = vrcp.pop %v7650
      %v7809 = vrcp.pop %v7655
      %v7810 = vrcp.pop %v7660
      %v7811 = vrcp.pop %v7665
      %v7812 = vrcp.pop %v7670
      %v7813 = vrcp.pop %v7675
      %v7814 = vrcp.pop %v7680
      %v7815 = vrcp.pop %v7685
      %v7816 = vrcp.pop %v7690
      %v7817 = vrcp.pop %v7695
      %v7818 = vrcp.pop %v7700
      %v7819 = vrcp.pop %v7705
      %v7820 = vrcp.pop %v7710
      %v7821 = vrcp.pop %v7715
      %v7822 = vrcp.pop %v7720
      %v7823 = vrcp.pop %v7725
      %v7824 = vrcp.pop %v7730
      %v7825 = vrcp.pop %v7735
      %v7826 = vrcp.pop %v7740
      %v7827 = vrcp.pop %v7745
      %v7828 = vrcp.pop %v7750
      %v7829 = vrcp.pop %v7755
      %v7830 = vrcp.pop %v7760
      %v7831 = vrcp.pop %v7765
      %v7832 = vrcp.pop %v7770
      %v7833 = vrcp.pop %v7775
      %v7834 = vrcp.pop %v7780
      %v7835 = vrcp.pop %v7785
      %v7836 = vrcp.pop %v7790
      %v7837 = vrcp.pop %v7795
      %v7838 = vrcp.pop %v7800
      %v7839 = vrcp.pop %v7805
      %v7840 = vmul.f32 %v7415, %v7808
      %v7841 = vmul.f32 %v7417, %v7809
      %v7842 = vmul.f32 %v7419, %v7810
      %v7843 = vmul.f32 %v7421, %v7811
      %v7844 = vmul.f32 %v7423, %v7812
      %v7845 = vmul.f32 %v7425, %v7813
      %v7846 = vmul.f32 %v7427, %v7814
      %v7847 = vmul.f32 %v7429, %v7815
      %v7848 = vmul.f32 %v7431, %v7816
      %v7849 = vmul.f32 %v7433, %v7817
      %v7850 = vmul.f32 %v7435, %v7818
      %v7851 = vmul.f32 %v7437, %v7819
      %v7852 = vmul.f32 %v7439, %v7820
      %v7853 = vmul.f32 %v7441, %v7821
      %v7854 = vmul.f32 %v7443, %v7822
      %v7855 = vmul.f32 %v7445, %v7823
      %v7856 = vmul.f32 %v7447, %v7824
      %v7857 = vmul.f32 %v7449, %v7825
      %v7858 = vmul.f32 %v7451, %v7826
      %v7859 = vmul.f32 %v7453, %v7827
      %v7860 = vmul.f32 %v7455, %v7828
      %v7861 = vmul.f32 %v7457, %v7829
      %v7862 = vmul.f32 %v7459, %v7830
      %v7863 = vmul.f32 %v7461, %v7831
      %v7864 = vmul.f32 %v7463, %v7832
      %v7865 = vmul.f32 %v7465, %v7833
      %v7866 = vmul.f32 %v7467, %v7834
      %v7867 = vmul.f32 %v7469, %v7835
      %v7868 = vmul.f32 %v7471, %v7836
      %v7869 = vmul.f32 %v7473, %v7837
      %v7870 = vmul.f32 %v7475, %v7838
      %v7871 = vmul.f32 %v7477, %v7839
      %v7872 = vpack.c.bf16 %v7841, %v7840
      %v7873 = vpack.c.bf16 %v7843, %v7842
      %v7874 = vpack.c.bf16 %v7845, %v7844
      %v7875 = vpack.c.bf16 %v7847, %v7846
      %v7876 = vpack.c.bf16 %v7849, %v7848
      %v7877 = vpack.c.bf16 %v7851, %v7850
      %v7878 = vpack.c.bf16 %v7853, %v7852
      %v7879 = vpack.c.bf16 %v7855, %v7854
      %v7880 = vpack.c.bf16 %v7857, %v7856
      %v7881 = vpack.c.bf16 %v7859, %v7858
      %v7882 = vpack.c.bf16 %v7861, %v7860
      %v7883 = vpack.c.bf16 %v7863, %v7862
      %v7884 = vpack.c.bf16 %v7865, %v7864
      %v7885 = vpack.c.bf16 %v7867, %v7866
      %v7886 = vpack.c.bf16 %v7869, %v7868
      %v7887 = vpack.c.bf16 %v7871, %v7870
      %v7888 = vld [vmem:[%s5] sm:$0xf]
      %v7889 = vld [vmem:[%s5 + $0x4] sm:$0xf]
      %v7890 = vld [vmem:[%s5 + $0x8] sm:$0xf]
      %v7891 = vld [vmem:[%s5 + $0xc] sm:$0xf]
      %v7896 = vunpack.c.l.b16 %v7888
      %v7897 = vunpack.c.l.b16 %v7889
      %v7898 = vunpack.c.l.b16 %v7890
      %v7899 = vunpack.c.l.b16 %v7891
      %v7900 = vpack.c.b16 %v7897, %v7896
      %v7901 = vpack.c.b16 %v7899, %v7898
      %v7905 = vsel %vm428, %v7872, 0
      %v7908 = vsel %vm428, %v7873, 0
      %v7911 = vsel %vm428, %v7874, 0
      %v7914 = vsel %vm428, %v7875, 0
      %v7917 = vsel %vm428, %v7876, 0
      %v7920 = vsel %vm428, %v7877, 0
      %v7923 = vsel %vm428, %v7878, 0
      %v7926 = vsel %vm428, %v7879, 0
      %v7929 = vsel %vm428, %v7880, 0
      %v7932 = vsel %vm428, %v7881, 0
      %v7935 = vsel %vm428, %v7882, 0
      %v7938 = vsel %vm428, %v7883, 0
      %v7941 = vsel %vm428, %v7884, 0
      %v7944 = vsel %vm428, %v7885, 0
      %v7947 = vsel %vm428, %v7886, 0
      %v7950 = vsel %vm428, %v7887, 0
      %7952 = vmatprep.subr.bf16.mxu0 0
      %7953 = vmatpush1.bf16.msra.mxu0 0
      %7954 = vmatprep.subr.bf16.mxu0 0
      %7955 = vmatpush1.bf16.msra.mxu0 0
      %7956 = vmatprep.subr.bf16.mxu0 0
      %7957 = vmatpush1.bf16.msra.mxu0 0
      %7958 = vmatprep.subr.bf16.mxu0 0
      %7959 = vmatpush1.bf16.msra.mxu0 0
      %7960 = vmatprep.subr.bf16.mxu0 0
      %7961 = vmatpush1.bf16.msra.mxu0 0
      %7962 = vmatprep.subr.bf16.mxu0 0
      %7963 = vmatpush1.bf16.msra.mxu0 0
      %7964 = vmatprep.subr.bf16.mxu0 0
      %7965 = vmatpush1.bf16.msra.mxu0 %v7901
      %7966 = vmatprep.subr.bf16.mxu0 0
      %7967 = vmatpush1.bf16.msra.mxu0 %v7900
      %7968 = vmatprep.subr.bf16.mxu0 0
      %7969 = vmatpush2.bf16.msra.mxu0 0
      %7970 = vmatprep.subr.bf16.mxu0 0
      %7971 = vmatpush2.bf16.msra.mxu0 0
      %7972 = vmatprep.subr.bf16.mxu0 0
      %7973 = vmatpush2.bf16.msra.mxu0 0
      %7974 = vmatprep.subr.bf16.mxu0 0
      %7975 = vmatpush2.bf16.msra.mxu0 0
      %7976 = vmatprep.subr.bf16.mxu0 0
      %7977 = vmatpush2.bf16.msra.mxu0 0
      %7978 = vmatprep.subr.bf16.mxu0 0
      %7979 = vmatpush2.bf16.msra.mxu0 0
      %7980 = vmatprep.subr.bf16.mxu0 0
      %7981 = vmatpush2.bf16.msra.mxu0 0
      %7982 = vmatprep.subr.bf16.mxu0 0
      %7983 = vmatpush2.bf16.msra.mxu0 0
      %7984 = vmatprep.mubr.bf16.mxu0 0
      %7985 = vmatmul.mubr.bf16.gmra.mxu0 %v7905
      %v7986 = vpop.f32.mrf.mxu0
      %v7987 = vadd.f32 0.0, %v7986
      %v7988 = vpop.f32.mrf.mxu0
      %v7989 = vpop.f32.mrf.mxu0
      %v7990 = vadd.f32 0.0, %v7989
      %v7991 = vpop.f32.mrf.mxu0
      %7992 = vmatprep.mubr.bf16.mxu0 0
      %7993 = vmatmul.mubr.bf16.gmra.mxu0 %v7908
      %v7994 = vpop.f32.mrf.mxu0
      %v7995 = vadd.f32 0.0, %v7994
      %v7996 = vpop.f32.mrf.mxu0
      %v7997 = vpop.f32.mrf.mxu0
      %v7998 = vadd.f32 0.0, %v7997
      %v7999 = vpop.f32.mrf.mxu0
      %8000 = vmatprep.mubr.bf16.mxu0 0
      %8001 = vmatmul.mubr.bf16.gmra.mxu0 %v7911
      %v8002 = vpop.f32.mrf.mxu0
      %v8003 = vadd.f32 0.0, %v8002
      %v8004 = vpop.f32.mrf.mxu0
      %v8005 = vpop.f32.mrf.mxu0
      %v8006 = vadd.f32 0.0, %v8005
      %v8007 = vpop.f32.mrf.mxu0
      %8008 = vmatprep.mubr.bf16.mxu0 0
      %8009 = vmatmul.mubr.bf16.gmra.mxu0 %v7914
      %v8010 = vpop.f32.mrf.mxu0
      %v8011 = vadd.f32 0.0, %v8010
      %v8012 = vpop.f32.mrf.mxu0
      %v8013 = vpop.f32.mrf.mxu0
      %v8014 = vadd.f32 0.0, %v8013
      %v8015 = vpop.f32.mrf.mxu0
      %8016 = vmatprep.mubr.bf16.mxu0 0
      %8017 = vmatmul.mubr.bf16.gmra.mxu0 %v7917
      %v8018 = vpop.f32.mrf.mxu0
      %v8019 = vadd.f32 0.0, %v8018
      %v8020 = vpop.f32.mrf.mxu0
      %v8021 = vpop.f32.mrf.mxu0
      %v8022 = vadd.f32 0.0, %v8021
      %v8023 = vpop.f32.mrf.mxu0
      %8024 = vmatprep.mubr.bf16.mxu0 0
      %8025 = vmatmul.mubr.bf16.gmra.mxu0 %v7920
      %v8026 = vpop.f32.mrf.mxu0
      %v8027 = vadd.f32 0.0, %v8026
      %v8028 = vpop.f32.mrf.mxu0
      %v8029 = vpop.f32.mrf.mxu0
      %v8030 = vadd.f32 0.0, %v8029
      %v8031 = vpop.f32.mrf.mxu0
      %8032 = vmatprep.mubr.bf16.mxu0 0
      %8033 = vmatmul.mubr.bf16.gmra.mxu0 %v7923
      %v8034 = vpop.f32.mrf.mxu0
      %v8035 = vadd.f32 0.0, %v8034
      %v8036 = vpop.f32.mrf.mxu0
      %v8037 = vpop.f32.mrf.mxu0
      %v8038 = vadd.f32 0.0, %v8037
      %v8039 = vpop.f32.mrf.mxu0
      %8040 = vmatprep.mubr.bf16.mxu0 0
      %8041 = vmatmul.mubr.bf16.gmra.mxu0 %v7926
      %v8042 = vpop.f32.mrf.mxu0
      %v8043 = vadd.f32 0.0, %v8042
      %v8044 = vpop.f32.mrf.mxu0
      %v8045 = vpop.f32.mrf.mxu0
      %v8046 = vadd.f32 0.0, %v8045
      %v8047 = vpop.f32.mrf.mxu0
      %8048 = vmatprep.mubr.bf16.mxu0 0
      %8049 = vmatmul.mubr.bf16.gmra.mxu0 %v7929
      %v8050 = vpop.f32.mrf.mxu0
      %v8051 = vadd.f32 0.0, %v8050
      %v8052 = vpop.f32.mrf.mxu0
      %v8053 = vpop.f32.mrf.mxu0
      %v8054 = vadd.f32 0.0, %v8053
      %v8055 = vpop.f32.mrf.mxu0
      %8056 = vmatprep.mubr.bf16.mxu0 0
      %8057 = vmatmul.mubr.bf16.gmra.mxu0 %v7932
      %v8058 = vpop.f32.mrf.mxu0
      %v8059 = vadd.f32 0.0, %v8058
      %v8060 = vpop.f32.mrf.mxu0
      %v8061 = vpop.f32.mrf.mxu0
      %v8062 = vadd.f32 0.0, %v8061
      %v8063 = vpop.f32.mrf.mxu0
      %8064 = vmatprep.mubr.bf16.mxu0 0
      %8065 = vmatmul.mubr.bf16.gmra.mxu0 %v7935
      %v8066 = vpop.f32.mrf.mxu0
      %v8067 = vadd.f32 0.0, %v8066
      %v8068 = vpop.f32.mrf.mxu0
      %v8069 = vpop.f32.mrf.mxu0
      %v8070 = vadd.f32 0.0, %v8069
      %v8071 = vpop.f32.mrf.mxu0
      %8072 = vmatprep.mubr.bf16.mxu0 0
      %8073 = vmatmul.mubr.bf16.gmra.mxu0 %v7938
      %v8074 = vpop.f32.mrf.mxu0
      %v8075 = vadd.f32 0.0, %v8074
      %v8076 = vpop.f32.mrf.mxu0
      %v8077 = vpop.f32.mrf.mxu0
      %v8078 = vadd.f32 0.0, %v8077
      %v8079 = vpop.f32.mrf.mxu0
      %8080 = vmatprep.mubr.bf16.mxu0 0
      %8081 = vmatmul.mubr.bf16.gmra.mxu0 %v7941
      %v8082 = vpop.f32.mrf.mxu0
      %v8083 = vadd.f32 0.0, %v8082
      %v8084 = vpop.f32.mrf.mxu0
      %v8085 = vpop.f32.mrf.mxu0
      %v8086 = vadd.f32 0.0, %v8085
      %v8087 = vpop.f32.mrf.mxu0
      %8088 = vmatprep.mubr.bf16.mxu0 0
      %8089 = vmatmul.mubr.bf16.gmra.mxu0 %v7944
      %v8090 = vpop.f32.mrf.mxu0
      %v8091 = vadd.f32 0.0, %v8090
      %v8092 = vpop.f32.mrf.mxu0
      %v8093 = vpop.f32.mrf.mxu0
      %v8094 = vadd.f32 0.0, %v8093
      %v8095 = vpop.f32.mrf.mxu0
      %8096 = vmatprep.mubr.bf16.mxu0 0
      %8097 = vmatmul.mubr.bf16.gmra.mxu0 %v7947
      %v8098 = vpop.f32.mrf.mxu0
      %v8099 = vadd.f32 0.0, %v8098
      %v8100 = vpop.f32.mrf.mxu0
      %v8101 = vpop.f32.mrf.mxu0
      %v8102 = vadd.f32 0.0, %v8101
      %v8103 = vpop.f32.mrf.mxu0
      %8104 = vmatprep.mubr.bf16.mxu0 0
      %8105 = vmatmul.mubr.bf16.gmra.mxu0 %v7950
      %v8106 = vpop.f32.mrf.mxu0
      %v8107 = vadd.f32 0.0, %v8106
      %v8108 = vpop.f32.mrf.mxu0
      %v8109 = vpop.f32.mrf.mxu0
      %v8110 = vadd.f32 0.0, %v8109
      %v8111 = vpop.f32.mrf.mxu0
      %8112 = vdwg.mxu0
      %v8113 = vadd.f32 %v707, %v7987
      %v8114 = vadd.f32 %v711, %v7990
      %v8115 = vadd.f32 %v717, %v7995
      %v8116 = vadd.f32 %v721, %v7998
      %v8117 = vadd.f32 %v727, %v8003
      %v8118 = vadd.f32 %v731, %v8006
      %v8119 = vadd.f32 %v737, %v8011
      %v8120 = vadd.f32 %v741, %v8014
      %v8121 = vadd.f32 %v747, %v8019
      %v8122 = vadd.f32 %v751, %v8022
      %v8123 = vadd.f32 %v757, %v8027
      %v8124 = vadd.f32 %v761, %v8030
      %v8125 = vadd.f32 %v767, %v8035
      %v8126 = vadd.f32 %v771, %v8038
      %v8127 = vadd.f32 %v777, %v8043
      %v8128 = vadd.f32 %v781, %v8046
      %v8129 = vadd.f32 %v787, %v8051
      %v8130 = vadd.f32 %v791, %v8054
      %v8131 = vadd.f32 %v797, %v8059
      %v8132 = vadd.f32 %v801, %v8062
      %v8133 = vadd.f32 %v807, %v8067
      %v8134 = vadd.f32 %v811, %v8070
      %v8135 = vadd.f32 %v817, %v8075
      %v8136 = vadd.f32 %v821, %v8078
      %v8137 = vadd.f32 %v827, %v8083
      %v8138 = vadd.f32 %v831, %v8086
      %v8139 = vadd.f32 %v837, %v8091
      %v8140 = vadd.f32 %v841, %v8094
      %v8141 = vadd.f32 %v847, %v8099
      %v8142 = vadd.f32 %v851, %v8102
      %v8143 = vadd.f32 %v857, %v8107
      %v8144 = vadd.f32 %v861, %v8110
      %v8145 = vxor.u32 %v8113, 2147483648
      %v8146 = vxor.u32 %v8114, 2147483648
      %v8147 = vxor.u32 %v8115, 2147483648
      %v8148 = vxor.u32 %v8116, 2147483648
      %v8149 = vxor.u32 %v8117, 2147483648
      %v8150 = vxor.u32 %v8118, 2147483648
      %v8151 = vxor.u32 %v8119, 2147483648
      %v8152 = vxor.u32 %v8120, 2147483648
      %v8153 = vxor.u32 %v8121, 2147483648
      %v8154 = vxor.u32 %v8122, 2147483648
      %v8155 = vxor.u32 %v8123, 2147483648
      %v8156 = vxor.u32 %v8124, 2147483648
      %v8157 = vxor.u32 %v8125, 2147483648
      %v8158 = vxor.u32 %v8126, 2147483648
      %v8159 = vxor.u32 %v8127, 2147483648
      %v8160 = vxor.u32 %v8128, 2147483648
      %v8161 = vxor.u32 %v8129, 2147483648
      %v8162 = vxor.u32 %v8130, 2147483648
      %v8163 = vxor.u32 %v8131, 2147483648
      %v8164 = vxor.u32 %v8132, 2147483648
      %v8165 = vxor.u32 %v8133, 2147483648
      %v8166 = vxor.u32 %v8134, 2147483648
      %v8167 = vxor.u32 %v8135, 2147483648
      %v8168 = vxor.u32 %v8136, 2147483648
      %v8169 = vxor.u32 %v8137, 2147483648
      %v8170 = vxor.u32 %v8138, 2147483648
      %v8171 = vxor.u32 %v8139, 2147483648
      %v8172 = vxor.u32 %v8140, 2147483648
      %v8173 = vxor.u32 %v8141, 2147483648
      %v8174 = vxor.u32 %v8142, 2147483648
      %v8175 = vxor.u32 %v8143, 2147483648
      %v8176 = vxor.u32 %v8144, 2147483648
      %v8177 = vmul.f32 %v8145, 1.442695
      %v8178 = vpow.pop %v8177
      %v8179 = vmul.f32 %v8146, 1.442695
      %v8180 = vpow.pop %v8179
      %v8181 = vmul.f32 %v8147, 1.442695
      %v8182 = vpow.pop %v8181
      %v8183 = vmul.f32 %v8148, 1.442695
      %v8184 = vpow.pop %v8183
      %v8185 = vmul.f32 %v8149, 1.442695
      %v8186 = vpow.pop %v8185
      %v8187 = vmul.f32 %v8150, 1.442695
      %v8188 = vpow.pop %v8187
      %v8189 = vmul.f32 %v8151, 1.442695
      %v8190 = vpow.pop %v8189
      %v8191 = vmul.f32 %v8152, 1.442695
      %v8192 = vpow.pop %v8191
      %v8193 = vmul.f32 %v8153, 1.442695
      %v8194 = vpow.pop %v8193
      %v8195 = vmul.f32 %v8154, 1.442695
      %v8196 = vpow.pop %v8195
      %v8197 = vmul.f32 %v8155, 1.442695
      %v8198 = vpow.pop %v8197
      %v8199 = vmul.f32 %v8156, 1.442695
      %v8200 = vpow.pop %v8199
      %v8201 = vmul.f32 %v8157, 1.442695
      %v8202 = vpow.pop %v8201
      %v8203 = vmul.f32 %v8158, 1.442695
      %v8204 = vpow.pop %v8203
      %v8205 = vmul.f32 %v8159, 1.442695
      %v8206 = vpow.pop %v8205
      %v8207 = vmul.f32 %v8160, 1.442695
      %v8208 = vpow.pop %v8207
      %v8209 = vmul.f32 %v8161, 1.442695
      %v8210 = vpow.pop %v8209
      %v8211 = vmul.f32 %v8162, 1.442695
      %v8212 = vpow.pop %v8211
      %v8213 = vmul.f32 %v8163, 1.442695
      %v8214 = vpow.pop %v8213
      %v8215 = vmul.f32 %v8164, 1.442695
      %v8216 = vpow.pop %v8215
      %v8217 = vmul.f32 %v8165, 1.442695
      %v8218 = vpow.pop %v8217
      %v8219 = vmul.f32 %v8166, 1.442695
      %v8220 = vpow.pop %v8219
      %v8221 = vmul.f32 %v8167, 1.442695
      %v8222 = vpow.pop %v8221
      %v8223 = vmul.f32 %v8168, 1.442695
      %v8224 = vpow.pop %v8223
      %v8225 = vmul.f32 %v8169, 1.442695
      %v8226 = vpow.pop %v8225
      %v8227 = vmul.f32 %v8170, 1.442695
      %v8228 = vpow.pop %v8227
      %v8229 = vmul.f32 %v8171, 1.442695
      %v8230 = vpow.pop %v8229
      %v8231 = vmul.f32 %v8172, 1.442695
      %v8232 = vpow.pop %v8231
      %v8233 = vmul.f32 %v8173, 1.442695
      %v8234 = vpow.pop %v8233
      %v8235 = vmul.f32 %v8174, 1.442695
      %v8236 = vpow.pop %v8235
      %v8237 = vmul.f32 %v8175, 1.442695
      %v8238 = vpow.pop %v8237
      %v8239 = vmul.f32 %v8176, 1.442695
      %v8240 = vpow.pop %v8239
      %v8241 = vadd.f32 %v8178, 1.0
      %v8242 = vadd.f32 %v8180, 1.0
      %v8243 = vadd.f32 %v8182, 1.0
      %v8244 = vadd.f32 %v8184, 1.0
      %v8245 = vadd.f32 %v8186, 1.0
      %v8246 = vadd.f32 %v8188, 1.0
      %v8247 = vadd.f32 %v8190, 1.0
      %v8248 = vadd.f32 %v8192, 1.0
      %v8249 = vadd.f32 %v8194, 1.0
      %v8250 = vadd.f32 %v8196, 1.0
      %v8251 = vadd.f32 %v8198, 1.0
      %v8252 = vadd.f32 %v8200, 1.0
      %v8253 = vadd.f32 %v8202, 1.0
      %v8254 = vadd.f32 %v8204, 1.0
      %v8255 = vadd.f32 %v8206, 1.0
      %v8256 = vadd.f32 %v8208, 1.0
      %v8257 = vadd.f32 %v8210, 1.0
      %v8258 = vadd.f32 %v8212, 1.0
      %v8259 = vadd.f32 %v8214, 1.0
      %v8260 = vadd.f32 %v8216, 1.0
      %v8261 = vadd.f32 %v8218, 1.0
      %v8262 = vadd.f32 %v8220, 1.0
      %v8263 = vadd.f32 %v8222, 1.0
      %v8264 = vadd.f32 %v8224, 1.0
      %v8265 = vadd.f32 %v8226, 1.0
      %v8266 = vadd.f32 %v8228, 1.0
      %v8267 = vadd.f32 %v8230, 1.0
      %v8268 = vadd.f32 %v8232, 1.0
      %v8269 = vadd.f32 %v8234, 1.0
      %v8270 = vadd.f32 %v8236, 1.0
      %v8271 = vadd.f32 %v8238, 1.0
      %v8272 = vadd.f32 %v8240, 1.0
      %v8273 = vrcp.pop %v8241
      %v8274 = vmul.f32 1.0, %v8273
      %v8275 = vrcp.pop %v8242
      %v8276 = vmul.f32 1.0, %v8275
      %v8277 = vrcp.pop %v8243
      %v8278 = vmul.f32 1.0, %v8277
      %v8279 = vrcp.pop %v8244
      %v8280 = vmul.f32 1.0, %v8279
      %v8281 = vrcp.pop %v8245
      %v8282 = vmul.f32 1.0, %v8281
      %v8283 = vrcp.pop %v8246
      %v8284 = vmul.f32 1.0, %v8283
      %v8285 = vrcp.pop %v8247
      %v8286 = vmul.f32 1.0, %v8285
      %v8287 = vrcp.pop %v8248
      %v8288 = vmul.f32 1.0, %v8287
      %v8289 = vrcp.pop %v8249
      %v8290 = vmul.f32 1.0, %v8289
      %v8291 = vrcp.pop %v8250
      %v8292 = vmul.f32 1.0, %v8291
      %v8293 = vrcp.pop %v8251
      %v8294 = vmul.f32 1.0, %v8293
      %v8295 = vrcp.pop %v8252
      %v8296 = vmul.f32 1.0, %v8295
      %v8297 = vrcp.pop %v8253
      %v8298 = vmul.f32 1.0, %v8297
      %v8299 = vrcp.pop %v8254
      %v8300 = vmul.f32 1.0, %v8299
      %v8301 = vrcp.pop %v8255
      %v8302 = vmul.f32 1.0, %v8301
      %v8303 = vrcp.pop %v8256
      %v8304 = vmul.f32 1.0, %v8303
      %v8305 = vrcp.pop %v8257
      %v8306 = vmul.f32 1.0, %v8305
      %v8307 = vrcp.pop %v8258
      %v8308 = vmul.f32 1.0, %v8307
      %v8309 = vrcp.pop %v8259
      %v8310 = vmul.f32 1.0, %v8309
      %v8311 = vrcp.pop %v8260
      %v8312 = vmul.f32 1.0, %v8311
      %v8313 = vrcp.pop %v8261
      %v8314 = vmul.f32 1.0, %v8313
      %v8315 = vrcp.pop %v8262
      %v8316 = vmul.f32 1.0, %v8315
      %v8317 = vrcp.pop %v8263
      %v8318 = vmul.f32 1.0, %v8317
      %v8319 = vrcp.pop %v8264
      %v8320 = vmul.f32 1.0, %v8319
      %v8321 = vrcp.pop %v8265
      %v8322 = vmul.f32 1.0, %v8321
      %v8323 = vrcp.pop %v8266
      %v8324 = vmul.f32 1.0, %v8323
      %v8325 = vrcp.pop %v8267
      %v8326 = vmul.f32 1.0, %v8325
      %v8327 = vrcp.pop %v8268
      %v8328 = vmul.f32 1.0, %v8327
      %v8329 = vrcp.pop %v8269
      %v8330 = vmul.f32 1.0, %v8329
      %v8331 = vrcp.pop %v8270
      %v8332 = vmul.f32 1.0, %v8331
      %v8333 = vrcp.pop %v8271
      %v8334 = vmul.f32 1.0, %v8333
      %v8335 = vrcp.pop %v8272
      %v8336 = vmul.f32 1.0, %v8335
      %v8337 = vtanh.pop %v8113
      %v8338 = vtanh.pop %v8114
      %v8339 = vtanh.pop %v8115
      %v8340 = vtanh.pop %v8116
      %v8341 = vtanh.pop %v8117
      %v8342 = vtanh.pop %v8118
      %v8343 = vtanh.pop %v8119
      %v8344 = vtanh.pop %v8120
      %v8345 = vtanh.pop %v8121
      %v8346 = vtanh.pop %v8122
      %v8347 = vtanh.pop %v8123
      %v8348 = vtanh.pop %v8124
      %v8349 = vtanh.pop %v8125
      %v8350 = vtanh.pop %v8126
      %v8351 = vtanh.pop %v8127
      %v8352 = vtanh.pop %v8128
      %v8353 = vtanh.pop %v8129
      %v8354 = vtanh.pop %v8130
      %v8355 = vtanh.pop %v8131
      %v8356 = vtanh.pop %v8132
      %v8357 = vtanh.pop %v8133
      %v8358 = vtanh.pop %v8134
      %v8359 = vtanh.pop %v8135
      %v8360 = vtanh.pop %v8136
      %v8361 = vtanh.pop %v8137
      %v8362 = vtanh.pop %v8138
      %v8363 = vtanh.pop %v8139
      %v8364 = vtanh.pop %v8140
      %v8365 = vtanh.pop %v8141
      %v8366 = vtanh.pop %v8142
      %v8367 = vtanh.pop %v8143
      %v8368 = vtanh.pop %v8144
      %v8369 = vmul.f32 %v8274, %v7840
      %v8370 = vmul.f32 %v8276, %v7841
      %v8371 = vmul.f32 %v8278, %v7842
      %v8372 = vmul.f32 %v8280, %v7843
      %v8373 = vmul.f32 %v8282, %v7844
      %v8374 = vmul.f32 %v8284, %v7845
      %v8375 = vmul.f32 %v8286, %v7846
      %v8376 = vmul.f32 %v8288, %v7847
      %v8377 = vmul.f32 %v8290, %v7848
      %v8378 = vmul.f32 %v8292, %v7849
      %v8379 = vmul.f32 %v8294, %v7850
      %v8380 = vmul.f32 %v8296, %v7851
      %v8381 = vmul.f32 %v8298, %v7852
      %v8382 = vmul.f32 %v8300, %v7853
      %v8383 = vmul.f32 %v8302, %v7854
      %v8384 = vmul.f32 %v8304, %v7855
      %v8385 = vmul.f32 %v8306, %v7856
      %v8386 = vmul.f32 %v8308, %v7857
      %v8387 = vmul.f32 %v8310, %v7858
      %v8388 = vmul.f32 %v8312, %v7859
      %v8389 = vmul.f32 %v8314, %v7860
      %v8390 = vmul.f32 %v8316, %v7861
      %v8391 = vmul.f32 %v8318, %v7862
      %v8392 = vmul.f32 %v8320, %v7863
      %v8393 = vmul.f32 %v8322, %v7864
      %v8394 = vmul.f32 %v8324, %v7865
      %v8395 = vmul.f32 %v8326, %v7866
      %v8396 = vmul.f32 %v8328, %v7867
      %v8397 = vmul.f32 %v8330, %v7868
      %v8398 = vmul.f32 %v8332, %v7869
      %v8399 = vmul.f32 %v8334, %v7870
      %v8400 = vmul.f32 %v8336, %v7871
      %8433 = vrot.lane.b32.xlu0 %v8337, 64
      %v8434 = vpop.permute.xlu0 %8433
      %8435 = vrot.lane.b32.xlu0 %v8338, 64
      %v8436 = vpop.permute.xlu0 %8435
      %8437 = vrot.lane.b32.xlu0 %v8339, 64
      %v8438 = vpop.permute.xlu0 %8437
      %8439 = vrot.lane.b32.xlu0 %v8340, 64
      %v8440 = vpop.permute.xlu0 %8439
      %8441 = vrot.lane.b32.xlu0 %v8341, 64
      %v8442 = vpop.permute.xlu0 %8441
      %8443 = vrot.lane.b32.xlu0 %v8342, 64
      %v8444 = vpop.permute.xlu0 %8443
      %8445 = vrot.lane.b32.xlu0 %v8343, 64
      %v8446 = vpop.permute.xlu0 %8445
      %8447 = vrot.lane.b32.xlu0 %v8344, 64
      %v8448 = vpop.permute.xlu0 %8447
      %8449 = vrot.lane.b32.xlu0 %v8345, 64
      %v8450 = vpop.permute.xlu0 %8449
      %8451 = vrot.lane.b32.xlu0 %v8346, 64
      %v8452 = vpop.permute.xlu0 %8451
      %8453 = vrot.lane.b32.xlu0 %v8347, 64
      %v8454 = vpop.permute.xlu0 %8453
      %8455 = vrot.lane.b32.xlu0 %v8348, 64
      %v8456 = vpop.permute.xlu0 %8455
      %8457 = vrot.lane.b32.xlu0 %v8349, 64
      %v8458 = vpop.permute.xlu0 %8457
      %8459 = vrot.lane.b32.xlu0 %v8350, 64
      %v8460 = vpop.permute.xlu0 %8459
      %8461 = vrot.lane.b32.xlu0 %v8351, 64
      %v8462 = vpop.permute.xlu0 %8461
      %8463 = vrot.lane.b32.xlu0 %v8352, 64
      %v8464 = vpop.permute.xlu0 %8463
      %8465 = vrot.lane.b32.xlu0 %v8353, 64
      %v8466 = vpop.permute.xlu0 %8465
      %8467 = vrot.lane.b32.xlu0 %v8354, 64
      %v8468 = vpop.permute.xlu0 %8467
      %8469 = vrot.lane.b32.xlu0 %v8355, 64
      %v8470 = vpop.permute.xlu0 %8469
      %8471 = vrot.lane.b32.xlu0 %v8356, 64
      %v8472 = vpop.permute.xlu0 %8471
      %8473 = vrot.lane.b32.xlu0 %v8357, 64
      %v8474 = vpop.permute.xlu0 %8473
      %8475 = vrot.lane.b32.xlu0 %v8358, 64
      %v8476 = vpop.permute.xlu0 %8475
      %8477 = vrot.lane.b32.xlu0 %v8359, 64
      %v8478 = vpop.permute.xlu0 %8477
      %8479 = vrot.lane.b32.xlu0 %v8360, 64
      %v8480 = vpop.permute.xlu0 %8479
      %8481 = vrot.lane.b32.xlu0 %v8361, 64
      %v8482 = vpop.permute.xlu0 %8481
      %8483 = vrot.lane.b32.xlu0 %v8362, 64
      %v8484 = vpop.permute.xlu0 %8483
      %8485 = vrot.lane.b32.xlu0 %v8363, 64
      %v8486 = vpop.permute.xlu0 %8485
      %8487 = vrot.lane.b32.xlu0 %v8364, 64
      %v8488 = vpop.permute.xlu0 %8487
      %8489 = vrot.lane.b32.xlu0 %v8365, 64
      %v8490 = vpop.permute.xlu0 %8489
      %8491 = vrot.lane.b32.xlu0 %v8366, 64
      %v8492 = vpop.permute.xlu0 %8491
      %8493 = vrot.lane.b32.xlu0 %v8367, 64
      %v8494 = vpop.permute.xlu0 %8493
      %8495 = vrot.lane.b32.xlu0 %v8368, 64
      %v8496 = vpop.permute.xlu0 %8495
      %v8529 = vmul.f32 %v8274, %v8434
      %v8530 = vmul.f32 %v8276, %v8436
      %v8531 = vmul.f32 %v8278, %v8438
      %v8532 = vmul.f32 %v8280, %v8440
      %v8533 = vmul.f32 %v8282, %v8442
      %v8534 = vmul.f32 %v8284, %v8444
      %v8535 = vmul.f32 %v8286, %v8446
      %v8536 = vmul.f32 %v8288, %v8448
      %v8537 = vmul.f32 %v8290, %v8450
      %v8538 = vmul.f32 %v8292, %v8452
      %v8539 = vmul.f32 %v8294, %v8454
      %v8540 = vmul.f32 %v8296, %v8456
      %v8541 = vmul.f32 %v8298, %v8458
      %v8542 = vmul.f32 %v8300, %v8460
      %v8543 = vmul.f32 %v8302, %v8462
      %v8544 = vmul.f32 %v8304, %v8464
      %v8545 = vmul.f32 %v8306, %v8466
      %v8546 = vmul.f32 %v8308, %v8468
      %v8547 = vmul.f32 %v8310, %v8470
      %v8548 = vmul.f32 %v8312, %v8472
      %v8549 = vmul.f32 %v8314, %v8474
      %v8550 = vmul.f32 %v8316, %v8476
      %v8551 = vmul.f32 %v8318, %v8478
      %v8552 = vmul.f32 %v8320, %v8480
      %v8553 = vmul.f32 %v8322, %v8482
      %v8554 = vmul.f32 %v8324, %v8484
      %v8555 = vmul.f32 %v8326, %v8486
      %v8556 = vmul.f32 %v8328, %v8488
      %v8557 = vmul.f32 %v8330, %v8490
      %v8558 = vmul.f32 %v8332, %v8492
      %v8559 = vmul.f32 %v8334, %v8494
      %v8560 = vmul.f32 %v8336, %v8496
      %8593 = vrot.lane.b32.xlu0 %v8529, 32
      %v8594 = vpop.permute.xlu0 %8593
      %8595 = vrot.lane.b32.xlu0 %v8530, 32
      %v8596 = vpop.permute.xlu0 %8595
      %8597 = vrot.lane.b32.xlu0 %v8531, 32
      %v8598 = vpop.permute.xlu0 %8597
      %8599 = vrot.lane.b32.xlu0 %v8532, 32
      %v8600 = vpop.permute.xlu0 %8599
      %8601 = vrot.lane.b32.xlu0 %v8533, 32
      %v8602 = vpop.permute.xlu0 %8601
      %8603 = vrot.lane.b32.xlu0 %v8534, 32
      %v8604 = vpop.permute.xlu0 %8603
      %8605 = vrot.lane.b32.xlu0 %v8535, 32
      %v8606 = vpop.permute.xlu0 %8605
      %8607 = vrot.lane.b32.xlu0 %v8536, 32
      %v8608 = vpop.permute.xlu0 %8607
      %8609 = vrot.lane.b32.xlu0 %v8537, 32
      %v8610 = vpop.permute.xlu0 %8609
      %8611 = vrot.lane.b32.xlu0 %v8538, 32
      %v8612 = vpop.permute.xlu0 %8611
      %8613 = vrot.lane.b32.xlu0 %v8539, 32
      %v8614 = vpop.permute.xlu0 %8613
      %8615 = vrot.lane.b32.xlu0 %v8540, 32
      %v8616 = vpop.permute.xlu0 %8615
      %8617 = vrot.lane.b32.xlu0 %v8541, 32
      %v8618 = vpop.permute.xlu0 %8617
      %8619 = vrot.lane.b32.xlu0 %v8542, 32
      %v8620 = vpop.permute.xlu0 %8619
      %8621 = vrot.lane.b32.xlu0 %v8543, 32
      %v8622 = vpop.permute.xlu0 %8621
      %8623 = vrot.lane.b32.xlu0 %v8544, 32
      %v8624 = vpop.permute.xlu0 %8623
      %8625 = vrot.lane.b32.xlu0 %v8545, 32
      %v8626 = vpop.permute.xlu0 %8625
      %8627 = vrot.lane.b32.xlu0 %v8546, 32
      %v8628 = vpop.permute.xlu0 %8627
      %8629 = vrot.lane.b32.xlu0 %v8547, 32
      %v8630 = vpop.permute.xlu0 %8629
      %8631 = vrot.lane.b32.xlu0 %v8548, 32
      %v8632 = vpop.permute.xlu0 %8631
      %8633 = vrot.lane.b32.xlu0 %v8549, 32
      %v8634 = vpop.permute.xlu0 %8633
      %8635 = vrot.lane.b32.xlu0 %v8550, 32
      %v8636 = vpop.permute.xlu0 %8635
      %8637 = vrot.lane.b32.xlu0 %v8551, 32
      %v8638 = vpop.permute.xlu0 %8637
      %8639 = vrot.lane.b32.xlu0 %v8552, 32
      %v8640 = vpop.permute.xlu0 %8639
      %8641 = vrot.lane.b32.xlu0 %v8553, 32
      %v8642 = vpop.permute.xlu0 %8641
      %8643 = vrot.lane.b32.xlu0 %v8554, 32
      %v8644 = vpop.permute.xlu0 %8643
      %8645 = vrot.lane.b32.xlu0 %v8555, 32
      %v8646 = vpop.permute.xlu0 %8645
      %8647 = vrot.lane.b32.xlu0 %v8556, 32
      %v8648 = vpop.permute.xlu0 %8647
      %8649 = vrot.lane.b32.xlu0 %v8557, 32
      %v8650 = vpop.permute.xlu0 %8649
      %8651 = vrot.lane.b32.xlu0 %v8558, 32
      %v8652 = vpop.permute.xlu0 %8651
      %8653 = vrot.lane.b32.xlu0 %v8559, 32
      %v8654 = vpop.permute.xlu0 %8653
      %8655 = vrot.lane.b32.xlu0 %v8560, 32
      %v8656 = vpop.permute.xlu0 %8655
      %v8689 = vadd.f32 %v8369, %v8594
      %v8690 = vadd.f32 %v8370, %v8596
      %v8691 = vadd.f32 %v8371, %v8598
      %v8692 = vadd.f32 %v8372, %v8600
      %v8693 = vadd.f32 %v8373, %v8602
      %v8694 = vadd.f32 %v8374, %v8604
      %v8695 = vadd.f32 %v8375, %v8606
      %v8696 = vadd.f32 %v8376, %v8608
      %v8697 = vadd.f32 %v8377, %v8610
      %v8698 = vadd.f32 %v8378, %v8612
      %v8699 = vadd.f32 %v8379, %v8614
      %v8700 = vadd.f32 %v8380, %v8616
      %v8701 = vadd.f32 %v8381, %v8618
      %v8702 = vadd.f32 %v8382, %v8620
      %v8703 = vadd.f32 %v8383, %v8622
      %v8704 = vadd.f32 %v8384, %v8624
      %v8705 = vadd.f32 %v8385, %v8626
      %v8706 = vadd.f32 %v8386, %v8628
      %v8707 = vadd.f32 %v8387, %v8630
      %v8708 = vadd.f32 %v8388, %v8632
      %v8709 = vadd.f32 %v8389, %v8634
      %v8710 = vadd.f32 %v8390, %v8636
      %v8711 = vadd.f32 %v8391, %v8638
      %v8712 = vadd.f32 %v8392, %v8640
      %v8713 = vadd.f32 %v8393, %v8642
      %v8714 = vadd.f32 %v8394, %v8644
      %v8715 = vadd.f32 %v8395, %v8646
      %v8716 = vadd.f32 %v8396, %v8648
      %v8717 = vadd.f32 %v8397, %v8650
      %v8718 = vadd.f32 %v8398, %v8652
      %v8719 = vadd.f32 %v8399, %v8654
      %v8720 = vadd.f32 %v8400, %v8656
      %v8721 = vtanh.pop %v8689
      %v8722 = vtanh.pop %v8690
      %v8723 = vtanh.pop %v8691
      %v8724 = vtanh.pop %v8692
      %v8725 = vtanh.pop %v8693
      %v8726 = vtanh.pop %v8694
      %v8727 = vtanh.pop %v8695
      %v8728 = vtanh.pop %v8696
      %v8729 = vtanh.pop %v8697
      %v8730 = vtanh.pop %v8698
      %v8731 = vtanh.pop %v8699
      %v8732 = vtanh.pop %v8700
      %v8733 = vtanh.pop %v8701
      %v8734 = vtanh.pop %v8702
      %v8735 = vtanh.pop %v8703
      %v8736 = vtanh.pop %v8704
      %v8737 = vtanh.pop %v8705
      %v8738 = vtanh.pop %v8706
      %v8739 = vtanh.pop %v8707
      %v8740 = vtanh.pop %v8708
      %v8741 = vtanh.pop %v8709
      %v8742 = vtanh.pop %v8710
      %v8743 = vtanh.pop %v8711
      %v8744 = vtanh.pop %v8712
      %v8745 = vtanh.pop %v8713
      %v8746 = vtanh.pop %v8714
      %v8747 = vtanh.pop %v8715
      %v8748 = vtanh.pop %v8716
      %v8749 = vtanh.pop %v8717
      %v8750 = vtanh.pop %v8718
      %v8751 = vtanh.pop %v8719
      %v8752 = vtanh.pop %v8720
      %8785 = vrot.lane.b32.xlu0 %v8721, 64
      %v8786 = vpop.permute.xlu0 %8785
      %8787 = vrot.lane.b32.xlu0 %v8722, 64
      %v8788 = vpop.permute.xlu0 %8787
      %8789 = vrot.lane.b32.xlu0 %v8723, 64
      %v8790 = vpop.permute.xlu0 %8789
      %8791 = vrot.lane.b32.xlu0 %v8724, 64
      %v8792 = vpop.permute.xlu0 %8791
      %8793 = vrot.lane.b32.xlu0 %v8725, 64
      %v8794 = vpop.permute.xlu0 %8793
      %8795 = vrot.lane.b32.xlu0 %v8726, 64
      %v8796 = vpop.permute.xlu0 %8795
      %8797 = vrot.lane.b32.xlu0 %v8727, 64
      %v8798 = vpop.permute.xlu0 %8797
      %8799 = vrot.lane.b32.xlu0 %v8728, 64
      %v8800 = vpop.permute.xlu0 %8799
      %8801 = vrot.lane.b32.xlu0 %v8729, 64
      %v8802 = vpop.permute.xlu0 %8801
      %8803 = vrot.lane.b32.xlu0 %v8730, 64
      %v8804 = vpop.permute.xlu0 %8803
      %8805 = vrot.lane.b32.xlu0 %v8731, 64
      %v8806 = vpop.permute.xlu0 %8805
      %8807 = vrot.lane.b32.xlu0 %v8732, 64
      %v8808 = vpop.permute.xlu0 %8807
      %8809 = vrot.lane.b32.xlu0 %v8733, 64
      %v8810 = vpop.permute.xlu0 %8809
      %8811 = vrot.lane.b32.xlu0 %v8734, 64
      %v8812 = vpop.permute.xlu0 %8811
      %8813 = vrot.lane.b32.xlu0 %v8735, 64
      %v8814 = vpop.permute.xlu0 %8813
      %8815 = vrot.lane.b32.xlu0 %v8736, 64
      %v8816 = vpop.permute.xlu0 %8815
      %8817 = vrot.lane.b32.xlu0 %v8737, 64
      %v8818 = vpop.permute.xlu0 %8817
      %8819 = vrot.lane.b32.xlu0 %v8738, 64
      %v8820 = vpop.permute.xlu0 %8819
      %8821 = vrot.lane.b32.xlu0 %v8739, 64
      %v8822 = vpop.permute.xlu0 %8821
      %8823 = vrot.lane.b32.xlu0 %v8740, 64
      %v8824 = vpop.permute.xlu0 %8823
      %8825 = vrot.lane.b32.xlu0 %v8741, 64
      %v8826 = vpop.permute.xlu0 %8825
      %8827 = vrot.lane.b32.xlu0 %v8742, 64
      %v8828 = vpop.permute.xlu0 %8827
      %8829 = vrot.lane.b32.xlu0 %v8743, 64
      %v8830 = vpop.permute.xlu0 %8829
      %8831 = vrot.lane.b32.xlu0 %v8744, 64
      %v8832 = vpop.permute.xlu0 %8831
      %8833 = vrot.lane.b32.xlu0 %v8745, 64
      %v8834 = vpop.permute.xlu0 %8833
      %8835 = vrot.lane.b32.xlu0 %v8746, 64
      %v8836 = vpop.permute.xlu0 %8835
      %8837 = vrot.lane.b32.xlu0 %v8747, 64
      %v8838 = vpop.permute.xlu0 %8837
      %8839 = vrot.lane.b32.xlu0 %v8748, 64
      %v8840 = vpop.permute.xlu0 %8839
      %8841 = vrot.lane.b32.xlu0 %v8749, 64
      %v8842 = vpop.permute.xlu0 %8841
      %8843 = vrot.lane.b32.xlu0 %v8750, 64
      %v8844 = vpop.permute.xlu0 %8843
      %8845 = vrot.lane.b32.xlu0 %v8751, 64
      %v8846 = vpop.permute.xlu0 %8845
      %8847 = vrot.lane.b32.xlu0 %v8752, 64
      %v8848 = vpop.permute.xlu0 %8847
      %v8881 = vmul.f32 %v8274, %v8786
      %v8882 = vmul.f32 %v8276, %v8788
      %v8883 = vmul.f32 %v8278, %v8790
      %v8884 = vmul.f32 %v8280, %v8792
      %v8885 = vmul.f32 %v8282, %v8794
      %v8886 = vmul.f32 %v8284, %v8796
      %v8887 = vmul.f32 %v8286, %v8798
      %v8888 = vmul.f32 %v8288, %v8800
      %v8889 = vmul.f32 %v8290, %v8802
      %v8890 = vmul.f32 %v8292, %v8804
      %v8891 = vmul.f32 %v8294, %v8806
      %v8892 = vmul.f32 %v8296, %v8808
      %v8893 = vmul.f32 %v8298, %v8810
      %v8894 = vmul.f32 %v8300, %v8812
      %v8895 = vmul.f32 %v8302, %v8814
      %v8896 = vmul.f32 %v8304, %v8816
      %v8897 = vmul.f32 %v8306, %v8818
      %v8898 = vmul.f32 %v8308, %v8820
      %v8899 = vmul.f32 %v8310, %v8822
      %v8900 = vmul.f32 %v8312, %v8824
      %v8901 = vmul.f32 %v8314, %v8826
      %v8902 = vmul.f32 %v8316, %v8828
      %v8903 = vmul.f32 %v8318, %v8830
      %v8904 = vmul.f32 %v8320, %v8832
      %v8905 = vmul.f32 %v8322, %v8834
      %v8906 = vmul.f32 %v8324, %v8836
      %v8907 = vmul.f32 %v8326, %v8838
      %v8908 = vmul.f32 %v8328, %v8840
      %v8909 = vmul.f32 %v8330, %v8842
      %v8910 = vmul.f32 %v8332, %v8844
      %v8911 = vmul.f32 %v8334, %v8846
      %v8912 = vmul.f32 %v8336, %v8848
      %8945 = vrot.lane.b32.xlu0 %v8881, 32
      %v8946 = vpop.permute.xlu0 %8945
      %8947 = vrot.lane.b32.xlu0 %v8882, 32
      %v8948 = vpop.permute.xlu0 %8947
      %8949 = vrot.lane.b32.xlu0 %v8883, 32
      %v8950 = vpop.permute.xlu0 %8949
      %8951 = vrot.lane.b32.xlu0 %v8884, 32
      %v8952 = vpop.permute.xlu0 %8951
      %8953 = vrot.lane.b32.xlu0 %v8885, 32
      %v8954 = vpop.permute.xlu0 %8953
      %8955 = vrot.lane.b32.xlu0 %v8886, 32
      %v8956 = vpop.permute.xlu0 %8955
      %8957 = vrot.lane.b32.xlu0 %v8887, 32
      %v8958 = vpop.permute.xlu0 %8957
      %8959 = vrot.lane.b32.xlu0 %v8888, 32
      %v8960 = vpop.permute.xlu0 %8959
      %8961 = vrot.lane.b32.xlu0 %v8889, 32
      %v8962 = vpop.permute.xlu0 %8961
      %8963 = vrot.lane.b32.xlu0 %v8890, 32
      %v8964 = vpop.permute.xlu0 %8963
      %8965 = vrot.lane.b32.xlu0 %v8891, 32
      %v8966 = vpop.permute.xlu0 %8965
      %8967 = vrot.lane.b32.xlu0 %v8892, 32
      %v8968 = vpop.permute.xlu0 %8967
      %8969 = vrot.lane.b32.xlu0 %v8893, 32
      %v8970 = vpop.permute.xlu0 %8969
      %8971 = vrot.lane.b32.xlu0 %v8894, 32
      %v8972 = vpop.permute.xlu0 %8971
      %8973 = vrot.lane.b32.xlu0 %v8895, 32
      %v8974 = vpop.permute.xlu0 %8973
      %8975 = vrot.lane.b32.xlu0 %v8896, 32
      %v8976 = vpop.permute.xlu0 %8975
      %8977 = vrot.lane.b32.xlu0 %v8897, 32
      %v8978 = vpop.permute.xlu0 %8977
      %8979 = vrot.lane.b32.xlu0 %v8898, 32
      %v8980 = vpop.permute.xlu0 %8979
      %8981 = vrot.lane.b32.xlu0 %v8899, 32
      %v8982 = vpop.permute.xlu0 %8981
      %8983 = vrot.lane.b32.xlu0 %v8900, 32
      %v8984 = vpop.permute.xlu0 %8983
      %8985 = vrot.lane.b32.xlu0 %v8901, 32
      %v8986 = vpop.permute.xlu0 %8985
      %8987 = vrot.lane.b32.xlu0 %v8902, 32
      %v8988 = vpop.permute.xlu0 %8987
      %8989 = vrot.lane.b32.xlu0 %v8903, 32
      %v8990 = vpop.permute.xlu0 %8989
      %8991 = vrot.lane.b32.xlu0 %v8904, 32
      %v8992 = vpop.permute.xlu0 %8991
      %8993 = vrot.lane.b32.xlu0 %v8905, 32
      %v8994 = vpop.permute.xlu0 %8993
      %8995 = vrot.lane.b32.xlu0 %v8906, 32
      %v8996 = vpop.permute.xlu0 %8995
      %8997 = vrot.lane.b32.xlu0 %v8907, 32
      %v8998 = vpop.permute.xlu0 %8997
      %8999 = vrot.lane.b32.xlu0 %v8908, 32
      %v9000 = vpop.permute.xlu0 %8999
      %9001 = vrot.lane.b32.xlu0 %v8909, 32
      %v9002 = vpop.permute.xlu0 %9001
      %9003 = vrot.lane.b32.xlu0 %v8910, 32
      %v9004 = vpop.permute.xlu0 %9003
      %9005 = vrot.lane.b32.xlu0 %v8911, 32
      %v9006 = vpop.permute.xlu0 %9005
      %9007 = vrot.lane.b32.xlu0 %v8912, 32
      %v9008 = vpop.permute.xlu0 %9007
      %9041 = vst.msk [vmem:[%s307] sm:$0xff] %vm428, %v8946
      %9042 = vst.msk [vmem:[%s307 + $0x8] sm:$0xff] %vm428, %v8948
      %9043 = vst.msk [vmem:[%s307 + $0x10] sm:$0xff] %vm428, %v8950
      %9044 = vst.msk [vmem:[%s307 + $0x18] sm:$0xff] %vm428, %v8952
      %9045 = vst.msk [vmem:[%s307 + $0x20] sm:$0xff] %vm428, %v8954
      %9046 = vst.msk [vmem:[%s307 + $0x28] sm:$0xff] %vm428, %v8956
      %9047 = vst.msk [vmem:[%s307 + $0x30] sm:$0xff] %vm428, %v8958
      %9048 = vst.msk [vmem:[%s307 + $0x38] sm:$0xff] %vm428, %v8960
      %9049 = vst.msk [vmem:[%s307 + $0x40] sm:$0xff] %vm428, %v8962
      %9050 = vst.msk [vmem:[%s307 + $0x48] sm:$0xff] %vm428, %v8964
      %9051 = vst.msk [vmem:[%s307 + $0x50] sm:$0xff] %vm428, %v8966
      %9052 = vst.msk [vmem:[%s307 + $0x58] sm:$0xff] %vm428, %v8968
      %9053 = vst.msk [vmem:[%s307 + $0x60] sm:$0xff] %vm428, %v8970
      %9054 = vst.msk [vmem:[%s307 + $0x68] sm:$0xff] %vm428, %v8972
      %9055 = vst.msk [vmem:[%s307 + $0x70] sm:$0xff] %vm428, %v8974
      %9056 = vst.msk [vmem:[%s307 + $0x78] sm:$0xff] %vm428, %v8976
      %9057 = vst.msk [vmem:[%s307 + $0x80] sm:$0xff] %vm428, %v8978
      %9058 = vst.msk [vmem:[%s307 + $0x88] sm:$0xff] %vm428, %v8980
      %9059 = vst.msk [vmem:[%s307 + $0x90] sm:$0xff] %vm428, %v8982
      %9060 = vst.msk [vmem:[%s307 + $0x98] sm:$0xff] %vm428, %v8984
      %9061 = vst.msk [vmem:[%s307 + $0xa0] sm:$0xff] %vm428, %v8986
      %9062 = vst.msk [vmem:[%s307 + $0xa8] sm:$0xff] %vm428, %v8988
      %9063 = vst.msk [vmem:[%s307 + $0xb0] sm:$0xff] %vm428, %v8990
      %9064 = vst.msk [vmem:[%s307 + $0xb8] sm:$0xff] %vm428, %v8992
      %9065 = vst.msk [vmem:[%s307 + $0xc0] sm:$0xff] %vm428, %v8994
      %9066 = vst.msk [vmem:[%s307 + $0xc8] sm:$0xff] %vm428, %v8996
      %9067 = vst.msk [vmem:[%s307 + $0xd0] sm:$0xff] %vm428, %v8998
      %9068 = vst.msk [vmem:[%s307 + $0xd8] sm:$0xff] %vm428, %v9000
      %9069 = vst.msk [vmem:[%s307 + $0xe0] sm:$0xff] %vm428, %v9002
      %9070 = vst.msk [vmem:[%s307 + $0xe8] sm:$0xff] %vm428, %v9004
      %9071 = vst.msk [vmem:[%s307 + $0xf0] sm:$0xff] %vm428, %v9006
      %9072 = vst.msk [vmem:[%s307 + $0xf8] sm:$0xff] %vm428, %v9008
      %s9073 = smul.u32 32, %s19
      %p9074 = scmp.lt.s32.totalorder %s9073, 63
      %s9075 = scalar_select %p9074, %s9073, 63
      %s9076 = smul.addr %s9075, 8
      %s9077 = scalar_lea.vmem %s8, %s9076
      // Predicated region
      $region53: #{bwd_lstm_forward.1} parent=51 // pred_check
        %p9078 = pneg %p210
      $region54: #{bwd_lstm_forward.1} parent=51 // pred_check_branch
        %9080 = sbr.rel (%p9078) target = $region56
      $region55: #{bwd_lstm_forward.1} parent=51 // pred_region
        %s9081 = smul.u32 32, %s19
      $region56: #{bwd_lstm_forward.1} parent=51 // pred_fallthru
        _
    $region52: #{bwd_lstm_forward.1} parent=5 // pred_fallthru
      _
    %p9082 = scmp.le.s32.totalorder 2, %s14
    // Predicated region
    $region57: #{bwd_lstm_forward.1} parent=5 // pred_check
      %p9083 = pneg %p9082
    $region58: #{bwd_lstm_forward.1} parent=5 // pred_check_branch
      %9085 = sbr.rel (%p9083) target = $region60
    $region59: #{bwd_lstm_forward.1} parent=5 // pred_region
      %s9086 = ssub.s32 %s14, 2
      // Predicated region
      $region61: #{bwd_lstm_forward.1} parent=59 // pred_check
        %p9087 = pneg %p216
      $region62: #{bwd_lstm_forward.1} parent=59 // pred_check_branch
        %9089 = sbr.rel (%p9087) target = $region64
      $region63: #{bwd_lstm_forward.1} parent=59 // pred_region
        %s9090 = smul.u32 32, %s20
        %p9091 = scmp.lt.s32.totalorder %s9090, 63
        %s9092 = scalar_select %p9091, %s9090, 63
        %s9093 = smul.addr %s9092, 8
        %s9094 = scalar_lea.vmem %s8, %s9093
      $region64: #{bwd_lstm_forward.1} parent=59 // pred_fallthru
        _
    $region60: #{bwd_lstm_forward.1} parent=5 // pred_fallthru
      _
  $region6: #{bwd_lstm_forward.1} parent=0 // loop_footer
    %s18 = sadd.s32 1, %s14
  $region7: #{bwd_lstm_forward.1} parent=0 // loop_footer_branch
    %13 = sbr.rel target = $region3
  $region8: #{bwd_lstm_forward.1} parent=0 // loop_exit
    _

</llo_original>
